<compile_context>
chip_gen: v7x
topology: tpu7x:2x2x1
jax: 0.10.0
libtpu: 0.0.40
codegen_flags: <defaults>
</compile_context>

<pallas_src>
import jax
import jax.numpy as jnp
from jax.experimental import pallas as pl
from jax.experimental.pallas import tpu as pltpu

SEG = 128  # lane-aligned segment stride inside the concatenated weight matrix


# ----------------------------------------------------------------------------
# Shared GATv2 attention body (message -> per-head softmax -> fused aggregation)
# ----------------------------------------------------------------------------
def _gat_body(xl, xr, skip, adj, bias, ea, we, attf, gb, H, C, slope):
    """xl: [Nsrc, HC] source transform; xr/skip: [rows, HC]/[rows, C] for the
    target rows of this tile; adj/bias/ea: row slabs [rows, Nsrc] / [3, rows, Nsrc]."""
    HC = H * C
    # Fused message build (single [rows, Nsrc, HC] live tensor): edge_dim=3
    # projection done with 3 VPU broadcast-FMAs, no MXU, no `e` temporary.
    m = (xr[:, None, :] + xl[None, :, :]
         + ea[0][:, :, None] * we[0:1, :]
         + ea[1][:, :, None] * we[1:2, :]
         + ea[2][:, :, None] * we[2:3, :])
    m = jnp.where(m > 0, m, slope * m)                                # leaky_relu(0.2)

    alphas, xls = [], []
    for h in range(H):                                                # H=2 unroll
        lo = h * C
        # attention vector folded into the reduction (no full `w` temporary)
        s = jnp.sum(m[:, :, lo:lo + C] * attf[:, lo:lo + C], axis=-1) + bias
        smax = jnp.max(s, axis=1, keepdims=True)
        p = jnp.exp(s - smax) * adj                                   # *adj guards 0-in-degree rows
        denom = jnp.sum(p, axis=1, keepdims=True) + 1e-16
        alphas.append(p * pl.reciprocal(denom, approx=True))          # [rows, Nsrc]
        xls.append(xl[:, lo:lo + C])                                   # [Nsrc, C]

    # One fused aggregation matmul instead of H small ones.
    acc = jnp.dot(jnp.concatenate(alphas, axis=1),                     # [rows, H*Nsrc]
                  jnp.concatenate(xls, axis=0),                        # [H*Nsrc, C]
                  preferred_element_type=jnp.float32)                  # [rows, C]
    return acc * (1.0 / H) + gb + skip


def _unpack_small(sp, HC, C):
    bcat = sp[0:1, :]          # [1, 3*SEG] (zero in the padded lanes)
    we = sp[1:4, 0:HC]         # [3, HC]
    attf = sp[4:5, 0:HC]       # [1, HC]
    gb = sp[5:6, 0:C]          # [1, C]
    pw = sp[6:7, 0:C]          # [1, C]  (PReLU weight; zeros for layer 1)
    return bcat, we, attf, gb, pw


# ----------------------------------------------------------------------------
# Fused two-layer kernel (single grid point; small graphs / demo fast path)
# ----------------------------------------------------------------------------
def make_fused_encoder_kernel(N, H, C, slope=0.2):
    HC = H * C

    def layer(x, adj, bias, ea, wcat, sp, apply_prelu):
        bcat, we, attf, gb, pw = _unpack_small(sp, HC, C)
        # One MXU matmul for [lin_l | lin_r | skip-Linear]; 128-aligned slices.
        t = jnp.dot(x, wcat, preferred_element_type=jnp.float32) + bcat   # [N, 3*SEG]
        xl = t[:, 0:HC]
        xr = t[:, SEG:SEG + HC]
        skip = t[:, 2 * SEG:2 * SEG + C]
        out = _gat_body(xl, xr, skip, adj, bias, ea, we, attf, gb, H, C, slope)
        if apply_prelu:
            out = jnp.where(out > 0, out, pw * out)
        return out

    def kernel(x_ref, adj_ref, ea_ref, wcat1_ref, sp1_ref, wcat2_ref, sp2_ref,
               out_ref):
        adj = adj_ref[...]                        # [N, N]     adj[i, j] = 1 iff edge j -> i
        ea = ea_ref[...]                          # [3, N, N]  lane-dense edge attrs
        bias = jnp.where(adj > 0, 0.0, -1e30)     # mask bias: once, shared by layers & heads
        h1 = layer(x_ref[...], adj, bias, ea, wcat1_ref[...], sp1_ref[...], False)
        out_ref[...] = layer(h1, adj, bias, ea, wcat2_ref[...], sp2_ref[...], True)

    return kernel


def _fused_call(x, adj, ea, pk, H, C):
    N = x.shape[0]
    args = [x, adj, ea, pk["wcat1"], pk["sp1"], pk["wcat2"], pk["sp2"]]
    return pl.pallas_call(
        make_fused_encoder_kernel(N, H, C),
        out_shape=jax.ShapeDtypeStruct((N, C), jnp.float32),
        in_specs=[pl.BlockSpec(memory_space=pltpu.MemorySpace.VMEM)] * len(args),
        out_specs=pl.BlockSpec(memory_space=pltpu.MemorySpace.VMEM),
    )(*args)


# ----------------------------------------------------------------------------
# Row-tiled single-layer kernel (grid over target-row slabs; large graphs)
# ----------------------------------------------------------------------------
def make_tiled_layer_kernel(H, C, apply_prelu, slope=0.2):
    HC = H * C

    def kernel(xs_ref, xd_ref, adj_ref, ea_ref, wcat_ref, sp_ref, out_ref):
        sp = sp_ref[...]
        bcat, we, attf, gb, pw = _unpack_small(sp, HC, C)
        wcat = wcat_ref[...]

        adj = adj_ref[...]                        # [TILE_I, Nsrc]
        ea = ea_ref[...]                          # [3, TILE_I, Nsrc]
        bias = jnp.where(adj > 0, 0.0, -1e30)     # once per tile, shared by heads

        # xl needs every source node; xr/skip only the tile's target rows.
        t_src = jnp.dot(xs_ref[...], wcat, preferred_element_type=jnp.float32) + bcat
        t_dst = jnp.dot(xd_ref[...], wcat, preferred_element_type=jnp.float32) + bcat
        xl = t_src[:, 0:HC]
        xr = t_dst[:, SEG:SEG + HC]
        skip = t_dst[:, 2 * SEG:2 * SEG + C]

        out = _gat_body(xl, xr, skip, adj, bias, ea, we, attf, gb, H, C, slope)
        if apply_prelu:
            out = jnp.where(out > 0, out, pw * out)
        out_ref[...] = out

    return kernel


def _tiled_layer_call(x, adj, ea, wcat, sp, H, C, tile_i, apply_prelu):
    N = adj.shape[0]
    assert N % tile_i == 0, "row tile must divide N (pad the graph otherwise)"
    fin = x.shape[1]
    return pl.pallas_call(
        make_tiled_layer_kernel(H, C, apply_prelu),
        out_shape=jax.ShapeDtypeStruct((N, C), jnp.float32),
        grid=(N // tile_i,),
        in_specs=[
            pl.BlockSpec((N, fin), lambda i: (0, 0)),            # x (all sources)
            pl.BlockSpec((tile_i, fin), lambda i: (i, 0)),       # x (tile targets)
            pl.BlockSpec((tile_i, N), lambda i: (i, 0)),         # adj row slab
            pl.BlockSpec((3, tile_i, N), lambda i: (0, i, 0)),   # edge attrs row slab
            pl.BlockSpec((fin, 3 * SEG), lambda i: (0, 0)),      # packed weights
            pl.BlockSpec((8, 3 * SEG), lambda i: (0, 0)),        # packed small params
        ],
        out_specs=pl.BlockSpec((tile_i, C), lambda i: (i, 0)),
        compiler_params=pltpu.CompilerParams(
            dimension_semantics=("parallel",)),
    )(x, x, adj, ea, wcat, sp)


def encoder_forward(x, adj, ea, pk, *, heads, hidden, row_tile=None):
    """row_tile=None -> fully fused single pallas_call (small graphs);
    row_tile=T      -> two row-tiled pallas_calls (large graphs)."""
    N = x.shape[0]
    if row_tile is None or row_tile >= N:
        return _fused_call(x, adj, ea, pk, heads, hidden)
    h1 = _tiled_layer_call(x, adj, ea, pk["wcat1"], pk["sp1"], heads, hidden,
                           row_tile, apply_prelu=False)
    return _tiled_layer_call(h1, adj, ea, pk["wcat2"], pk["sp2"], heads, hidden,
                             row_tile, apply_prelu=True)


# ----------------------------------------------------------------------------
# Parameter init (deterministic, synthetic; PyG GATv2Conv shapes) + one-time
# packing (hoisted out of the per-forward path).
# ----------------------------------------------------------------------------
def glorot(key, shape):
    fan_in, fan_out = shape[0], shape[-1]
    scale = (6.0 / (fan_in + fan_out)) ** 0.5
    return jax.random.uniform(key, shape, jnp.float32, -scale, scale)


def init_layer_params(key, fin, hidden, heads):
    ks = jax.random.split(key, 5)
    H, C = heads, hidden
    return {
        "wl": glorot(ks[0], (fin, H * C)),        # lin_l weight (sources)
        "bl": jnp.zeros((1, H * C), jnp.float32),
        "wr": glorot(ks[1], (fin, H * C)),        # lin_r weight (targets)
        "br": jnp.zeros((1, H * C), jnp.float32),
        "we": glorot(ks[2], (3, H * C)),          # lin_edge weight (edge_dim=3)
        "att": glorot(ks[3], (H, C)),             # attention vector per head
        "gb": jnp.zeros((1, C), jnp.float32),     # GAT output bias (concat=False)
        "wlin": glorot(ks[4], (fin, C)),          # skip Linear weight
        "blin": jnp.zeros((1, C), jnp.float32),
    }


def init_encoder_params(key, in_channels, hidden, heads):
    k1, k2 = jax.random.split(key)
    return {
        "layer1": init_layer_params(k1, in_channels, hidden, heads),
        "layer2": init_layer_params(k2, hidden, hidden, heads),
        "prelu": jnp.full((1, hidden), 0.25, jnp.float32),   # nn.PReLU(hidden) init
    }


def pack_layer_params(p, prelu=None):
    H, C = p["att"].shape
    HC = H * C
    assert HC <= SEG and C <= SEG
    fin = p["wl"].shape[0]
    # 128-lane aligned segments: [0:HC]=lin_l, [128:128+HC]=lin_r, [256:256+C]=skip
    wcat = jnp.zeros((fin, 3 * SEG), jnp.float32)
    wcat = wcat.at[:, 0:HC].set(p["wl"])
    wcat = wcat.at[:, SEG:SEG + HC].set(p["wr"])
    wcat = wcat.at[:, 2 * SEG:2 * SEG + C].set(p["wlin"])
    # One packed [8, 384] array for all the tiny params (one DMA instead of ~6).
    sp = jnp.zeros((8, 3 * SEG), jnp.float32)
    sp = sp.at[0, 0:HC].set(p["bl"][0])
    sp = sp.at[0, SEG:SEG + HC].set(p["br"][0])
    sp = sp.at[0, 2 * SEG:2 * SEG + C].set(p["blin"][0])
    sp = sp.at[1:4, 0:HC].set(p["we"])
    sp = sp.at[4, 0:HC].set(p["att"].reshape(-1))
    sp = sp.at[5, 0:C].set(p["gb"][0])
    if prelu is not None:
        sp = sp.at[6, 0:C].set(prelu[0])
    return wcat, sp


def pack_encoder_params(params):
    wcat1, sp1 = pack_layer_params(params["layer1"])
    wcat2, sp2 = pack_layer_params(params["layer2"], prelu=params["prelu"])
    return {"wcat1": wcat1, "sp1": sp1, "wcat2": wcat2, "sp2": sp2}


# ----------------------------------------------------------------------------
# Graph densification (static graph -> built ONCE, outside the hot path):
#   adj[i, j] = 1.0 iff edge j -> i ;  ea[:, i, j] = edge_attr of that edge
#   (lane-dense [3, N, N] layout).
# ----------------------------------------------------------------------------
def build_dense_graph(edge_index, edge_attr, N):
    src, dst = edge_index[0], edge_index[1]
    adj = jnp.zeros((N, N), jnp.float32).at[dst, src].set(1.0)
    ea = jnp.zeros((3, N, N), jnp.float32).at[:, dst, src].set(edge_attr.T)
    return adj, ea


# ----------------------------------------------------------------------------
# Pure-JAX reference (same math, exact division) for a correctness check.
# ----------------------------------------------------------------------------
def _layer_ref(x, adj, ea, wcat, sp, H, C, prelu=False):
    hp = jax.lax.Precision.HIGHEST
    HC = H * C
    bcat, we, attf, gb, pw = sp[0:1, :], sp[1:4, 0:HC], sp[4:5, 0:HC], sp[5:6, 0:C], sp[6:7, 0:C]
    t = jnp.dot(x, wcat, precision=hp) + bcat
    xl, xr, skip = t[:, 0:HC], t[:, SEG:SEG + HC], t[:, 2 * SEG:2 * SEG + C]
    e = jnp.einsum("kij,kf->ijf", ea, we, precision=hp)
    m = xr[:, None, :] + xl[None, :, :] + e
    m = jnp.where(m > 0, m, 0.2 * m)
    acc = jnp.zeros((x.shape[0], C), jnp.float32)
    for h in range(H):
        lo = h * C
        s = jnp.sum(m[:, :, lo:lo + C] * attf[:, lo:lo + C], axis=-1)
        s = jnp.where(adj > 0, s, -1e30)
        p = jnp.exp(s - s.max(axis=1, keepdims=True)) * adj
        alpha = p / (p.sum(axis=1, keepdims=True) + 1e-16)
        acc = acc + jnp.dot(alpha, xl[:, lo:lo + C], precision=hp)
    out = acc / H + gb + skip
    if prelu:
        out = jnp.where(out > 0, out, pw * out)
    return out


def encoder_reference(x, adj, ea, pk, *, heads, hidden):
    h1 = _layer_ref(x, adj, ea, pk["wcat1"], pk["sp1"], heads, hidden, prelu=False)
    return _layer_ref(h1, adj, ea, pk["wcat2"], pk["sp2"], heads, hidden, prelu=True)


# ----------------------------------------------------------------------------
if __name__ == "__main__":
    N = 16            # nodes
    IN_CH = 16        # in_channels
    HIDDEN = 32       # hidden_channels (= out_channels for the residual add)
    HEADS = 2

    key = jax.random.PRNGKey(0)
    kx, ke, kp = jax.random.split(key, 3)

    x = jax.random.normal(kx, (N, IN_CH), jnp.float32)

    # Deterministic edge list (j -> i): ring + a few extras, every node has an in-edge.
    src = jnp.concatenate([jnp.arange(N), jnp.array([2, 5, 7, 11, 13, 1])]).astype(jnp.int32)
    dst = jnp.concatenate([(jnp.arange(N) + 1) % N, jnp.array([0, 3, 4, 9, 6, 14])]).astype(jnp.int32)
    edge_index = jnp.stack([src, dst], axis=0)                 # [2, E]
    edge_attr = jax.random.normal(ke, (src.shape[0], 3), jnp.float32)

    # Hoisted one-time work: parameter packing + graph densification.
    params = init_encoder_params(kp, IN_CH, HIDDEN, HEADS)
    packed = pack_encoder_params(params)
    adj, ea = build_dense_graph(edge_index, edge_attr, N)

    ref = encoder_reference(x, adj, ea, packed, heads=HEADS, hidden=HIDDEN)

    # Fused single-call path (small graphs).
    fwd_fused = jax.jit(lambda a, b, c, d: encoder_forward(a, b, c, d, heads=HEADS, hidden=HIDDEN))
    out = jax.block_until_ready(fwd_fused(x, adj, ea, packed))
    assert out.shape == (N, HIDDEN) and out.dtype == jnp.float32
    err = float(jnp.max(jnp.abs(out - ref)))
    assert jnp.allclose(out, ref, rtol=5e-2, atol=5e-2), err

    # Row-tiled path (large graphs), exercised here with TILE_I=8 -> grid=(2,).
    fwd_tiled = jax.jit(lambda a, b, c, d: encoder_forward(a, b, c, d, heads=HEADS,
                                                           hidden=HIDDEN, row_tile=8))
    out_t = jax.block_until_ready(fwd_tiled(x, adj, ea, packed))
    err_t = float(jnp.max(jnp.abs(out_t - ref)))
    assert jnp.allclose(out_t, ref, rtol=5e-2, atol=5e-2), err_t

    print("KERNEL_OK")
</pallas_src>

<mosaic_0001>
module attributes {stable_mosaic.version = 11 : i64} {
  func.func @kernel(%arg0: memref<16x16xf32, #tpu.memory_space<vmem>>, %arg1: memref<16x16xf32, #tpu.memory_space<vmem>>, %arg2: memref<3x16x16xf32, #tpu.memory_space<vmem>>, %arg3: memref<16x384xf32, #tpu.memory_space<vmem>>, %arg4: memref<8x384xf32, #tpu.memory_space<vmem>>, %arg5: memref<32x384xf32, #tpu.memory_space<vmem>>, %arg6: memref<8x384xf32, #tpu.memory_space<vmem>>, %arg7: memref<16x32xf32, #tpu.memory_space<vmem>>) attributes {dimension_semantics = [], scalar_prefetch = 0 : i64, scratch_operands = 0 : i64, tpu.core_type = #tpu.core_type<tc>} {
    %c0 = arith.constant 0 : index
    %c0_0 = arith.constant 0 : index
    %0 = vector.load %arg1[%c0, %c0_0] : memref<16x16xf32, #tpu.memory_space<vmem>>, vector<16x16xf32>
    %c0_1 = arith.constant 0 : index
    %c0_2 = arith.constant 0 : index
    %c0_3 = arith.constant 0 : index
    %1 = vector.load %arg2[%c0_1, %c0_2, %c0_3] : memref<3x16x16xf32, #tpu.memory_space<vmem>>, vector<3x16x16xf32>
    %cst = arith.constant 0.000000e+00 : f32
    %2 = vector.broadcast %cst : f32 to vector<16x16xf32>
    %3 = arith.cmpf ogt, %0, %2 : vector<16x16xf32>
    %cst_4 = arith.constant 0.000000e+00 : f32
    %cst_5 = arith.constant -1.000000e+30 : f32
    %4 = vector.broadcast %cst_4 : f32 to vector<16x16xf32>
    %5 = vector.broadcast %cst_5 : f32 to vector<16x16xf32>
    %6 = arith.select %3, %4, %5 : vector<16x16xi1>, vector<16x16xf32>
    %c0_6 = arith.constant 0 : index
    %c0_7 = arith.constant 0 : index
    %7 = vector.load %arg0[%c0_6, %c0_7] : memref<16x16xf32, #tpu.memory_space<vmem>>, vector<16x16xf32>
    %c0_8 = arith.constant 0 : index
    %c0_9 = arith.constant 0 : index
    %8 = vector.load %arg3[%c0_8, %c0_9] : memref<16x384xf32, #tpu.memory_space<vmem>>, vector<16x384xf32>
    %c0_10 = arith.constant 0 : index
    %c0_11 = arith.constant 0 : index
    %9 = vector.load %arg4[%c0_10, %c0_11] : memref<8x384xf32, #tpu.memory_space<vmem>>, vector<8x384xf32>
    %10 = vector.extract_strided_slice %9 {offsets = [0, 0], sizes = [1, 384], strides = [1, 1]} : vector<8x384xf32> to vector<1x384xf32>
    %11 = vector.extract_strided_slice %9 {offsets = [1, 0], sizes = [3, 64], strides = [1, 1]} : vector<8x384xf32> to vector<3x64xf32>
    %12 = vector.extract_strided_slice %9 {offsets = [4, 0], sizes = [1, 64], strides = [1, 1]} : vector<8x384xf32> to vector<1x64xf32>
    %13 = vector.extract_strided_slice %9 {offsets = [5, 0], sizes = [1, 32], strides = [1, 1]} : vector<8x384xf32> to vector<1x32xf32>
    %cst_12 = arith.constant dense<0.000000e+00> : vector<16x384xf32>
    %14 = tpu.matmul %7, %8, %cst_12 {dimension_numbers = #tpu.dot_dimension_numbers<[1], [0], [0], [1], [0, 0, 1, 1], [], []>} : vector<16x16xf32>, vector<16x384xf32>, vector<16x384xf32> -> vector<16x384xf32>
    %15 = vector.broadcast %10 : vector<1x384xf32> to vector<16x384xf32>
    %16 = arith.addf %14, %15 : vector<16x384xf32>
    %17 = vector.extract_strided_slice %16 {offsets = [0, 0], sizes = [16, 64], strides = [1, 1]} : vector<16x384xf32> to vector<16x64xf32>
    %18 = vector.extract_strided_slice %16 {offsets = [0, 128], sizes = [16, 64], strides = [1, 1]} : vector<16x384xf32> to vector<16x64xf32>
    %19 = vector.extract_strided_slice %16 {offsets = [0, 256], sizes = [16, 32], strides = [1, 1]} : vector<16x384xf32> to vector<16x32xf32>
    %20 = vector.shape_cast %18 : vector<16x64xf32> to vector<16x1x64xf32>
    %21 = vector.shape_cast %17 : vector<16x64xf32> to vector<1x16x64xf32>
    %22 = vector.broadcast %20 : vector<16x1x64xf32> to vector<16x16x64xf32>
    %23 = vector.broadcast %21 : vector<1x16x64xf32> to vector<16x16x64xf32>
    %24 = arith.addf %22, %23 : vector<16x16x64xf32>
    %25 = vector.extract_strided_slice %1 {offsets = [0, 0, 0], sizes = [1, 16, 16], strides = [1, 1, 1]} : vector<3x16x16xf32> to vector<1x16x16xf32>
    %26 = vector.shape_cast %25 : vector<1x16x16xf32> to vector<16x16xf32>
    %27 = vector.shape_cast %26 : vector<16x16xf32> to vector<16x16x1xf32>
    %28 = vector.extract_strided_slice %11 {offsets = [0, 0], sizes = [1, 64], strides = [1, 1]} : vector<3x64xf32> to vector<1x64xf32>
    %29 = vector.shape_cast %28 : vector<1x64xf32> to vector<1x1x64xf32>
    %30 = vector.broadcast %27 : vector<16x16x1xf32> to vector<16x16x64xf32>
    %31 = vector.broadcast %29 : vector<1x1x64xf32> to vector<16x16x64xf32>
    %32 = arith.mulf %30, %31 : vector<16x16x64xf32>
    %33 = arith.addf %24, %32 : vector<16x16x64xf32>
    %34 = vector.extract_strided_slice %1 {offsets = [1, 0, 0], sizes = [1, 16, 16], strides = [1, 1, 1]} : vector<3x16x16xf32> to vector<1x16x16xf32>
    %35 = vector.shape_cast %34 : vector<1x16x16xf32> to vector<16x16xf32>
    %36 = vector.shape_cast %35 : vector<16x16xf32> to vector<16x16x1xf32>
    %37 = vector.extract_strided_slice %11 {offsets = [1, 0], sizes = [1, 64], strides = [1, 1]} : vector<3x64xf32> to vector<1x64xf32>
    %38 = vector.shape_cast %37 : vector<1x64xf32> to vector<1x1x64xf32>
    %39 = vector.broadcast %36 : vector<16x16x1xf32> to vector<16x16x64xf32>
    %40 = vector.broadcast %38 : vector<1x1x64xf32> to vector<16x16x64xf32>
    %41 = arith.mulf %39, %40 : vector<16x16x64xf32>
    %42 = arith.addf %33, %41 : vector<16x16x64xf32>
    %43 = vector.extract_strided_slice %1 {offsets = [2, 0, 0], sizes = [1, 16, 16], strides = [1, 1, 1]} : vector<3x16x16xf32> to vector<1x16x16xf32>
    %44 = vector.shape_cast %43 : vector<1x16x16xf32> to vector<16x16xf32>
    %45 = vector.shape_cast %44 : vector<16x16xf32> to vector<16x16x1xf32>
    %46 = vector.extract_strided_slice %11 {offsets = [2, 0], sizes = [1, 64], strides = [1, 1]} : vector<3x64xf32> to vector<1x64xf32>
    %47 = vector.shape_cast %46 : vector<1x64xf32> to vector<1x1x64xf32>
    %48 = vector.broadcast %45 : vector<16x16x1xf32> to vector<16x16x64xf32>
    %49 = vector.broadcast %47 : vector<1x1x64xf32> to vector<16x16x64xf32>
    %50 = arith.mulf %48, %49 : vector<16x16x64xf32>
    %51 = arith.addf %42, %50 : vector<16x16x64xf32>
    %cst_13 = arith.constant 0.000000e+00 : f32
    %52 = vector.broadcast %cst_13 : f32 to vector<16x16x64xf32>
    %53 = arith.cmpf ogt, %51, %52 : vector<16x16x64xf32>
    %cst_14 = arith.constant 2.000000e-01 : f32
    %54 = vector.broadcast %cst_14 : f32 to vector<16x16x64xf32>
    %55 = arith.mulf %54, %51 : vector<16x16x64xf32>
    %56 = arith.select %53, %51, %55 : vector<16x16x64xi1>, vector<16x16x64xf32>
    %57 = vector.extract_strided_slice %56 {offsets = [0, 0, 0], sizes = [16, 16, 32], strides = [1, 1, 1]} : vector<16x16x64xf32> to vector<16x16x32xf32>
    %58 = vector.extract_strided_slice %12 {offsets = [0, 0], sizes = [1, 32], strides = [1, 1]} : vector<1x64xf32> to vector<1x32xf32>
    %59 = vector.shape_cast %58 : vector<1x32xf32> to vector<1x1x32xf32>
    %60 = vector.broadcast %59 : vector<1x1x32xf32> to vector<16x16x32xf32>
    %61 = arith.mulf %57, %60 : vector<16x16x32xf32>
    %cst_15 = arith.constant dense<0.000000e+00> : vector<16x16xf32>
    %62 = vector.multi_reduction <add>, %61, %cst_15 [2] : vector<16x16x32xf32> to vector<16x16xf32>
    %63 = arith.addf %62, %6 : vector<16x16xf32>
    %cst_16 = arith.constant dense<0xFF800000> : vector<16xf32>
    %64 = vector.multi_reduction <maximumf>, %63, %cst_16 [1] : vector<16x16xf32> to vector<16xf32>
    %65 = vector.shape_cast %64 : vector<16xf32> to vector<16x1xf32>
    %66 = vector.broadcast %65 : vector<16x1xf32> to vector<16x16xf32>
    %67 = arith.subf %63, %66 : vector<16x16xf32>
    %68 = math.exp %67 : vector<16x16xf32>
    %69 = arith.mulf %68, %0 : vector<16x16xf32>
    %cst_17 = arith.constant dense<0.000000e+00> : vector<16xf32>
    %70 = vector.multi_reduction <add>, %69, %cst_17 [1] : vector<16x16xf32> to vector<16xf32>
    %71 = vector.shape_cast %70 : vector<16xf32> to vector<16x1xf32>
    %cst_18 = arith.constant 1.000000e-16 : f32
    %72 = vector.broadcast %cst_18 : f32 to vector<16x1xf32>
    %73 = arith.addf %71, %72 : vector<16x1xf32>
    %74 = tpu.reciprocal %73 {approx = true} : vector<16x1xf32> -> vector<16x1xf32>
    %75 = vector.broadcast %74 : vector<16x1xf32> to vector<16x16xf32>
    %76 = arith.mulf %69, %75 : vector<16x16xf32>
    %77 = vector.extract_strided_slice %17 {offsets = [0, 0], sizes = [16, 32], strides = [1, 1]} : vector<16x64xf32> to vector<16x32xf32>
    %78 = vector.extract_strided_slice %56 {offsets = [0, 0, 32], sizes = [16, 16, 32], strides = [1, 1, 1]} : vector<16x16x64xf32> to vector<16x16x32xf32>
    %79 = vector.extract_strided_slice %12 {offsets = [0, 32], sizes = [1, 32], strides = [1, 1]} : vector<1x64xf32> to vector<1x32xf32>
    %80 = vector.shape_cast %79 : vector<1x32xf32> to vector<1x1x32xf32>
    %81 = vector.broadcast %80 : vector<1x1x32xf32> to vector<16x16x32xf32>
    %82 = arith.mulf %78, %81 : vector<16x16x32xf32>
    %cst_19 = arith.constant dense<0.000000e+00> : vector<16x16xf32>
    %83 = vector.multi_reduction <add>, %82, %cst_19 [2] : vector<16x16x32xf32> to vector<16x16xf32>
    %84 = arith.addf %83, %6 : vector<16x16xf32>
    %cst_20 = arith.constant dense<0xFF800000> : vector<16xf32>
    %85 = vector.multi_reduction <maximumf>, %84, %cst_20 [1] : vector<16x16xf32> to vector<16xf32>
    %86 = vector.shape_cast %85 : vector<16xf32> to vector<16x1xf32>
    %87 = vector.broadcast %86 : vector<16x1xf32> to vector<16x16xf32>
    %88 = arith.subf %84, %87 : vector<16x16xf32>
    %89 = math.exp %88 : vector<16x16xf32>
    %90 = arith.mulf %89, %0 : vector<16x16xf32>
    %cst_21 = arith.constant dense<0.000000e+00> : vector<16xf32>
    %91 = vector.multi_reduction <add>, %90, %cst_21 [1] : vector<16x16xf32> to vector<16xf32>
    %92 = vector.shape_cast %91 : vector<16xf32> to vector<16x1xf32>
    %cst_22 = arith.constant 1.000000e-16 : f32
    %93 = vector.broadcast %cst_22 : f32 to vector<16x1xf32>
    %94 = arith.addf %92, %93 : vector<16x1xf32>
    %95 = tpu.reciprocal %94 {approx = true} : vector<16x1xf32> -> vector<16x1xf32>
    %96 = vector.broadcast %95 : vector<16x1xf32> to vector<16x16xf32>
    %97 = arith.mulf %90, %96 : vector<16x16xf32>
    %98 = vector.extract_strided_slice %17 {offsets = [0, 32], sizes = [16, 32], strides = [1, 1]} : vector<16x64xf32> to vector<16x32xf32>
    %99 = tpu.concatenate %76, %97 in 1 : vector<16x16xf32>, vector<16x16xf32> -> vector<16x32xf32>
    %100 = tpu.concatenate %77, %98 in 0 : vector<16x32xf32>, vector<16x32xf32> -> vector<32x32xf32>
    %cst_23 = arith.constant dense<0.000000e+00> : vector<16x32xf32>
    %101 = tpu.matmul %99, %100, %cst_23 {dimension_numbers = #tpu.dot_dimension_numbers<[1], [0], [0], [1], [0, 0, 1, 1], [], []>} : vector<16x32xf32>, vector<32x32xf32>, vector<16x32xf32> -> vector<16x32xf32>
    %cst_24 = arith.constant 5.000000e-01 : f32
    %102 = vector.broadcast %cst_24 : f32 to vector<16x32xf32>
    %103 = arith.mulf %101, %102 : vector<16x32xf32>
    %104 = vector.broadcast %13 : vector<1x32xf32> to vector<16x32xf32>
    %105 = arith.addf %103, %104 : vector<16x32xf32>
    %106 = arith.addf %105, %19 : vector<16x32xf32>
    %c0_25 = arith.constant 0 : index
    %c0_26 = arith.constant 0 : index
    %107 = vector.load %arg5[%c0_25, %c0_26] : memref<32x384xf32, #tpu.memory_space<vmem>>, vector<32x384xf32>
    %c0_27 = arith.constant 0 : index
    %c0_28 = arith.constant 0 : index
    %108 = vector.load %arg6[%c0_27, %c0_28] : memref<8x384xf32, #tpu.memory_space<vmem>>, vector<8x384xf32>
    %109 = vector.extract_strided_slice %108 {offsets = [0, 0], sizes = [1, 384], strides = [1, 1]} : vector<8x384xf32> to vector<1x384xf32>
    %110 = vector.extract_strided_slice %108 {offsets = [1, 0], sizes = [3, 64], strides = [1, 1]} : vector<8x384xf32> to vector<3x64xf32>
    %111 = vector.extract_strided_slice %108 {offsets = [4, 0], sizes = [1, 64], strides = [1, 1]} : vector<8x384xf32> to vector<1x64xf32>
    %112 = vector.extract_strided_slice %108 {offsets = [5, 0], sizes = [1, 32], strides = [1, 1]} : vector<8x384xf32> to vector<1x32xf32>
    %113 = vector.extract_strided_slice %108 {offsets = [6, 0], sizes = [1, 32], strides = [1, 1]} : vector<8x384xf32> to vector<1x32xf32>
    %cst_29 = arith.constant dense<0.000000e+00> : vector<16x384xf32>
    %114 = tpu.matmul %106, %107, %cst_29 {dimension_numbers = #tpu.dot_dimension_numbers<[1], [0], [0], [1], [0, 0, 1, 1], [], []>} : vector<16x32xf32>, vector<32x384xf32>, vector<16x384xf32> -> vector<16x384xf32>
    %115 = vector.broadcast %109 : vector<1x384xf32> to vector<16x384xf32>
    %116 = arith.addf %114, %115 : vector<16x384xf32>
    %117 = vector.extract_strided_slice %116 {offsets = [0, 0], sizes = [16, 64], strides = [1, 1]} : vector<16x384xf32> to vector<16x64xf32>
    %118 = vector.extract_strided_slice %116 {offsets = [0, 128], sizes = [16, 64], strides = [1, 1]} : vector<16x384xf32> to vector<16x64xf32>
    %119 = vector.extract_strided_slice %116 {offsets = [0, 256], sizes = [16, 32], strides = [1, 1]} : vector<16x384xf32> to vector<16x32xf32>
    %120 = vector.shape_cast %118 : vector<16x64xf32> to vector<16x1x64xf32>
    %121 = vector.shape_cast %117 : vector<16x64xf32> to vector<1x16x64xf32>
    %122 = vector.broadcast %120 : vector<16x1x64xf32> to vector<16x16x64xf32>
    %123 = vector.broadcast %121 : vector<1x16x64xf32> to vector<16x16x64xf32>
    %124 = arith.addf %122, %123 : vector<16x16x64xf32>
    %125 = vector.extract_strided_slice %1 {offsets = [0, 0, 0], sizes = [1, 16, 16], strides = [1, 1, 1]} : vector<3x16x16xf32> to vector<1x16x16xf32>
    %126 = vector.shape_cast %125 : vector<1x16x16xf32> to vector<16x16xf32>
    %127 = vector.shape_cast %126 : vector<16x16xf32> to vector<16x16x1xf32>
    %128 = vector.extract_strided_slice %110 {offsets = [0, 0], sizes = [1, 64], strides = [1, 1]} : vector<3x64xf32> to vector<1x64xf32>
    %129 = vector.shape_cast %128 : vector<1x64xf32> to vector<1x1x64xf32>
    %130 = vector.broadcast %127 : vector<16x16x1xf32> to vector<16x16x64xf32>
    %131 = vector.broadcast %129 : vector<1x1x64xf32> to vector<16x16x64xf32>
    %132 = arith.mulf %130, %131 : vector<16x16x64xf32>
    %133 = arith.addf %124, %132 : vector<16x16x64xf32>
    %134 = vector.extract_strided_slice %1 {offsets = [1, 0, 0], sizes = [1, 16, 16], strides = [1, 1, 1]} : vector<3x16x16xf32> to vector<1x16x16xf32>
    %135 = vector.shape_cast %134 : vector<1x16x16xf32> to vector<16x16xf32>
    %136 = vector.shape_cast %135 : vector<16x16xf32> to vector<16x16x1xf32>
    %137 = vector.extract_strided_slice %110 {offsets = [1, 0], sizes = [1, 64], strides = [1, 1]} : vector<3x64xf32> to vector<1x64xf32>
    %138 = vector.shape_cast %137 : vector<1x64xf32> to vector<1x1x64xf32>
    %139 = vector.broadcast %136 : vector<16x16x1xf32> to vector<16x16x64xf32>
    %140 = vector.broadcast %138 : vector<1x1x64xf32> to vector<16x16x64xf32>
    %141 = arith.mulf %139, %140 : vector<16x16x64xf32>
    %142 = arith.addf %133, %141 : vector<16x16x64xf32>
    %143 = vector.extract_strided_slice %1 {offsets = [2, 0, 0], sizes = [1, 16, 16], strides = [1, 1, 1]} : vector<3x16x16xf32> to vector<1x16x16xf32>
    %144 = vector.shape_cast %143 : vector<1x16x16xf32> to vector<16x16xf32>
    %145 = vector.shape_cast %144 : vector<16x16xf32> to vector<16x16x1xf32>
    %146 = vector.extract_strided_slice %110 {offsets = [2, 0], sizes = [1, 64], strides = [1, 1]} : vector<3x64xf32> to vector<1x64xf32>
    %147 = vector.shape_cast %146 : vector<1x64xf32> to vector<1x1x64xf32>
    %148 = vector.broadcast %145 : vector<16x16x1xf32> to vector<16x16x64xf32>
    %149 = vector.broadcast %147 : vector<1x1x64xf32> to vector<16x16x64xf32>
    %150 = arith.mulf %148, %149 : vector<16x16x64xf32>
    %151 = arith.addf %142, %150 : vector<16x16x64xf32>
    %cst_30 = arith.constant 0.000000e+00 : f32
    %152 = vector.broadcast %cst_30 : f32 to vector<16x16x64xf32>
    %153 = arith.cmpf ogt, %151, %152 : vector<16x16x64xf32>
    %cst_31 = arith.constant 2.000000e-01 : f32
    %154 = vector.broadcast %cst_31 : f32 to vector<16x16x64xf32>
    %155 = arith.mulf %154, %151 : vector<16x16x64xf32>
    %156 = arith.select %153, %151, %155 : vector<16x16x64xi1>, vector<16x16x64xf32>
    %157 = vector.extract_strided_slice %156 {offsets = [0, 0, 0], sizes = [16, 16, 32], strides = [1, 1, 1]} : vector<16x16x64xf32> to vector<16x16x32xf32>
    %158 = vector.extract_strided_slice %111 {offsets = [0, 0], sizes = [1, 32], strides = [1, 1]} : vector<1x64xf32> to vector<1x32xf32>
    %159 = vector.shape_cast %158 : vector<1x32xf32> to vector<1x1x32xf32>
    %160 = vector.broadcast %159 : vector<1x1x32xf32> to vector<16x16x32xf32>
    %161 = arith.mulf %157, %160 : vector<16x16x32xf32>
    %cst_32 = arith.constant dense<0.000000e+00> : vector<16x16xf32>
    %162 = vector.multi_reduction <add>, %161, %cst_32 [2] : vector<16x16x32xf32> to vector<16x16xf32>
    %163 = arith.addf %162, %6 : vector<16x16xf32>
    %cst_33 = arith.constant dense<0xFF800000> : vector<16xf32>
    %164 = vector.multi_reduction <maximumf>, %163, %cst_33 [1] : vector<16x16xf32> to vector<16xf32>
    %165 = vector.shape_cast %164 : vector<16xf32> to vector<16x1xf32>
    %166 = vector.broadcast %165 : vector<16x1xf32> to vector<16x16xf32>
    %167 = arith.subf %163, %166 : vector<16x16xf32>
    %168 = math.exp %167 : vector<16x16xf32>
    %169 = arith.mulf %168, %0 : vector<16x16xf32>
    %cst_34 = arith.constant dense<0.000000e+00> : vector<16xf32>
    %170 = vector.multi_reduction <add>, %169, %cst_34 [1] : vector<16x16xf32> to vector<16xf32>
    %171 = vector.shape_cast %170 : vector<16xf32> to vector<16x1xf32>
    %cst_35 = arith.constant 1.000000e-16 : f32
    %172 = vector.broadcast %cst_35 : f32 to vector<16x1xf32>
    %173 = arith.addf %171, %172 : vector<16x1xf32>
    %174 = tpu.reciprocal %173 {approx = true} : vector<16x1xf32> -> vector<16x1xf32>
    %175 = vector.broadcast %174 : vector<16x1xf32> to vector<16x16xf32>
    %176 = arith.mulf %169, %175 : vector<16x16xf32>
    %177 = vector.extract_strided_slice %117 {offsets = [0, 0], sizes = [16, 32], strides = [1, 1]} : vector<16x64xf32> to vector<16x32xf32>
    %178 = vector.extract_strided_slice %156 {offsets = [0, 0, 32], sizes = [16, 16, 32], strides = [1, 1, 1]} : vector<16x16x64xf32> to vector<16x16x32xf32>
    %179 = vector.extract_strided_slice %111 {offsets = [0, 32], sizes = [1, 32], strides = [1, 1]} : vector<1x64xf32> to vector<1x32xf32>
    %180 = vector.shape_cast %179 : vector<1x32xf32> to vector<1x1x32xf32>
    %181 = vector.broadcast %180 : vector<1x1x32xf32> to vector<16x16x32xf32>
    %182 = arith.mulf %178, %181 : vector<16x16x32xf32>
    %cst_36 = arith.constant dense<0.000000e+00> : vector<16x16xf32>
    %183 = vector.multi_reduction <add>, %182, %cst_36 [2] : vector<16x16x32xf32> to vector<16x16xf32>
    %184 = arith.addf %183, %6 : vector<16x16xf32>
    %cst_37 = arith.constant dense<0xFF800000> : vector<16xf32>
    %185 = vector.multi_reduction <maximumf>, %184, %cst_37 [1] : vector<16x16xf32> to vector<16xf32>
    %186 = vector.shape_cast %185 : vector<16xf32> to vector<16x1xf32>
    %187 = vector.broadcast %186 : vector<16x1xf32> to vector<16x16xf32>
    %188 = arith.subf %184, %187 : vector<16x16xf32>
    %189 = math.exp %188 : vector<16x16xf32>
    %190 = arith.mulf %189, %0 : vector<16x16xf32>
    %cst_38 = arith.constant dense<0.000000e+00> : vector<16xf32>
    %191 = vector.multi_reduction <add>, %190, %cst_38 [1] : vector<16x16xf32> to vector<16xf32>
    %192 = vector.shape_cast %191 : vector<16xf32> to vector<16x1xf32>
    %cst_39 = arith.constant 1.000000e-16 : f32
    %193 = vector.broadcast %cst_39 : f32 to vector<16x1xf32>
    %194 = arith.addf %192, %193 : vector<16x1xf32>
    %195 = tpu.reciprocal %194 {approx = true} : vector<16x1xf32> -> vector<16x1xf32>
    %196 = vector.broadcast %195 : vector<16x1xf32> to vector<16x16xf32>
    %197 = arith.mulf %190, %196 : vector<16x16xf32>
    %198 = vector.extract_strided_slice %117 {offsets = [0, 32], sizes = [16, 32], strides = [1, 1]} : vector<16x64xf32> to vector<16x32xf32>
    %199 = tpu.concatenate %176, %197 in 1 : vector<16x16xf32>, vector<16x16xf32> -> vector<16x32xf32>
    %200 = tpu.concatenate %177, %198 in 0 : vector<16x32xf32>, vector<16x32xf32> -> vector<32x32xf32>
    %cst_40 = arith.constant dense<0.000000e+00> : vector<16x32xf32>
    %201 = tpu.matmul %199, %200, %cst_40 {dimension_numbers = #tpu.dot_dimension_numbers<[1], [0], [0], [1], [0, 0, 1, 1], [], []>} : vector<16x32xf32>, vector<32x32xf32>, vector<16x32xf32> -> vector<16x32xf32>
    %cst_41 = arith.constant 5.000000e-01 : f32
    %202 = vector.broadcast %cst_41 : f32 to vector<16x32xf32>
    %203 = arith.mulf %201, %202 : vector<16x32xf32>
    %204 = vector.broadcast %112 : vector<1x32xf32> to vector<16x32xf32>
    %205 = arith.addf %203, %204 : vector<16x32xf32>
    %206 = arith.addf %205, %119 : vector<16x32xf32>
    %cst_42 = arith.constant 0.000000e+00 : f32
    %207 = vector.broadcast %cst_42 : f32 to vector<16x32xf32>
    %208 = arith.cmpf ogt, %206, %207 : vector<16x32xf32>
    %209 = vector.broadcast %113 : vector<1x32xf32> to vector<16x32xf32>
    %210 = arith.mulf %209, %206 : vector<16x32xf32>
    %211 = arith.select %208, %206, %210 : vector<16x32xi1>, vector<16x32xf32>
    %c0_43 = arith.constant 0 : index
    %c0_44 = arith.constant 0 : index
    %212 = vector.load %arg7[%c0_43, %c0_44] : memref<16x32xf32, #tpu.memory_space<vmem>>, vector<16x32xf32>
    tpu.vector_store %arg7[%c0_43, %c0_44], %211 {strides = array<i32>} : memref<16x32xf32, #tpu.memory_space<vmem>>, vector<16x32xf32>,
    return
  }
}

</mosaic_0001>

<llo_original>
// kernel: _lambda_.1
$region0: #{_lambda_.1}
  #allocation0 [shape = 'u32[]', space=smem, size = 0x4, offset = 0x4, fixed_abs, tag = 'smem constant byte address 0x4 - core index']
  #allocation1 [shape = 'u32[144,128]{1,0:T(1,128)}', space=vmem, size = 0x12000, scoped, tag = 'internal scratch']
  %s0 = inlined_call_operand.hbm [shape: f32[16,16], index: 0, kind: input, shape index: {}]
  %s1 = inlined_call_operand.hbm [shape: f32[16,16], index: 1, kind: input, shape index: {}]
  %s2 = inlined_call_operand.hbm [shape: f32[3,16,16], index: 2, kind: input, shape index: {}]
  %s3 = inlined_call_operand.hbm [shape: f32[16,384], index: 3, kind: input, shape index: {}]
  %s4 = inlined_call_operand.hbm [shape: f32[8,384], index: 4, kind: input, shape index: {}]
  %s5 = inlined_call_operand.hbm [shape: f32[32,384], index: 5, kind: input, shape index: {}]
  %s6 = inlined_call_operand.hbm [shape: f32[8,384], index: 6, kind: input, shape index: {}]
  %s7 = inlined_call_operand.hbm [shape: f32[16,32], index: 7, kind: output, shape index: {}]
  %s8 = sld [smem:[#allocation0]]
  $region66: #{_lambda_.1} parent=0
    _
  %s10 = ssub.s32 1, %s8
  %s11 = scalar_select 0, %s10, %s8
  $region1: #{_lambda_.1} parent=0
    #allocation2 [shape = 'u8[8192]{0}', space=vmem, size = 0x2000, scoped, tag = 'input window, operand 0, single buffered']
    #allocation3 [shape = 's32[1]{0}', space=sflag, size = 0x4, scoped, tag = 'scoped memory for _lambda_.1']
    #allocation4 [shape = 's32[1]{0}', space=sflag, size = 0x4, scoped, tag = 'scoped memory for _lambda_.1']
    #allocation5 [shape = 'u8[8192]{0}', space=vmem, size = 0x2000, scoped, tag = 'input window, operand 1, single buffered']
    #allocation6 [shape = 's32[1]{0}', space=sflag, size = 0x4, scoped, tag = 'scoped memory for _lambda_.1']
    #allocation7 [shape = 'u8[24576]{0}', space=vmem, size = 0x6000, scoped, tag = 'input window, operand 2, single buffered']
    #allocation8 [shape = 'u8[24576]{0}', space=vmem, size = 0x6000, scoped, tag = 'input window, operand 3, single buffered']
    #allocation9 [shape = 's32[1]{0}', space=sflag, size = 0x4, scoped, tag = 'scoped memory for _lambda_.1']
    #allocation10 [shape = 'u8[12288]{0}', space=vmem, size = 0x3000, scoped, tag = 'input window, operand 4, single buffered']
    #allocation11 [shape = 'u8[49152]{0}', space=vmem, size = 0xc000, scoped, tag = 'input window, operand 5, single buffered']
    #allocation12 [shape = 's32[1]{0}', space=sflag, size = 0x4, scoped, tag = 'scoped memory for _lambda_.1']
    #allocation13 [shape = 'u8[12288]{0}', space=vmem, size = 0x3000, scoped, tag = 'input window, operand 6, single buffered']
    #allocation14 [shape = 'u8[8192]{0}', space=vmem, size = 0x2000, scoped, tag = 'output window, operand 0, single buffered']
    %12 = vsyncpa [#allocation3], 0
    %13 = vsyncpa [#allocation6], 0
    %14 = vsyncpa [#allocation9], 0
    %15 = vsyncpa [#allocation12], 0
    %16 = vsyncpa [#allocation4], 0
    // Predicated region
    $region2: #{_lambda_.1} parent=1 // pred_check
      _
    $region3: #{_lambda_.1} parent=1 // pred_check_branch
      %18 = sbr.rel (0) target = $region5
    $region4: #{_lambda_.1} parent=1 // pred_region
      %s20 = ssub.s32 256, 256
      %21 = vsyncadd [#allocation3], %s20
      %s22 = sshll.u32 [#allocation2], 4
      %s23 = int_to_ptr.vmem [resolvable:$true] %s22
      %28 = dma.hbm_to_vmem [thread:$0]  %s0, 256, %s23, [#allocation3], 128, 128, 8
    $region5: #{_lambda_.1} parent=1 // pred_fallthru
      _
    // Predicated region
    $region6: #{_lambda_.1} parent=1 // pred_check
      _
    $region7: #{_lambda_.1} parent=1 // pred_check_branch
      %30 = sbr.rel (0) target = $region9
    $region8: #{_lambda_.1} parent=1 // pred_region
      %s32 = ssub.s32 256, 256
      %33 = vsyncadd [#allocation6], %s32
      %s34 = sshll.u32 [#allocation5], 4
      %s35 = int_to_ptr.vmem [resolvable:$true] %s34
      %40 = dma.hbm_to_vmem [thread:$0]  %s1, 256, %s35, [#allocation6], 128, 128, 8
    $region9: #{_lambda_.1} parent=1 // pred_fallthru
      _
    // Predicated region
    $region10: #{_lambda_.1} parent=1 // pred_check
      _
    $region11: #{_lambda_.1} parent=1 // pred_check_branch
      %42 = sbr.rel (0) target = $region13
    $region12: #{_lambda_.1} parent=1 // pred_region
      %s44 = ssub.s32 768, 768
      %45 = vsyncadd [#allocation6], %s44
      %s46 = sshll.u32 [#allocation7], 4
      %s47 = int_to_ptr.vmem [resolvable:$true] %s46
      %52 = dma.hbm_to_vmem [thread:$0]  %s2, 768, %s47, [#allocation6], 128, 128, 8
    $region13: #{_lambda_.1} parent=1 // pred_fallthru
      _
    // Predicated region
    $region14: #{_lambda_.1} parent=1 // pred_check
      _
    $region15: #{_lambda_.1} parent=1 // pred_check_branch
      %54 = sbr.rel (0) target = $region17
    $region16: #{_lambda_.1} parent=1 // pred_region
      %s56 = ssub.s32 768, 768
      %57 = vsyncadd [#allocation9], %s56
      %s58 = sshll.u32 [#allocation8], 4
      %s59 = int_to_ptr.vmem [resolvable:$true] %s58
      %64 = dma.hbm_to_vmem [thread:$0]  %s3, 768, %s59, [#allocation9], 384, 384, 24
    $region17: #{_lambda_.1} parent=1 // pred_fallthru
      _
    // Predicated region
    $region18: #{_lambda_.1} parent=1 // pred_check
      _
    $region19: #{_lambda_.1} parent=1 // pred_check_branch
      %66 = sbr.rel (0) target = $region21
    $region20: #{_lambda_.1} parent=1 // pred_region
      %s68 = ssub.s32 384, 384
      %69 = vsyncadd [#allocation9], %s68
      %s71 = sshll.u32 [#allocation10], 4
      %s72 = int_to_ptr.vmem [resolvable:$true] %s71
      %74 = dma.hbm_to_vmem [thread:$0]  %s4, 384, %s72, [#allocation9]
    $region21: #{_lambda_.1} parent=1 // pred_fallthru
      _
    // Predicated region
    $region22: #{_lambda_.1} parent=1 // pred_check
      _
    $region23: #{_lambda_.1} parent=1 // pred_check_branch
      %76 = sbr.rel (0) target = $region25
    $region24: #{_lambda_.1} parent=1 // pred_region
      %s78 = ssub.s32 1536, 1536
      %79 = vsyncadd [#allocation12], %s78
      %s80 = sshll.u32 [#allocation11], 4
      %s81 = int_to_ptr.vmem [resolvable:$true] %s80
      %86 = dma.hbm_to_vmem [thread:$0]  %s5, 1536, %s81, [#allocation12], 384, 384, 24
    $region25: #{_lambda_.1} parent=1 // pred_fallthru
      _
    // Predicated region
    $region26: #{_lambda_.1} parent=1 // pred_check
      _
    $region27: #{_lambda_.1} parent=1 // pred_check_branch
      %88 = sbr.rel (0) target = $region29
    $region28: #{_lambda_.1} parent=1 // pred_region
      %s90 = ssub.s32 384, 384
      %91 = vsyncadd [#allocation12], %s90
      %s93 = sshll.u32 [#allocation13], 4
      %s94 = int_to_ptr.vmem [resolvable:$true] %s93
      %96 = dma.hbm_to_vmem [thread:$0]  %s6, 384, %s94, [#allocation12]
    $region29: #{_lambda_.1} parent=1 // pred_fallthru
      _
    // Predicated region
    $region30: #{_lambda_.1} parent=1 // pred_check
      _
    $region31: #{_lambda_.1} parent=1 // pred_check_branch
      %98 = sbr.rel (0) target = $region33
    $region32: #{_lambda_.1} parent=1 // pred_region
      %99 = dma.done [#allocation3], 256
    $region33: #{_lambda_.1} parent=1 // pred_fallthru
      _
    // Predicated region
    $region34: #{_lambda_.1} parent=1 // pred_check
      _
    $region35: #{_lambda_.1} parent=1 // pred_check_branch
      %101 = sbr.rel (0) target = $region37
    $region36: #{_lambda_.1} parent=1 // pred_region
      %102 = dma.done [#allocation6], 256
    $region37: #{_lambda_.1} parent=1 // pred_fallthru
      _
    // Predicated region
    $region38: #{_lambda_.1} parent=1 // pred_check
      _
    $region39: #{_lambda_.1} parent=1 // pred_check_branch
      %104 = sbr.rel (0) target = $region41
    $region40: #{_lambda_.1} parent=1 // pred_region
      %105 = dma.done [#allocation6], 768
    $region41: #{_lambda_.1} parent=1 // pred_fallthru
      _
    // Predicated region
    $region42: #{_lambda_.1} parent=1 // pred_check
      _
    $region43: #{_lambda_.1} parent=1 // pred_check_branch
      %107 = sbr.rel (0) target = $region45
    $region44: #{_lambda_.1} parent=1 // pred_region
      %108 = dma.done [#allocation9], 768
    $region45: #{_lambda_.1} parent=1 // pred_fallthru
      _
    // Predicated region
    $region46: #{_lambda_.1} parent=1 // pred_check
      _
    $region47: #{_lambda_.1} parent=1 // pred_check_branch
      %110 = sbr.rel (0) target = $region49
    $region48: #{_lambda_.1} parent=1 // pred_region
      %111 = dma.done [#allocation9], 384
    $region49: #{_lambda_.1} parent=1 // pred_fallthru
      _
    // Predicated region
    $region50: #{_lambda_.1} parent=1 // pred_check
      _
    $region51: #{_lambda_.1} parent=1 // pred_check_branch
      %113 = sbr.rel (0) target = $region53
    $region52: #{_lambda_.1} parent=1 // pred_region
      %114 = dma.done [#allocation12], 1536
    $region53: #{_lambda_.1} parent=1 // pred_fallthru
      _
    // Predicated region
    $region54: #{_lambda_.1} parent=1 // pred_check
      _
    $region55: #{_lambda_.1} parent=1 // pred_check_branch
      %116 = sbr.rel (0) target = $region57
    $region56: #{_lambda_.1} parent=1 // pred_region
      %117 = dma.done [#allocation12], 384
    $region57: #{_lambda_.1} parent=1 // pred_fallthru
      _
    %v118 = vld [vmem:[#allocation5] sm:$0xff]
    %v119 = vld [vmem:[#allocation5 + $0x8] sm:$0xff]
    %v120 = vld [vmem:[#allocation7] sm:$0xff]
    %v121 = vld [vmem:[#allocation7 + $0x8] sm:$0xff]
    %v122 = vld [vmem:[#allocation7 + $0x10] sm:$0xff]
    %v123 = vld [vmem:[#allocation7 + $0x18] sm:$0xff]
    %v124 = vld [vmem:[#allocation7 + $0x20] sm:$0xff]
    %v125 = vld [vmem:[#allocation7 + $0x28] sm:$0xff]
    %vm126 = vcmp.gt.f32.partialorder %v118, 0.0
    %vm127 = vcmp.gt.f32.partialorder %v119, 0.0
    %v128 = vsel %vm126, 0.0, -1e+30
    %v129 = vsel %vm127, 0.0, -1e+30
    %v130 = vld [vmem:[#allocation2] sm:$0xff]
    %v131 = vld [vmem:[#allocation2 + $0x8] sm:$0xff]
    %v132 = vld [vmem:[#allocation8] sm:$0xff]
    %v133 = vld [vmem:[#allocation8 + $0x8] sm:$0xff]
    %v134 = vld [vmem:[#allocation8 + $0x10] sm:$0xff]
    %v135 = vld [vmem:[#allocation8 + $0x18] sm:$0xff]
    %v136 = vld [vmem:[#allocation8 + $0x20] sm:$0xff]
    %v137 = vld [vmem:[#allocation8 + $0x28] sm:$0xff]
    %v138 = vld [vmem:[#allocation10] sm:$0xff]
    %v139 = vld [vmem:[#allocation10 + $0x8] sm:$0xff]
    %v140 = vld [vmem:[#allocation10 + $0x10] sm:$0xff]
    %v141 = vlaneseq
    %v142 = vshrl.u32 %v141, 7
    %v143 = vsub.s32 0, %v142
    %v144 = vrot.slane %v138, %v143
    %v145 = vlaneseq
    %v146 = vshrl.u32 %v145, 7
    %v147 = vsub.s32 0, %v146
    %v148 = vrot.slane %v139, %v147
    %v149 = vlaneseq
    %v150 = vshrl.u32 %v149, 7
    %v151 = vsub.s32 0, %v150
    %v152 = vrot.slane %v140, %v151
    %vm153 = vcmask 130048
    %v155 = vsel %vm153, %v130, 0
    %v158 = vsel %vm153, %v131, 0
    %160 = vmatprep.subr.mxu0 %v133
    %161 = vmatpush1.msra.mxu0 %v132
    %162 = vmatprep.subr.mxu0 %v136
    %163 = vmatpush1.msra.mxu0 %v135
    %164 = vmatprep.subr.mxu0 0.0
    %165 = vmatpush1.msra.mxu0 0.0
    %166 = vmatprep.subr.mxu0 0.0
    %167 = vmatpush1.msra.mxu0 0.0
    %168 = vmatprep.subr.mxu0 0.0
    %169 = vmatpush1.msra.mxu0 0.0
    %170 = vmatprep.subr.mxu0 0.0
    %171 = vmatpush1.msra.mxu0 0.0
    %172 = vmatprep.subr.mxu0 0.0
    %173 = vmatpush1.msra.mxu0 0.0
    %174 = vmatprep.subr.mxu0 0.0
    %175 = vmatpush1.msra.mxu0 0.0
    %176 = vmatprep.subr.mxu0 0.0
    %177 = vmatpush1.msra.mxu0 0.0
    %178 = vmatprep.subr.mxu0 0.0
    %179 = vmatpush1.msra.mxu0 0.0
    %180 = vmatprep.subr.mxu0 0.0
    %181 = vmatpush1.msra.mxu0 0.0
    %182 = vmatprep.subr.mxu0 0.0
    %183 = vmatpush1.msra.mxu0 0.0
    %184 = vmatprep.subr.mxu0 0.0
    %185 = vmatpush1.msra.mxu0 0.0
    %186 = vmatprep.subr.mxu0 0.0
    %187 = vmatpush1.msra.mxu0 0.0
    %188 = vmatprep.subr.mxu0 0.0
    %189 = vmatpush1.msra.mxu0 0.0
    %190 = vmatprep.subr.mxu0 0.0
    %191 = vmatpush1.msra.mxu0 0.0
    %192 = vmatprep.subr.mxu0 0.0
    %193 = vmatpush1.msra.mxu0 0.0
    %194 = vmatprep.subr.mxu0 0.0
    %195 = vmatpush1.msra.mxu0 0.0
    %196 = vmatprep.subr.mxu0 0.0
    %197 = vmatpush1.msra.mxu0 0.0
    %198 = vmatprep.subr.mxu0 0.0
    %199 = vmatpush1.msra.mxu0 0.0
    %200 = vmatprep.subr.mxu0 0.0
    %201 = vmatpush1.msra.mxu0 0.0
    %202 = vmatprep.subr.mxu0 0.0
    %203 = vmatpush1.msra.mxu0 0.0
    %204 = vmatprep.subr.mxu0 0.0
    %205 = vmatpush1.msra.mxu0 0.0
    %206 = vmatprep.subr.mxu0 0.0
    %207 = vmatpush1.msra.mxu0 0.0
    %208 = vmatprep.subr.mxu0 0.0
    %209 = vmatpush1.msra.mxu0 0.0
    %210 = vmatprep.subr.mxu0 0.0
    %211 = vmatpush1.msra.mxu0 0.0
    %212 = vmatprep.subr.mxu0 0.0
    %213 = vmatpush1.msra.mxu0 0.0
    %214 = vmatprep.subr.mxu0 0.0
    %215 = vmatpush1.msra.mxu0 0.0
    %216 = vmatprep.subr.mxu0 0.0
    %217 = vmatpush1.msra.mxu0 0.0
    %218 = vmatprep.subr.mxu0 0.0
    %219 = vmatpush1.msra.mxu0 0.0
    %220 = vmatprep.subr.mxu0 0.0
    %221 = vmatpush1.msra.mxu0 0.0
    %222 = vmatprep.subr.mxu0 0.0
    %223 = vmatpush1.msra.mxu0 0.0
    %224 = vmatprep.mubr.f32.mxu0 0.0
    %225 = vmatmul.mubr.f32.gmra.mrb[0].mxu0 %v155
    %v226 = vpop.f32.mrb[0].mxu0
    %v227 = vadd.f32 %v144, %v226
    %v228 = vpop.f32.mrb[0].mxu0
    %v229 = vadd.f32 %v148, %v228
    %230 = vmatprep.mubr.f32.mxu0 0.0
    %231 = vmatmul.mubr.f32.gmra.mrb[0].mxu0 %v158
    %v232 = vpop.f32.mrb[0].mxu0
    %v233 = vadd.f32 %v144, %v232
    %v234 = vpop.f32.mrb[0].mxu0
    %v235 = vadd.f32 %v148, %v234
    %236 = vdwg.mxu0
    %237 = vmatprep.subr.mxu0 0.0
    %238 = vmatpush1.msra.mxu0 %v134
    %239 = vmatprep.subr.mxu0 0.0
    %240 = vmatpush1.msra.mxu0 %v137
    %241 = vmatprep.subr.mxu0 0.0
    %242 = vmatpush1.msra.mxu0 0.0
    %243 = vmatprep.subr.mxu0 0.0
    %244 = vmatpush1.msra.mxu0 0.0
    %245 = vmatprep.subr.mxu0 0.0
    %246 = vmatpush1.msra.mxu0 0.0
    %247 = vmatprep.subr.mxu0 0.0
    %248 = vmatpush1.msra.mxu0 0.0
    %249 = vmatprep.subr.mxu0 0.0
    %250 = vmatpush1.msra.mxu0 0.0
    %251 = vmatprep.subr.mxu0 0.0
    %252 = vmatpush1.msra.mxu0 0.0
    %253 = vmatprep.subr.mxu0 0.0
    %254 = vmatpush1.msra.mxu0 0.0
    %255 = vmatprep.subr.mxu0 0.0
    %256 = vmatpush1.msra.mxu0 0.0
    %257 = vmatprep.subr.mxu0 0.0
    %258 = vmatpush1.msra.mxu0 0.0
    %259 = vmatprep.subr.mxu0 0.0
    %260 = vmatpush1.msra.mxu0 0.0
    %261 = vmatprep.subr.mxu0 0.0
    %262 = vmatpush1.msra.mxu0 0.0
    %263 = vmatprep.subr.mxu0 0.0
    %264 = vmatpush1.msra.mxu0 0.0
    %265 = vmatprep.subr.mxu0 0.0
    %266 = vmatpush1.msra.mxu0 0.0
    %267 = vmatprep.subr.mxu0 0.0
    %268 = vmatpush1.msra.mxu0 0.0
    %269 = vmatprep.subr.mxu0 0.0
    %270 = vmatpush1.msra.mxu0 0.0
    %271 = vmatprep.subr.mxu0 0.0
    %272 = vmatpush1.msra.mxu0 0.0
    %273 = vmatprep.subr.mxu0 0.0
    %274 = vmatpush1.msra.mxu0 0.0
    %275 = vmatprep.subr.mxu0 0.0
    %276 = vmatpush1.msra.mxu0 0.0
    %277 = vmatprep.subr.mxu0 0.0
    %278 = vmatpush1.msra.mxu0 0.0
    %279 = vmatprep.subr.mxu0 0.0
    %280 = vmatpush1.msra.mxu0 0.0
    %281 = vmatprep.subr.mxu0 0.0
    %282 = vmatpush1.msra.mxu0 0.0
    %283 = vmatprep.subr.mxu0 0.0
    %284 = vmatpush1.msra.mxu0 0.0
    %285 = vmatprep.subr.mxu0 0.0
    %286 = vmatpush1.msra.mxu0 0.0
    %287 = vmatprep.subr.mxu0 0.0
    %288 = vmatpush1.msra.mxu0 0.0
    %289 = vmatprep.subr.mxu0 0.0
    %290 = vmatpush1.msra.mxu0 0.0
    %291 = vmatprep.subr.mxu0 0.0
    %292 = vmatpush1.msra.mxu0 0.0
    %293 = vmatprep.subr.mxu0 0.0
    %294 = vmatpush1.msra.mxu0 0.0
    %295 = vmatprep.subr.mxu0 0.0
    %296 = vmatpush1.msra.mxu0 0.0
    %297 = vmatprep.subr.mxu0 0.0
    %298 = vmatpush1.msra.mxu0 0.0
    %299 = vmatprep.subr.mxu0 0.0
    %300 = vmatpush1.msra.mxu0 0.0
    %301 = vmatprep.mubr.f32.mxu0 0.0
    %302 = vmatmul.mubr.f32.gmra.mrb[0].mxu0 %v155
    %v303 = vpop.f32.mrb[0].mxu0
    %v304 = vadd.f32 %v152, %v303
    %v305 = vpop.f32.mrb[0].mxu0
    %306 = vmatprep.mubr.f32.mxu0 0.0
    %307 = vmatmul.mubr.f32.gmra.mrb[0].mxu0 %v158
    %v308 = vpop.f32.mrb[0].mxu0
    %v309 = vadd.f32 %v152, %v308
    %v310 = vpop.f32.mrb[0].mxu0
    %311 = vdwg.mxu0
    %v314 = vcombine.high %v229, %v229
    %v316 = vunpack.c.l.s4 1966171168
    %v317 = vunpack.c.0.s8 %v316
    %v318 = vlaneseq
    %v319 = vshrl.u32 %v318, 7
    %v320 = vsub.s32 %v317, %v319
    %v321 = vrot.slane %v229, %v320
    %v323 = vunpack.c.l.s4 1966171168
    %v324 = vunpack.c.0.s8 %v323
    %v325 = vlaneseq
    %v326 = vshrl.u32 %v325, 7
    %v327 = vsub.s32 %v324, %v326
    %v328 = vrot.slane %v314, %v327
    %v329 = vcombine.high %v321, %v321
    %v330 = vcombine.high %v328, %v328
    %v332 = vunpack.c.l.s4 1966171168
    %v333 = vunpack.c.0.s8 %v332
    %v334 = vlaneseq
    %v335 = vshrl.u32 %v334, 7
    %v336 = vsub.s32 %v333, %v335
    %v337 = vrot.slane %v321, %v336
    %v339 = vunpack.c.l.s4 1966171168
    %v340 = vunpack.c.0.s8 %v339
    %v341 = vlaneseq
    %v342 = vshrl.u32 %v341, 7
    %v343 = vsub.s32 %v340, %v342
    %v344 = vrot.slane %v328, %v343
    %v346 = vunpack.c.l.s4 1966171168
    %v347 = vunpack.c.0.s8 %v346
    %v348 = vlaneseq
    %v349 = vshrl.u32 %v348, 7
    %v350 = vsub.s32 %v347, %v349
    %v351 = vrot.slane %v329, %v350
    %v353 = vunpack.c.l.s4 1966171168
    %v354 = vunpack.c.0.s8 %v353
    %v355 = vlaneseq
    %v356 = vshrl.u32 %v355, 7
    %v357 = vsub.s32 %v354, %v356
    %v358 = vrot.slane %v330, %v357
    %v359 = vcombine.high %v337, %v337
    %v360 = vcombine.high %v344, %v344
    %v361 = vcombine.high %v351, %v351
    %v362 = vcombine.high %v358, %v358
    %v363 = vcombine.high %v235, %v235
    %v365 = vunpack.c.l.s4 1966171168
    %v366 = vunpack.c.0.s8 %v365
    %v367 = vlaneseq
    %v368 = vshrl.u32 %v367, 7
    %v369 = vsub.s32 %v366, %v368
    %v370 = vrot.slane %v235, %v369
    %v372 = vunpack.c.l.s4 1966171168
    %v373 = vunpack.c.0.s8 %v372
    %v374 = vlaneseq
    %v375 = vshrl.u32 %v374, 7
    %v376 = vsub.s32 %v373, %v375
    %v377 = vrot.slane %v363, %v376
    %v378 = vcombine.high %v370, %v370
    %v379 = vcombine.high %v377, %v377
    %v381 = vunpack.c.l.s4 1966171168
    %v382 = vunpack.c.0.s8 %v381
    %v383 = vlaneseq
    %v384 = vshrl.u32 %v383, 7
    %v385 = vsub.s32 %v382, %v384
    %v386 = vrot.slane %v370, %v385
    %v388 = vunpack.c.l.s4 1966171168
    %v389 = vunpack.c.0.s8 %v388
    %v390 = vlaneseq
    %v391 = vshrl.u32 %v390, 7
    %v392 = vsub.s32 %v389, %v391
    %v393 = vrot.slane %v377, %v392
    %v395 = vunpack.c.l.s4 1966171168
    %v396 = vunpack.c.0.s8 %v395
    %v397 = vlaneseq
    %v398 = vshrl.u32 %v397, 7
    %v399 = vsub.s32 %v396, %v398
    %v400 = vrot.slane %v378, %v399
    %v402 = vunpack.c.l.s4 1966171168
    %v403 = vunpack.c.0.s8 %v402
    %v404 = vlaneseq
    %v405 = vshrl.u32 %v404, 7
    %v406 = vsub.s32 %v403, %v405
    %v407 = vrot.slane %v379, %v406
    %v408 = vcombine.high %v386, %v386
    %v409 = vcombine.high %v393, %v393
    %v410 = vcombine.high %v400, %v400
    %v411 = vcombine.high %v407, %v407
    %v412 = vlaneseq
    %v413 = vshrl.u32 %v412, 7
    %v414 = vsub.s32 0, %v413
    %v415 = vrot.slane %v337, %v414
    %v416 = vlaneseq
    %v417 = vshrl.u32 %v416, 7
    %v418 = vsub.s32 0, %v417
    %v419 = vrot.slane %v351, %v418
    %v420 = vlaneseq
    %v421 = vshrl.u32 %v420, 7
    %v422 = vsub.s32 0, %v421
    %v423 = vrot.slane %v359, %v422
    %v424 = vlaneseq
    %v425 = vshrl.u32 %v424, 7
    %v426 = vsub.s32 0, %v425
    %v427 = vrot.slane %v361, %v426
    %v428 = vlaneseq
    %v429 = vshrl.u32 %v428, 7
    %v430 = vsub.s32 0, %v429
    %v431 = vrot.slane %v344, %v430
    %v432 = vlaneseq
    %v433 = vshrl.u32 %v432, 7
    %v434 = vsub.s32 0, %v433
    %v435 = vrot.slane %v358, %v434
    %v436 = vlaneseq
    %v437 = vshrl.u32 %v436, 7
    %v438 = vsub.s32 0, %v437
    %v439 = vrot.slane %v360, %v438
    %v440 = vlaneseq
    %v441 = vshrl.u32 %v440, 7
    %v442 = vsub.s32 0, %v441
    %v443 = vrot.slane %v362, %v442
    %v444 = vlaneseq
    %v445 = vshrl.u32 %v444, 7
    %v446 = vsub.s32 0, %v445
    %v447 = vrot.slane %v386, %v446
    %v448 = vlaneseq
    %v449 = vshrl.u32 %v448, 7
    %v450 = vsub.s32 0, %v449
    %v451 = vrot.slane %v400, %v450
    %v452 = vlaneseq
    %v453 = vshrl.u32 %v452, 7
    %v454 = vsub.s32 0, %v453
    %v455 = vrot.slane %v408, %v454
    %v456 = vlaneseq
    %v457 = vshrl.u32 %v456, 7
    %v458 = vsub.s32 0, %v457
    %v459 = vrot.slane %v410, %v458
    %v460 = vlaneseq
    %v461 = vshrl.u32 %v460, 7
    %v462 = vsub.s32 0, %v461
    %v463 = vrot.slane %v393, %v462
    %v464 = vlaneseq
    %v465 = vshrl.u32 %v464, 7
    %v466 = vsub.s32 0, %v465
    %v467 = vrot.slane %v407, %v466
    %v468 = vlaneseq
    %v469 = vshrl.u32 %v468, 7
    %v470 = vsub.s32 0, %v469
    %v471 = vrot.slane %v409, %v470
    %v472 = vlaneseq
    %v473 = vshrl.u32 %v472, 7
    %v474 = vsub.s32 0, %v473
    %v475 = vrot.slane %v411, %v474
    %v492 = vadd.f32 %v415, %v227
    %v493 = vadd.f32 %v415, %v233
    %v494 = vadd.f32 %v419, %v227
    %v495 = vadd.f32 %v419, %v233
    %v496 = vadd.f32 %v423, %v227
    %v497 = vadd.f32 %v423, %v233
    %v498 = vadd.f32 %v427, %v227
    %v499 = vadd.f32 %v427, %v233
    %v500 = vadd.f32 %v431, %v227
    %v501 = vadd.f32 %v431, %v233
    %v502 = vadd.f32 %v435, %v227
    %v503 = vadd.f32 %v435, %v233
    %v504 = vadd.f32 %v439, %v227
    %v505 = vadd.f32 %v439, %v233
    %v506 = vadd.f32 %v443, %v227
    %v507 = vadd.f32 %v443, %v233
    %v508 = vadd.f32 %v447, %v227
    %v509 = vadd.f32 %v447, %v233
    %v510 = vadd.f32 %v451, %v227
    %v511 = vadd.f32 %v451, %v233
    %v512 = vadd.f32 %v455, %v227
    %v513 = vadd.f32 %v455, %v233
    %v514 = vadd.f32 %v459, %v227
    %v515 = vadd.f32 %v459, %v233
    %v516 = vadd.f32 %v463, %v227
    %v517 = vadd.f32 %v463, %v233
    %v518 = vadd.f32 %v467, %v227
    %v519 = vadd.f32 %v467, %v233
    %v520 = vadd.f32 %v471, %v227
    %v521 = vadd.f32 %v471, %v233
    %v522 = vadd.f32 %v475, %v227
    %v523 = vadd.f32 %v475, %v233
    %v524 = vlaneseq
    %v525 = vshrl.u32 %v524, 7
    %v526 = vsub.s32 0, %v525
    %v527 = vrot.slane %v120, %v526
    %529 = vbcast.lane.b32.xlu0 %v527, 256
    %v530 = vpop.permute.xlu0 %529
    %s532 = sor.u32 256, 8
    %533 = vbcast.lane.b32.xlu0 %v527, %s532
    %v534 = vpop.permute.xlu0 %533
    %v535 = vlaneseq
    %v536 = vshrl.u32 %v535, 7
    %v537 = vsub.s32 1, %v536
    %v538 = vrot.slane %v120, %v537
    %540 = vbcast.lane.b32.xlu0 %v538, 256
    %v541 = vpop.permute.xlu0 %540
    %s543 = sor.u32 256, 8
    %544 = vbcast.lane.b32.xlu0 %v538, %s543
    %v545 = vpop.permute.xlu0 %544
    %v546 = vlaneseq
    %v547 = vshrl.u32 %v546, 7
    %v548 = vsub.s32 2, %v547
    %v549 = vrot.slane %v120, %v548
    %551 = vbcast.lane.b32.xlu0 %v549, 256
    %v552 = vpop.permute.xlu0 %551
    %s554 = sor.u32 256, 8
    %555 = vbcast.lane.b32.xlu0 %v549, %s554
    %v556 = vpop.permute.xlu0 %555
    %v557 = vlaneseq
    %v558 = vshrl.u32 %v557, 7
    %v559 = vsub.s32 3, %v558
    %v560 = vrot.slane %v120, %v559
    %562 = vbcast.lane.b32.xlu0 %v560, 256
    %v563 = vpop.permute.xlu0 %562
    %s565 = sor.u32 256, 8
    %566 = vbcast.lane.b32.xlu0 %v560, %s565
    %v567 = vpop.permute.xlu0 %566
    %v568 = vlaneseq
    %v569 = vshrl.u32 %v568, 7
    %v570 = vsub.s32 4, %v569
    %v571 = vrot.slane %v120, %v570
    %573 = vbcast.lane.b32.xlu0 %v571, 256
    %v574 = vpop.permute.xlu0 %573
    %s576 = sor.u32 256, 8
    %577 = vbcast.lane.b32.xlu0 %v571, %s576
    %v578 = vpop.permute.xlu0 %577
    %v579 = vlaneseq
    %v580 = vshrl.u32 %v579, 7
    %v581 = vsub.s32 5, %v580
    %v582 = vrot.slane %v120, %v581
    %584 = vbcast.lane.b32.xlu0 %v582, 256
    %v585 = vpop.permute.xlu0 %584
    %s587 = sor.u32 256, 8
    %588 = vbcast.lane.b32.xlu0 %v582, %s587
    %v589 = vpop.permute.xlu0 %588
    %v590 = vlaneseq
    %v591 = vshrl.u32 %v590, 7
    %v592 = vsub.s32 6, %v591
    %v593 = vrot.slane %v120, %v592
    %595 = vbcast.lane.b32.xlu0 %v593, 256
    %v596 = vpop.permute.xlu0 %595
    %s598 = sor.u32 256, 8
    %599 = vbcast.lane.b32.xlu0 %v593, %s598
    %v600 = vpop.permute.xlu0 %599
    %v601 = vlaneseq
    %v602 = vshrl.u32 %v601, 7
    %v603 = vsub.s32 7, %v602
    %v604 = vrot.slane %v120, %v603
    %606 = vbcast.lane.b32.xlu0 %v604, 256
    %v607 = vpop.permute.xlu0 %606
    %s609 = sor.u32 256, 8
    %610 = vbcast.lane.b32.xlu0 %v604, %s609
    %v611 = vpop.permute.xlu0 %610
    %v612 = vlaneseq
    %v613 = vshrl.u32 %v612, 7
    %v614 = vsub.s32 0, %v613
    %v615 = vrot.slane %v121, %v614
    %617 = vbcast.lane.b32.xlu0 %v615, 256
    %v618 = vpop.permute.xlu0 %617
    %s620 = sor.u32 256, 8
    %621 = vbcast.lane.b32.xlu0 %v615, %s620
    %v622 = vpop.permute.xlu0 %621
    %v623 = vlaneseq
    %v624 = vshrl.u32 %v623, 7
    %v625 = vsub.s32 1, %v624
    %v626 = vrot.slane %v121, %v625
    %628 = vbcast.lane.b32.xlu0 %v626, 256
    %v629 = vpop.permute.xlu0 %628
    %s631 = sor.u32 256, 8
    %632 = vbcast.lane.b32.xlu0 %v626, %s631
    %v633 = vpop.permute.xlu0 %632
    %v634 = vlaneseq
    %v635 = vshrl.u32 %v634, 7
    %v636 = vsub.s32 2, %v635
    %v637 = vrot.slane %v121, %v636
    %639 = vbcast.lane.b32.xlu0 %v637, 256
    %v640 = vpop.permute.xlu0 %639
    %s642 = sor.u32 256, 8
    %643 = vbcast.lane.b32.xlu0 %v637, %s642
    %v644 = vpop.permute.xlu0 %643
    %v645 = vlaneseq
    %v646 = vshrl.u32 %v645, 7
    %v647 = vsub.s32 3, %v646
    %v648 = vrot.slane %v121, %v647
    %650 = vbcast.lane.b32.xlu0 %v648, 256
    %v651 = vpop.permute.xlu0 %650
    %s653 = sor.u32 256, 8
    %654 = vbcast.lane.b32.xlu0 %v648, %s653
    %v655 = vpop.permute.xlu0 %654
    %v656 = vlaneseq
    %v657 = vshrl.u32 %v656, 7
    %v658 = vsub.s32 4, %v657
    %v659 = vrot.slane %v121, %v658
    %661 = vbcast.lane.b32.xlu0 %v659, 256
    %v662 = vpop.permute.xlu0 %661
    %s664 = sor.u32 256, 8
    %665 = vbcast.lane.b32.xlu0 %v659, %s664
    %v666 = vpop.permute.xlu0 %665
    %v667 = vlaneseq
    %v668 = vshrl.u32 %v667, 7
    %v669 = vsub.s32 5, %v668
    %v670 = vrot.slane %v121, %v669
    %672 = vbcast.lane.b32.xlu0 %v670, 256
    %v673 = vpop.permute.xlu0 %672
    %s675 = sor.u32 256, 8
    %676 = vbcast.lane.b32.xlu0 %v670, %s675
    %v677 = vpop.permute.xlu0 %676
    %v678 = vlaneseq
    %v679 = vshrl.u32 %v678, 7
    %v680 = vsub.s32 6, %v679
    %v681 = vrot.slane %v121, %v680
    %683 = vbcast.lane.b32.xlu0 %v681, 256
    %v684 = vpop.permute.xlu0 %683
    %s686 = sor.u32 256, 8
    %687 = vbcast.lane.b32.xlu0 %v681, %s686
    %v688 = vpop.permute.xlu0 %687
    %v689 = vlaneseq
    %v690 = vshrl.u32 %v689, 7
    %v691 = vsub.s32 7, %v690
    %v692 = vrot.slane %v121, %v691
    %694 = vbcast.lane.b32.xlu0 %v692, 256
    %v695 = vpop.permute.xlu0 %694
    %s697 = sor.u32 256, 8
    %698 = vbcast.lane.b32.xlu0 %v692, %s697
    %v699 = vpop.permute.xlu0 %698
    %v700 = vlaneseq
    %v701 = vshrl.u32 %v700, 7
    %v702 = vsub.s32 1, %v701
    %v703 = vrot.slane %v138, %v702
    %v704 = vmul.f32 %v530, %v703
    %v705 = vmul.f32 %v534, %v703
    %v706 = vmul.f32 %v541, %v703
    %v707 = vmul.f32 %v545, %v703
    %v708 = vmul.f32 %v552, %v703
    %v709 = vmul.f32 %v556, %v703
    %v710 = vmul.f32 %v563, %v703
    %v711 = vmul.f32 %v567, %v703
    %v712 = vmul.f32 %v574, %v703
    %v713 = vmul.f32 %v578, %v703
    %v714 = vmul.f32 %v585, %v703
    %v715 = vmul.f32 %v589, %v703
    %v716 = vmul.f32 %v596, %v703
    %v717 = vmul.f32 %v600, %v703
    %v718 = vmul.f32 %v607, %v703
    %v719 = vmul.f32 %v611, %v703
    %v720 = vmul.f32 %v618, %v703
    %v721 = vmul.f32 %v622, %v703
    %v722 = vmul.f32 %v629, %v703
    %v723 = vmul.f32 %v633, %v703
    %v724 = vmul.f32 %v640, %v703
    %v725 = vmul.f32 %v644, %v703
    %v726 = vmul.f32 %v651, %v703
    %v727 = vmul.f32 %v655, %v703
    %v728 = vmul.f32 %v662, %v703
    %v729 = vmul.f32 %v666, %v703
    %v730 = vmul.f32 %v673, %v703
    %v731 = vmul.f32 %v677, %v703
    %v732 = vmul.f32 %v684, %v703
    %v733 = vmul.f32 %v688, %v703
    %v734 = vmul.f32 %v695, %v703
    %v735 = vmul.f32 %v699, %v703
    %v736 = vadd.f32 %v492, %v704
    %v737 = vadd.f32 %v493, %v705
    %v738 = vadd.f32 %v494, %v706
    %v739 = vadd.f32 %v495, %v707
    %v740 = vadd.f32 %v496, %v708
    %v741 = vadd.f32 %v497, %v709
    %v742 = vadd.f32 %v498, %v710
    %v743 = vadd.f32 %v499, %v711
    %v744 = vadd.f32 %v500, %v712
    %v745 = vadd.f32 %v501, %v713
    %v746 = vadd.f32 %v502, %v714
    %v747 = vadd.f32 %v503, %v715
    %v748 = vadd.f32 %v504, %v716
    %v749 = vadd.f32 %v505, %v717
    %v750 = vadd.f32 %v506, %v718
    %v751 = vadd.f32 %v507, %v719
    %v752 = vadd.f32 %v508, %v720
    %v753 = vadd.f32 %v509, %v721
    %v754 = vadd.f32 %v510, %v722
    %v755 = vadd.f32 %v511, %v723
    %v756 = vadd.f32 %v512, %v724
    %v757 = vadd.f32 %v513, %v725
    %v758 = vadd.f32 %v514, %v726
    %v759 = vadd.f32 %v515, %v727
    %v760 = vadd.f32 %v516, %v728
    %v761 = vadd.f32 %v517, %v729
    %v762 = vadd.f32 %v518, %v730
    %v763 = vadd.f32 %v519, %v731
    %v764 = vadd.f32 %v520, %v732
    %v765 = vadd.f32 %v521, %v733
    %v766 = vadd.f32 %v522, %v734
    %v767 = vadd.f32 %v523, %v735
    %v768 = vlaneseq
    %v769 = vshrl.u32 %v768, 7
    %v770 = vsub.s32 0, %v769
    %v771 = vrot.slane %v122, %v770
    %773 = vbcast.lane.b32.xlu0 %v771, 256
    %v774 = vpop.permute.xlu0 %773
    %s776 = sor.u32 256, 8
    %777 = vbcast.lane.b32.xlu0 %v771, %s776
    %v778 = vpop.permute.xlu0 %777
    %v779 = vlaneseq
    %v780 = vshrl.u32 %v779, 7
    %v781 = vsub.s32 1, %v780
    %v782 = vrot.slane %v122, %v781
    %784 = vbcast.lane.b32.xlu0 %v782, 256
    %v785 = vpop.permute.xlu0 %784
    %s787 = sor.u32 256, 8
    %788 = vbcast.lane.b32.xlu0 %v782, %s787
    %v789 = vpop.permute.xlu0 %788
    %v790 = vlaneseq
    %v791 = vshrl.u32 %v790, 7
    %v792 = vsub.s32 2, %v791
    %v793 = vrot.slane %v122, %v792
    %795 = vbcast.lane.b32.xlu0 %v793, 256
    %v796 = vpop.permute.xlu0 %795
    %s798 = sor.u32 256, 8
    %799 = vbcast.lane.b32.xlu0 %v793, %s798
    %v800 = vpop.permute.xlu0 %799
    %v801 = vlaneseq
    %v802 = vshrl.u32 %v801, 7
    %v803 = vsub.s32 3, %v802
    %v804 = vrot.slane %v122, %v803
    %806 = vbcast.lane.b32.xlu0 %v804, 256
    %v807 = vpop.permute.xlu0 %806
    %s809 = sor.u32 256, 8
    %810 = vbcast.lane.b32.xlu0 %v804, %s809
    %v811 = vpop.permute.xlu0 %810
    %v812 = vlaneseq
    %v813 = vshrl.u32 %v812, 7
    %v814 = vsub.s32 4, %v813
    %v815 = vrot.slane %v122, %v814
    %817 = vbcast.lane.b32.xlu0 %v815, 256
    %v818 = vpop.permute.xlu0 %817
    %s820 = sor.u32 256, 8
    %821 = vbcast.lane.b32.xlu0 %v815, %s820
    %v822 = vpop.permute.xlu0 %821
    %v823 = vlaneseq
    %v824 = vshrl.u32 %v823, 7
    %v825 = vsub.s32 5, %v824
    %v826 = vrot.slane %v122, %v825
    %828 = vbcast.lane.b32.xlu0 %v826, 256
    %v829 = vpop.permute.xlu0 %828
    %s831 = sor.u32 256, 8
    %832 = vbcast.lane.b32.xlu0 %v826, %s831
    %v833 = vpop.permute.xlu0 %832
    %v834 = vlaneseq
    %v835 = vshrl.u32 %v834, 7
    %v836 = vsub.s32 6, %v835
    %v837 = vrot.slane %v122, %v836
    %839 = vbcast.lane.b32.xlu0 %v837, 256
    %v840 = vpop.permute.xlu0 %839
    %s842 = sor.u32 256, 8
    %843 = vbcast.lane.b32.xlu0 %v837, %s842
    %v844 = vpop.permute.xlu0 %843
    %v845 = vlaneseq
    %v846 = vshrl.u32 %v845, 7
    %v847 = vsub.s32 7, %v846
    %v848 = vrot.slane %v122, %v847
    %850 = vbcast.lane.b32.xlu0 %v848, 256
    %v851 = vpop.permute.xlu0 %850
    %s853 = sor.u32 256, 8
    %854 = vbcast.lane.b32.xlu0 %v848, %s853
    %v855 = vpop.permute.xlu0 %854
    %v856 = vlaneseq
    %v857 = vshrl.u32 %v856, 7
    %v858 = vsub.s32 0, %v857
    %v859 = vrot.slane %v123, %v858
    %861 = vbcast.lane.b32.xlu0 %v859, 256
    %v862 = vpop.permute.xlu0 %861
    %s864 = sor.u32 256, 8
    %865 = vbcast.lane.b32.xlu0 %v859, %s864
    %v866 = vpop.permute.xlu0 %865
    %v867 = vlaneseq
    %v868 = vshrl.u32 %v867, 7
    %v869 = vsub.s32 1, %v868
    %v870 = vrot.slane %v123, %v869
    %872 = vbcast.lane.b32.xlu0 %v870, 256
    %v873 = vpop.permute.xlu0 %872
    %s875 = sor.u32 256, 8
    %876 = vbcast.lane.b32.xlu0 %v870, %s875
    %v877 = vpop.permute.xlu0 %876
    %v878 = vlaneseq
    %v879 = vshrl.u32 %v878, 7
    %v880 = vsub.s32 2, %v879
    %v881 = vrot.slane %v123, %v880
    %883 = vbcast.lane.b32.xlu0 %v881, 256
    %v884 = vpop.permute.xlu0 %883
    %s886 = sor.u32 256, 8
    %887 = vbcast.lane.b32.xlu0 %v881, %s886
    %v888 = vpop.permute.xlu0 %887
    %v889 = vlaneseq
    %v890 = vshrl.u32 %v889, 7
    %v891 = vsub.s32 3, %v890
    %v892 = vrot.slane %v123, %v891
    %894 = vbcast.lane.b32.xlu0 %v892, 256
    %v895 = vpop.permute.xlu0 %894
    %s897 = sor.u32 256, 8
    %898 = vbcast.lane.b32.xlu0 %v892, %s897
    %v899 = vpop.permute.xlu0 %898
    %v900 = vlaneseq
    %v901 = vshrl.u32 %v900, 7
    %v902 = vsub.s32 4, %v901
    %v903 = vrot.slane %v123, %v902
    %905 = vbcast.lane.b32.xlu0 %v903, 256
    %v906 = vpop.permute.xlu0 %905
    %s908 = sor.u32 256, 8
    %909 = vbcast.lane.b32.xlu0 %v903, %s908
    %v910 = vpop.permute.xlu0 %909
    %v911 = vlaneseq
    %v912 = vshrl.u32 %v911, 7
    %v913 = vsub.s32 5, %v912
    %v914 = vrot.slane %v123, %v913
    %916 = vbcast.lane.b32.xlu0 %v914, 256
    %v917 = vpop.permute.xlu0 %916
    %s919 = sor.u32 256, 8
    %920 = vbcast.lane.b32.xlu0 %v914, %s919
    %v921 = vpop.permute.xlu0 %920
    %v922 = vlaneseq
    %v923 = vshrl.u32 %v922, 7
    %v924 = vsub.s32 6, %v923
    %v925 = vrot.slane %v123, %v924
    %927 = vbcast.lane.b32.xlu0 %v925, 256
    %v928 = vpop.permute.xlu0 %927
    %s930 = sor.u32 256, 8
    %931 = vbcast.lane.b32.xlu0 %v925, %s930
    %v932 = vpop.permute.xlu0 %931
    %v933 = vlaneseq
    %v934 = vshrl.u32 %v933, 7
    %v935 = vsub.s32 7, %v934
    %v936 = vrot.slane %v123, %v935
    %938 = vbcast.lane.b32.xlu0 %v936, 256
    %v939 = vpop.permute.xlu0 %938
    %s941 = sor.u32 256, 8
    %942 = vbcast.lane.b32.xlu0 %v936, %s941
    %v943 = vpop.permute.xlu0 %942
    %v944 = vlaneseq
    %v945 = vshrl.u32 %v944, 7
    %v946 = vsub.s32 2, %v945
    %v947 = vrot.slane %v138, %v946
    %v948 = vmul.f32 %v774, %v947
    %v949 = vmul.f32 %v778, %v947
    %v950 = vmul.f32 %v785, %v947
    %v951 = vmul.f32 %v789, %v947
    %v952 = vmul.f32 %v796, %v947
    %v953 = vmul.f32 %v800, %v947
    %v954 = vmul.f32 %v807, %v947
    %v955 = vmul.f32 %v811, %v947
    %v956 = vmul.f32 %v818, %v947
    %v957 = vmul.f32 %v822, %v947
    %v958 = vmul.f32 %v829, %v947
    %v959 = vmul.f32 %v833, %v947
    %v960 = vmul.f32 %v840, %v947
    %v961 = vmul.f32 %v844, %v947
    %v962 = vmul.f32 %v851, %v947
    %v963 = vmul.f32 %v855, %v947
    %v964 = vmul.f32 %v862, %v947
    %v965 = vmul.f32 %v866, %v947
    %v966 = vmul.f32 %v873, %v947
    %v967 = vmul.f32 %v877, %v947
    %v968 = vmul.f32 %v884, %v947
    %v969 = vmul.f32 %v888, %v947
    %v970 = vmul.f32 %v895, %v947
    %v971 = vmul.f32 %v899, %v947
    %v972 = vmul.f32 %v906, %v947
    %v973 = vmul.f32 %v910, %v947
    %v974 = vmul.f32 %v917, %v947
    %v975 = vmul.f32 %v921, %v947
    %v976 = vmul.f32 %v928, %v947
    %v977 = vmul.f32 %v932, %v947
    %v978 = vmul.f32 %v939, %v947
    %v979 = vmul.f32 %v943, %v947
    %v980 = vadd.f32 %v736, %v948
    %v981 = vadd.f32 %v737, %v949
    %v982 = vadd.f32 %v738, %v950
    %v983 = vadd.f32 %v739, %v951
    %v984 = vadd.f32 %v740, %v952
    %v985 = vadd.f32 %v741, %v953
    %v986 = vadd.f32 %v742, %v954
    %v987 = vadd.f32 %v743, %v955
    %v988 = vadd.f32 %v744, %v956
    %v989 = vadd.f32 %v745, %v957
    %v990 = vadd.f32 %v746, %v958
    %v991 = vadd.f32 %v747, %v959
    %v992 = vadd.f32 %v748, %v960
    %v993 = vadd.f32 %v749, %v961
    %v994 = vadd.f32 %v750, %v962
    %v995 = vadd.f32 %v751, %v963
    %v996 = vadd.f32 %v752, %v964
    %v997 = vadd.f32 %v753, %v965
    %v998 = vadd.f32 %v754, %v966
    %v999 = vadd.f32 %v755, %v967
    %v1000 = vadd.f32 %v756, %v968
    %v1001 = vadd.f32 %v757, %v969
    %v1002 = vadd.f32 %v758, %v970
    %v1003 = vadd.f32 %v759, %v971
    %v1004 = vadd.f32 %v760, %v972
    %v1005 = vadd.f32 %v761, %v973
    %v1006 = vadd.f32 %v762, %v974
    %v1007 = vadd.f32 %v763, %v975
    %v1008 = vadd.f32 %v764, %v976
    %v1009 = vadd.f32 %v765, %v977
    %v1010 = vadd.f32 %v766, %v978
    %v1011 = vadd.f32 %v767, %v979
    %v1012 = vlaneseq
    %v1013 = vshrl.u32 %v1012, 7
    %v1014 = vsub.s32 0, %v1013
    %v1015 = vrot.slane %v124, %v1014
    %1017 = vbcast.lane.b32.xlu0 %v1015, 256
    %v1018 = vpop.permute.xlu0 %1017
    %s1020 = sor.u32 256, 8
    %1021 = vbcast.lane.b32.xlu0 %v1015, %s1020
    %v1022 = vpop.permute.xlu0 %1021
    %v1023 = vlaneseq
    %v1024 = vshrl.u32 %v1023, 7
    %v1025 = vsub.s32 1, %v1024
    %v1026 = vrot.slane %v124, %v1025
    %1028 = vbcast.lane.b32.xlu0 %v1026, 256
    %v1029 = vpop.permute.xlu0 %1028
    %s1031 = sor.u32 256, 8
    %1032 = vbcast.lane.b32.xlu0 %v1026, %s1031
    %v1033 = vpop.permute.xlu0 %1032
    %v1034 = vlaneseq
    %v1035 = vshrl.u32 %v1034, 7
    %v1036 = vsub.s32 2, %v1035
    %v1037 = vrot.slane %v124, %v1036
    %1039 = vbcast.lane.b32.xlu0 %v1037, 256
    %v1040 = vpop.permute.xlu0 %1039
    %s1042 = sor.u32 256, 8
    %1043 = vbcast.lane.b32.xlu0 %v1037, %s1042
    %v1044 = vpop.permute.xlu0 %1043
    %v1045 = vlaneseq
    %v1046 = vshrl.u32 %v1045, 7
    %v1047 = vsub.s32 3, %v1046
    %v1048 = vrot.slane %v124, %v1047
    %1050 = vbcast.lane.b32.xlu0 %v1048, 256
    %v1051 = vpop.permute.xlu0 %1050
    %s1053 = sor.u32 256, 8
    %1054 = vbcast.lane.b32.xlu0 %v1048, %s1053
    %v1055 = vpop.permute.xlu0 %1054
    %v1056 = vlaneseq
    %v1057 = vshrl.u32 %v1056, 7
    %v1058 = vsub.s32 4, %v1057
    %v1059 = vrot.slane %v124, %v1058
    %1061 = vbcast.lane.b32.xlu0 %v1059, 256
    %v1062 = vpop.permute.xlu0 %1061
    %s1064 = sor.u32 256, 8
    %1065 = vbcast.lane.b32.xlu0 %v1059, %s1064
    %v1066 = vpop.permute.xlu0 %1065
    %v1067 = vlaneseq
    %v1068 = vshrl.u32 %v1067, 7
    %v1069 = vsub.s32 5, %v1068
    %v1070 = vrot.slane %v124, %v1069
    %1072 = vbcast.lane.b32.xlu0 %v1070, 256
    %v1073 = vpop.permute.xlu0 %1072
    %s1075 = sor.u32 256, 8
    %1076 = vbcast.lane.b32.xlu0 %v1070, %s1075
    %v1077 = vpop.permute.xlu0 %1076
    %v1078 = vlaneseq
    %v1079 = vshrl.u32 %v1078, 7
    %v1080 = vsub.s32 6, %v1079
    %v1081 = vrot.slane %v124, %v1080
    %1083 = vbcast.lane.b32.xlu0 %v1081, 256
    %v1084 = vpop.permute.xlu0 %1083
    %s1086 = sor.u32 256, 8
    %1087 = vbcast.lane.b32.xlu0 %v1081, %s1086
    %v1088 = vpop.permute.xlu0 %1087
    %v1089 = vlaneseq
    %v1090 = vshrl.u32 %v1089, 7
    %v1091 = vsub.s32 7, %v1090
    %v1092 = vrot.slane %v124, %v1091
    %1094 = vbcast.lane.b32.xlu0 %v1092, 256
    %v1095 = vpop.permute.xlu0 %1094
    %s1097 = sor.u32 256, 8
    %1098 = vbcast.lane.b32.xlu0 %v1092, %s1097
    %v1099 = vpop.permute.xlu0 %1098
    %v1100 = vlaneseq
    %v1101 = vshrl.u32 %v1100, 7
    %v1102 = vsub.s32 0, %v1101
    %v1103 = vrot.slane %v125, %v1102
    %1105 = vbcast.lane.b32.xlu0 %v1103, 256
    %v1106 = vpop.permute.xlu0 %1105
    %s1108 = sor.u32 256, 8
    %1109 = vbcast.lane.b32.xlu0 %v1103, %s1108
    %v1110 = vpop.permute.xlu0 %1109
    %v1111 = vlaneseq
    %v1112 = vshrl.u32 %v1111, 7
    %v1113 = vsub.s32 1, %v1112
    %v1114 = vrot.slane %v125, %v1113
    %1116 = vbcast.lane.b32.xlu0 %v1114, 256
    %v1117 = vpop.permute.xlu0 %1116
    %s1119 = sor.u32 256, 8
    %1120 = vbcast.lane.b32.xlu0 %v1114, %s1119
    %v1121 = vpop.permute.xlu0 %1120
    %v1122 = vlaneseq
    %v1123 = vshrl.u32 %v1122, 7
    %v1124 = vsub.s32 2, %v1123
    %v1125 = vrot.slane %v125, %v1124
    %1127 = vbcast.lane.b32.xlu0 %v1125, 256
    %v1128 = vpop.permute.xlu0 %1127
    %s1130 = sor.u32 256, 8
    %1131 = vbcast.lane.b32.xlu0 %v1125, %s1130
    %v1132 = vpop.permute.xlu0 %1131
    %v1133 = vlaneseq
    %v1134 = vshrl.u32 %v1133, 7
    %v1135 = vsub.s32 3, %v1134
    %v1136 = vrot.slane %v125, %v1135
    %1138 = vbcast.lane.b32.xlu0 %v1136, 256
    %v1139 = vpop.permute.xlu0 %1138
    %s1141 = sor.u32 256, 8
    %1142 = vbcast.lane.b32.xlu0 %v1136, %s1141
    %v1143 = vpop.permute.xlu0 %1142
    %v1144 = vlaneseq
    %v1145 = vshrl.u32 %v1144, 7
    %v1146 = vsub.s32 4, %v1145
    %v1147 = vrot.slane %v125, %v1146
    %1149 = vbcast.lane.b32.xlu0 %v1147, 256
    %v1150 = vpop.permute.xlu0 %1149
    %s1152 = sor.u32 256, 8
    %1153 = vbcast.lane.b32.xlu0 %v1147, %s1152
    %v1154 = vpop.permute.xlu0 %1153
    %v1155 = vlaneseq
    %v1156 = vshrl.u32 %v1155, 7
    %v1157 = vsub.s32 5, %v1156
    %v1158 = vrot.slane %v125, %v1157
    %1160 = vbcast.lane.b32.xlu0 %v1158, 256
    %v1161 = vpop.permute.xlu0 %1160
    %s1163 = sor.u32 256, 8
    %1164 = vbcast.lane.b32.xlu0 %v1158, %s1163
    %v1165 = vpop.permute.xlu0 %1164
    %v1166 = vlaneseq
    %v1167 = vshrl.u32 %v1166, 7
    %v1168 = vsub.s32 6, %v1167
    %v1169 = vrot.slane %v125, %v1168
    %1171 = vbcast.lane.b32.xlu0 %v1169, 256
    %v1172 = vpop.permute.xlu0 %1171
    %s1174 = sor.u32 256, 8
    %1175 = vbcast.lane.b32.xlu0 %v1169, %s1174
    %v1176 = vpop.permute.xlu0 %1175
    %v1177 = vlaneseq
    %v1178 = vshrl.u32 %v1177, 7
    %v1179 = vsub.s32 7, %v1178
    %v1180 = vrot.slane %v125, %v1179
    %1182 = vbcast.lane.b32.xlu0 %v1180, 256
    %v1183 = vpop.permute.xlu0 %1182
    %s1185 = sor.u32 256, 8
    %1186 = vbcast.lane.b32.xlu0 %v1180, %s1185
    %v1187 = vpop.permute.xlu0 %1186
    %v1188 = vlaneseq
    %v1189 = vshrl.u32 %v1188, 7
    %v1190 = vsub.s32 3, %v1189
    %v1191 = vrot.slane %v138, %v1190
    %v1192 = vmul.f32 %v1018, %v1191
    %v1193 = vmul.f32 %v1022, %v1191
    %v1194 = vmul.f32 %v1029, %v1191
    %v1195 = vmul.f32 %v1033, %v1191
    %v1196 = vmul.f32 %v1040, %v1191
    %v1197 = vmul.f32 %v1044, %v1191
    %v1198 = vmul.f32 %v1051, %v1191
    %v1199 = vmul.f32 %v1055, %v1191
    %v1200 = vmul.f32 %v1062, %v1191
    %v1201 = vmul.f32 %v1066, %v1191
    %v1202 = vmul.f32 %v1073, %v1191
    %v1203 = vmul.f32 %v1077, %v1191
    %v1204 = vmul.f32 %v1084, %v1191
    %v1205 = vmul.f32 %v1088, %v1191
    %v1206 = vmul.f32 %v1095, %v1191
    %v1207 = vmul.f32 %v1099, %v1191
    %v1208 = vmul.f32 %v1106, %v1191
    %v1209 = vmul.f32 %v1110, %v1191
    %v1210 = vmul.f32 %v1117, %v1191
    %v1211 = vmul.f32 %v1121, %v1191
    %v1212 = vmul.f32 %v1128, %v1191
    %v1213 = vmul.f32 %v1132, %v1191
    %v1214 = vmul.f32 %v1139, %v1191
    %v1215 = vmul.f32 %v1143, %v1191
    %v1216 = vmul.f32 %v1150, %v1191
    %v1217 = vmul.f32 %v1154, %v1191
    %v1218 = vmul.f32 %v1161, %v1191
    %v1219 = vmul.f32 %v1165, %v1191
    %v1220 = vmul.f32 %v1172, %v1191
    %v1221 = vmul.f32 %v1176, %v1191
    %v1222 = vmul.f32 %v1183, %v1191
    %v1223 = vmul.f32 %v1187, %v1191
    %v1224 = vadd.f32 %v980, %v1192
    %v1225 = vadd.f32 %v981, %v1193
    %v1226 = vadd.f32 %v982, %v1194
    %v1227 = vadd.f32 %v983, %v1195
    %v1228 = vadd.f32 %v984, %v1196
    %v1229 = vadd.f32 %v985, %v1197
    %v1230 = vadd.f32 %v986, %v1198
    %v1231 = vadd.f32 %v987, %v1199
    %v1232 = vadd.f32 %v988, %v1200
    %v1233 = vadd.f32 %v989, %v1201
    %v1234 = vadd.f32 %v990, %v1202
    %v1235 = vadd.f32 %v991, %v1203
    %v1236 = vadd.f32 %v992, %v1204
    %v1237 = vadd.f32 %v993, %v1205
    %v1238 = vadd.f32 %v994, %v1206
    %v1239 = vadd.f32 %v995, %v1207
    %v1240 = vadd.f32 %v996, %v1208
    %v1241 = vadd.f32 %v997, %v1209
    %v1242 = vadd.f32 %v998, %v1210
    %v1243 = vadd.f32 %v999, %v1211
    %v1244 = vadd.f32 %v1000, %v1212
    %v1245 = vadd.f32 %v1001, %v1213
    %v1246 = vadd.f32 %v1002, %v1214
    %v1247 = vadd.f32 %v1003, %v1215
    %v1248 = vadd.f32 %v1004, %v1216
    %v1249 = vadd.f32 %v1005, %v1217
    %v1250 = vadd.f32 %v1006, %v1218
    %v1251 = vadd.f32 %v1007, %v1219
    %v1252 = vadd.f32 %v1008, %v1220
    %v1253 = vadd.f32 %v1009, %v1221
    %v1254 = vadd.f32 %v1010, %v1222
    %v1255 = vadd.f32 %v1011, %v1223
    %vm1256 = vcmp.gt.f32.partialorder %v1224, 0.0
    %vm1257 = vcmp.gt.f32.partialorder %v1225, 0.0
    %vm1258 = vcmp.gt.f32.partialorder %v1226, 0.0
    %vm1259 = vcmp.gt.f32.partialorder %v1227, 0.0
    %vm1260 = vcmp.gt.f32.partialorder %v1228, 0.0
    %vm1261 = vcmp.gt.f32.partialorder %v1229, 0.0
    %vm1262 = vcmp.gt.f32.partialorder %v1230, 0.0
    %vm1263 = vcmp.gt.f32.partialorder %v1231, 0.0
    %vm1264 = vcmp.gt.f32.partialorder %v1232, 0.0
    %vm1265 = vcmp.gt.f32.partialorder %v1233, 0.0
    %vm1266 = vcmp.gt.f32.partialorder %v1234, 0.0
    %vm1267 = vcmp.gt.f32.partialorder %v1235, 0.0
    %vm1268 = vcmp.gt.f32.partialorder %v1236, 0.0
    %vm1269 = vcmp.gt.f32.partialorder %v1237, 0.0
    %vm1270 = vcmp.gt.f32.partialorder %v1238, 0.0
    %vm1271 = vcmp.gt.f32.partialorder %v1239, 0.0
    %vm1272 = vcmp.gt.f32.partialorder %v1240, 0.0
    %vm1273 = vcmp.gt.f32.partialorder %v1241, 0.0
    %vm1274 = vcmp.gt.f32.partialorder %v1242, 0.0
    %vm1275 = vcmp.gt.f32.partialorder %v1243, 0.0
    %vm1276 = vcmp.gt.f32.partialorder %v1244, 0.0
    %vm1277 = vcmp.gt.f32.partialorder %v1245, 0.0
    %vm1278 = vcmp.gt.f32.partialorder %v1246, 0.0
    %vm1279 = vcmp.gt.f32.partialorder %v1247, 0.0
    %vm1280 = vcmp.gt.f32.partialorder %v1248, 0.0
    %vm1281 = vcmp.gt.f32.partialorder %v1249, 0.0
    %vm1282 = vcmp.gt.f32.partialorder %v1250, 0.0
    %vm1283 = vcmp.gt.f32.partialorder %v1251, 0.0
    %vm1284 = vcmp.gt.f32.partialorder %v1252, 0.0
    %vm1285 = vcmp.gt.f32.partialorder %v1253, 0.0
    %vm1286 = vcmp.gt.f32.partialorder %v1254, 0.0
    %vm1287 = vcmp.gt.f32.partialorder %v1255, 0.0
    %v1288 = vmul.f32 %v1224, 0.2
    %v1289 = vmul.f32 %v1225, 0.2
    %v1290 = vmul.f32 %v1226, 0.2
    %v1291 = vmul.f32 %v1227, 0.2
    %v1292 = vmul.f32 %v1228, 0.2
    %v1293 = vmul.f32 %v1229, 0.2
    %v1294 = vmul.f32 %v1230, 0.2
    %v1295 = vmul.f32 %v1231, 0.2
    %v1296 = vmul.f32 %v1232, 0.2
    %v1297 = vmul.f32 %v1233, 0.2
    %v1298 = vmul.f32 %v1234, 0.2
    %v1299 = vmul.f32 %v1235, 0.2
    %v1300 = vmul.f32 %v1236, 0.2
    %v1301 = vmul.f32 %v1237, 0.2
    %v1302 = vmul.f32 %v1238, 0.2
    %v1303 = vmul.f32 %v1239, 0.2
    %v1304 = vmul.f32 %v1240, 0.2
    %v1305 = vmul.f32 %v1241, 0.2
    %v1306 = vmul.f32 %v1242, 0.2
    %v1307 = vmul.f32 %v1243, 0.2
    %v1308 = vmul.f32 %v1244, 0.2
    %v1309 = vmul.f32 %v1245, 0.2
    %v1310 = vmul.f32 %v1246, 0.2
    %v1311 = vmul.f32 %v1247, 0.2
    %v1312 = vmul.f32 %v1248, 0.2
    %v1313 = vmul.f32 %v1249, 0.2
    %v1314 = vmul.f32 %v1250, 0.2
    %v1315 = vmul.f32 %v1251, 0.2
    %v1316 = vmul.f32 %v1252, 0.2
    %v1317 = vmul.f32 %v1253, 0.2
    %v1318 = vmul.f32 %v1254, 0.2
    %v1319 = vmul.f32 %v1255, 0.2
    %v1320 = vsel %vm1256, %v1224, %v1288
    %v1321 = vsel %vm1257, %v1225, %v1289
    %v1322 = vsel %vm1258, %v1226, %v1290
    %v1323 = vsel %vm1259, %v1227, %v1291
    %v1324 = vsel %vm1260, %v1228, %v1292
    %v1325 = vsel %vm1261, %v1229, %v1293
    %v1326 = vsel %vm1262, %v1230, %v1294
    %v1327 = vsel %vm1263, %v1231, %v1295
    %v1328 = vsel %vm1264, %v1232, %v1296
    %v1329 = vsel %vm1265, %v1233, %v1297
    %v1330 = vsel %vm1266, %v1234, %v1298
    %v1331 = vsel %vm1267, %v1235, %v1299
    %v1332 = vsel %vm1268, %v1236, %v1300
    %v1333 = vsel %vm1269, %v1237, %v1301
    %v1334 = vsel %vm1270, %v1238, %v1302
    %v1335 = vsel %vm1271, %v1239, %v1303
    %v1336 = vsel %vm1272, %v1240, %v1304
    %v1337 = vsel %vm1273, %v1241, %v1305
    %v1338 = vsel %vm1274, %v1242, %v1306
    %v1339 = vsel %vm1275, %v1243, %v1307
    %v1340 = vsel %vm1276, %v1244, %v1308
    %v1341 = vsel %vm1277, %v1245, %v1309
    %v1342 = vsel %vm1278, %v1246, %v1310
    %v1343 = vsel %vm1279, %v1247, %v1311
    %v1344 = vsel %vm1280, %v1248, %v1312
    %v1345 = vsel %vm1281, %v1249, %v1313
    %v1346 = vsel %vm1282, %v1250, %v1314
    %v1347 = vsel %vm1283, %v1251, %v1315
    %v1348 = vsel %vm1284, %v1252, %v1316
    %v1349 = vsel %vm1285, %v1253, %v1317
    %v1350 = vsel %vm1286, %v1254, %v1318
    %v1351 = vsel %vm1287, %v1255, %v1319
    %v1352 = vlaneseq
    %v1353 = vshrl.u32 %v1352, 7
    %v1354 = vsub.s32 4, %v1353
    %v1355 = vrot.slane %v138, %v1354
    %v1356 = vmul.f32 %v1320, %v1355
    %v1357 = vmul.f32 %v1321, %v1355
    %v1358 = vmul.f32 %v1322, %v1355
    %v1359 = vmul.f32 %v1323, %v1355
    %v1360 = vmul.f32 %v1324, %v1355
    %v1361 = vmul.f32 %v1325, %v1355
    %v1362 = vmul.f32 %v1326, %v1355
    %v1363 = vmul.f32 %v1327, %v1355
    %v1364 = vmul.f32 %v1328, %v1355
    %v1365 = vmul.f32 %v1329, %v1355
    %v1366 = vmul.f32 %v1330, %v1355
    %v1367 = vmul.f32 %v1331, %v1355
    %v1368 = vmul.f32 %v1332, %v1355
    %v1369 = vmul.f32 %v1333, %v1355
    %v1370 = vmul.f32 %v1334, %v1355
    %v1371 = vmul.f32 %v1335, %v1355
    %v1372 = vmul.f32 %v1336, %v1355
    %v1373 = vmul.f32 %v1337, %v1355
    %v1374 = vmul.f32 %v1338, %v1355
    %v1375 = vmul.f32 %v1339, %v1355
    %v1376 = vmul.f32 %v1340, %v1355
    %v1377 = vmul.f32 %v1341, %v1355
    %v1378 = vmul.f32 %v1342, %v1355
    %v1379 = vmul.f32 %v1343, %v1355
    %v1380 = vmul.f32 %v1344, %v1355
    %v1381 = vmul.f32 %v1345, %v1355
    %v1382 = vmul.f32 %v1346, %v1355
    %v1383 = vmul.f32 %v1347, %v1355
    %v1384 = vmul.f32 %v1348, %v1355
    %v1385 = vmul.f32 %v1349, %v1355
    %v1386 = vmul.f32 %v1350, %v1355
    %v1387 = vmul.f32 %v1351, %v1355
    %vm1388 = vcmask 261120
    %v1389 = vsel %vm1388, %v1356, 0.0
    %1390 = vadd.xlane.f32.xlu0 %v1389
    %v1391 = vpop.xlane.xlu0 %1390
    %v1392 = vsel %vm1388, %v1357, 0.0
    %1393 = vadd.xlane.f32.xlu0 %v1392
    %v1394 = vpop.xlane.xlu0 %1393
    %v1395 = vsel %vm1388, %v1358, 0.0
    %1396 = vadd.xlane.f32.xlu0 %v1395
    %v1397 = vpop.xlane.xlu0 %1396
    %v1398 = vsel %vm1388, %v1359, 0.0
    %1399 = vadd.xlane.f32.xlu0 %v1398
    %v1400 = vpop.xlane.xlu0 %1399
    %v1401 = vsel %vm1388, %v1360, 0.0
    %1402 = vadd.xlane.f32.xlu0 %v1401
    %v1403 = vpop.xlane.xlu0 %1402
    %v1404 = vsel %vm1388, %v1361, 0.0
    %1405 = vadd.xlane.f32.xlu0 %v1404
    %v1406 = vpop.xlane.xlu0 %1405
    %v1407 = vsel %vm1388, %v1362, 0.0
    %1408 = vadd.xlane.f32.xlu0 %v1407
    %v1409 = vpop.xlane.xlu0 %1408
    %v1410 = vsel %vm1388, %v1363, 0.0
    %1411 = vadd.xlane.f32.xlu0 %v1410
    %v1412 = vpop.xlane.xlu0 %1411
    %v1413 = vsel %vm1388, %v1364, 0.0
    %1414 = vadd.xlane.f32.xlu0 %v1413
    %v1415 = vpop.xlane.xlu0 %1414
    %v1416 = vsel %vm1388, %v1365, 0.0
    %1417 = vadd.xlane.f32.xlu0 %v1416
    %v1418 = vpop.xlane.xlu0 %1417
    %v1419 = vsel %vm1388, %v1366, 0.0
    %1420 = vadd.xlane.f32.xlu0 %v1419
    %v1421 = vpop.xlane.xlu0 %1420
    %v1422 = vsel %vm1388, %v1367, 0.0
    %1423 = vadd.xlane.f32.xlu0 %v1422
    %v1424 = vpop.xlane.xlu0 %1423
    %v1425 = vsel %vm1388, %v1368, 0.0
    %1426 = vadd.xlane.f32.xlu0 %v1425
    %v1427 = vpop.xlane.xlu0 %1426
    %v1428 = vsel %vm1388, %v1369, 0.0
    %1429 = vadd.xlane.f32.xlu0 %v1428
    %v1430 = vpop.xlane.xlu0 %1429
    %v1431 = vsel %vm1388, %v1370, 0.0
    %1432 = vadd.xlane.f32.xlu0 %v1431
    %v1433 = vpop.xlane.xlu0 %1432
    %v1434 = vsel %vm1388, %v1371, 0.0
    %1435 = vadd.xlane.f32.xlu0 %v1434
    %v1436 = vpop.xlane.xlu0 %1435
    %v1437 = vsel %vm1388, %v1372, 0.0
    %1438 = vadd.xlane.f32.xlu0 %v1437
    %v1439 = vpop.xlane.xlu0 %1438
    %v1440 = vsel %vm1388, %v1373, 0.0
    %1441 = vadd.xlane.f32.xlu0 %v1440
    %v1442 = vpop.xlane.xlu0 %1441
    %v1443 = vsel %vm1388, %v1374, 0.0
    %1444 = vadd.xlane.f32.xlu0 %v1443
    %v1445 = vpop.xlane.xlu0 %1444
    %v1446 = vsel %vm1388, %v1375, 0.0
    %1447 = vadd.xlane.f32.xlu0 %v1446
    %v1448 = vpop.xlane.xlu0 %1447
    %v1449 = vsel %vm1388, %v1376, 0.0
    %1450 = vadd.xlane.f32.xlu0 %v1449
    %v1451 = vpop.xlane.xlu0 %1450
    %v1452 = vsel %vm1388, %v1377, 0.0
    %1453 = vadd.xlane.f32.xlu0 %v1452
    %v1454 = vpop.xlane.xlu0 %1453
    %v1455 = vsel %vm1388, %v1378, 0.0
    %1456 = vadd.xlane.f32.xlu0 %v1455
    %v1457 = vpop.xlane.xlu0 %1456
    %v1458 = vsel %vm1388, %v1379, 0.0
    %1459 = vadd.xlane.f32.xlu0 %v1458
    %v1460 = vpop.xlane.xlu0 %1459
    %v1461 = vsel %vm1388, %v1380, 0.0
    %1462 = vadd.xlane.f32.xlu0 %v1461
    %v1463 = vpop.xlane.xlu0 %1462
    %v1464 = vsel %vm1388, %v1381, 0.0
    %1465 = vadd.xlane.f32.xlu0 %v1464
    %v1466 = vpop.xlane.xlu0 %1465
    %v1467 = vsel %vm1388, %v1382, 0.0
    %1468 = vadd.xlane.f32.xlu0 %v1467
    %v1469 = vpop.xlane.xlu0 %1468
    %v1470 = vsel %vm1388, %v1383, 0.0
    %1471 = vadd.xlane.f32.xlu0 %v1470
    %v1472 = vpop.xlane.xlu0 %1471
    %v1473 = vsel %vm1388, %v1384, 0.0
    %1474 = vadd.xlane.f32.xlu0 %v1473
    %v1475 = vpop.xlane.xlu0 %1474
    %v1476 = vsel %vm1388, %v1385, 0.0
    %1477 = vadd.xlane.f32.xlu0 %v1476
    %v1478 = vpop.xlane.xlu0 %1477
    %v1479 = vsel %vm1388, %v1386, 0.0
    %1480 = vadd.xlane.f32.xlu0 %v1479
    %v1481 = vpop.xlane.xlu0 %1480
    %v1482 = vsel %vm1388, %v1387, 0.0
    %1483 = vadd.xlane.f32.xlu0 %v1482
    %v1484 = vpop.xlane.xlu0 %1483
    %v1487 = vlaneseq
    %v1488 = vshrl.u32 %v1487, 7
    %v1489 = vsub.s32 0, %v1488
    %v1490 = vrot.slane %v128, %v1489
    %1492 = vbcast.lane.b32.xlu0 %v1490, 256
    %v1493 = vpop.permute.xlu0 %1492
    %s1495 = sor.u32 256, 8
    %1496 = vbcast.lane.b32.xlu0 %v1490, %s1495
    %v1497 = vpop.permute.xlu0 %1496
    %v1498 = vlaneseq
    %v1499 = vshrl.u32 %v1498, 7
    %v1500 = vsub.s32 1, %v1499
    %v1501 = vrot.slane %v128, %v1500
    %1503 = vbcast.lane.b32.xlu0 %v1501, 256
    %v1504 = vpop.permute.xlu0 %1503
    %s1506 = sor.u32 256, 8
    %1507 = vbcast.lane.b32.xlu0 %v1501, %s1506
    %v1508 = vpop.permute.xlu0 %1507
    %v1509 = vlaneseq
    %v1510 = vshrl.u32 %v1509, 7
    %v1511 = vsub.s32 2, %v1510
    %v1512 = vrot.slane %v128, %v1511
    %1514 = vbcast.lane.b32.xlu0 %v1512, 256
    %v1515 = vpop.permute.xlu0 %1514
    %s1517 = sor.u32 256, 8
    %1518 = vbcast.lane.b32.xlu0 %v1512, %s1517
    %v1519 = vpop.permute.xlu0 %1518
    %v1520 = vlaneseq
    %v1521 = vshrl.u32 %v1520, 7
    %v1522 = vsub.s32 3, %v1521
    %v1523 = vrot.slane %v128, %v1522
    %1525 = vbcast.lane.b32.xlu0 %v1523, 256
    %v1526 = vpop.permute.xlu0 %1525
    %s1528 = sor.u32 256, 8
    %1529 = vbcast.lane.b32.xlu0 %v1523, %s1528
    %v1530 = vpop.permute.xlu0 %1529
    %v1531 = vlaneseq
    %v1532 = vshrl.u32 %v1531, 7
    %v1533 = vsub.s32 4, %v1532
    %v1534 = vrot.slane %v128, %v1533
    %1536 = vbcast.lane.b32.xlu0 %v1534, 256
    %v1537 = vpop.permute.xlu0 %1536
    %s1539 = sor.u32 256, 8
    %1540 = vbcast.lane.b32.xlu0 %v1534, %s1539
    %v1541 = vpop.permute.xlu0 %1540
    %v1542 = vlaneseq
    %v1543 = vshrl.u32 %v1542, 7
    %v1544 = vsub.s32 5, %v1543
    %v1545 = vrot.slane %v128, %v1544
    %1547 = vbcast.lane.b32.xlu0 %v1545, 256
    %v1548 = vpop.permute.xlu0 %1547
    %s1550 = sor.u32 256, 8
    %1551 = vbcast.lane.b32.xlu0 %v1545, %s1550
    %v1552 = vpop.permute.xlu0 %1551
    %v1553 = vlaneseq
    %v1554 = vshrl.u32 %v1553, 7
    %v1555 = vsub.s32 6, %v1554
    %v1556 = vrot.slane %v128, %v1555
    %1558 = vbcast.lane.b32.xlu0 %v1556, 256
    %v1559 = vpop.permute.xlu0 %1558
    %s1561 = sor.u32 256, 8
    %1562 = vbcast.lane.b32.xlu0 %v1556, %s1561
    %v1563 = vpop.permute.xlu0 %1562
    %v1564 = vlaneseq
    %v1565 = vshrl.u32 %v1564, 7
    %v1566 = vsub.s32 7, %v1565
    %v1567 = vrot.slane %v128, %v1566
    %1569 = vbcast.lane.b32.xlu0 %v1567, 256
    %v1570 = vpop.permute.xlu0 %1569
    %s1572 = sor.u32 256, 8
    %1573 = vbcast.lane.b32.xlu0 %v1567, %s1572
    %v1574 = vpop.permute.xlu0 %1573
    %v1575 = vlaneseq
    %v1576 = vshrl.u32 %v1575, 7
    %v1577 = vsub.s32 0, %v1576
    %v1578 = vrot.slane %v129, %v1577
    %1580 = vbcast.lane.b32.xlu0 %v1578, 256
    %v1581 = vpop.permute.xlu0 %1580
    %s1583 = sor.u32 256, 8
    %1584 = vbcast.lane.b32.xlu0 %v1578, %s1583
    %v1585 = vpop.permute.xlu0 %1584
    %v1586 = vlaneseq
    %v1587 = vshrl.u32 %v1586, 7
    %v1588 = vsub.s32 1, %v1587
    %v1589 = vrot.slane %v129, %v1588
    %1591 = vbcast.lane.b32.xlu0 %v1589, 256
    %v1592 = vpop.permute.xlu0 %1591
    %s1594 = sor.u32 256, 8
    %1595 = vbcast.lane.b32.xlu0 %v1589, %s1594
    %v1596 = vpop.permute.xlu0 %1595
    %v1597 = vlaneseq
    %v1598 = vshrl.u32 %v1597, 7
    %v1599 = vsub.s32 2, %v1598
    %v1600 = vrot.slane %v129, %v1599
    %1602 = vbcast.lane.b32.xlu0 %v1600, 256
    %v1603 = vpop.permute.xlu0 %1602
    %s1605 = sor.u32 256, 8
    %1606 = vbcast.lane.b32.xlu0 %v1600, %s1605
    %v1607 = vpop.permute.xlu0 %1606
    %v1608 = vlaneseq
    %v1609 = vshrl.u32 %v1608, 7
    %v1610 = vsub.s32 3, %v1609
    %v1611 = vrot.slane %v129, %v1610
    %1613 = vbcast.lane.b32.xlu0 %v1611, 256
    %v1614 = vpop.permute.xlu0 %1613
    %s1616 = sor.u32 256, 8
    %1617 = vbcast.lane.b32.xlu0 %v1611, %s1616
    %v1618 = vpop.permute.xlu0 %1617
    %v1619 = vlaneseq
    %v1620 = vshrl.u32 %v1619, 7
    %v1621 = vsub.s32 4, %v1620
    %v1622 = vrot.slane %v129, %v1621
    %1624 = vbcast.lane.b32.xlu0 %v1622, 256
    %v1625 = vpop.permute.xlu0 %1624
    %s1627 = sor.u32 256, 8
    %1628 = vbcast.lane.b32.xlu0 %v1622, %s1627
    %v1629 = vpop.permute.xlu0 %1628
    %v1630 = vlaneseq
    %v1631 = vshrl.u32 %v1630, 7
    %v1632 = vsub.s32 5, %v1631
    %v1633 = vrot.slane %v129, %v1632
    %1635 = vbcast.lane.b32.xlu0 %v1633, 256
    %v1636 = vpop.permute.xlu0 %1635
    %s1638 = sor.u32 256, 8
    %1639 = vbcast.lane.b32.xlu0 %v1633, %s1638
    %v1640 = vpop.permute.xlu0 %1639
    %v1641 = vlaneseq
    %v1642 = vshrl.u32 %v1641, 7
    %v1643 = vsub.s32 6, %v1642
    %v1644 = vrot.slane %v129, %v1643
    %1646 = vbcast.lane.b32.xlu0 %v1644, 256
    %v1647 = vpop.permute.xlu0 %1646
    %s1649 = sor.u32 256, 8
    %1650 = vbcast.lane.b32.xlu0 %v1644, %s1649
    %v1651 = vpop.permute.xlu0 %1650
    %v1652 = vlaneseq
    %v1653 = vshrl.u32 %v1652, 7
    %v1654 = vsub.s32 7, %v1653
    %v1655 = vrot.slane %v129, %v1654
    %1657 = vbcast.lane.b32.xlu0 %v1655, 256
    %v1658 = vpop.permute.xlu0 %1657
    %s1660 = sor.u32 256, 8
    %1661 = vbcast.lane.b32.xlu0 %v1655, %s1660
    %v1662 = vpop.permute.xlu0 %1661
    %v1695 = vadd.f32 %v1391, %v1493
    %v1696 = vadd.f32 %v1394, %v1497
    %v1697 = vadd.f32 %v1397, %v1504
    %v1698 = vadd.f32 %v1400, %v1508
    %v1699 = vadd.f32 %v1403, %v1515
    %v1700 = vadd.f32 %v1406, %v1519
    %v1701 = vadd.f32 %v1409, %v1526
    %v1702 = vadd.f32 %v1412, %v1530
    %v1703 = vadd.f32 %v1415, %v1537
    %v1704 = vadd.f32 %v1418, %v1541
    %v1705 = vadd.f32 %v1421, %v1548
    %v1706 = vadd.f32 %v1424, %v1552
    %v1707 = vadd.f32 %v1427, %v1559
    %v1708 = vadd.f32 %v1430, %v1563
    %v1709 = vadd.f32 %v1433, %v1570
    %v1710 = vadd.f32 %v1436, %v1574
    %v1711 = vadd.f32 %v1439, %v1581
    %v1712 = vadd.f32 %v1442, %v1585
    %v1713 = vadd.f32 %v1445, %v1592
    %v1714 = vadd.f32 %v1448, %v1596
    %v1715 = vadd.f32 %v1451, %v1603
    %v1716 = vadd.f32 %v1454, %v1607
    %v1717 = vadd.f32 %v1457, %v1614
    %v1718 = vadd.f32 %v1460, %v1618
    %v1719 = vadd.f32 %v1463, %v1625
    %v1720 = vadd.f32 %v1466, %v1629
    %v1721 = vadd.f32 %v1469, %v1636
    %v1722 = vadd.f32 %v1472, %v1640
    %v1723 = vadd.f32 %v1475, %v1647
    %v1724 = vadd.f32 %v1478, %v1651
    %v1725 = vadd.f32 %v1481, %v1658
    %v1726 = vadd.f32 %v1484, %v1662
    %1759 = vset.pattern.permute.xlu0 0
    %1760 = vperm.xlu0 %1759, %v1695
    %v1761 = vpop.permute.xlu0 %1760
    %1762 = vset.pattern.permute.xlu0 0
    %1763 = vperm.xlu0 %1762, %v1696
    %v1764 = vpop.permute.xlu0 %1763
    %1765 = vset.pattern.permute.xlu0 0
    %1766 = vperm.xlu0 %1765, %v1697
    %v1767 = vpop.permute.xlu0 %1766
    %1768 = vset.pattern.permute.xlu0 0
    %1769 = vperm.xlu0 %1768, %v1698
    %v1770 = vpop.permute.xlu0 %1769
    %1771 = vset.pattern.permute.xlu0 0
    %1772 = vperm.xlu0 %1771, %v1699
    %v1773 = vpop.permute.xlu0 %1772
    %1774 = vset.pattern.permute.xlu0 0
    %1775 = vperm.xlu0 %1774, %v1700
    %v1776 = vpop.permute.xlu0 %1775
    %1777 = vset.pattern.permute.xlu0 0
    %1778 = vperm.xlu0 %1777, %v1701
    %v1779 = vpop.permute.xlu0 %1778
    %1780 = vset.pattern.permute.xlu0 0
    %1781 = vperm.xlu0 %1780, %v1702
    %v1782 = vpop.permute.xlu0 %1781
    %1783 = vset.pattern.permute.xlu0 0
    %1784 = vperm.xlu0 %1783, %v1703
    %v1785 = vpop.permute.xlu0 %1784
    %1786 = vset.pattern.permute.xlu0 0
    %1787 = vperm.xlu0 %1786, %v1704
    %v1788 = vpop.permute.xlu0 %1787
    %1789 = vset.pattern.permute.xlu0 0
    %1790 = vperm.xlu0 %1789, %v1705
    %v1791 = vpop.permute.xlu0 %1790
    %1792 = vset.pattern.permute.xlu0 0
    %1793 = vperm.xlu0 %1792, %v1706
    %v1794 = vpop.permute.xlu0 %1793
    %1795 = vset.pattern.permute.xlu0 0
    %1796 = vperm.xlu0 %1795, %v1707
    %v1797 = vpop.permute.xlu0 %1796
    %1798 = vset.pattern.permute.xlu0 0
    %1799 = vperm.xlu0 %1798, %v1708
    %v1800 = vpop.permute.xlu0 %1799
    %1801 = vset.pattern.permute.xlu0 0
    %1802 = vperm.xlu0 %1801, %v1709
    %v1803 = vpop.permute.xlu0 %1802
    %1804 = vset.pattern.permute.xlu0 0
    %1805 = vperm.xlu0 %1804, %v1710
    %v1806 = vpop.permute.xlu0 %1805
    %1807 = vset.pattern.permute.xlu0 0
    %1808 = vperm.xlu0 %1807, %v1711
    %v1809 = vpop.permute.xlu0 %1808
    %1810 = vset.pattern.permute.xlu0 0
    %1811 = vperm.xlu0 %1810, %v1712
    %v1812 = vpop.permute.xlu0 %1811
    %1813 = vset.pattern.permute.xlu0 0
    %1814 = vperm.xlu0 %1813, %v1713
    %v1815 = vpop.permute.xlu0 %1814
    %1816 = vset.pattern.permute.xlu0 0
    %1817 = vperm.xlu0 %1816, %v1714
    %v1818 = vpop.permute.xlu0 %1817
    %1819 = vset.pattern.permute.xlu0 0
    %1820 = vperm.xlu0 %1819, %v1715
    %v1821 = vpop.permute.xlu0 %1820
    %1822 = vset.pattern.permute.xlu0 0
    %1823 = vperm.xlu0 %1822, %v1716
    %v1824 = vpop.permute.xlu0 %1823
    %1825 = vset.pattern.permute.xlu0 0
    %1826 = vperm.xlu0 %1825, %v1717
    %v1827 = vpop.permute.xlu0 %1826
    %1828 = vset.pattern.permute.xlu0 0
    %1829 = vperm.xlu0 %1828, %v1718
    %v1830 = vpop.permute.xlu0 %1829
    %1831 = vset.pattern.permute.xlu0 0
    %1832 = vperm.xlu0 %1831, %v1719
    %v1833 = vpop.permute.xlu0 %1832
    %1834 = vset.pattern.permute.xlu0 0
    %1835 = vperm.xlu0 %1834, %v1720
    %v1836 = vpop.permute.xlu0 %1835
    %1837 = vset.pattern.permute.xlu0 0
    %1838 = vperm.xlu0 %1837, %v1721
    %v1839 = vpop.permute.xlu0 %1838
    %1840 = vset.pattern.permute.xlu0 0
    %1841 = vperm.xlu0 %1840, %v1722
    %v1842 = vpop.permute.xlu0 %1841
    %1843 = vset.pattern.permute.xlu0 0
    %1844 = vperm.xlu0 %1843, %v1723
    %v1845 = vpop.permute.xlu0 %1844
    %1846 = vset.pattern.permute.xlu0 0
    %1847 = vperm.xlu0 %1846, %v1724
    %v1848 = vpop.permute.xlu0 %1847
    %1849 = vset.pattern.permute.xlu0 0
    %1850 = vperm.xlu0 %1849, %v1725
    %v1851 = vpop.permute.xlu0 %1850
    %1852 = vset.pattern.permute.xlu0 0
    %1853 = vperm.xlu0 %1852, %v1726
    %v1854 = vpop.permute.xlu0 %1853
    %v1855 = vlaneseq
    %v1856 = vand.u32 %v1855, 127
    %v1857 = vlaneseq
    %v1858 = vshrl.u32 %v1857, 7
    %v1859 = vsub.s32 %v1856, %v1858
    %v1860 = vrot.slane %v1761, %v1859
    %v1861 = vadd.s32 %v1856, 4294967288
    %v1862 = vlaneseq
    %v1863 = vshrl.u32 %v1862, 7
    %v1864 = vsub.s32 %v1861, %v1863
    %v1865 = vrot.slane %v1764, %v1864
    %vm1866 = vcmask 130112
    %v1867 = vsel %vm1866, %v1865, %v1860
    %v1868 = vlaneseq
    %v1869 = vshrl.u32 %v1868, 7
    %v1870 = vsub.s32 %v1856, %v1869
    %v1871 = vrot.slane %v1767, %v1870
    %v1872 = vlaneseq
    %v1873 = vshrl.u32 %v1872, 7
    %v1874 = vsub.s32 %v1861, %v1873
    %v1875 = vrot.slane %v1770, %v1874
    %v1876 = vsel %vm1866, %v1875, %v1871
    %v1877 = vlaneseq
    %v1878 = vshrl.u32 %v1877, 7
    %v1879 = vsub.s32 %v1856, %v1878
    %v1880 = vrot.slane %v1773, %v1879
    %v1881 = vlaneseq
    %v1882 = vshrl.u32 %v1881, 7
    %v1883 = vsub.s32 %v1861, %v1882
    %v1884 = vrot.slane %v1776, %v1883
    %v1885 = vsel %vm1866, %v1884, %v1880
    %v1886 = vlaneseq
    %v1887 = vshrl.u32 %v1886, 7
    %v1888 = vsub.s32 %v1856, %v1887
    %v1889 = vrot.slane %v1779, %v1888
    %v1890 = vlaneseq
    %v1891 = vshrl.u32 %v1890, 7
    %v1892 = vsub.s32 %v1861, %v1891
    %v1893 = vrot.slane %v1782, %v1892
    %v1894 = vsel %vm1866, %v1893, %v1889
    %v1895 = vlaneseq
    %v1896 = vshrl.u32 %v1895, 7
    %v1897 = vsub.s32 %v1856, %v1896
    %v1898 = vrot.slane %v1785, %v1897
    %v1899 = vlaneseq
    %v1900 = vshrl.u32 %v1899, 7
    %v1901 = vsub.s32 %v1861, %v1900
    %v1902 = vrot.slane %v1788, %v1901
    %v1903 = vsel %vm1866, %v1902, %v1898
    %v1904 = vlaneseq
    %v1905 = vshrl.u32 %v1904, 7
    %v1906 = vsub.s32 %v1856, %v1905
    %v1907 = vrot.slane %v1791, %v1906
    %v1908 = vlaneseq
    %v1909 = vshrl.u32 %v1908, 7
    %v1910 = vsub.s32 %v1861, %v1909
    %v1911 = vrot.slane %v1794, %v1910
    %v1912 = vsel %vm1866, %v1911, %v1907
    %v1913 = vlaneseq
    %v1914 = vshrl.u32 %v1913, 7
    %v1915 = vsub.s32 %v1856, %v1914
    %v1916 = vrot.slane %v1797, %v1915
    %v1917 = vlaneseq
    %v1918 = vshrl.u32 %v1917, 7
    %v1919 = vsub.s32 %v1861, %v1918
    %v1920 = vrot.slane %v1800, %v1919
    %v1921 = vsel %vm1866, %v1920, %v1916
    %v1922 = vlaneseq
    %v1923 = vshrl.u32 %v1922, 7
    %v1924 = vsub.s32 %v1856, %v1923
    %v1925 = vrot.slane %v1803, %v1924
    %v1926 = vlaneseq
    %v1927 = vshrl.u32 %v1926, 7
    %v1928 = vsub.s32 %v1861, %v1927
    %v1929 = vrot.slane %v1806, %v1928
    %v1930 = vsel %vm1866, %v1929, %v1925
    %v1931 = vlaneseq
    %v1932 = vshrl.u32 %v1931, 7
    %v1933 = vsub.s32 %v1856, %v1932
    %v1934 = vrot.slane %v1809, %v1933
    %v1935 = vlaneseq
    %v1936 = vshrl.u32 %v1935, 7
    %v1937 = vsub.s32 %v1861, %v1936
    %v1938 = vrot.slane %v1812, %v1937
    %v1939 = vsel %vm1866, %v1938, %v1934
    %v1940 = vlaneseq
    %v1941 = vshrl.u32 %v1940, 7
    %v1942 = vsub.s32 %v1856, %v1941
    %v1943 = vrot.slane %v1815, %v1942
    %v1944 = vlaneseq
    %v1945 = vshrl.u32 %v1944, 7
    %v1946 = vsub.s32 %v1861, %v1945
    %v1947 = vrot.slane %v1818, %v1946
    %v1948 = vsel %vm1866, %v1947, %v1943
    %v1949 = vlaneseq
    %v1950 = vshrl.u32 %v1949, 7
    %v1951 = vsub.s32 %v1856, %v1950
    %v1952 = vrot.slane %v1821, %v1951
    %v1953 = vlaneseq
    %v1954 = vshrl.u32 %v1953, 7
    %v1955 = vsub.s32 %v1861, %v1954
    %v1956 = vrot.slane %v1824, %v1955
    %v1957 = vsel %vm1866, %v1956, %v1952
    %v1958 = vlaneseq
    %v1959 = vshrl.u32 %v1958, 7
    %v1960 = vsub.s32 %v1856, %v1959
    %v1961 = vrot.slane %v1827, %v1960
    %v1962 = vlaneseq
    %v1963 = vshrl.u32 %v1962, 7
    %v1964 = vsub.s32 %v1861, %v1963
    %v1965 = vrot.slane %v1830, %v1964
    %v1966 = vsel %vm1866, %v1965, %v1961
    %v1967 = vlaneseq
    %v1968 = vshrl.u32 %v1967, 7
    %v1969 = vsub.s32 %v1856, %v1968
    %v1970 = vrot.slane %v1833, %v1969
    %v1971 = vlaneseq
    %v1972 = vshrl.u32 %v1971, 7
    %v1973 = vsub.s32 %v1861, %v1972
    %v1974 = vrot.slane %v1836, %v1973
    %v1975 = vsel %vm1866, %v1974, %v1970
    %v1976 = vlaneseq
    %v1977 = vshrl.u32 %v1976, 7
    %v1978 = vsub.s32 %v1856, %v1977
    %v1979 = vrot.slane %v1839, %v1978
    %v1980 = vlaneseq
    %v1981 = vshrl.u32 %v1980, 7
    %v1982 = vsub.s32 %v1861, %v1981
    %v1983 = vrot.slane %v1842, %v1982
    %v1984 = vsel %vm1866, %v1983, %v1979
    %v1985 = vlaneseq
    %v1986 = vshrl.u32 %v1985, 7
    %v1987 = vsub.s32 %v1856, %v1986
    %v1988 = vrot.slane %v1845, %v1987
    %v1989 = vlaneseq
    %v1990 = vshrl.u32 %v1989, 7
    %v1991 = vsub.s32 %v1861, %v1990
    %v1992 = vrot.slane %v1848, %v1991
    %v1993 = vsel %vm1866, %v1992, %v1988
    %v1994 = vlaneseq
    %v1995 = vshrl.u32 %v1994, 7
    %v1996 = vsub.s32 %v1856, %v1995
    %v1997 = vrot.slane %v1851, %v1996
    %v1998 = vlaneseq
    %v1999 = vshrl.u32 %v1998, 7
    %v2000 = vsub.s32 %v1861, %v1999
    %v2001 = vrot.slane %v1854, %v2000
    %v2002 = vsel %vm1866, %v2001, %v1997
    %vm2003 = vcmask 1041409
    %v2004 = vsel %vm2003, %v1876, %v1867
    %vm2005 = vcmask 1042434
    %v2006 = vsel %vm2005, %v1885, %v2004
    %vm2007 = vcmask 1043459
    %v2008 = vsel %vm2007, %v1894, %v2006
    %vm2009 = vcmask 1044484
    %v2010 = vsel %vm2009, %v1903, %v2008
    %vm2011 = vcmask 1045509
    %v2012 = vsel %vm2011, %v1912, %v2010
    %vm2013 = vcmask 1046534
    %v2014 = vsel %vm2013, %v1921, %v2012
    %vm2015 = vcmask 1047559
    %v2016 = vsel %vm2015, %v1930, %v2014
    %v2017 = vsel %vm2003, %v1948, %v1939
    %v2018 = vsel %vm2005, %v1957, %v2017
    %v2019 = vsel %vm2007, %v1966, %v2018
    %v2020 = vsel %vm2009, %v1975, %v2019
    %v2021 = vsel %vm2011, %v1984, %v2020
    %v2022 = vsel %vm2013, %v1993, %v2021
    %v2023 = vsel %vm2015, %v2002, %v2022
    %v2026 = vsel %vm153, %v2016, -inf
    %2027 = vmax.xlane.f32.xlu0 %v2026
    %v2028 = vpop.xlane.xlu0 %2027
    %v2029 = vsel %vm153, %v2023, -inf
    %2030 = vmax.xlane.f32.xlu0 %v2029
    %v2031 = vpop.xlane.xlu0 %2030
    %v2034 = vlaneseq
    %v2035 = vshrl.u32 %v2034, 7
    %v2036 = vsub.s32 0, %v2035
    %v2037 = vrot.slane %v2028, %v2036
    %v2038 = vlaneseq
    %v2039 = vshrl.u32 %v2038, 7
    %v2040 = vsub.s32 1, %v2039
    %v2041 = vrot.slane %v2028, %v2040
    %v2042 = vlaneseq
    %v2043 = vshrl.u32 %v2042, 7
    %v2044 = vsub.s32 2, %v2043
    %v2045 = vrot.slane %v2028, %v2044
    %v2046 = vlaneseq
    %v2047 = vshrl.u32 %v2046, 7
    %v2048 = vsub.s32 3, %v2047
    %v2049 = vrot.slane %v2028, %v2048
    %v2050 = vlaneseq
    %v2051 = vshrl.u32 %v2050, 7
    %v2052 = vsub.s32 4, %v2051
    %v2053 = vrot.slane %v2028, %v2052
    %v2054 = vlaneseq
    %v2055 = vshrl.u32 %v2054, 7
    %v2056 = vsub.s32 5, %v2055
    %v2057 = vrot.slane %v2028, %v2056
    %v2058 = vlaneseq
    %v2059 = vshrl.u32 %v2058, 7
    %v2060 = vsub.s32 6, %v2059
    %v2061 = vrot.slane %v2028, %v2060
    %v2062 = vlaneseq
    %v2063 = vshrl.u32 %v2062, 7
    %v2064 = vsub.s32 7, %v2063
    %v2065 = vrot.slane %v2028, %v2064
    %v2066 = vlaneseq
    %v2067 = vshrl.u32 %v2066, 7
    %v2068 = vsub.s32 0, %v2067
    %v2069 = vrot.slane %v2031, %v2068
    %v2070 = vlaneseq
    %v2071 = vshrl.u32 %v2070, 7
    %v2072 = vsub.s32 1, %v2071
    %v2073 = vrot.slane %v2031, %v2072
    %v2074 = vlaneseq
    %v2075 = vshrl.u32 %v2074, 7
    %v2076 = vsub.s32 2, %v2075
    %v2077 = vrot.slane %v2031, %v2076
    %v2078 = vlaneseq
    %v2079 = vshrl.u32 %v2078, 7
    %v2080 = vsub.s32 3, %v2079
    %v2081 = vrot.slane %v2031, %v2080
    %v2082 = vlaneseq
    %v2083 = vshrl.u32 %v2082, 7
    %v2084 = vsub.s32 4, %v2083
    %v2085 = vrot.slane %v2031, %v2084
    %v2086 = vlaneseq
    %v2087 = vshrl.u32 %v2086, 7
    %v2088 = vsub.s32 5, %v2087
    %v2089 = vrot.slane %v2031, %v2088
    %v2090 = vlaneseq
    %v2091 = vshrl.u32 %v2090, 7
    %v2092 = vsub.s32 6, %v2091
    %v2093 = vrot.slane %v2031, %v2092
    %v2094 = vlaneseq
    %v2095 = vshrl.u32 %v2094, 7
    %v2096 = vsub.s32 7, %v2095
    %v2097 = vrot.slane %v2031, %v2096
    %v2114 = vsub.f32 %v1695, %v2037
    %v2115 = vsub.f32 %v1696, %v2037
    %v2116 = vsub.f32 %v1697, %v2041
    %v2117 = vsub.f32 %v1698, %v2041
    %v2118 = vsub.f32 %v1699, %v2045
    %v2119 = vsub.f32 %v1700, %v2045
    %v2120 = vsub.f32 %v1701, %v2049
    %v2121 = vsub.f32 %v1702, %v2049
    %v2122 = vsub.f32 %v1703, %v2053
    %v2123 = vsub.f32 %v1704, %v2053
    %v2124 = vsub.f32 %v1705, %v2057
    %v2125 = vsub.f32 %v1706, %v2057
    %v2126 = vsub.f32 %v1707, %v2061
    %v2127 = vsub.f32 %v1708, %v2061
    %v2128 = vsub.f32 %v1709, %v2065
    %v2129 = vsub.f32 %v1710, %v2065
    %v2130 = vsub.f32 %v1711, %v2069
    %v2131 = vsub.f32 %v1712, %v2069
    %v2132 = vsub.f32 %v1713, %v2073
    %v2133 = vsub.f32 %v1714, %v2073
    %v2134 = vsub.f32 %v1715, %v2077
    %v2135 = vsub.f32 %v1716, %v2077
    %v2136 = vsub.f32 %v1717, %v2081
    %v2137 = vsub.f32 %v1718, %v2081
    %v2138 = vsub.f32 %v1719, %v2085
    %v2139 = vsub.f32 %v1720, %v2085
    %v2140 = vsub.f32 %v1721, %v2089
    %v2141 = vsub.f32 %v1722, %v2089
    %v2142 = vsub.f32 %v1723, %v2093
    %v2143 = vsub.f32 %v1724, %v2093
    %v2144 = vsub.f32 %v1725, %v2097
    %v2145 = vsub.f32 %v1726, %v2097
    %v2146 = vmul.f32 %v2114, 1.442695
    %v2147 = vpow.pop %v2146
    %v2148 = vmul.f32 %v2115, 1.442695
    %v2149 = vpow.pop %v2148
    %v2150 = vmul.f32 %v2116, 1.442695
    %v2151 = vpow.pop %v2150
    %v2152 = vmul.f32 %v2117, 1.442695
    %v2153 = vpow.pop %v2152
    %v2154 = vmul.f32 %v2118, 1.442695
    %v2155 = vpow.pop %v2154
    %v2156 = vmul.f32 %v2119, 1.442695
    %v2157 = vpow.pop %v2156
    %v2158 = vmul.f32 %v2120, 1.442695
    %v2159 = vpow.pop %v2158
    %v2160 = vmul.f32 %v2121, 1.442695
    %v2161 = vpow.pop %v2160
    %v2162 = vmul.f32 %v2122, 1.442695
    %v2163 = vpow.pop %v2162
    %v2164 = vmul.f32 %v2123, 1.442695
    %v2165 = vpow.pop %v2164
    %v2166 = vmul.f32 %v2124, 1.442695
    %v2167 = vpow.pop %v2166
    %v2168 = vmul.f32 %v2125, 1.442695
    %v2169 = vpow.pop %v2168
    %v2170 = vmul.f32 %v2126, 1.442695
    %v2171 = vpow.pop %v2170
    %v2172 = vmul.f32 %v2127, 1.442695
    %v2173 = vpow.pop %v2172
    %v2174 = vmul.f32 %v2128, 1.442695
    %v2175 = vpow.pop %v2174
    %v2176 = vmul.f32 %v2129, 1.442695
    %v2177 = vpow.pop %v2176
    %v2178 = vmul.f32 %v2130, 1.442695
    %v2179 = vpow.pop %v2178
    %v2180 = vmul.f32 %v2131, 1.442695
    %v2181 = vpow.pop %v2180
    %v2182 = vmul.f32 %v2132, 1.442695
    %v2183 = vpow.pop %v2182
    %v2184 = vmul.f32 %v2133, 1.442695
    %v2185 = vpow.pop %v2184
    %v2186 = vmul.f32 %v2134, 1.442695
    %v2187 = vpow.pop %v2186
    %v2188 = vmul.f32 %v2135, 1.442695
    %v2189 = vpow.pop %v2188
    %v2190 = vmul.f32 %v2136, 1.442695
    %v2191 = vpow.pop %v2190
    %v2192 = vmul.f32 %v2137, 1.442695
    %v2193 = vpow.pop %v2192
    %v2194 = vmul.f32 %v2138, 1.442695
    %v2195 = vpow.pop %v2194
    %v2196 = vmul.f32 %v2139, 1.442695
    %v2197 = vpow.pop %v2196
    %v2198 = vmul.f32 %v2140, 1.442695
    %v2199 = vpow.pop %v2198
    %v2200 = vmul.f32 %v2141, 1.442695
    %v2201 = vpow.pop %v2200
    %v2202 = vmul.f32 %v2142, 1.442695
    %v2203 = vpow.pop %v2202
    %v2204 = vmul.f32 %v2143, 1.442695
    %v2205 = vpow.pop %v2204
    %v2206 = vmul.f32 %v2144, 1.442695
    %v2207 = vpow.pop %v2206
    %v2208 = vmul.f32 %v2145, 1.442695
    %v2209 = vpow.pop %v2208
    %v2212 = vlaneseq
    %v2213 = vshrl.u32 %v2212, 7
    %v2214 = vsub.s32 0, %v2213
    %v2215 = vrot.slane %v118, %v2214
    %2217 = vbcast.lane.b32.xlu0 %v2215, 256
    %v2218 = vpop.permute.xlu0 %2217
    %s2220 = sor.u32 256, 8
    %2221 = vbcast.lane.b32.xlu0 %v2215, %s2220
    %v2222 = vpop.permute.xlu0 %2221
    %v2223 = vlaneseq
    %v2224 = vshrl.u32 %v2223, 7
    %v2225 = vsub.s32 1, %v2224
    %v2226 = vrot.slane %v118, %v2225
    %2228 = vbcast.lane.b32.xlu0 %v2226, 256
    %v2229 = vpop.permute.xlu0 %2228
    %s2231 = sor.u32 256, 8
    %2232 = vbcast.lane.b32.xlu0 %v2226, %s2231
    %v2233 = vpop.permute.xlu0 %2232
    %v2234 = vlaneseq
    %v2235 = vshrl.u32 %v2234, 7
    %v2236 = vsub.s32 2, %v2235
    %v2237 = vrot.slane %v118, %v2236
    %2239 = vbcast.lane.b32.xlu0 %v2237, 256
    %v2240 = vpop.permute.xlu0 %2239
    %s2242 = sor.u32 256, 8
    %2243 = vbcast.lane.b32.xlu0 %v2237, %s2242
    %v2244 = vpop.permute.xlu0 %2243
    %v2245 = vlaneseq
    %v2246 = vshrl.u32 %v2245, 7
    %v2247 = vsub.s32 3, %v2246
    %v2248 = vrot.slane %v118, %v2247
    %2250 = vbcast.lane.b32.xlu0 %v2248, 256
    %v2251 = vpop.permute.xlu0 %2250
    %s2253 = sor.u32 256, 8
    %2254 = vbcast.lane.b32.xlu0 %v2248, %s2253
    %v2255 = vpop.permute.xlu0 %2254
    %v2256 = vlaneseq
    %v2257 = vshrl.u32 %v2256, 7
    %v2258 = vsub.s32 4, %v2257
    %v2259 = vrot.slane %v118, %v2258
    %2261 = vbcast.lane.b32.xlu0 %v2259, 256
    %v2262 = vpop.permute.xlu0 %2261
    %s2264 = sor.u32 256, 8
    %2265 = vbcast.lane.b32.xlu0 %v2259, %s2264
    %v2266 = vpop.permute.xlu0 %2265
    %v2267 = vlaneseq
    %v2268 = vshrl.u32 %v2267, 7
    %v2269 = vsub.s32 5, %v2268
    %v2270 = vrot.slane %v118, %v2269
    %2272 = vbcast.lane.b32.xlu0 %v2270, 256
    %v2273 = vpop.permute.xlu0 %2272
    %s2275 = sor.u32 256, 8
    %2276 = vbcast.lane.b32.xlu0 %v2270, %s2275
    %v2277 = vpop.permute.xlu0 %2276
    %v2278 = vlaneseq
    %v2279 = vshrl.u32 %v2278, 7
    %v2280 = vsub.s32 6, %v2279
    %v2281 = vrot.slane %v118, %v2280
    %2283 = vbcast.lane.b32.xlu0 %v2281, 256
    %v2284 = vpop.permute.xlu0 %2283
    %s2286 = sor.u32 256, 8
    %2287 = vbcast.lane.b32.xlu0 %v2281, %s2286
    %v2288 = vpop.permute.xlu0 %2287
    %v2289 = vlaneseq
    %v2290 = vshrl.u32 %v2289, 7
    %v2291 = vsub.s32 7, %v2290
    %v2292 = vrot.slane %v118, %v2291
    %2294 = vbcast.lane.b32.xlu0 %v2292, 256
    %v2295 = vpop.permute.xlu0 %2294
    %s2297 = sor.u32 256, 8
    %2298 = vbcast.lane.b32.xlu0 %v2292, %s2297
    %v2299 = vpop.permute.xlu0 %2298
    %v2300 = vlaneseq
    %v2301 = vshrl.u32 %v2300, 7
    %v2302 = vsub.s32 0, %v2301
    %v2303 = vrot.slane %v119, %v2302
    %2305 = vbcast.lane.b32.xlu0 %v2303, 256
    %v2306 = vpop.permute.xlu0 %2305
    %s2308 = sor.u32 256, 8
    %2309 = vbcast.lane.b32.xlu0 %v2303, %s2308
    %v2310 = vpop.permute.xlu0 %2309
    %v2311 = vlaneseq
    %v2312 = vshrl.u32 %v2311, 7
    %v2313 = vsub.s32 1, %v2312
    %v2314 = vrot.slane %v119, %v2313
    %2316 = vbcast.lane.b32.xlu0 %v2314, 256
    %v2317 = vpop.permute.xlu0 %2316
    %s2319 = sor.u32 256, 8
    %2320 = vbcast.lane.b32.xlu0 %v2314, %s2319
    %v2321 = vpop.permute.xlu0 %2320
    %v2322 = vlaneseq
    %v2323 = vshrl.u32 %v2322, 7
    %v2324 = vsub.s32 2, %v2323
    %v2325 = vrot.slane %v119, %v2324
    %2327 = vbcast.lane.b32.xlu0 %v2325, 256
    %v2328 = vpop.permute.xlu0 %2327
    %s2330 = sor.u32 256, 8
    %2331 = vbcast.lane.b32.xlu0 %v2325, %s2330
    %v2332 = vpop.permute.xlu0 %2331
    %v2333 = vlaneseq
    %v2334 = vshrl.u32 %v2333, 7
    %v2335 = vsub.s32 3, %v2334
    %v2336 = vrot.slane %v119, %v2335
    %2338 = vbcast.lane.b32.xlu0 %v2336, 256
    %v2339 = vpop.permute.xlu0 %2338
    %s2341 = sor.u32 256, 8
    %2342 = vbcast.lane.b32.xlu0 %v2336, %s2341
    %v2343 = vpop.permute.xlu0 %2342
    %v2344 = vlaneseq
    %v2345 = vshrl.u32 %v2344, 7
    %v2346 = vsub.s32 4, %v2345
    %v2347 = vrot.slane %v119, %v2346
    %2349 = vbcast.lane.b32.xlu0 %v2347, 256
    %v2350 = vpop.permute.xlu0 %2349
    %s2352 = sor.u32 256, 8
    %2353 = vbcast.lane.b32.xlu0 %v2347, %s2352
    %v2354 = vpop.permute.xlu0 %2353
    %v2355 = vlaneseq
    %v2356 = vshrl.u32 %v2355, 7
    %v2357 = vsub.s32 5, %v2356
    %v2358 = vrot.slane %v119, %v2357
    %2360 = vbcast.lane.b32.xlu0 %v2358, 256
    %v2361 = vpop.permute.xlu0 %2360
    %s2363 = sor.u32 256, 8
    %2364 = vbcast.lane.b32.xlu0 %v2358, %s2363
    %v2365 = vpop.permute.xlu0 %2364
    %v2366 = vlaneseq
    %v2367 = vshrl.u32 %v2366, 7
    %v2368 = vsub.s32 6, %v2367
    %v2369 = vrot.slane %v119, %v2368
    %2371 = vbcast.lane.b32.xlu0 %v2369, 256
    %v2372 = vpop.permute.xlu0 %2371
    %s2374 = sor.u32 256, 8
    %2375 = vbcast.lane.b32.xlu0 %v2369, %s2374
    %v2376 = vpop.permute.xlu0 %2375
    %v2377 = vlaneseq
    %v2378 = vshrl.u32 %v2377, 7
    %v2379 = vsub.s32 7, %v2378
    %v2380 = vrot.slane %v119, %v2379
    %2382 = vbcast.lane.b32.xlu0 %v2380, 256
    %v2383 = vpop.permute.xlu0 %2382
    %s2385 = sor.u32 256, 8
    %2386 = vbcast.lane.b32.xlu0 %v2380, %s2385
    %v2387 = vpop.permute.xlu0 %2386
    %v2420 = vmul.f32 %v2147, %v2218
    %v2421 = vmul.f32 %v2149, %v2222
    %v2422 = vmul.f32 %v2151, %v2229
    %v2423 = vmul.f32 %v2153, %v2233
    %v2424 = vmul.f32 %v2155, %v2240
    %v2425 = vmul.f32 %v2157, %v2244
    %v2426 = vmul.f32 %v2159, %v2251
    %v2427 = vmul.f32 %v2161, %v2255
    %v2428 = vmul.f32 %v2163, %v2262
    %v2429 = vmul.f32 %v2165, %v2266
    %v2430 = vmul.f32 %v2167, %v2273
    %v2431 = vmul.f32 %v2169, %v2277
    %v2432 = vmul.f32 %v2171, %v2284
    %v2433 = vmul.f32 %v2173, %v2288
    %v2434 = vmul.f32 %v2175, %v2295
    %v2435 = vmul.f32 %v2177, %v2299
    %v2436 = vmul.f32 %v2179, %v2306
    %v2437 = vmul.f32 %v2181, %v2310
    %v2438 = vmul.f32 %v2183, %v2317
    %v2439 = vmul.f32 %v2185, %v2321
    %v2440 = vmul.f32 %v2187, %v2328
    %v2441 = vmul.f32 %v2189, %v2332
    %v2442 = vmul.f32 %v2191, %v2339
    %v2443 = vmul.f32 %v2193, %v2343
    %v2444 = vmul.f32 %v2195, %v2350
    %v2445 = vmul.f32 %v2197, %v2354
    %v2446 = vmul.f32 %v2199, %v2361
    %v2447 = vmul.f32 %v2201, %v2365
    %v2448 = vmul.f32 %v2203, %v2372
    %v2449 = vmul.f32 %v2205, %v2376
    %v2450 = vmul.f32 %v2207, %v2383
    %v2451 = vmul.f32 %v2209, %v2387
    %2484 = vset.pattern.permute.xlu0 0
    %2485 = vperm.xlu0 %2484, %v2420
    %v2486 = vpop.permute.xlu0 %2485
    %2487 = vset.pattern.permute.xlu0 0
    %2488 = vperm.xlu0 %2487, %v2421
    %v2489 = vpop.permute.xlu0 %2488
    %2490 = vset.pattern.permute.xlu0 0
    %2491 = vperm.xlu0 %2490, %v2422
    %v2492 = vpop.permute.xlu0 %2491
    %2493 = vset.pattern.permute.xlu0 0
    %2494 = vperm.xlu0 %2493, %v2423
    %v2495 = vpop.permute.xlu0 %2494
    %2496 = vset.pattern.permute.xlu0 0
    %2497 = vperm.xlu0 %2496, %v2424
    %v2498 = vpop.permute.xlu0 %2497
    %2499 = vset.pattern.permute.xlu0 0
    %2500 = vperm.xlu0 %2499, %v2425
    %v2501 = vpop.permute.xlu0 %2500
    %2502 = vset.pattern.permute.xlu0 0
    %2503 = vperm.xlu0 %2502, %v2426
    %v2504 = vpop.permute.xlu0 %2503
    %2505 = vset.pattern.permute.xlu0 0
    %2506 = vperm.xlu0 %2505, %v2427
    %v2507 = vpop.permute.xlu0 %2506
    %2508 = vset.pattern.permute.xlu0 0
    %2509 = vperm.xlu0 %2508, %v2428
    %v2510 = vpop.permute.xlu0 %2509
    %2511 = vset.pattern.permute.xlu0 0
    %2512 = vperm.xlu0 %2511, %v2429
    %v2513 = vpop.permute.xlu0 %2512
    %2514 = vset.pattern.permute.xlu0 0
    %2515 = vperm.xlu0 %2514, %v2430
    %v2516 = vpop.permute.xlu0 %2515
    %2517 = vset.pattern.permute.xlu0 0
    %2518 = vperm.xlu0 %2517, %v2431
    %v2519 = vpop.permute.xlu0 %2518
    %2520 = vset.pattern.permute.xlu0 0
    %2521 = vperm.xlu0 %2520, %v2432
    %v2522 = vpop.permute.xlu0 %2521
    %2523 = vset.pattern.permute.xlu0 0
    %2524 = vperm.xlu0 %2523, %v2433
    %v2525 = vpop.permute.xlu0 %2524
    %2526 = vset.pattern.permute.xlu0 0
    %2527 = vperm.xlu0 %2526, %v2434
    %v2528 = vpop.permute.xlu0 %2527
    %2529 = vset.pattern.permute.xlu0 0
    %2530 = vperm.xlu0 %2529, %v2435
    %v2531 = vpop.permute.xlu0 %2530
    %2532 = vset.pattern.permute.xlu0 0
    %2533 = vperm.xlu0 %2532, %v2436
    %v2534 = vpop.permute.xlu0 %2533
    %2535 = vset.pattern.permute.xlu0 0
    %2536 = vperm.xlu0 %2535, %v2437
    %v2537 = vpop.permute.xlu0 %2536
    %2538 = vset.pattern.permute.xlu0 0
    %2539 = vperm.xlu0 %2538, %v2438
    %v2540 = vpop.permute.xlu0 %2539
    %2541 = vset.pattern.permute.xlu0 0
    %2542 = vperm.xlu0 %2541, %v2439
    %v2543 = vpop.permute.xlu0 %2542
    %2544 = vset.pattern.permute.xlu0 0
    %2545 = vperm.xlu0 %2544, %v2440
    %v2546 = vpop.permute.xlu0 %2545
    %2547 = vset.pattern.permute.xlu0 0
    %2548 = vperm.xlu0 %2547, %v2441
    %v2549 = vpop.permute.xlu0 %2548
    %2550 = vset.pattern.permute.xlu0 0
    %2551 = vperm.xlu0 %2550, %v2442
    %v2552 = vpop.permute.xlu0 %2551
    %2553 = vset.pattern.permute.xlu0 0
    %2554 = vperm.xlu0 %2553, %v2443
    %v2555 = vpop.permute.xlu0 %2554
    %2556 = vset.pattern.permute.xlu0 0
    %2557 = vperm.xlu0 %2556, %v2444
    %v2558 = vpop.permute.xlu0 %2557
    %2559 = vset.pattern.permute.xlu0 0
    %2560 = vperm.xlu0 %2559, %v2445
    %v2561 = vpop.permute.xlu0 %2560
    %2562 = vset.pattern.permute.xlu0 0
    %2563 = vperm.xlu0 %2562, %v2446
    %v2564 = vpop.permute.xlu0 %2563
    %2565 = vset.pattern.permute.xlu0 0
    %2566 = vperm.xlu0 %2565, %v2447
    %v2567 = vpop.permute.xlu0 %2566
    %2568 = vset.pattern.permute.xlu0 0
    %2569 = vperm.xlu0 %2568, %v2448
    %v2570 = vpop.permute.xlu0 %2569
    %2571 = vset.pattern.permute.xlu0 0
    %2572 = vperm.xlu0 %2571, %v2449
    %v2573 = vpop.permute.xlu0 %2572
    %2574 = vset.pattern.permute.xlu0 0
    %2575 = vperm.xlu0 %2574, %v2450
    %v2576 = vpop.permute.xlu0 %2575
    %2577 = vset.pattern.permute.xlu0 0
    %2578 = vperm.xlu0 %2577, %v2451
    %v2579 = vpop.permute.xlu0 %2578
    %v2580 = vlaneseq
    %v2581 = vshrl.u32 %v2580, 7
    %v2582 = vsub.s32 %v1856, %v2581
    %v2583 = vrot.slane %v2486, %v2582
    %v2584 = vlaneseq
    %v2585 = vshrl.u32 %v2584, 7
    %v2586 = vsub.s32 %v1861, %v2585
    %v2587 = vrot.slane %v2489, %v2586
    %v2588 = vsel %vm1866, %v2587, %v2583
    %v2589 = vlaneseq
    %v2590 = vshrl.u32 %v2589, 7
    %v2591 = vsub.s32 %v1856, %v2590
    %v2592 = vrot.slane %v2492, %v2591
    %v2593 = vlaneseq
    %v2594 = vshrl.u32 %v2593, 7
    %v2595 = vsub.s32 %v1861, %v2594
    %v2596 = vrot.slane %v2495, %v2595
    %v2597 = vsel %vm1866, %v2596, %v2592
    %v2598 = vlaneseq
    %v2599 = vshrl.u32 %v2598, 7
    %v2600 = vsub.s32 %v1856, %v2599
    %v2601 = vrot.slane %v2498, %v2600
    %v2602 = vlaneseq
    %v2603 = vshrl.u32 %v2602, 7
    %v2604 = vsub.s32 %v1861, %v2603
    %v2605 = vrot.slane %v2501, %v2604
    %v2606 = vsel %vm1866, %v2605, %v2601
    %v2607 = vlaneseq
    %v2608 = vshrl.u32 %v2607, 7
    %v2609 = vsub.s32 %v1856, %v2608
    %v2610 = vrot.slane %v2504, %v2609
    %v2611 = vlaneseq
    %v2612 = vshrl.u32 %v2611, 7
    %v2613 = vsub.s32 %v1861, %v2612
    %v2614 = vrot.slane %v2507, %v2613
    %v2615 = vsel %vm1866, %v2614, %v2610
    %v2616 = vlaneseq
    %v2617 = vshrl.u32 %v2616, 7
    %v2618 = vsub.s32 %v1856, %v2617
    %v2619 = vrot.slane %v2510, %v2618
    %v2620 = vlaneseq
    %v2621 = vshrl.u32 %v2620, 7
    %v2622 = vsub.s32 %v1861, %v2621
    %v2623 = vrot.slane %v2513, %v2622
    %v2624 = vsel %vm1866, %v2623, %v2619
    %v2625 = vlaneseq
    %v2626 = vshrl.u32 %v2625, 7
    %v2627 = vsub.s32 %v1856, %v2626
    %v2628 = vrot.slane %v2516, %v2627
    %v2629 = vlaneseq
    %v2630 = vshrl.u32 %v2629, 7
    %v2631 = vsub.s32 %v1861, %v2630
    %v2632 = vrot.slane %v2519, %v2631
    %v2633 = vsel %vm1866, %v2632, %v2628
    %v2634 = vlaneseq
    %v2635 = vshrl.u32 %v2634, 7
    %v2636 = vsub.s32 %v1856, %v2635
    %v2637 = vrot.slane %v2522, %v2636
    %v2638 = vlaneseq
    %v2639 = vshrl.u32 %v2638, 7
    %v2640 = vsub.s32 %v1861, %v2639
    %v2641 = vrot.slane %v2525, %v2640
    %v2642 = vsel %vm1866, %v2641, %v2637
    %v2643 = vlaneseq
    %v2644 = vshrl.u32 %v2643, 7
    %v2645 = vsub.s32 %v1856, %v2644
    %v2646 = vrot.slane %v2528, %v2645
    %v2647 = vlaneseq
    %v2648 = vshrl.u32 %v2647, 7
    %v2649 = vsub.s32 %v1861, %v2648
    %v2650 = vrot.slane %v2531, %v2649
    %v2651 = vsel %vm1866, %v2650, %v2646
    %v2652 = vlaneseq
    %v2653 = vshrl.u32 %v2652, 7
    %v2654 = vsub.s32 %v1856, %v2653
    %v2655 = vrot.slane %v2534, %v2654
    %v2656 = vlaneseq
    %v2657 = vshrl.u32 %v2656, 7
    %v2658 = vsub.s32 %v1861, %v2657
    %v2659 = vrot.slane %v2537, %v2658
    %v2660 = vsel %vm1866, %v2659, %v2655
    %v2661 = vlaneseq
    %v2662 = vshrl.u32 %v2661, 7
    %v2663 = vsub.s32 %v1856, %v2662
    %v2664 = vrot.slane %v2540, %v2663
    %v2665 = vlaneseq
    %v2666 = vshrl.u32 %v2665, 7
    %v2667 = vsub.s32 %v1861, %v2666
    %v2668 = vrot.slane %v2543, %v2667
    %v2669 = vsel %vm1866, %v2668, %v2664
    %v2670 = vlaneseq
    %v2671 = vshrl.u32 %v2670, 7
    %v2672 = vsub.s32 %v1856, %v2671
    %v2673 = vrot.slane %v2546, %v2672
    %v2674 = vlaneseq
    %v2675 = vshrl.u32 %v2674, 7
    %v2676 = vsub.s32 %v1861, %v2675
    %v2677 = vrot.slane %v2549, %v2676
    %v2678 = vsel %vm1866, %v2677, %v2673
    %v2679 = vlaneseq
    %v2680 = vshrl.u32 %v2679, 7
    %v2681 = vsub.s32 %v1856, %v2680
    %v2682 = vrot.slane %v2552, %v2681
    %v2683 = vlaneseq
    %v2684 = vshrl.u32 %v2683, 7
    %v2685 = vsub.s32 %v1861, %v2684
    %v2686 = vrot.slane %v2555, %v2685
    %v2687 = vsel %vm1866, %v2686, %v2682
    %v2688 = vlaneseq
    %v2689 = vshrl.u32 %v2688, 7
    %v2690 = vsub.s32 %v1856, %v2689
    %v2691 = vrot.slane %v2558, %v2690
    %v2692 = vlaneseq
    %v2693 = vshrl.u32 %v2692, 7
    %v2694 = vsub.s32 %v1861, %v2693
    %v2695 = vrot.slane %v2561, %v2694
    %v2696 = vsel %vm1866, %v2695, %v2691
    %v2697 = vlaneseq
    %v2698 = vshrl.u32 %v2697, 7
    %v2699 = vsub.s32 %v1856, %v2698
    %v2700 = vrot.slane %v2564, %v2699
    %v2701 = vlaneseq
    %v2702 = vshrl.u32 %v2701, 7
    %v2703 = vsub.s32 %v1861, %v2702
    %v2704 = vrot.slane %v2567, %v2703
    %v2705 = vsel %vm1866, %v2704, %v2700
    %v2706 = vlaneseq
    %v2707 = vshrl.u32 %v2706, 7
    %v2708 = vsub.s32 %v1856, %v2707
    %v2709 = vrot.slane %v2570, %v2708
    %v2710 = vlaneseq
    %v2711 = vshrl.u32 %v2710, 7
    %v2712 = vsub.s32 %v1861, %v2711
    %v2713 = vrot.slane %v2573, %v2712
    %v2714 = vsel %vm1866, %v2713, %v2709
    %v2715 = vlaneseq
    %v2716 = vshrl.u32 %v2715, 7
    %v2717 = vsub.s32 %v1856, %v2716
    %v2718 = vrot.slane %v2576, %v2717
    %v2719 = vlaneseq
    %v2720 = vshrl.u32 %v2719, 7
    %v2721 = vsub.s32 %v1861, %v2720
    %v2722 = vrot.slane %v2579, %v2721
    %v2723 = vsel %vm1866, %v2722, %v2718
    %v2724 = vsel %vm2003, %v2597, %v2588
    %v2725 = vsel %vm2005, %v2606, %v2724
    %v2726 = vsel %vm2007, %v2615, %v2725
    %v2727 = vsel %vm2009, %v2624, %v2726
    %v2728 = vsel %vm2011, %v2633, %v2727
    %v2729 = vsel %vm2013, %v2642, %v2728
    %v2730 = vsel %vm2015, %v2651, %v2729
    %v2731 = vsel %vm2003, %v2669, %v2660
    %v2732 = vsel %vm2005, %v2678, %v2731
    %v2733 = vsel %vm2007, %v2687, %v2732
    %v2734 = vsel %vm2009, %v2696, %v2733
    %v2735 = vsel %vm2011, %v2705, %v2734
    %v2736 = vsel %vm2013, %v2714, %v2735
    %v2737 = vsel %vm2015, %v2723, %v2736
    %v2740 = vsel %vm153, %v2730, 0.0
    %2741 = vadd.xlane.f32.xlu0 %v2740
    %v2742 = vpop.xlane.xlu0 %2741
    %v2743 = vsel %vm153, %v2737, 0.0
    %2744 = vadd.xlane.f32.xlu0 %v2743
    %v2745 = vpop.xlane.xlu0 %2744
    %v2746 = vadd.f32 %v2742, 1e-16
    %v2747 = vadd.f32 %v2745, 1e-16
    %v2748 = vrcp.pop %v2746
    %v2749 = vrcp.pop %v2747
    %v2752 = vlaneseq
    %v2753 = vshrl.u32 %v2752, 7
    %v2754 = vsub.s32 0, %v2753
    %v2755 = vrot.slane %v2748, %v2754
    %v2756 = vlaneseq
    %v2757 = vshrl.u32 %v2756, 7
    %v2758 = vsub.s32 1, %v2757
    %v2759 = vrot.slane %v2748, %v2758
    %v2760 = vlaneseq
    %v2761 = vshrl.u32 %v2760, 7
    %v2762 = vsub.s32 2, %v2761
    %v2763 = vrot.slane %v2748, %v2762
    %v2764 = vlaneseq
    %v2765 = vshrl.u32 %v2764, 7
    %v2766 = vsub.s32 3, %v2765
    %v2767 = vrot.slane %v2748, %v2766
    %v2768 = vlaneseq
    %v2769 = vshrl.u32 %v2768, 7
    %v2770 = vsub.s32 4, %v2769
    %v2771 = vrot.slane %v2748, %v2770
    %v2772 = vlaneseq
    %v2773 = vshrl.u32 %v2772, 7
    %v2774 = vsub.s32 5, %v2773
    %v2775 = vrot.slane %v2748, %v2774
    %v2776 = vlaneseq
    %v2777 = vshrl.u32 %v2776, 7
    %v2778 = vsub.s32 6, %v2777
    %v2779 = vrot.slane %v2748, %v2778
    %v2780 = vlaneseq
    %v2781 = vshrl.u32 %v2780, 7
    %v2782 = vsub.s32 7, %v2781
    %v2783 = vrot.slane %v2748, %v2782
    %v2784 = vlaneseq
    %v2785 = vshrl.u32 %v2784, 7
    %v2786 = vsub.s32 0, %v2785
    %v2787 = vrot.slane %v2749, %v2786
    %v2788 = vlaneseq
    %v2789 = vshrl.u32 %v2788, 7
    %v2790 = vsub.s32 1, %v2789
    %v2791 = vrot.slane %v2749, %v2790
    %v2792 = vlaneseq
    %v2793 = vshrl.u32 %v2792, 7
    %v2794 = vsub.s32 2, %v2793
    %v2795 = vrot.slane %v2749, %v2794
    %v2796 = vlaneseq
    %v2797 = vshrl.u32 %v2796, 7
    %v2798 = vsub.s32 3, %v2797
    %v2799 = vrot.slane %v2749, %v2798
    %v2800 = vlaneseq
    %v2801 = vshrl.u32 %v2800, 7
    %v2802 = vsub.s32 4, %v2801
    %v2803 = vrot.slane %v2749, %v2802
    %v2804 = vlaneseq
    %v2805 = vshrl.u32 %v2804, 7
    %v2806 = vsub.s32 5, %v2805
    %v2807 = vrot.slane %v2749, %v2806
    %v2808 = vlaneseq
    %v2809 = vshrl.u32 %v2808, 7
    %v2810 = vsub.s32 6, %v2809
    %v2811 = vrot.slane %v2749, %v2810
    %v2812 = vlaneseq
    %v2813 = vshrl.u32 %v2812, 7
    %v2814 = vsub.s32 7, %v2813
    %v2815 = vrot.slane %v2749, %v2814
    %v2832 = vmul.f32 %v2420, %v2755
    %v2833 = vmul.f32 %v2421, %v2755
    %v2834 = vmul.f32 %v2422, %v2759
    %v2835 = vmul.f32 %v2423, %v2759
    %v2836 = vmul.f32 %v2424, %v2763
    %v2837 = vmul.f32 %v2425, %v2763
    %v2838 = vmul.f32 %v2426, %v2767
    %v2839 = vmul.f32 %v2427, %v2767
    %v2840 = vmul.f32 %v2428, %v2771
    %v2841 = vmul.f32 %v2429, %v2771
    %v2842 = vmul.f32 %v2430, %v2775
    %v2843 = vmul.f32 %v2431, %v2775
    %v2844 = vmul.f32 %v2432, %v2779
    %v2845 = vmul.f32 %v2433, %v2779
    %v2846 = vmul.f32 %v2434, %v2783
    %v2847 = vmul.f32 %v2435, %v2783
    %v2848 = vmul.f32 %v2436, %v2787
    %v2849 = vmul.f32 %v2437, %v2787
    %v2850 = vmul.f32 %v2438, %v2791
    %v2851 = vmul.f32 %v2439, %v2791
    %v2852 = vmul.f32 %v2440, %v2795
    %v2853 = vmul.f32 %v2441, %v2795
    %v2854 = vmul.f32 %v2442, %v2799
    %v2855 = vmul.f32 %v2443, %v2799
    %v2856 = vmul.f32 %v2444, %v2803
    %v2857 = vmul.f32 %v2445, %v2803
    %v2858 = vmul.f32 %v2446, %v2807
    %v2859 = vmul.f32 %v2447, %v2807
    %v2860 = vmul.f32 %v2448, %v2811
    %v2861 = vmul.f32 %v2449, %v2811
    %v2862 = vmul.f32 %v2450, %v2815
    %v2863 = vmul.f32 %v2451, %v2815
    %2896 = vrot.lane.b32.xlu0 %v1356, 96
    %v2897 = vpop.permute.xlu0 %2896
    %2898 = vrot.lane.b32.xlu0 %v1357, 96
    %v2899 = vpop.permute.xlu0 %2898
    %2900 = vrot.lane.b32.xlu0 %v1358, 96
    %v2901 = vpop.permute.xlu0 %2900
    %2902 = vrot.lane.b32.xlu0 %v1359, 96
    %v2903 = vpop.permute.xlu0 %2902
    %2904 = vrot.lane.b32.xlu0 %v1360, 96
    %v2905 = vpop.permute.xlu0 %2904
    %2906 = vrot.lane.b32.xlu0 %v1361, 96
    %v2907 = vpop.permute.xlu0 %2906
    %2908 = vrot.lane.b32.xlu0 %v1362, 96
    %v2909 = vpop.permute.xlu0 %2908
    %2910 = vrot.lane.b32.xlu0 %v1363, 96
    %v2911 = vpop.permute.xlu0 %2910
    %2912 = vrot.lane.b32.xlu0 %v1364, 96
    %v2913 = vpop.permute.xlu0 %2912
    %2914 = vrot.lane.b32.xlu0 %v1365, 96
    %v2915 = vpop.permute.xlu0 %2914
    %2916 = vrot.lane.b32.xlu0 %v1366, 96
    %v2917 = vpop.permute.xlu0 %2916
    %2918 = vrot.lane.b32.xlu0 %v1367, 96
    %v2919 = vpop.permute.xlu0 %2918
    %2920 = vrot.lane.b32.xlu0 %v1368, 96
    %v2921 = vpop.permute.xlu0 %2920
    %2922 = vrot.lane.b32.xlu0 %v1369, 96
    %v2923 = vpop.permute.xlu0 %2922
    %2924 = vrot.lane.b32.xlu0 %v1370, 96
    %v2925 = vpop.permute.xlu0 %2924
    %2926 = vrot.lane.b32.xlu0 %v1371, 96
    %v2927 = vpop.permute.xlu0 %2926
    %2928 = vrot.lane.b32.xlu0 %v1372, 96
    %v2929 = vpop.permute.xlu0 %2928
    %2930 = vrot.lane.b32.xlu0 %v1373, 96
    %v2931 = vpop.permute.xlu0 %2930
    %2932 = vrot.lane.b32.xlu0 %v1374, 96
    %v2933 = vpop.permute.xlu0 %2932
    %2934 = vrot.lane.b32.xlu0 %v1375, 96
    %v2935 = vpop.permute.xlu0 %2934
    %2936 = vrot.lane.b32.xlu0 %v1376, 96
    %v2937 = vpop.permute.xlu0 %2936
    %2938 = vrot.lane.b32.xlu0 %v1377, 96
    %v2939 = vpop.permute.xlu0 %2938
    %2940 = vrot.lane.b32.xlu0 %v1378, 96
    %v2941 = vpop.permute.xlu0 %2940
    %2942 = vrot.lane.b32.xlu0 %v1379, 96
    %v2943 = vpop.permute.xlu0 %2942
    %2944 = vrot.lane.b32.xlu0 %v1380, 96
    %v2945 = vpop.permute.xlu0 %2944
    %2946 = vrot.lane.b32.xlu0 %v1381, 96
    %v2947 = vpop.permute.xlu0 %2946
    %2948 = vrot.lane.b32.xlu0 %v1382, 96
    %v2949 = vpop.permute.xlu0 %2948
    %2950 = vrot.lane.b32.xlu0 %v1383, 96
    %v2951 = vpop.permute.xlu0 %2950
    %2952 = vrot.lane.b32.xlu0 %v1384, 96
    %v2953 = vpop.permute.xlu0 %2952
    %2954 = vrot.lane.b32.xlu0 %v1385, 96
    %v2955 = vpop.permute.xlu0 %2954
    %2956 = vrot.lane.b32.xlu0 %v1386, 96
    %v2957 = vpop.permute.xlu0 %2956
    %2958 = vrot.lane.b32.xlu0 %v1387, 96
    %v2959 = vpop.permute.xlu0 %2958
    %v2992 = vsel %vm1388, %v2897, 0.0
    %2993 = vadd.xlane.f32.xlu0 %v2992
    %v2994 = vpop.xlane.xlu0 %2993
    %v2995 = vsel %vm1388, %v2899, 0.0
    %2996 = vadd.xlane.f32.xlu0 %v2995
    %v2997 = vpop.xlane.xlu0 %2996
    %v2998 = vsel %vm1388, %v2901, 0.0
    %2999 = vadd.xlane.f32.xlu0 %v2998
    %v3000 = vpop.xlane.xlu0 %2999
    %v3001 = vsel %vm1388, %v2903, 0.0
    %3002 = vadd.xlane.f32.xlu0 %v3001
    %v3003 = vpop.xlane.xlu0 %3002
    %v3004 = vsel %vm1388, %v2905, 0.0
    %3005 = vadd.xlane.f32.xlu0 %v3004
    %v3006 = vpop.xlane.xlu0 %3005
    %v3007 = vsel %vm1388, %v2907, 0.0
    %3008 = vadd.xlane.f32.xlu0 %v3007
    %v3009 = vpop.xlane.xlu0 %3008
    %v3010 = vsel %vm1388, %v2909, 0.0
    %3011 = vadd.xlane.f32.xlu0 %v3010
    %v3012 = vpop.xlane.xlu0 %3011
    %v3013 = vsel %vm1388, %v2911, 0.0
    %3014 = vadd.xlane.f32.xlu0 %v3013
    %v3015 = vpop.xlane.xlu0 %3014
    %v3016 = vsel %vm1388, %v2913, 0.0
    %3017 = vadd.xlane.f32.xlu0 %v3016
    %v3018 = vpop.xlane.xlu0 %3017
    %v3019 = vsel %vm1388, %v2915, 0.0
    %3020 = vadd.xlane.f32.xlu0 %v3019
    %v3021 = vpop.xlane.xlu0 %3020
    %v3022 = vsel %vm1388, %v2917, 0.0
    %3023 = vadd.xlane.f32.xlu0 %v3022
    %v3024 = vpop.xlane.xlu0 %3023
    %v3025 = vsel %vm1388, %v2919, 0.0
    %3026 = vadd.xlane.f32.xlu0 %v3025
    %v3027 = vpop.xlane.xlu0 %3026
    %v3028 = vsel %vm1388, %v2921, 0.0
    %3029 = vadd.xlane.f32.xlu0 %v3028
    %v3030 = vpop.xlane.xlu0 %3029
    %v3031 = vsel %vm1388, %v2923, 0.0
    %3032 = vadd.xlane.f32.xlu0 %v3031
    %v3033 = vpop.xlane.xlu0 %3032
    %v3034 = vsel %vm1388, %v2925, 0.0
    %3035 = vadd.xlane.f32.xlu0 %v3034
    %v3036 = vpop.xlane.xlu0 %3035
    %v3037 = vsel %vm1388, %v2927, 0.0
    %3038 = vadd.xlane.f32.xlu0 %v3037
    %v3039 = vpop.xlane.xlu0 %3038
    %v3040 = vsel %vm1388, %v2929, 0.0
    %3041 = vadd.xlane.f32.xlu0 %v3040
    %v3042 = vpop.xlane.xlu0 %3041
    %v3043 = vsel %vm1388, %v2931, 0.0
    %3044 = vadd.xlane.f32.xlu0 %v3043
    %v3045 = vpop.xlane.xlu0 %3044
    %v3046 = vsel %vm1388, %v2933, 0.0
    %3047 = vadd.xlane.f32.xlu0 %v3046
    %v3048 = vpop.xlane.xlu0 %3047
    %v3049 = vsel %vm1388, %v2935, 0.0
    %3050 = vadd.xlane.f32.xlu0 %v3049
    %v3051 = vpop.xlane.xlu0 %3050
    %v3052 = vsel %vm1388, %v2937, 0.0
    %3053 = vadd.xlane.f32.xlu0 %v3052
    %v3054 = vpop.xlane.xlu0 %3053
    %v3055 = vsel %vm1388, %v2939, 0.0
    %3056 = vadd.xlane.f32.xlu0 %v3055
    %v3057 = vpop.xlane.xlu0 %3056
    %v3058 = vsel %vm1388, %v2941, 0.0
    %3059 = vadd.xlane.f32.xlu0 %v3058
    %v3060 = vpop.xlane.xlu0 %3059
    %v3061 = vsel %vm1388, %v2943, 0.0
    %3062 = vadd.xlane.f32.xlu0 %v3061
    %v3063 = vpop.xlane.xlu0 %3062
    %v3064 = vsel %vm1388, %v2945, 0.0
    %3065 = vadd.xlane.f32.xlu0 %v3064
    %v3066 = vpop.xlane.xlu0 %3065
    %v3067 = vsel %vm1388, %v2947, 0.0
    %3068 = vadd.xlane.f32.xlu0 %v3067
    %v3069 = vpop.xlane.xlu0 %3068
    %v3070 = vsel %vm1388, %v2949, 0.0
    %3071 = vadd.xlane.f32.xlu0 %v3070
    %v3072 = vpop.xlane.xlu0 %3071
    %v3073 = vsel %vm1388, %v2951, 0.0
    %3074 = vadd.xlane.f32.xlu0 %v3073
    %v3075 = vpop.xlane.xlu0 %3074
    %v3076 = vsel %vm1388, %v2953, 0.0
    %3077 = vadd.xlane.f32.xlu0 %v3076
    %v3078 = vpop.xlane.xlu0 %3077
    %v3079 = vsel %vm1388, %v2955, 0.0
    %3080 = vadd.xlane.f32.xlu0 %v3079
    %v3081 = vpop.xlane.xlu0 %3080
    %v3082 = vsel %vm1388, %v2957, 0.0
    %3083 = vadd.xlane.f32.xlu0 %v3082
    %v3084 = vpop.xlane.xlu0 %3083
    %v3085 = vsel %vm1388, %v2959, 0.0
    %3086 = vadd.xlane.f32.xlu0 %v3085
    %v3087 = vpop.xlane.xlu0 %3086
    %v3088 = vadd.f32 %v2994, %v1493
    %v3089 = vadd.f32 %v2997, %v1497
    %v3090 = vadd.f32 %v3000, %v1504
    %v3091 = vadd.f32 %v3003, %v1508
    %v3092 = vadd.f32 %v3006, %v1515
    %v3093 = vadd.f32 %v3009, %v1519
    %v3094 = vadd.f32 %v3012, %v1526
    %v3095 = vadd.f32 %v3015, %v1530
    %v3096 = vadd.f32 %v3018, %v1537
    %v3097 = vadd.f32 %v3021, %v1541
    %v3098 = vadd.f32 %v3024, %v1548
    %v3099 = vadd.f32 %v3027, %v1552
    %v3100 = vadd.f32 %v3030, %v1559
    %v3101 = vadd.f32 %v3033, %v1563
    %v3102 = vadd.f32 %v3036, %v1570
    %v3103 = vadd.f32 %v3039, %v1574
    %v3104 = vadd.f32 %v3042, %v1581
    %v3105 = vadd.f32 %v3045, %v1585
    %v3106 = vadd.f32 %v3048, %v1592
    %v3107 = vadd.f32 %v3051, %v1596
    %v3108 = vadd.f32 %v3054, %v1603
    %v3109 = vadd.f32 %v3057, %v1607
    %v3110 = vadd.f32 %v3060, %v1614
    %v3111 = vadd.f32 %v3063, %v1618
    %v3112 = vadd.f32 %v3066, %v1625
    %v3113 = vadd.f32 %v3069, %v1629
    %v3114 = vadd.f32 %v3072, %v1636
    %v3115 = vadd.f32 %v3075, %v1640
    %v3116 = vadd.f32 %v3078, %v1647
    %v3117 = vadd.f32 %v3081, %v1651
    %v3118 = vadd.f32 %v3084, %v1658
    %v3119 = vadd.f32 %v3087, %v1662
    %3152 = vset.pattern.permute.xlu0 0
    %3153 = vperm.xlu0 %3152, %v3088
    %v3154 = vpop.permute.xlu0 %3153
    %3155 = vset.pattern.permute.xlu0 0
    %3156 = vperm.xlu0 %3155, %v3089
    %v3157 = vpop.permute.xlu0 %3156
    %3158 = vset.pattern.permute.xlu0 0
    %3159 = vperm.xlu0 %3158, %v3090
    %v3160 = vpop.permute.xlu0 %3159
    %3161 = vset.pattern.permute.xlu0 0
    %3162 = vperm.xlu0 %3161, %v3091
    %v3163 = vpop.permute.xlu0 %3162
    %3164 = vset.pattern.permute.xlu0 0
    %3165 = vperm.xlu0 %3164, %v3092
    %v3166 = vpop.permute.xlu0 %3165
    %3167 = vset.pattern.permute.xlu0 0
    %3168 = vperm.xlu0 %3167, %v3093
    %v3169 = vpop.permute.xlu0 %3168
    %3170 = vset.pattern.permute.xlu0 0
    %3171 = vperm.xlu0 %3170, %v3094
    %v3172 = vpop.permute.xlu0 %3171
    %3173 = vset.pattern.permute.xlu0 0
    %3174 = vperm.xlu0 %3173, %v3095
    %v3175 = vpop.permute.xlu0 %3174
    %3176 = vset.pattern.permute.xlu0 0
    %3177 = vperm.xlu0 %3176, %v3096
    %v3178 = vpop.permute.xlu0 %3177
    %3179 = vset.pattern.permute.xlu0 0
    %3180 = vperm.xlu0 %3179, %v3097
    %v3181 = vpop.permute.xlu0 %3180
    %3182 = vset.pattern.permute.xlu0 0
    %3183 = vperm.xlu0 %3182, %v3098
    %v3184 = vpop.permute.xlu0 %3183
    %3185 = vset.pattern.permute.xlu0 0
    %3186 = vperm.xlu0 %3185, %v3099
    %v3187 = vpop.permute.xlu0 %3186
    %3188 = vset.pattern.permute.xlu0 0
    %3189 = vperm.xlu0 %3188, %v3100
    %v3190 = vpop.permute.xlu0 %3189
    %3191 = vset.pattern.permute.xlu0 0
    %3192 = vperm.xlu0 %3191, %v3101
    %v3193 = vpop.permute.xlu0 %3192
    %3194 = vset.pattern.permute.xlu0 0
    %3195 = vperm.xlu0 %3194, %v3102
    %v3196 = vpop.permute.xlu0 %3195
    %3197 = vset.pattern.permute.xlu0 0
    %3198 = vperm.xlu0 %3197, %v3103
    %v3199 = vpop.permute.xlu0 %3198
    %3200 = vset.pattern.permute.xlu0 0
    %3201 = vperm.xlu0 %3200, %v3104
    %v3202 = vpop.permute.xlu0 %3201
    %3203 = vset.pattern.permute.xlu0 0
    %3204 = vperm.xlu0 %3203, %v3105
    %v3205 = vpop.permute.xlu0 %3204
    %3206 = vset.pattern.permute.xlu0 0
    %3207 = vperm.xlu0 %3206, %v3106
    %v3208 = vpop.permute.xlu0 %3207
    %3209 = vset.pattern.permute.xlu0 0
    %3210 = vperm.xlu0 %3209, %v3107
    %v3211 = vpop.permute.xlu0 %3210
    %3212 = vset.pattern.permute.xlu0 0
    %3213 = vperm.xlu0 %3212, %v3108
    %v3214 = vpop.permute.xlu0 %3213
    %3215 = vset.pattern.permute.xlu0 0
    %3216 = vperm.xlu0 %3215, %v3109
    %v3217 = vpop.permute.xlu0 %3216
    %3218 = vset.pattern.permute.xlu0 0
    %3219 = vperm.xlu0 %3218, %v3110
    %v3220 = vpop.permute.xlu0 %3219
    %3221 = vset.pattern.permute.xlu0 0
    %3222 = vperm.xlu0 %3221, %v3111
    %v3223 = vpop.permute.xlu0 %3222
    %3224 = vset.pattern.permute.xlu0 0
    %3225 = vperm.xlu0 %3224, %v3112
    %v3226 = vpop.permute.xlu0 %3225
    %3227 = vset.pattern.permute.xlu0 0
    %3228 = vperm.xlu0 %3227, %v3113
    %v3229 = vpop.permute.xlu0 %3228
    %3230 = vset.pattern.permute.xlu0 0
    %3231 = vperm.xlu0 %3230, %v3114
    %v3232 = vpop.permute.xlu0 %3231
    %3233 = vset.pattern.permute.xlu0 0
    %3234 = vperm.xlu0 %3233, %v3115
    %v3235 = vpop.permute.xlu0 %3234
    %3236 = vset.pattern.permute.xlu0 0
    %3237 = vperm.xlu0 %3236, %v3116
    %v3238 = vpop.permute.xlu0 %3237
    %3239 = vset.pattern.permute.xlu0 0
    %3240 = vperm.xlu0 %3239, %v3117
    %v3241 = vpop.permute.xlu0 %3240
    %3242 = vset.pattern.permute.xlu0 0
    %3243 = vperm.xlu0 %3242, %v3118
    %v3244 = vpop.permute.xlu0 %3243
    %3245 = vset.pattern.permute.xlu0 0
    %3246 = vperm.xlu0 %3245, %v3119
    %v3247 = vpop.permute.xlu0 %3246
    %v3248 = vlaneseq
    %v3249 = vshrl.u32 %v3248, 7
    %v3250 = vsub.s32 %v1856, %v3249
    %v3251 = vrot.slane %v3154, %v3250
    %v3252 = vlaneseq
    %v3253 = vshrl.u32 %v3252, 7
    %v3254 = vsub.s32 %v1861, %v3253
    %v3255 = vrot.slane %v3157, %v3254
    %v3256 = vsel %vm1866, %v3255, %v3251
    %v3257 = vlaneseq
    %v3258 = vshrl.u32 %v3257, 7
    %v3259 = vsub.s32 %v1856, %v3258
    %v3260 = vrot.slane %v3160, %v3259
    %v3261 = vlaneseq
    %v3262 = vshrl.u32 %v3261, 7
    %v3263 = vsub.s32 %v1861, %v3262
    %v3264 = vrot.slane %v3163, %v3263
    %v3265 = vsel %vm1866, %v3264, %v3260
    %v3266 = vlaneseq
    %v3267 = vshrl.u32 %v3266, 7
    %v3268 = vsub.s32 %v1856, %v3267
    %v3269 = vrot.slane %v3166, %v3268
    %v3270 = vlaneseq
    %v3271 = vshrl.u32 %v3270, 7
    %v3272 = vsub.s32 %v1861, %v3271
    %v3273 = vrot.slane %v3169, %v3272
    %v3274 = vsel %vm1866, %v3273, %v3269
    %v3275 = vlaneseq
    %v3276 = vshrl.u32 %v3275, 7
    %v3277 = vsub.s32 %v1856, %v3276
    %v3278 = vrot.slane %v3172, %v3277
    %v3279 = vlaneseq
    %v3280 = vshrl.u32 %v3279, 7
    %v3281 = vsub.s32 %v1861, %v3280
    %v3282 = vrot.slane %v3175, %v3281
    %v3283 = vsel %vm1866, %v3282, %v3278
    %v3284 = vlaneseq
    %v3285 = vshrl.u32 %v3284, 7
    %v3286 = vsub.s32 %v1856, %v3285
    %v3287 = vrot.slane %v3178, %v3286
    %v3288 = vlaneseq
    %v3289 = vshrl.u32 %v3288, 7
    %v3290 = vsub.s32 %v1861, %v3289
    %v3291 = vrot.slane %v3181, %v3290
    %v3292 = vsel %vm1866, %v3291, %v3287
    %v3293 = vlaneseq
    %v3294 = vshrl.u32 %v3293, 7
    %v3295 = vsub.s32 %v1856, %v3294
    %v3296 = vrot.slane %v3184, %v3295
    %v3297 = vlaneseq
    %v3298 = vshrl.u32 %v3297, 7
    %v3299 = vsub.s32 %v1861, %v3298
    %v3300 = vrot.slane %v3187, %v3299
    %v3301 = vsel %vm1866, %v3300, %v3296
    %v3302 = vlaneseq
    %v3303 = vshrl.u32 %v3302, 7
    %v3304 = vsub.s32 %v1856, %v3303
    %v3305 = vrot.slane %v3190, %v3304
    %v3306 = vlaneseq
    %v3307 = vshrl.u32 %v3306, 7
    %v3308 = vsub.s32 %v1861, %v3307
    %v3309 = vrot.slane %v3193, %v3308
    %v3310 = vsel %vm1866, %v3309, %v3305
    %v3311 = vlaneseq
    %v3312 = vshrl.u32 %v3311, 7
    %v3313 = vsub.s32 %v1856, %v3312
    %v3314 = vrot.slane %v3196, %v3313
    %v3315 = vlaneseq
    %v3316 = vshrl.u32 %v3315, 7
    %v3317 = vsub.s32 %v1861, %v3316
    %v3318 = vrot.slane %v3199, %v3317
    %v3319 = vsel %vm1866, %v3318, %v3314
    %v3320 = vlaneseq
    %v3321 = vshrl.u32 %v3320, 7
    %v3322 = vsub.s32 %v1856, %v3321
    %v3323 = vrot.slane %v3202, %v3322
    %v3324 = vlaneseq
    %v3325 = vshrl.u32 %v3324, 7
    %v3326 = vsub.s32 %v1861, %v3325
    %v3327 = vrot.slane %v3205, %v3326
    %v3328 = vsel %vm1866, %v3327, %v3323
    %v3329 = vlaneseq
    %v3330 = vshrl.u32 %v3329, 7
    %v3331 = vsub.s32 %v1856, %v3330
    %v3332 = vrot.slane %v3208, %v3331
    %v3333 = vlaneseq
    %v3334 = vshrl.u32 %v3333, 7
    %v3335 = vsub.s32 %v1861, %v3334
    %v3336 = vrot.slane %v3211, %v3335
    %v3337 = vsel %vm1866, %v3336, %v3332
    %v3338 = vlaneseq
    %v3339 = vshrl.u32 %v3338, 7
    %v3340 = vsub.s32 %v1856, %v3339
    %v3341 = vrot.slane %v3214, %v3340
    %v3342 = vlaneseq
    %v3343 = vshrl.u32 %v3342, 7
    %v3344 = vsub.s32 %v1861, %v3343
    %v3345 = vrot.slane %v3217, %v3344
    %v3346 = vsel %vm1866, %v3345, %v3341
    %v3347 = vlaneseq
    %v3348 = vshrl.u32 %v3347, 7
    %v3349 = vsub.s32 %v1856, %v3348
    %v3350 = vrot.slane %v3220, %v3349
    %v3351 = vlaneseq
    %v3352 = vshrl.u32 %v3351, 7
    %v3353 = vsub.s32 %v1861, %v3352
    %v3354 = vrot.slane %v3223, %v3353
    %v3355 = vsel %vm1866, %v3354, %v3350
    %v3356 = vlaneseq
    %v3357 = vshrl.u32 %v3356, 7
    %v3358 = vsub.s32 %v1856, %v3357
    %v3359 = vrot.slane %v3226, %v3358
    %v3360 = vlaneseq
    %v3361 = vshrl.u32 %v3360, 7
    %v3362 = vsub.s32 %v1861, %v3361
    %v3363 = vrot.slane %v3229, %v3362
    %v3364 = vsel %vm1866, %v3363, %v3359
    %v3365 = vlaneseq
    %v3366 = vshrl.u32 %v3365, 7
    %v3367 = vsub.s32 %v1856, %v3366
    %v3368 = vrot.slane %v3232, %v3367
    %v3369 = vlaneseq
    %v3370 = vshrl.u32 %v3369, 7
    %v3371 = vsub.s32 %v1861, %v3370
    %v3372 = vrot.slane %v3235, %v3371
    %v3373 = vsel %vm1866, %v3372, %v3368
    %v3374 = vlaneseq
    %v3375 = vshrl.u32 %v3374, 7
    %v3376 = vsub.s32 %v1856, %v3375
    %v3377 = vrot.slane %v3238, %v3376
    %v3378 = vlaneseq
    %v3379 = vshrl.u32 %v3378, 7
    %v3380 = vsub.s32 %v1861, %v3379
    %v3381 = vrot.slane %v3241, %v3380
    %v3382 = vsel %vm1866, %v3381, %v3377
    %v3383 = vlaneseq
    %v3384 = vshrl.u32 %v3383, 7
    %v3385 = vsub.s32 %v1856, %v3384
    %v3386 = vrot.slane %v3244, %v3385
    %v3387 = vlaneseq
    %v3388 = vshrl.u32 %v3387, 7
    %v3389 = vsub.s32 %v1861, %v3388
    %v3390 = vrot.slane %v3247, %v3389
    %v3391 = vsel %vm1866, %v3390, %v3386
    %v3392 = vsel %vm2003, %v3265, %v3256
    %v3393 = vsel %vm2005, %v3274, %v3392
    %v3394 = vsel %vm2007, %v3283, %v3393
    %v3395 = vsel %vm2009, %v3292, %v3394
    %v3396 = vsel %vm2011, %v3301, %v3395
    %v3397 = vsel %vm2013, %v3310, %v3396
    %v3398 = vsel %vm2015, %v3319, %v3397
    %v3399 = vsel %vm2003, %v3337, %v3328
    %v3400 = vsel %vm2005, %v3346, %v3399
    %v3401 = vsel %vm2007, %v3355, %v3400
    %v3402 = vsel %vm2009, %v3364, %v3401
    %v3403 = vsel %vm2011, %v3373, %v3402
    %v3404 = vsel %vm2013, %v3382, %v3403
    %v3405 = vsel %vm2015, %v3391, %v3404
    %v3408 = vsel %vm153, %v3398, -inf
    %3409 = vmax.xlane.f32.xlu0 %v3408
    %v3410 = vpop.xlane.xlu0 %3409
    %v3411 = vsel %vm153, %v3405, -inf
    %3412 = vmax.xlane.f32.xlu0 %v3411
    %v3413 = vpop.xlane.xlu0 %3412
    %v3416 = vlaneseq
    %v3417 = vshrl.u32 %v3416, 7
    %v3418 = vsub.s32 0, %v3417
    %v3419 = vrot.slane %v3410, %v3418
    %v3420 = vlaneseq
    %v3421 = vshrl.u32 %v3420, 7
    %v3422 = vsub.s32 1, %v3421
    %v3423 = vrot.slane %v3410, %v3422
    %v3424 = vlaneseq
    %v3425 = vshrl.u32 %v3424, 7
    %v3426 = vsub.s32 2, %v3425
    %v3427 = vrot.slane %v3410, %v3426
    %v3428 = vlaneseq
    %v3429 = vshrl.u32 %v3428, 7
    %v3430 = vsub.s32 3, %v3429
    %v3431 = vrot.slane %v3410, %v3430
    %v3432 = vlaneseq
    %v3433 = vshrl.u32 %v3432, 7
    %v3434 = vsub.s32 4, %v3433
    %v3435 = vrot.slane %v3410, %v3434
    %v3436 = vlaneseq
    %v3437 = vshrl.u32 %v3436, 7
    %v3438 = vsub.s32 5, %v3437
    %v3439 = vrot.slane %v3410, %v3438
    %v3440 = vlaneseq
    %v3441 = vshrl.u32 %v3440, 7
    %v3442 = vsub.s32 6, %v3441
    %v3443 = vrot.slane %v3410, %v3442
    %v3444 = vlaneseq
    %v3445 = vshrl.u32 %v3444, 7
    %v3446 = vsub.s32 7, %v3445
    %v3447 = vrot.slane %v3410, %v3446
    %v3448 = vlaneseq
    %v3449 = vshrl.u32 %v3448, 7
    %v3450 = vsub.s32 0, %v3449
    %v3451 = vrot.slane %v3413, %v3450
    %v3452 = vlaneseq
    %v3453 = vshrl.u32 %v3452, 7
    %v3454 = vsub.s32 1, %v3453
    %v3455 = vrot.slane %v3413, %v3454
    %v3456 = vlaneseq
    %v3457 = vshrl.u32 %v3456, 7
    %v3458 = vsub.s32 2, %v3457
    %v3459 = vrot.slane %v3413, %v3458
    %v3460 = vlaneseq
    %v3461 = vshrl.u32 %v3460, 7
    %v3462 = vsub.s32 3, %v3461
    %v3463 = vrot.slane %v3413, %v3462
    %v3464 = vlaneseq
    %v3465 = vshrl.u32 %v3464, 7
    %v3466 = vsub.s32 4, %v3465
    %v3467 = vrot.slane %v3413, %v3466
    %v3468 = vlaneseq
    %v3469 = vshrl.u32 %v3468, 7
    %v3470 = vsub.s32 5, %v3469
    %v3471 = vrot.slane %v3413, %v3470
    %v3472 = vlaneseq
    %v3473 = vshrl.u32 %v3472, 7
    %v3474 = vsub.s32 6, %v3473
    %v3475 = vrot.slane %v3413, %v3474
    %v3476 = vlaneseq
    %v3477 = vshrl.u32 %v3476, 7
    %v3478 = vsub.s32 7, %v3477
    %v3479 = vrot.slane %v3413, %v3478
    %v3496 = vsub.f32 %v3088, %v3419
    %v3497 = vsub.f32 %v3089, %v3419
    %v3498 = vsub.f32 %v3090, %v3423
    %v3499 = vsub.f32 %v3091, %v3423
    %v3500 = vsub.f32 %v3092, %v3427
    %v3501 = vsub.f32 %v3093, %v3427
    %v3502 = vsub.f32 %v3094, %v3431
    %v3503 = vsub.f32 %v3095, %v3431
    %v3504 = vsub.f32 %v3096, %v3435
    %v3505 = vsub.f32 %v3097, %v3435
    %v3506 = vsub.f32 %v3098, %v3439
    %v3507 = vsub.f32 %v3099, %v3439
    %v3508 = vsub.f32 %v3100, %v3443
    %v3509 = vsub.f32 %v3101, %v3443
    %v3510 = vsub.f32 %v3102, %v3447
    %v3511 = vsub.f32 %v3103, %v3447
    %v3512 = vsub.f32 %v3104, %v3451
    %v3513 = vsub.f32 %v3105, %v3451
    %v3514 = vsub.f32 %v3106, %v3455
    %v3515 = vsub.f32 %v3107, %v3455
    %v3516 = vsub.f32 %v3108, %v3459
    %v3517 = vsub.f32 %v3109, %v3459
    %v3518 = vsub.f32 %v3110, %v3463
    %v3519 = vsub.f32 %v3111, %v3463
    %v3520 = vsub.f32 %v3112, %v3467
    %v3521 = vsub.f32 %v3113, %v3467
    %v3522 = vsub.f32 %v3114, %v3471
    %v3523 = vsub.f32 %v3115, %v3471
    %v3524 = vsub.f32 %v3116, %v3475
    %v3525 = vsub.f32 %v3117, %v3475
    %v3526 = vsub.f32 %v3118, %v3479
    %v3527 = vsub.f32 %v3119, %v3479
    %v3528 = vmul.f32 %v3496, 1.442695
    %v3529 = vpow.pop %v3528
    %v3530 = vmul.f32 %v3497, 1.442695
    %v3531 = vpow.pop %v3530
    %v3532 = vmul.f32 %v3498, 1.442695
    %v3533 = vpow.pop %v3532
    %v3534 = vmul.f32 %v3499, 1.442695
    %v3535 = vpow.pop %v3534
    %v3536 = vmul.f32 %v3500, 1.442695
    %v3537 = vpow.pop %v3536
    %v3538 = vmul.f32 %v3501, 1.442695
    %v3539 = vpow.pop %v3538
    %v3540 = vmul.f32 %v3502, 1.442695
    %v3541 = vpow.pop %v3540
    %v3542 = vmul.f32 %v3503, 1.442695
    %v3543 = vpow.pop %v3542
    %v3544 = vmul.f32 %v3504, 1.442695
    %v3545 = vpow.pop %v3544
    %v3546 = vmul.f32 %v3505, 1.442695
    %v3547 = vpow.pop %v3546
    %v3548 = vmul.f32 %v3506, 1.442695
    %v3549 = vpow.pop %v3548
    %v3550 = vmul.f32 %v3507, 1.442695
    %v3551 = vpow.pop %v3550
    %v3552 = vmul.f32 %v3508, 1.442695
    %v3553 = vpow.pop %v3552
    %v3554 = vmul.f32 %v3509, 1.442695
    %v3555 = vpow.pop %v3554
    %v3556 = vmul.f32 %v3510, 1.442695
    %v3557 = vpow.pop %v3556
    %v3558 = vmul.f32 %v3511, 1.442695
    %v3559 = vpow.pop %v3558
    %v3560 = vmul.f32 %v3512, 1.442695
    %v3561 = vpow.pop %v3560
    %v3562 = vmul.f32 %v3513, 1.442695
    %v3563 = vpow.pop %v3562
    %v3564 = vmul.f32 %v3514, 1.442695
    %v3565 = vpow.pop %v3564
    %v3566 = vmul.f32 %v3515, 1.442695
    %v3567 = vpow.pop %v3566
    %v3568 = vmul.f32 %v3516, 1.442695
    %v3569 = vpow.pop %v3568
    %v3570 = vmul.f32 %v3517, 1.442695
    %v3571 = vpow.pop %v3570
    %v3572 = vmul.f32 %v3518, 1.442695
    %v3573 = vpow.pop %v3572
    %v3574 = vmul.f32 %v3519, 1.442695
    %v3575 = vpow.pop %v3574
    %v3576 = vmul.f32 %v3520, 1.442695
    %v3577 = vpow.pop %v3576
    %v3578 = vmul.f32 %v3521, 1.442695
    %v3579 = vpow.pop %v3578
    %v3580 = vmul.f32 %v3522, 1.442695
    %v3581 = vpow.pop %v3580
    %v3582 = vmul.f32 %v3523, 1.442695
    %v3583 = vpow.pop %v3582
    %v3584 = vmul.f32 %v3524, 1.442695
    %v3585 = vpow.pop %v3584
    %v3586 = vmul.f32 %v3525, 1.442695
    %v3587 = vpow.pop %v3586
    %v3588 = vmul.f32 %v3526, 1.442695
    %v3589 = vpow.pop %v3588
    %v3590 = vmul.f32 %v3527, 1.442695
    %v3591 = vpow.pop %v3590
    %v3592 = vmul.f32 %v3529, %v2218
    %v3593 = vmul.f32 %v3531, %v2222
    %v3594 = vmul.f32 %v3533, %v2229
    %v3595 = vmul.f32 %v3535, %v2233
    %v3596 = vmul.f32 %v3537, %v2240
    %v3597 = vmul.f32 %v3539, %v2244
    %v3598 = vmul.f32 %v3541, %v2251
    %v3599 = vmul.f32 %v3543, %v2255
    %v3600 = vmul.f32 %v3545, %v2262
    %v3601 = vmul.f32 %v3547, %v2266
    %v3602 = vmul.f32 %v3549, %v2273
    %v3603 = vmul.f32 %v3551, %v2277
    %v3604 = vmul.f32 %v3553, %v2284
    %v3605 = vmul.f32 %v3555, %v2288
    %v3606 = vmul.f32 %v3557, %v2295
    %v3607 = vmul.f32 %v3559, %v2299
    %v3608 = vmul.f32 %v3561, %v2306
    %v3609 = vmul.f32 %v3563, %v2310
    %v3610 = vmul.f32 %v3565, %v2317
    %v3611 = vmul.f32 %v3567, %v2321
    %v3612 = vmul.f32 %v3569, %v2328
    %v3613 = vmul.f32 %v3571, %v2332
    %v3614 = vmul.f32 %v3573, %v2339
    %v3615 = vmul.f32 %v3575, %v2343
    %v3616 = vmul.f32 %v3577, %v2350
    %v3617 = vmul.f32 %v3579, %v2354
    %v3618 = vmul.f32 %v3581, %v2361
    %v3619 = vmul.f32 %v3583, %v2365
    %v3620 = vmul.f32 %v3585, %v2372
    %v3621 = vmul.f32 %v3587, %v2376
    %v3622 = vmul.f32 %v3589, %v2383
    %v3623 = vmul.f32 %v3591, %v2387
    %3656 = vset.pattern.permute.xlu0 0
    %3657 = vperm.xlu0 %3656, %v3592
    %v3658 = vpop.permute.xlu0 %3657
    %3659 = vset.pattern.permute.xlu0 0
    %3660 = vperm.xlu0 %3659, %v3593
    %v3661 = vpop.permute.xlu0 %3660
    %3662 = vset.pattern.permute.xlu0 0
    %3663 = vperm.xlu0 %3662, %v3594
    %v3664 = vpop.permute.xlu0 %3663
    %3665 = vset.pattern.permute.xlu0 0
    %3666 = vperm.xlu0 %3665, %v3595
    %v3667 = vpop.permute.xlu0 %3666
    %3668 = vset.pattern.permute.xlu0 0
    %3669 = vperm.xlu0 %3668, %v3596
    %v3670 = vpop.permute.xlu0 %3669
    %3671 = vset.pattern.permute.xlu0 0
    %3672 = vperm.xlu0 %3671, %v3597
    %v3673 = vpop.permute.xlu0 %3672
    %3674 = vset.pattern.permute.xlu0 0
    %3675 = vperm.xlu0 %3674, %v3598
    %v3676 = vpop.permute.xlu0 %3675
    %3677 = vset.pattern.permute.xlu0 0
    %3678 = vperm.xlu0 %3677, %v3599
    %v3679 = vpop.permute.xlu0 %3678
    %3680 = vset.pattern.permute.xlu0 0
    %3681 = vperm.xlu0 %3680, %v3600
    %v3682 = vpop.permute.xlu0 %3681
    %3683 = vset.pattern.permute.xlu0 0
    %3684 = vperm.xlu0 %3683, %v3601
    %v3685 = vpop.permute.xlu0 %3684
    %3686 = vset.pattern.permute.xlu0 0
    %3687 = vperm.xlu0 %3686, %v3602
    %v3688 = vpop.permute.xlu0 %3687
    %3689 = vset.pattern.permute.xlu0 0
    %3690 = vperm.xlu0 %3689, %v3603
    %v3691 = vpop.permute.xlu0 %3690
    %3692 = vset.pattern.permute.xlu0 0
    %3693 = vperm.xlu0 %3692, %v3604
    %v3694 = vpop.permute.xlu0 %3693
    %3695 = vset.pattern.permute.xlu0 0
    %3696 = vperm.xlu0 %3695, %v3605
    %v3697 = vpop.permute.xlu0 %3696
    %3698 = vset.pattern.permute.xlu0 0
    %3699 = vperm.xlu0 %3698, %v3606
    %v3700 = vpop.permute.xlu0 %3699
    %3701 = vset.pattern.permute.xlu0 0
    %3702 = vperm.xlu0 %3701, %v3607
    %v3703 = vpop.permute.xlu0 %3702
    %3704 = vset.pattern.permute.xlu0 0
    %3705 = vperm.xlu0 %3704, %v3608
    %v3706 = vpop.permute.xlu0 %3705
    %3707 = vset.pattern.permute.xlu0 0
    %3708 = vperm.xlu0 %3707, %v3609
    %v3709 = vpop.permute.xlu0 %3708
    %3710 = vset.pattern.permute.xlu0 0
    %3711 = vperm.xlu0 %3710, %v3610
    %v3712 = vpop.permute.xlu0 %3711
    %3713 = vset.pattern.permute.xlu0 0
    %3714 = vperm.xlu0 %3713, %v3611
    %v3715 = vpop.permute.xlu0 %3714
    %3716 = vset.pattern.permute.xlu0 0
    %3717 = vperm.xlu0 %3716, %v3612
    %v3718 = vpop.permute.xlu0 %3717
    %3719 = vset.pattern.permute.xlu0 0
    %3720 = vperm.xlu0 %3719, %v3613
    %v3721 = vpop.permute.xlu0 %3720
    %3722 = vset.pattern.permute.xlu0 0
    %3723 = vperm.xlu0 %3722, %v3614
    %v3724 = vpop.permute.xlu0 %3723
    %3725 = vset.pattern.permute.xlu0 0
    %3726 = vperm.xlu0 %3725, %v3615
    %v3727 = vpop.permute.xlu0 %3726
    %3728 = vset.pattern.permute.xlu0 0
    %3729 = vperm.xlu0 %3728, %v3616
    %v3730 = vpop.permute.xlu0 %3729
    %3731 = vset.pattern.permute.xlu0 0
    %3732 = vperm.xlu0 %3731, %v3617
    %v3733 = vpop.permute.xlu0 %3732
    %3734 = vset.pattern.permute.xlu0 0
    %3735 = vperm.xlu0 %3734, %v3618
    %v3736 = vpop.permute.xlu0 %3735
    %3737 = vset.pattern.permute.xlu0 0
    %3738 = vperm.xlu0 %3737, %v3619
    %v3739 = vpop.permute.xlu0 %3738
    %3740 = vset.pattern.permute.xlu0 0
    %3741 = vperm.xlu0 %3740, %v3620
    %v3742 = vpop.permute.xlu0 %3741
    %3743 = vset.pattern.permute.xlu0 0
    %3744 = vperm.xlu0 %3743, %v3621
    %v3745 = vpop.permute.xlu0 %3744
    %3746 = vset.pattern.permute.xlu0 0
    %3747 = vperm.xlu0 %3746, %v3622
    %v3748 = vpop.permute.xlu0 %3747
    %3749 = vset.pattern.permute.xlu0 0
    %3750 = vperm.xlu0 %3749, %v3623
    %v3751 = vpop.permute.xlu0 %3750
    %v3752 = vlaneseq
    %v3753 = vshrl.u32 %v3752, 7
    %v3754 = vsub.s32 %v1856, %v3753
    %v3755 = vrot.slane %v3658, %v3754
    %v3756 = vlaneseq
    %v3757 = vshrl.u32 %v3756, 7
    %v3758 = vsub.s32 %v1861, %v3757
    %v3759 = vrot.slane %v3661, %v3758
    %v3760 = vsel %vm1866, %v3759, %v3755
    %v3761 = vlaneseq
    %v3762 = vshrl.u32 %v3761, 7
    %v3763 = vsub.s32 %v1856, %v3762
    %v3764 = vrot.slane %v3664, %v3763
    %v3765 = vlaneseq
    %v3766 = vshrl.u32 %v3765, 7
    %v3767 = vsub.s32 %v1861, %v3766
    %v3768 = vrot.slane %v3667, %v3767
    %v3769 = vsel %vm1866, %v3768, %v3764
    %v3770 = vlaneseq
    %v3771 = vshrl.u32 %v3770, 7
    %v3772 = vsub.s32 %v1856, %v3771
    %v3773 = vrot.slane %v3670, %v3772
    %v3774 = vlaneseq
    %v3775 = vshrl.u32 %v3774, 7
    %v3776 = vsub.s32 %v1861, %v3775
    %v3777 = vrot.slane %v3673, %v3776
    %v3778 = vsel %vm1866, %v3777, %v3773
    %v3779 = vlaneseq
    %v3780 = vshrl.u32 %v3779, 7
    %v3781 = vsub.s32 %v1856, %v3780
    %v3782 = vrot.slane %v3676, %v3781
    %v3783 = vlaneseq
    %v3784 = vshrl.u32 %v3783, 7
    %v3785 = vsub.s32 %v1861, %v3784
    %v3786 = vrot.slane %v3679, %v3785
    %v3787 = vsel %vm1866, %v3786, %v3782
    %v3788 = vlaneseq
    %v3789 = vshrl.u32 %v3788, 7
    %v3790 = vsub.s32 %v1856, %v3789
    %v3791 = vrot.slane %v3682, %v3790
    %v3792 = vlaneseq
    %v3793 = vshrl.u32 %v3792, 7
    %v3794 = vsub.s32 %v1861, %v3793
    %v3795 = vrot.slane %v3685, %v3794
    %v3796 = vsel %vm1866, %v3795, %v3791
    %v3797 = vlaneseq
    %v3798 = vshrl.u32 %v3797, 7
    %v3799 = vsub.s32 %v1856, %v3798
    %v3800 = vrot.slane %v3688, %v3799
    %v3801 = vlaneseq
    %v3802 = vshrl.u32 %v3801, 7
    %v3803 = vsub.s32 %v1861, %v3802
    %v3804 = vrot.slane %v3691, %v3803
    %v3805 = vsel %vm1866, %v3804, %v3800
    %v3806 = vlaneseq
    %v3807 = vshrl.u32 %v3806, 7
    %v3808 = vsub.s32 %v1856, %v3807
    %v3809 = vrot.slane %v3694, %v3808
    %v3810 = vlaneseq
    %v3811 = vshrl.u32 %v3810, 7
    %v3812 = vsub.s32 %v1861, %v3811
    %v3813 = vrot.slane %v3697, %v3812
    %v3814 = vsel %vm1866, %v3813, %v3809
    %v3815 = vlaneseq
    %v3816 = vshrl.u32 %v3815, 7
    %v3817 = vsub.s32 %v1856, %v3816
    %v3818 = vrot.slane %v3700, %v3817
    %v3819 = vlaneseq
    %v3820 = vshrl.u32 %v3819, 7
    %v3821 = vsub.s32 %v1861, %v3820
    %v3822 = vrot.slane %v3703, %v3821
    %v3823 = vsel %vm1866, %v3822, %v3818
    %v3824 = vlaneseq
    %v3825 = vshrl.u32 %v3824, 7
    %v3826 = vsub.s32 %v1856, %v3825
    %v3827 = vrot.slane %v3706, %v3826
    %v3828 = vlaneseq
    %v3829 = vshrl.u32 %v3828, 7
    %v3830 = vsub.s32 %v1861, %v3829
    %v3831 = vrot.slane %v3709, %v3830
    %v3832 = vsel %vm1866, %v3831, %v3827
    %v3833 = vlaneseq
    %v3834 = vshrl.u32 %v3833, 7
    %v3835 = vsub.s32 %v1856, %v3834
    %v3836 = vrot.slane %v3712, %v3835
    %v3837 = vlaneseq
    %v3838 = vshrl.u32 %v3837, 7
    %v3839 = vsub.s32 %v1861, %v3838
    %v3840 = vrot.slane %v3715, %v3839
    %v3841 = vsel %vm1866, %v3840, %v3836
    %v3842 = vlaneseq
    %v3843 = vshrl.u32 %v3842, 7
    %v3844 = vsub.s32 %v1856, %v3843
    %v3845 = vrot.slane %v3718, %v3844
    %v3846 = vlaneseq
    %v3847 = vshrl.u32 %v3846, 7
    %v3848 = vsub.s32 %v1861, %v3847
    %v3849 = vrot.slane %v3721, %v3848
    %v3850 = vsel %vm1866, %v3849, %v3845
    %v3851 = vlaneseq
    %v3852 = vshrl.u32 %v3851, 7
    %v3853 = vsub.s32 %v1856, %v3852
    %v3854 = vrot.slane %v3724, %v3853
    %v3855 = vlaneseq
    %v3856 = vshrl.u32 %v3855, 7
    %v3857 = vsub.s32 %v1861, %v3856
    %v3858 = vrot.slane %v3727, %v3857
    %v3859 = vsel %vm1866, %v3858, %v3854
    %v3860 = vlaneseq
    %v3861 = vshrl.u32 %v3860, 7
    %v3862 = vsub.s32 %v1856, %v3861
    %v3863 = vrot.slane %v3730, %v3862
    %v3864 = vlaneseq
    %v3865 = vshrl.u32 %v3864, 7
    %v3866 = vsub.s32 %v1861, %v3865
    %v3867 = vrot.slane %v3733, %v3866
    %v3868 = vsel %vm1866, %v3867, %v3863
    %v3869 = vlaneseq
    %v3870 = vshrl.u32 %v3869, 7
    %v3871 = vsub.s32 %v1856, %v3870
    %v3872 = vrot.slane %v3736, %v3871
    %v3873 = vlaneseq
    %v3874 = vshrl.u32 %v3873, 7
    %v3875 = vsub.s32 %v1861, %v3874
    %v3876 = vrot.slane %v3739, %v3875
    %v3877 = vsel %vm1866, %v3876, %v3872
    %v3878 = vlaneseq
    %v3879 = vshrl.u32 %v3878, 7
    %v3880 = vsub.s32 %v1856, %v3879
    %v3881 = vrot.slane %v3742, %v3880
    %v3882 = vlaneseq
    %v3883 = vshrl.u32 %v3882, 7
    %v3884 = vsub.s32 %v1861, %v3883
    %v3885 = vrot.slane %v3745, %v3884
    %v3886 = vsel %vm1866, %v3885, %v3881
    %v3887 = vlaneseq
    %v3888 = vshrl.u32 %v3887, 7
    %v3889 = vsub.s32 %v1856, %v3888
    %v3890 = vrot.slane %v3748, %v3889
    %v3891 = vlaneseq
    %v3892 = vshrl.u32 %v3891, 7
    %v3893 = vsub.s32 %v1861, %v3892
    %v3894 = vrot.slane %v3751, %v3893
    %v3895 = vsel %vm1866, %v3894, %v3890
    %v3896 = vsel %vm2003, %v3769, %v3760
    %v3897 = vsel %vm2005, %v3778, %v3896
    %v3898 = vsel %vm2007, %v3787, %v3897
    %v3899 = vsel %vm2009, %v3796, %v3898
    %v3900 = vsel %vm2011, %v3805, %v3899
    %v3901 = vsel %vm2013, %v3814, %v3900
    %v3902 = vsel %vm2015, %v3823, %v3901
    %v3903 = vsel %vm2003, %v3841, %v3832
    %v3904 = vsel %vm2005, %v3850, %v3903
    %v3905 = vsel %vm2007, %v3859, %v3904
    %v3906 = vsel %vm2009, %v3868, %v3905
    %v3907 = vsel %vm2011, %v3877, %v3906
    %v3908 = vsel %vm2013, %v3886, %v3907
    %v3909 = vsel %vm2015, %v3895, %v3908
    %v3912 = vsel %vm153, %v3902, 0.0
    %3913 = vadd.xlane.f32.xlu0 %v3912
    %v3914 = vpop.xlane.xlu0 %3913
    %v3915 = vsel %vm153, %v3909, 0.0
    %3916 = vadd.xlane.f32.xlu0 %v3915
    %v3917 = vpop.xlane.xlu0 %3916
    %v3918 = vadd.f32 %v3914, 1e-16
    %v3919 = vadd.f32 %v3917, 1e-16
    %v3920 = vrcp.pop %v3918
    %v3921 = vrcp.pop %v3919
    %v3924 = vlaneseq
    %v3925 = vshrl.u32 %v3924, 7
    %v3926 = vsub.s32 0, %v3925
    %v3927 = vrot.slane %v3920, %v3926
    %v3928 = vlaneseq
    %v3929 = vshrl.u32 %v3928, 7
    %v3930 = vsub.s32 1, %v3929
    %v3931 = vrot.slane %v3920, %v3930
    %v3932 = vlaneseq
    %v3933 = vshrl.u32 %v3932, 7
    %v3934 = vsub.s32 2, %v3933
    %v3935 = vrot.slane %v3920, %v3934
    %v3936 = vlaneseq
    %v3937 = vshrl.u32 %v3936, 7
    %v3938 = vsub.s32 3, %v3937
    %v3939 = vrot.slane %v3920, %v3938
    %v3940 = vlaneseq
    %v3941 = vshrl.u32 %v3940, 7
    %v3942 = vsub.s32 4, %v3941
    %v3943 = vrot.slane %v3920, %v3942
    %v3944 = vlaneseq
    %v3945 = vshrl.u32 %v3944, 7
    %v3946 = vsub.s32 5, %v3945
    %v3947 = vrot.slane %v3920, %v3946
    %v3948 = vlaneseq
    %v3949 = vshrl.u32 %v3948, 7
    %v3950 = vsub.s32 6, %v3949
    %v3951 = vrot.slane %v3920, %v3950
    %v3952 = vlaneseq
    %v3953 = vshrl.u32 %v3952, 7
    %v3954 = vsub.s32 7, %v3953
    %v3955 = vrot.slane %v3920, %v3954
    %v3956 = vlaneseq
    %v3957 = vshrl.u32 %v3956, 7
    %v3958 = vsub.s32 0, %v3957
    %v3959 = vrot.slane %v3921, %v3958
    %v3960 = vlaneseq
    %v3961 = vshrl.u32 %v3960, 7
    %v3962 = vsub.s32 1, %v3961
    %v3963 = vrot.slane %v3921, %v3962
    %v3964 = vlaneseq
    %v3965 = vshrl.u32 %v3964, 7
    %v3966 = vsub.s32 2, %v3965
    %v3967 = vrot.slane %v3921, %v3966
    %v3968 = vlaneseq
    %v3969 = vshrl.u32 %v3968, 7
    %v3970 = vsub.s32 3, %v3969
    %v3971 = vrot.slane %v3921, %v3970
    %v3972 = vlaneseq
    %v3973 = vshrl.u32 %v3972, 7
    %v3974 = vsub.s32 4, %v3973
    %v3975 = vrot.slane %v3921, %v3974
    %v3976 = vlaneseq
    %v3977 = vshrl.u32 %v3976, 7
    %v3978 = vsub.s32 5, %v3977
    %v3979 = vrot.slane %v3921, %v3978
    %v3980 = vlaneseq
    %v3981 = vshrl.u32 %v3980, 7
    %v3982 = vsub.s32 6, %v3981
    %v3983 = vrot.slane %v3921, %v3982
    %v3984 = vlaneseq
    %v3985 = vshrl.u32 %v3984, 7
    %v3986 = vsub.s32 7, %v3985
    %v3987 = vrot.slane %v3921, %v3986
    %v4004 = vmul.f32 %v3592, %v3927
    %v4005 = vmul.f32 %v3593, %v3927
    %v4006 = vmul.f32 %v3594, %v3931
    %v4007 = vmul.f32 %v3595, %v3931
    %v4008 = vmul.f32 %v3596, %v3935
    %v4009 = vmul.f32 %v3597, %v3935
    %v4010 = vmul.f32 %v3598, %v3939
    %v4011 = vmul.f32 %v3599, %v3939
    %v4012 = vmul.f32 %v3600, %v3943
    %v4013 = vmul.f32 %v3601, %v3943
    %v4014 = vmul.f32 %v3602, %v3947
    %v4015 = vmul.f32 %v3603, %v3947
    %v4016 = vmul.f32 %v3604, %v3951
    %v4017 = vmul.f32 %v3605, %v3951
    %v4018 = vmul.f32 %v3606, %v3955
    %v4019 = vmul.f32 %v3607, %v3955
    %v4020 = vmul.f32 %v3608, %v3959
    %v4021 = vmul.f32 %v3609, %v3959
    %v4022 = vmul.f32 %v3610, %v3963
    %v4023 = vmul.f32 %v3611, %v3963
    %v4024 = vmul.f32 %v3612, %v3967
    %v4025 = vmul.f32 %v3613, %v3967
    %v4026 = vmul.f32 %v3614, %v3971
    %v4027 = vmul.f32 %v3615, %v3971
    %v4028 = vmul.f32 %v3616, %v3975
    %v4029 = vmul.f32 %v3617, %v3975
    %v4030 = vmul.f32 %v3618, %v3979
    %v4031 = vmul.f32 %v3619, %v3979
    %v4032 = vmul.f32 %v3620, %v3983
    %v4033 = vmul.f32 %v3621, %v3983
    %v4034 = vmul.f32 %v3622, %v3987
    %v4035 = vmul.f32 %v3623, %v3987
    %4068 = vset.pattern.permute.xlu0 0
    %4069 = vperm.xlu0 %4068, %v2832
    %v4070 = vpop.permute.xlu0 %4069
    %4071 = vset.pattern.permute.xlu0 0
    %4072 = vperm.xlu0 %4071, %v2833
    %v4073 = vpop.permute.xlu0 %4072
    %4074 = vset.pattern.permute.xlu0 0
    %4075 = vperm.xlu0 %4074, %v2834
    %v4076 = vpop.permute.xlu0 %4075
    %4077 = vset.pattern.permute.xlu0 0
    %4078 = vperm.xlu0 %4077, %v2835
    %v4079 = vpop.permute.xlu0 %4078
    %4080 = vset.pattern.permute.xlu0 0
    %4081 = vperm.xlu0 %4080, %v2836
    %v4082 = vpop.permute.xlu0 %4081
    %4083 = vset.pattern.permute.xlu0 0
    %4084 = vperm.xlu0 %4083, %v2837
    %v4085 = vpop.permute.xlu0 %4084
    %4086 = vset.pattern.permute.xlu0 0
    %4087 = vperm.xlu0 %4086, %v2838
    %v4088 = vpop.permute.xlu0 %4087
    %4089 = vset.pattern.permute.xlu0 0
    %4090 = vperm.xlu0 %4089, %v2839
    %v4091 = vpop.permute.xlu0 %4090
    %4092 = vset.pattern.permute.xlu0 0
    %4093 = vperm.xlu0 %4092, %v2840
    %v4094 = vpop.permute.xlu0 %4093
    %4095 = vset.pattern.permute.xlu0 0
    %4096 = vperm.xlu0 %4095, %v2841
    %v4097 = vpop.permute.xlu0 %4096
    %4098 = vset.pattern.permute.xlu0 0
    %4099 = vperm.xlu0 %4098, %v2842
    %v4100 = vpop.permute.xlu0 %4099
    %4101 = vset.pattern.permute.xlu0 0
    %4102 = vperm.xlu0 %4101, %v2843
    %v4103 = vpop.permute.xlu0 %4102
    %4104 = vset.pattern.permute.xlu0 0
    %4105 = vperm.xlu0 %4104, %v2844
    %v4106 = vpop.permute.xlu0 %4105
    %4107 = vset.pattern.permute.xlu0 0
    %4108 = vperm.xlu0 %4107, %v2845
    %v4109 = vpop.permute.xlu0 %4108
    %4110 = vset.pattern.permute.xlu0 0
    %4111 = vperm.xlu0 %4110, %v2846
    %v4112 = vpop.permute.xlu0 %4111
    %4113 = vset.pattern.permute.xlu0 0
    %4114 = vperm.xlu0 %4113, %v2847
    %v4115 = vpop.permute.xlu0 %4114
    %4116 = vset.pattern.permute.xlu0 0
    %4117 = vperm.xlu0 %4116, %v2848
    %v4118 = vpop.permute.xlu0 %4117
    %4119 = vset.pattern.permute.xlu0 0
    %4120 = vperm.xlu0 %4119, %v2849
    %v4121 = vpop.permute.xlu0 %4120
    %4122 = vset.pattern.permute.xlu0 0
    %4123 = vperm.xlu0 %4122, %v2850
    %v4124 = vpop.permute.xlu0 %4123
    %4125 = vset.pattern.permute.xlu0 0
    %4126 = vperm.xlu0 %4125, %v2851
    %v4127 = vpop.permute.xlu0 %4126
    %4128 = vset.pattern.permute.xlu0 0
    %4129 = vperm.xlu0 %4128, %v2852
    %v4130 = vpop.permute.xlu0 %4129
    %4131 = vset.pattern.permute.xlu0 0
    %4132 = vperm.xlu0 %4131, %v2853
    %v4133 = vpop.permute.xlu0 %4132
    %4134 = vset.pattern.permute.xlu0 0
    %4135 = vperm.xlu0 %4134, %v2854
    %v4136 = vpop.permute.xlu0 %4135
    %4137 = vset.pattern.permute.xlu0 0
    %4138 = vperm.xlu0 %4137, %v2855
    %v4139 = vpop.permute.xlu0 %4138
    %4140 = vset.pattern.permute.xlu0 0
    %4141 = vperm.xlu0 %4140, %v2856
    %v4142 = vpop.permute.xlu0 %4141
    %4143 = vset.pattern.permute.xlu0 0
    %4144 = vperm.xlu0 %4143, %v2857
    %v4145 = vpop.permute.xlu0 %4144
    %4146 = vset.pattern.permute.xlu0 0
    %4147 = vperm.xlu0 %4146, %v2858
    %v4148 = vpop.permute.xlu0 %4147
    %4149 = vset.pattern.permute.xlu0 0
    %4150 = vperm.xlu0 %4149, %v2859
    %v4151 = vpop.permute.xlu0 %4150
    %4152 = vset.pattern.permute.xlu0 0
    %4153 = vperm.xlu0 %4152, %v2860
    %v4154 = vpop.permute.xlu0 %4153
    %4155 = vset.pattern.permute.xlu0 0
    %4156 = vperm.xlu0 %4155, %v2861
    %v4157 = vpop.permute.xlu0 %4156
    %4158 = vset.pattern.permute.xlu0 0
    %4159 = vperm.xlu0 %4158, %v2862
    %v4160 = vpop.permute.xlu0 %4159
    %4161 = vset.pattern.permute.xlu0 0
    %4162 = vperm.xlu0 %4161, %v2863
    %v4163 = vpop.permute.xlu0 %4162
    %v4164 = vlaneseq
    %v4165 = vshrl.u32 %v4164, 7
    %v4166 = vsub.s32 %v1856, %v4165
    %v4167 = vrot.slane %v4070, %v4166
    %v4168 = vlaneseq
    %v4169 = vshrl.u32 %v4168, 7
    %v4170 = vsub.s32 %v1861, %v4169
    %v4171 = vrot.slane %v4073, %v4170
    %v4172 = vsel %vm1866, %v4171, %v4167
    %v4173 = vlaneseq
    %v4174 = vshrl.u32 %v4173, 7
    %v4175 = vsub.s32 %v1856, %v4174
    %v4176 = vrot.slane %v4076, %v4175
    %v4177 = vlaneseq
    %v4178 = vshrl.u32 %v4177, 7
    %v4179 = vsub.s32 %v1861, %v4178
    %v4180 = vrot.slane %v4079, %v4179
    %v4181 = vsel %vm1866, %v4180, %v4176
    %v4182 = vlaneseq
    %v4183 = vshrl.u32 %v4182, 7
    %v4184 = vsub.s32 %v1856, %v4183
    %v4185 = vrot.slane %v4082, %v4184
    %v4186 = vlaneseq
    %v4187 = vshrl.u32 %v4186, 7
    %v4188 = vsub.s32 %v1861, %v4187
    %v4189 = vrot.slane %v4085, %v4188
    %v4190 = vsel %vm1866, %v4189, %v4185
    %v4191 = vlaneseq
    %v4192 = vshrl.u32 %v4191, 7
    %v4193 = vsub.s32 %v1856, %v4192
    %v4194 = vrot.slane %v4088, %v4193
    %v4195 = vlaneseq
    %v4196 = vshrl.u32 %v4195, 7
    %v4197 = vsub.s32 %v1861, %v4196
    %v4198 = vrot.slane %v4091, %v4197
    %v4199 = vsel %vm1866, %v4198, %v4194
    %v4200 = vlaneseq
    %v4201 = vshrl.u32 %v4200, 7
    %v4202 = vsub.s32 %v1856, %v4201
    %v4203 = vrot.slane %v4094, %v4202
    %v4204 = vlaneseq
    %v4205 = vshrl.u32 %v4204, 7
    %v4206 = vsub.s32 %v1861, %v4205
    %v4207 = vrot.slane %v4097, %v4206
    %v4208 = vsel %vm1866, %v4207, %v4203
    %v4209 = vlaneseq
    %v4210 = vshrl.u32 %v4209, 7
    %v4211 = vsub.s32 %v1856, %v4210
    %v4212 = vrot.slane %v4100, %v4211
    %v4213 = vlaneseq
    %v4214 = vshrl.u32 %v4213, 7
    %v4215 = vsub.s32 %v1861, %v4214
    %v4216 = vrot.slane %v4103, %v4215
    %v4217 = vsel %vm1866, %v4216, %v4212
    %v4218 = vlaneseq
    %v4219 = vshrl.u32 %v4218, 7
    %v4220 = vsub.s32 %v1856, %v4219
    %v4221 = vrot.slane %v4106, %v4220
    %v4222 = vlaneseq
    %v4223 = vshrl.u32 %v4222, 7
    %v4224 = vsub.s32 %v1861, %v4223
    %v4225 = vrot.slane %v4109, %v4224
    %v4226 = vsel %vm1866, %v4225, %v4221
    %v4227 = vlaneseq
    %v4228 = vshrl.u32 %v4227, 7
    %v4229 = vsub.s32 %v1856, %v4228
    %v4230 = vrot.slane %v4112, %v4229
    %v4231 = vlaneseq
    %v4232 = vshrl.u32 %v4231, 7
    %v4233 = vsub.s32 %v1861, %v4232
    %v4234 = vrot.slane %v4115, %v4233
    %v4235 = vsel %vm1866, %v4234, %v4230
    %v4236 = vlaneseq
    %v4237 = vshrl.u32 %v4236, 7
    %v4238 = vsub.s32 %v1856, %v4237
    %v4239 = vrot.slane %v4118, %v4238
    %v4240 = vlaneseq
    %v4241 = vshrl.u32 %v4240, 7
    %v4242 = vsub.s32 %v1861, %v4241
    %v4243 = vrot.slane %v4121, %v4242
    %v4244 = vsel %vm1866, %v4243, %v4239
    %v4245 = vlaneseq
    %v4246 = vshrl.u32 %v4245, 7
    %v4247 = vsub.s32 %v1856, %v4246
    %v4248 = vrot.slane %v4124, %v4247
    %v4249 = vlaneseq
    %v4250 = vshrl.u32 %v4249, 7
    %v4251 = vsub.s32 %v1861, %v4250
    %v4252 = vrot.slane %v4127, %v4251
    %v4253 = vsel %vm1866, %v4252, %v4248
    %v4254 = vlaneseq
    %v4255 = vshrl.u32 %v4254, 7
    %v4256 = vsub.s32 %v1856, %v4255
    %v4257 = vrot.slane %v4130, %v4256
    %v4258 = vlaneseq
    %v4259 = vshrl.u32 %v4258, 7
    %v4260 = vsub.s32 %v1861, %v4259
    %v4261 = vrot.slane %v4133, %v4260
    %v4262 = vsel %vm1866, %v4261, %v4257
    %v4263 = vlaneseq
    %v4264 = vshrl.u32 %v4263, 7
    %v4265 = vsub.s32 %v1856, %v4264
    %v4266 = vrot.slane %v4136, %v4265
    %v4267 = vlaneseq
    %v4268 = vshrl.u32 %v4267, 7
    %v4269 = vsub.s32 %v1861, %v4268
    %v4270 = vrot.slane %v4139, %v4269
    %v4271 = vsel %vm1866, %v4270, %v4266
    %v4272 = vlaneseq
    %v4273 = vshrl.u32 %v4272, 7
    %v4274 = vsub.s32 %v1856, %v4273
    %v4275 = vrot.slane %v4142, %v4274
    %v4276 = vlaneseq
    %v4277 = vshrl.u32 %v4276, 7
    %v4278 = vsub.s32 %v1861, %v4277
    %v4279 = vrot.slane %v4145, %v4278
    %v4280 = vsel %vm1866, %v4279, %v4275
    %v4281 = vlaneseq
    %v4282 = vshrl.u32 %v4281, 7
    %v4283 = vsub.s32 %v1856, %v4282
    %v4284 = vrot.slane %v4148, %v4283
    %v4285 = vlaneseq
    %v4286 = vshrl.u32 %v4285, 7
    %v4287 = vsub.s32 %v1861, %v4286
    %v4288 = vrot.slane %v4151, %v4287
    %v4289 = vsel %vm1866, %v4288, %v4284
    %v4290 = vlaneseq
    %v4291 = vshrl.u32 %v4290, 7
    %v4292 = vsub.s32 %v1856, %v4291
    %v4293 = vrot.slane %v4154, %v4292
    %v4294 = vlaneseq
    %v4295 = vshrl.u32 %v4294, 7
    %v4296 = vsub.s32 %v1861, %v4295
    %v4297 = vrot.slane %v4157, %v4296
    %v4298 = vsel %vm1866, %v4297, %v4293
    %v4299 = vlaneseq
    %v4300 = vshrl.u32 %v4299, 7
    %v4301 = vsub.s32 %v1856, %v4300
    %v4302 = vrot.slane %v4160, %v4301
    %v4303 = vlaneseq
    %v4304 = vshrl.u32 %v4303, 7
    %v4305 = vsub.s32 %v1861, %v4304
    %v4306 = vrot.slane %v4163, %v4305
    %v4307 = vsel %vm1866, %v4306, %v4302
    %v4308 = vsel %vm2003, %v4181, %v4172
    %v4309 = vsel %vm2005, %v4190, %v4308
    %v4310 = vsel %vm2007, %v4199, %v4309
    %v4311 = vsel %vm2009, %v4208, %v4310
    %v4312 = vsel %vm2011, %v4217, %v4311
    %v4313 = vsel %vm2013, %v4226, %v4312
    %v4314 = vsel %vm2015, %v4235, %v4313
    %v4315 = vsel %vm2003, %v4253, %v4244
    %v4316 = vsel %vm2005, %v4262, %v4315
    %v4317 = vsel %vm2007, %v4271, %v4316
    %v4318 = vsel %vm2009, %v4280, %v4317
    %v4319 = vsel %vm2011, %v4289, %v4318
    %v4320 = vsel %vm2013, %v4298, %v4319
    %v4321 = vsel %vm2015, %v4307, %v4320
    %4356 = vset.pattern.permute.xlu0 0
    %4357 = vperm.xlu0 %4356, %v4004
    %v4358 = vpop.permute.xlu0 %4357
    %4359 = vset.pattern.permute.xlu0 0
    %4360 = vperm.xlu0 %4359, %v4005
    %v4361 = vpop.permute.xlu0 %4360
    %4362 = vset.pattern.permute.xlu0 0
    %4363 = vperm.xlu0 %4362, %v4006
    %v4364 = vpop.permute.xlu0 %4363
    %4365 = vset.pattern.permute.xlu0 0
    %4366 = vperm.xlu0 %4365, %v4007
    %v4367 = vpop.permute.xlu0 %4366
    %4368 = vset.pattern.permute.xlu0 0
    %4369 = vperm.xlu0 %4368, %v4008
    %v4370 = vpop.permute.xlu0 %4369
    %4371 = vset.pattern.permute.xlu0 0
    %4372 = vperm.xlu0 %4371, %v4009
    %v4373 = vpop.permute.xlu0 %4372
    %4374 = vset.pattern.permute.xlu0 0
    %4375 = vperm.xlu0 %4374, %v4010
    %v4376 = vpop.permute.xlu0 %4375
    %4377 = vset.pattern.permute.xlu0 0
    %4378 = vperm.xlu0 %4377, %v4011
    %v4379 = vpop.permute.xlu0 %4378
    %4380 = vset.pattern.permute.xlu0 0
    %4381 = vperm.xlu0 %4380, %v4012
    %v4382 = vpop.permute.xlu0 %4381
    %4383 = vset.pattern.permute.xlu0 0
    %4384 = vperm.xlu0 %4383, %v4013
    %v4385 = vpop.permute.xlu0 %4384
    %4386 = vset.pattern.permute.xlu0 0
    %4387 = vperm.xlu0 %4386, %v4014
    %v4388 = vpop.permute.xlu0 %4387
    %4389 = vset.pattern.permute.xlu0 0
    %4390 = vperm.xlu0 %4389, %v4015
    %v4391 = vpop.permute.xlu0 %4390
    %4392 = vset.pattern.permute.xlu0 0
    %4393 = vperm.xlu0 %4392, %v4016
    %v4394 = vpop.permute.xlu0 %4393
    %4395 = vset.pattern.permute.xlu0 0
    %4396 = vperm.xlu0 %4395, %v4017
    %v4397 = vpop.permute.xlu0 %4396
    %4398 = vset.pattern.permute.xlu0 0
    %4399 = vperm.xlu0 %4398, %v4018
    %v4400 = vpop.permute.xlu0 %4399
    %4401 = vset.pattern.permute.xlu0 0
    %4402 = vperm.xlu0 %4401, %v4019
    %v4403 = vpop.permute.xlu0 %4402
    %4404 = vset.pattern.permute.xlu0 0
    %4405 = vperm.xlu0 %4404, %v4020
    %v4406 = vpop.permute.xlu0 %4405
    %4407 = vset.pattern.permute.xlu0 0
    %4408 = vperm.xlu0 %4407, %v4021
    %v4409 = vpop.permute.xlu0 %4408
    %4410 = vset.pattern.permute.xlu0 0
    %4411 = vperm.xlu0 %4410, %v4022
    %v4412 = vpop.permute.xlu0 %4411
    %4413 = vset.pattern.permute.xlu0 0
    %4414 = vperm.xlu0 %4413, %v4023
    %v4415 = vpop.permute.xlu0 %4414
    %4416 = vset.pattern.permute.xlu0 0
    %4417 = vperm.xlu0 %4416, %v4024
    %v4418 = vpop.permute.xlu0 %4417
    %4419 = vset.pattern.permute.xlu0 0
    %4420 = vperm.xlu0 %4419, %v4025
    %v4421 = vpop.permute.xlu0 %4420
    %4422 = vset.pattern.permute.xlu0 0
    %4423 = vperm.xlu0 %4422, %v4026
    %v4424 = vpop.permute.xlu0 %4423
    %4425 = vset.pattern.permute.xlu0 0
    %4426 = vperm.xlu0 %4425, %v4027
    %v4427 = vpop.permute.xlu0 %4426
    %4428 = vset.pattern.permute.xlu0 0
    %4429 = vperm.xlu0 %4428, %v4028
    %v4430 = vpop.permute.xlu0 %4429
    %4431 = vset.pattern.permute.xlu0 0
    %4432 = vperm.xlu0 %4431, %v4029
    %v4433 = vpop.permute.xlu0 %4432
    %4434 = vset.pattern.permute.xlu0 0
    %4435 = vperm.xlu0 %4434, %v4030
    %v4436 = vpop.permute.xlu0 %4435
    %4437 = vset.pattern.permute.xlu0 0
    %4438 = vperm.xlu0 %4437, %v4031
    %v4439 = vpop.permute.xlu0 %4438
    %4440 = vset.pattern.permute.xlu0 0
    %4441 = vperm.xlu0 %4440, %v4032
    %v4442 = vpop.permute.xlu0 %4441
    %4443 = vset.pattern.permute.xlu0 0
    %4444 = vperm.xlu0 %4443, %v4033
    %v4445 = vpop.permute.xlu0 %4444
    %4446 = vset.pattern.permute.xlu0 0
    %4447 = vperm.xlu0 %4446, %v4034
    %v4448 = vpop.permute.xlu0 %4447
    %4449 = vset.pattern.permute.xlu0 0
    %4450 = vperm.xlu0 %4449, %v4035
    %v4451 = vpop.permute.xlu0 %4450
    %v4452 = vadd.s32 %v1856, 4294967280
    %v4453 = vlaneseq
    %v4454 = vshrl.u32 %v4453, 7
    %v4455 = vsub.s32 %v4452, %v4454
    %v4456 = vrot.slane %v4358, %v4455
    %v4457 = vadd.s32 %v1856, 4294967272
    %v4458 = vlaneseq
    %v4459 = vshrl.u32 %v4458, 7
    %v4460 = vsub.s32 %v4457, %v4459
    %v4461 = vrot.slane %v4361, %v4460
    %vm4462 = vcmask 261312
    %v4463 = vsel %vm4462, %v4461, %v4456
    %v4464 = vlaneseq
    %v4465 = vshrl.u32 %v4464, 7
    %v4466 = vsub.s32 %v4452, %v4465
    %v4467 = vrot.slane %v4364, %v4466
    %v4468 = vlaneseq
    %v4469 = vshrl.u32 %v4468, 7
    %v4470 = vsub.s32 %v4457, %v4469
    %v4471 = vrot.slane %v4367, %v4470
    %v4472 = vsel %vm4462, %v4471, %v4467
    %v4473 = vlaneseq
    %v4474 = vshrl.u32 %v4473, 7
    %v4475 = vsub.s32 %v4452, %v4474
    %v4476 = vrot.slane %v4370, %v4475
    %v4477 = vlaneseq
    %v4478 = vshrl.u32 %v4477, 7
    %v4479 = vsub.s32 %v4457, %v4478
    %v4480 = vrot.slane %v4373, %v4479
    %v4481 = vsel %vm4462, %v4480, %v4476
    %v4482 = vlaneseq
    %v4483 = vshrl.u32 %v4482, 7
    %v4484 = vsub.s32 %v4452, %v4483
    %v4485 = vrot.slane %v4376, %v4484
    %v4486 = vlaneseq
    %v4487 = vshrl.u32 %v4486, 7
    %v4488 = vsub.s32 %v4457, %v4487
    %v4489 = vrot.slane %v4379, %v4488
    %v4490 = vsel %vm4462, %v4489, %v4485
    %v4491 = vlaneseq
    %v4492 = vshrl.u32 %v4491, 7
    %v4493 = vsub.s32 %v4452, %v4492
    %v4494 = vrot.slane %v4382, %v4493
    %v4495 = vlaneseq
    %v4496 = vshrl.u32 %v4495, 7
    %v4497 = vsub.s32 %v4457, %v4496
    %v4498 = vrot.slane %v4385, %v4497
    %v4499 = vsel %vm4462, %v4498, %v4494
    %v4500 = vlaneseq
    %v4501 = vshrl.u32 %v4500, 7
    %v4502 = vsub.s32 %v4452, %v4501
    %v4503 = vrot.slane %v4388, %v4502
    %v4504 = vlaneseq
    %v4505 = vshrl.u32 %v4504, 7
    %v4506 = vsub.s32 %v4457, %v4505
    %v4507 = vrot.slane %v4391, %v4506
    %v4508 = vsel %vm4462, %v4507, %v4503
    %v4509 = vlaneseq
    %v4510 = vshrl.u32 %v4509, 7
    %v4511 = vsub.s32 %v4452, %v4510
    %v4512 = vrot.slane %v4394, %v4511
    %v4513 = vlaneseq
    %v4514 = vshrl.u32 %v4513, 7
    %v4515 = vsub.s32 %v4457, %v4514
    %v4516 = vrot.slane %v4397, %v4515
    %v4517 = vsel %vm4462, %v4516, %v4512
    %v4518 = vlaneseq
    %v4519 = vshrl.u32 %v4518, 7
    %v4520 = vsub.s32 %v4452, %v4519
    %v4521 = vrot.slane %v4400, %v4520
    %v4522 = vlaneseq
    %v4523 = vshrl.u32 %v4522, 7
    %v4524 = vsub.s32 %v4457, %v4523
    %v4525 = vrot.slane %v4403, %v4524
    %v4526 = vsel %vm4462, %v4525, %v4521
    %v4527 = vlaneseq
    %v4528 = vshrl.u32 %v4527, 7
    %v4529 = vsub.s32 %v4452, %v4528
    %v4530 = vrot.slane %v4406, %v4529
    %v4531 = vlaneseq
    %v4532 = vshrl.u32 %v4531, 7
    %v4533 = vsub.s32 %v4457, %v4532
    %v4534 = vrot.slane %v4409, %v4533
    %v4535 = vsel %vm4462, %v4534, %v4530
    %v4536 = vlaneseq
    %v4537 = vshrl.u32 %v4536, 7
    %v4538 = vsub.s32 %v4452, %v4537
    %v4539 = vrot.slane %v4412, %v4538
    %v4540 = vlaneseq
    %v4541 = vshrl.u32 %v4540, 7
    %v4542 = vsub.s32 %v4457, %v4541
    %v4543 = vrot.slane %v4415, %v4542
    %v4544 = vsel %vm4462, %v4543, %v4539
    %v4545 = vlaneseq
    %v4546 = vshrl.u32 %v4545, 7
    %v4547 = vsub.s32 %v4452, %v4546
    %v4548 = vrot.slane %v4418, %v4547
    %v4549 = vlaneseq
    %v4550 = vshrl.u32 %v4549, 7
    %v4551 = vsub.s32 %v4457, %v4550
    %v4552 = vrot.slane %v4421, %v4551
    %v4553 = vsel %vm4462, %v4552, %v4548
    %v4554 = vlaneseq
    %v4555 = vshrl.u32 %v4554, 7
    %v4556 = vsub.s32 %v4452, %v4555
    %v4557 = vrot.slane %v4424, %v4556
    %v4558 = vlaneseq
    %v4559 = vshrl.u32 %v4558, 7
    %v4560 = vsub.s32 %v4457, %v4559
    %v4561 = vrot.slane %v4427, %v4560
    %v4562 = vsel %vm4462, %v4561, %v4557
    %v4563 = vlaneseq
    %v4564 = vshrl.u32 %v4563, 7
    %v4565 = vsub.s32 %v4452, %v4564
    %v4566 = vrot.slane %v4430, %v4565
    %v4567 = vlaneseq
    %v4568 = vshrl.u32 %v4567, 7
    %v4569 = vsub.s32 %v4457, %v4568
    %v4570 = vrot.slane %v4433, %v4569
    %v4571 = vsel %vm4462, %v4570, %v4566
    %v4572 = vlaneseq
    %v4573 = vshrl.u32 %v4572, 7
    %v4574 = vsub.s32 %v4452, %v4573
    %v4575 = vrot.slane %v4436, %v4574
    %v4576 = vlaneseq
    %v4577 = vshrl.u32 %v4576, 7
    %v4578 = vsub.s32 %v4457, %v4577
    %v4579 = vrot.slane %v4439, %v4578
    %v4580 = vsel %vm4462, %v4579, %v4575
    %v4581 = vlaneseq
    %v4582 = vshrl.u32 %v4581, 7
    %v4583 = vsub.s32 %v4452, %v4582
    %v4584 = vrot.slane %v4442, %v4583
    %v4585 = vlaneseq
    %v4586 = vshrl.u32 %v4585, 7
    %v4587 = vsub.s32 %v4457, %v4586
    %v4588 = vrot.slane %v4445, %v4587
    %v4589 = vsel %vm4462, %v4588, %v4584
    %v4590 = vlaneseq
    %v4591 = vshrl.u32 %v4590, 7
    %v4592 = vsub.s32 %v4452, %v4591
    %v4593 = vrot.slane %v4448, %v4592
    %v4594 = vlaneseq
    %v4595 = vshrl.u32 %v4594, 7
    %v4596 = vsub.s32 %v4457, %v4595
    %v4597 = vrot.slane %v4451, %v4596
    %v4598 = vsel %vm4462, %v4597, %v4593
    %v4599 = vsel %vm2003, %v4472, %v4463
    %v4600 = vsel %vm2005, %v4481, %v4599
    %v4601 = vsel %vm2007, %v4490, %v4600
    %v4602 = vsel %vm2009, %v4499, %v4601
    %v4603 = vsel %vm2011, %v4508, %v4602
    %v4604 = vsel %vm2013, %v4517, %v4603
    %v4605 = vsel %vm2015, %v4526, %v4604
    %v4606 = vsel %vm2003, %v4544, %v4535
    %v4607 = vsel %vm2005, %v4553, %v4606
    %v4608 = vsel %vm2007, %v4562, %v4607
    %v4609 = vsel %vm2009, %v4571, %v4608
    %v4610 = vsel %vm2011, %v4580, %v4609
    %v4611 = vsel %vm2013, %v4589, %v4610
    %v4612 = vsel %vm2015, %v4598, %v4611
    %v4615 = vsel %vm153, %v4314, %v4605
    %v4616 = vsel %vm153, %v4321, %v4612
    %4619 = vrot.lane.b32.xlu0 %v227, 96
    %v4620 = vpop.permute.xlu0 %4619
    %4621 = vrot.lane.b32.xlu0 %v233, 96
    %v4622 = vpop.permute.xlu0 %4621
    %v4626 = vsel %vm1388, %v4615, 0
    %v4629 = vsel %vm1388, %v4616, 0
    %4631 = vmatprep.subr.mxu0 0.0
    %4632 = vmatpush1.msra.mxu0 %v227
    %4633 = vmatprep.subr.mxu0 0.0
    %4634 = vmatpush1.msra.mxu0 %v233
    %4635 = vmatprep.subr.mxu0 0.0
    %4636 = vmatpush1.msra.mxu0 %v4620
    %4637 = vmatprep.subr.mxu0 0.0
    %4638 = vmatpush1.msra.mxu0 %v4622
    %4639 = vmatprep.subr.mxu0 0.0
    %4640 = vmatpush1.msra.mxu0 0.0
    %4641 = vmatprep.subr.mxu0 0.0
    %4642 = vmatpush1.msra.mxu0 0.0
    %4643 = vmatprep.subr.mxu0 0.0
    %4644 = vmatpush1.msra.mxu0 0.0
    %4645 = vmatprep.subr.mxu0 0.0
    %4646 = vmatpush1.msra.mxu0 0.0
    %4647 = vmatprep.subr.mxu0 0.0
    %4648 = vmatpush1.msra.mxu0 0.0
    %4649 = vmatprep.subr.mxu0 0.0
    %4650 = vmatpush1.msra.mxu0 0.0
    %4651 = vmatprep.subr.mxu0 0.0
    %4652 = vmatpush1.msra.mxu0 0.0
    %4653 = vmatprep.subr.mxu0 0.0
    %4654 = vmatpush1.msra.mxu0 0.0
    %4655 = vmatprep.subr.mxu0 0.0
    %4656 = vmatpush1.msra.mxu0 0.0
    %4657 = vmatprep.subr.mxu0 0.0
    %4658 = vmatpush1.msra.mxu0 0.0
    %4659 = vmatprep.subr.mxu0 0.0
    %4660 = vmatpush1.msra.mxu0 0.0
    %4661 = vmatprep.subr.mxu0 0.0
    %4662 = vmatpush1.msra.mxu0 0.0
    %4663 = vmatprep.subr.mxu0 0.0
    %4664 = vmatpush1.msra.mxu0 0.0
    %4665 = vmatprep.subr.mxu0 0.0
    %4666 = vmatpush1.msra.mxu0 0.0
    %4667 = vmatprep.subr.mxu0 0.0
    %4668 = vmatpush1.msra.mxu0 0.0
    %4669 = vmatprep.subr.mxu0 0.0
    %4670 = vmatpush1.msra.mxu0 0.0
    %4671 = vmatprep.subr.mxu0 0.0
    %4672 = vmatpush1.msra.mxu0 0.0
    %4673 = vmatprep.subr.mxu0 0.0
    %4674 = vmatpush1.msra.mxu0 0.0
    %4675 = vmatprep.subr.mxu0 0.0
    %4676 = vmatpush1.msra.mxu0 0.0
    %4677 = vmatprep.subr.mxu0 0.0
    %4678 = vmatpush1.msra.mxu0 0.0
    %4679 = vmatprep.subr.mxu0 0.0
    %4680 = vmatpush1.msra.mxu0 0.0
    %4681 = vmatprep.subr.mxu0 0.0
    %4682 = vmatpush1.msra.mxu0 0.0
    %4683 = vmatprep.subr.mxu0 0.0
    %4684 = vmatpush1.msra.mxu0 0.0
    %4685 = vmatprep.subr.mxu0 0.0
    %4686 = vmatpush1.msra.mxu0 0.0
    %4687 = vmatprep.subr.mxu0 0.0
    %4688 = vmatpush1.msra.mxu0 0.0
    %4689 = vmatprep.subr.mxu0 0.0
    %4690 = vmatpush1.msra.mxu0 0.0
    %4691 = vmatprep.subr.mxu0 0.0
    %4692 = vmatpush1.msra.mxu0 0.0
    %4693 = vmatprep.subr.mxu0 0.0
    %4694 = vmatpush1.msra.mxu0 0.0
    %4695 = vmatprep.mubr.f32.mxu0 0.0
    %4696 = vmatmul.mubr.f32.gmra.mrb[0].mxu0 %v4626
    %v4697 = vpop.f32.mrb[0].mxu0
    %v4698 = vadd.f32 0.0, %v4697
    %v4699 = vpop.f32.mrb[0].mxu0
    %4700 = vmatprep.mubr.f32.mxu0 0.0
    %4701 = vmatmul.mubr.f32.gmra.mrb[0].mxu0 %v4629
    %v4702 = vpop.f32.mrb[0].mxu0
    %v4703 = vadd.f32 0.0, %v4702
    %v4704 = vpop.f32.mrb[0].mxu0
    %4705 = vdwg.mxu0
    %v4706 = vmul.f32 %v4698, 0.5
    %v4707 = vmul.f32 %v4703, 0.5
    %v4708 = vlaneseq
    %v4709 = vshrl.u32 %v4708, 7
    %v4710 = vsub.s32 5, %v4709
    %v4711 = vrot.slane %v138, %v4710
    %v4712 = vadd.f32 %v4706, %v4711
    %v4713 = vadd.f32 %v4707, %v4711
    %v4714 = vadd.f32 %v4712, %v304
    %v4715 = vadd.f32 %v4713, %v309
    %v4716 = vld [vmem:[#allocation11] sm:$0xff]
    %v4717 = vld [vmem:[#allocation11 + $0x8] sm:$0xff]
    %v4718 = vld [vmem:[#allocation11 + $0x10] sm:$0xff]
    %v4719 = vld [vmem:[#allocation11 + $0x18] sm:$0xff]
    %v4720 = vld [vmem:[#allocation11 + $0x20] sm:$0xff]
    %v4721 = vld [vmem:[#allocation11 + $0x28] sm:$0xff]
    %v4722 = vld [vmem:[#allocation11 + $0x30] sm:$0xff]
    %v4723 = vld [vmem:[#allocation11 + $0x38] sm:$0xff]
    %v4724 = vld [vmem:[#allocation11 + $0x40] sm:$0xff]
    %v4725 = vld [vmem:[#allocation11 + $0x48] sm:$0xff]
    %v4726 = vld [vmem:[#allocation11 + $0x50] sm:$0xff]
    %v4727 = vld [vmem:[#allocation11 + $0x58] sm:$0xff]
    %v4728 = vld [vmem:[#allocation13] sm:$0xff]
    %v4729 = vld [vmem:[#allocation13 + $0x8] sm:$0xff]
    %v4730 = vld [vmem:[#allocation13 + $0x10] sm:$0xff]
    %v4731 = vlaneseq
    %v4732 = vshrl.u32 %v4731, 7
    %v4733 = vsub.s32 0, %v4732
    %v4734 = vrot.slane %v4728, %v4733
    %v4735 = vlaneseq
    %v4736 = vshrl.u32 %v4735, 7
    %v4737 = vsub.s32 0, %v4736
    %v4738 = vrot.slane %v4729, %v4737
    %v4739 = vlaneseq
    %v4740 = vshrl.u32 %v4739, 7
    %v4741 = vsub.s32 0, %v4740
    %v4742 = vrot.slane %v4730, %v4741
    %v4744 = vsel %vm1388, %v4714, 0
    %v4747 = vsel %vm1388, %v4715, 0
    %4749 = vmatprep.subr.mxu0 %v4717
    %4750 = vmatpush1.msra.mxu0 %v4716
    %4751 = vmatprep.subr.mxu0 %v4720
    %4752 = vmatpush1.msra.mxu0 %v4719
    %4753 = vmatprep.subr.mxu0 %v4723
    %4754 = vmatpush1.msra.mxu0 %v4722
    %4755 = vmatprep.subr.mxu0 %v4726
    %4756 = vmatpush1.msra.mxu0 %v4725
    %4757 = vmatprep.subr.mxu0 0.0
    %4758 = vmatpush1.msra.mxu0 0.0
    %4759 = vmatprep.subr.mxu0 0.0
    %4760 = vmatpush1.msra.mxu0 0.0
    %4761 = vmatprep.subr.mxu0 0.0
    %4762 = vmatpush1.msra.mxu0 0.0
    %4763 = vmatprep.subr.mxu0 0.0
    %4764 = vmatpush1.msra.mxu0 0.0
    %4765 = vmatprep.subr.mxu0 0.0
    %4766 = vmatpush1.msra.mxu0 0.0
    %4767 = vmatprep.subr.mxu0 0.0
    %4768 = vmatpush1.msra.mxu0 0.0
    %4769 = vmatprep.subr.mxu0 0.0
    %4770 = vmatpush1.msra.mxu0 0.0
    %4771 = vmatprep.subr.mxu0 0.0
    %4772 = vmatpush1.msra.mxu0 0.0
    %4773 = vmatprep.subr.mxu0 0.0
    %4774 = vmatpush1.msra.mxu0 0.0
    %4775 = vmatprep.subr.mxu0 0.0
    %4776 = vmatpush1.msra.mxu0 0.0
    %4777 = vmatprep.subr.mxu0 0.0
    %4778 = vmatpush1.msra.mxu0 0.0
    %4779 = vmatprep.subr.mxu0 0.0
    %4780 = vmatpush1.msra.mxu0 0.0
    %4781 = vmatprep.subr.mxu0 0.0
    %4782 = vmatpush1.msra.mxu0 0.0
    %4783 = vmatprep.subr.mxu0 0.0
    %4784 = vmatpush1.msra.mxu0 0.0
    %4785 = vmatprep.subr.mxu0 0.0
    %4786 = vmatpush1.msra.mxu0 0.0
    %4787 = vmatprep.subr.mxu0 0.0
    %4788 = vmatpush1.msra.mxu0 0.0
    %4789 = vmatprep.subr.mxu0 0.0
    %4790 = vmatpush1.msra.mxu0 0.0
    %4791 = vmatprep.subr.mxu0 0.0
    %4792 = vmatpush1.msra.mxu0 0.0
    %4793 = vmatprep.subr.mxu0 0.0
    %4794 = vmatpush1.msra.mxu0 0.0
    %4795 = vmatprep.subr.mxu0 0.0
    %4796 = vmatpush1.msra.mxu0 0.0
    %4797 = vmatprep.subr.mxu0 0.0
    %4798 = vmatpush1.msra.mxu0 0.0
    %4799 = vmatprep.subr.mxu0 0.0
    %4800 = vmatpush1.msra.mxu0 0.0
    %4801 = vmatprep.subr.mxu0 0.0
    %4802 = vmatpush1.msra.mxu0 0.0
    %4803 = vmatprep.subr.mxu0 0.0
    %4804 = vmatpush1.msra.mxu0 0.0
    %4805 = vmatprep.subr.mxu0 0.0
    %4806 = vmatpush1.msra.mxu0 0.0
    %4807 = vmatprep.subr.mxu0 0.0
    %4808 = vmatpush1.msra.mxu0 0.0
    %4809 = vmatprep.subr.mxu0 0.0
    %4810 = vmatpush1.msra.mxu0 0.0
    %4811 = vmatprep.subr.mxu0 0.0
    %4812 = vmatpush1.msra.mxu0 0.0
    %4813 = vmatprep.mubr.f32.mxu0 0.0
    %4814 = vmatmul.mubr.f32.gmra.mrb[0].mxu0 %v4744
    %v4815 = vpop.f32.mrb[0].mxu0
    %v4816 = vadd.f32 %v4734, %v4815
    %v4817 = vpop.f32.mrb[0].mxu0
    %v4818 = vadd.f32 %v4738, %v4817
    %4819 = vmatprep.mubr.f32.mxu0 0.0
    %4820 = vmatmul.mubr.f32.gmra.mrb[0].mxu0 %v4747
    %v4821 = vpop.f32.mrb[0].mxu0
    %v4822 = vadd.f32 %v4734, %v4821
    %v4823 = vpop.f32.mrb[0].mxu0
    %v4824 = vadd.f32 %v4738, %v4823
    %4825 = vdwg.mxu0
    %4826 = vmatprep.subr.mxu0 0.0
    %4827 = vmatpush1.msra.mxu0 %v4718
    %4828 = vmatprep.subr.mxu0 0.0
    %4829 = vmatpush1.msra.mxu0 %v4721
    %4830 = vmatprep.subr.mxu0 0.0
    %4831 = vmatpush1.msra.mxu0 %v4724
    %4832 = vmatprep.subr.mxu0 0.0
    %4833 = vmatpush1.msra.mxu0 %v4727
    %4834 = vmatprep.subr.mxu0 0.0
    %4835 = vmatpush1.msra.mxu0 0.0
    %4836 = vmatprep.subr.mxu0 0.0
    %4837 = vmatpush1.msra.mxu0 0.0
    %4838 = vmatprep.subr.mxu0 0.0
    %4839 = vmatpush1.msra.mxu0 0.0
    %4840 = vmatprep.subr.mxu0 0.0
    %4841 = vmatpush1.msra.mxu0 0.0
    %4842 = vmatprep.subr.mxu0 0.0
    %4843 = vmatpush1.msra.mxu0 0.0
    %4844 = vmatprep.subr.mxu0 0.0
    %4845 = vmatpush1.msra.mxu0 0.0
    %4846 = vmatprep.subr.mxu0 0.0
    %4847 = vmatpush1.msra.mxu0 0.0
    %4848 = vmatprep.subr.mxu0 0.0
    %4849 = vmatpush1.msra.mxu0 0.0
    %4850 = vmatprep.subr.mxu0 0.0
    %4851 = vmatpush1.msra.mxu0 0.0
    %4852 = vmatprep.subr.mxu0 0.0
    %4853 = vmatpush1.msra.mxu0 0.0
    %4854 = vmatprep.subr.mxu0 0.0
    %4855 = vmatpush1.msra.mxu0 0.0
    %4856 = vmatprep.subr.mxu0 0.0
    %4857 = vmatpush1.msra.mxu0 0.0
    %4858 = vmatprep.subr.mxu0 0.0
    %4859 = vmatpush1.msra.mxu0 0.0
    %4860 = vmatprep.subr.mxu0 0.0
    %4861 = vmatpush1.msra.mxu0 0.0
    %4862 = vmatprep.subr.mxu0 0.0
    %4863 = vmatpush1.msra.mxu0 0.0
    %4864 = vmatprep.subr.mxu0 0.0
    %4865 = vmatpush1.msra.mxu0 0.0
    %4866 = vmatprep.subr.mxu0 0.0
    %4867 = vmatpush1.msra.mxu0 0.0
    %4868 = vmatprep.subr.mxu0 0.0
    %4869 = vmatpush1.msra.mxu0 0.0
    %4870 = vmatprep.subr.mxu0 0.0
    %4871 = vmatpush1.msra.mxu0 0.0
    %4872 = vmatprep.subr.mxu0 0.0
    %4873 = vmatpush1.msra.mxu0 0.0
    %4874 = vmatprep.subr.mxu0 0.0
    %4875 = vmatpush1.msra.mxu0 0.0
    %4876 = vmatprep.subr.mxu0 0.0
    %4877 = vmatpush1.msra.mxu0 0.0
    %4878 = vmatprep.subr.mxu0 0.0
    %4879 = vmatpush1.msra.mxu0 0.0
    %4880 = vmatprep.subr.mxu0 0.0
    %4881 = vmatpush1.msra.mxu0 0.0
    %4882 = vmatprep.subr.mxu0 0.0
    %4883 = vmatpush1.msra.mxu0 0.0
    %4884 = vmatprep.subr.mxu0 0.0
    %4885 = vmatpush1.msra.mxu0 0.0
    %4886 = vmatprep.subr.mxu0 0.0
    %4887 = vmatpush1.msra.mxu0 0.0
    %4888 = vmatprep.subr.mxu0 0.0
    %4889 = vmatpush1.msra.mxu0 0.0
    %4890 = vmatprep.mubr.f32.mxu0 0.0
    %4891 = vmatmul.mubr.f32.gmra.mrb[0].mxu0 %v4744
    %v4892 = vpop.f32.mrb[0].mxu0
    %v4893 = vadd.f32 %v4742, %v4892
    %v4894 = vpop.f32.mrb[0].mxu0
    %4895 = vmatprep.mubr.f32.mxu0 0.0
    %4896 = vmatmul.mubr.f32.gmra.mrb[0].mxu0 %v4747
    %v4897 = vpop.f32.mrb[0].mxu0
    %v4898 = vadd.f32 %v4742, %v4897
    %v4899 = vpop.f32.mrb[0].mxu0
    %4900 = vdwg.mxu0
    %v4903 = vcombine.high %v4818, %v4818
    %v4905 = vunpack.c.l.s4 1966171168
    %v4906 = vunpack.c.0.s8 %v4905
    %v4907 = vlaneseq
    %v4908 = vshrl.u32 %v4907, 7
    %v4909 = vsub.s32 %v4906, %v4908
    %v4910 = vrot.slane %v4818, %v4909
    %v4912 = vunpack.c.l.s4 1966171168
    %v4913 = vunpack.c.0.s8 %v4912
    %v4914 = vlaneseq
    %v4915 = vshrl.u32 %v4914, 7
    %v4916 = vsub.s32 %v4913, %v4915
    %v4917 = vrot.slane %v4903, %v4916
    %v4918 = vcombine.high %v4910, %v4910
    %v4919 = vcombine.high %v4917, %v4917
    %v4921 = vunpack.c.l.s4 1966171168
    %v4922 = vunpack.c.0.s8 %v4921
    %v4923 = vlaneseq
    %v4924 = vshrl.u32 %v4923, 7
    %v4925 = vsub.s32 %v4922, %v4924
    %v4926 = vrot.slane %v4910, %v4925
    %v4928 = vunpack.c.l.s4 1966171168
    %v4929 = vunpack.c.0.s8 %v4928
    %v4930 = vlaneseq
    %v4931 = vshrl.u32 %v4930, 7
    %v4932 = vsub.s32 %v4929, %v4931
    %v4933 = vrot.slane %v4917, %v4932
    %v4935 = vunpack.c.l.s4 1966171168
    %v4936 = vunpack.c.0.s8 %v4935
    %v4937 = vlaneseq
    %v4938 = vshrl.u32 %v4937, 7
    %v4939 = vsub.s32 %v4936, %v4938
    %v4940 = vrot.slane %v4918, %v4939
    %v4942 = vunpack.c.l.s4 1966171168
    %v4943 = vunpack.c.0.s8 %v4942
    %v4944 = vlaneseq
    %v4945 = vshrl.u32 %v4944, 7
    %v4946 = vsub.s32 %v4943, %v4945
    %v4947 = vrot.slane %v4919, %v4946
    %v4948 = vcombine.high %v4926, %v4926
    %v4949 = vcombine.high %v4933, %v4933
    %v4950 = vcombine.high %v4940, %v4940
    %v4951 = vcombine.high %v4947, %v4947
    %v4952 = vcombine.high %v4824, %v4824
    %v4954 = vunpack.c.l.s4 1966171168
    %v4955 = vunpack.c.0.s8 %v4954
    %v4956 = vlaneseq
    %v4957 = vshrl.u32 %v4956, 7
    %v4958 = vsub.s32 %v4955, %v4957
    %v4959 = vrot.slane %v4824, %v4958
    %v4961 = vunpack.c.l.s4 1966171168
    %v4962 = vunpack.c.0.s8 %v4961
    %v4963 = vlaneseq
    %v4964 = vshrl.u32 %v4963, 7
    %v4965 = vsub.s32 %v4962, %v4964
    %v4966 = vrot.slane %v4952, %v4965
    %v4967 = vcombine.high %v4959, %v4959
    %v4968 = vcombine.high %v4966, %v4966
    %v4970 = vunpack.c.l.s4 1966171168
    %v4971 = vunpack.c.0.s8 %v4970
    %v4972 = vlaneseq
    %v4973 = vshrl.u32 %v4972, 7
    %v4974 = vsub.s32 %v4971, %v4973
    %v4975 = vrot.slane %v4959, %v4974
    %v4977 = vunpack.c.l.s4 1966171168
    %v4978 = vunpack.c.0.s8 %v4977
    %v4979 = vlaneseq
    %v4980 = vshrl.u32 %v4979, 7
    %v4981 = vsub.s32 %v4978, %v4980
    %v4982 = vrot.slane %v4966, %v4981
    %v4984 = vunpack.c.l.s4 1966171168
    %v4985 = vunpack.c.0.s8 %v4984
    %v4986 = vlaneseq
    %v4987 = vshrl.u32 %v4986, 7
    %v4988 = vsub.s32 %v4985, %v4987
    %v4989 = vrot.slane %v4967, %v4988
    %v4991 = vunpack.c.l.s4 1966171168
    %v4992 = vunpack.c.0.s8 %v4991
    %v4993 = vlaneseq
    %v4994 = vshrl.u32 %v4993, 7
    %v4995 = vsub.s32 %v4992, %v4994
    %v4996 = vrot.slane %v4968, %v4995
    %v4997 = vcombine.high %v4975, %v4975
    %v4998 = vcombine.high %v4982, %v4982
    %v4999 = vcombine.high %v4989, %v4989
    %v5000 = vcombine.high %v4996, %v4996
    %v5001 = vlaneseq
    %v5002 = vshrl.u32 %v5001, 7
    %v5003 = vsub.s32 0, %v5002
    %v5004 = vrot.slane %v4926, %v5003
    %v5005 = vlaneseq
    %v5006 = vshrl.u32 %v5005, 7
    %v5007 = vsub.s32 0, %v5006
    %v5008 = vrot.slane %v4940, %v5007
    %v5009 = vlaneseq
    %v5010 = vshrl.u32 %v5009, 7
    %v5011 = vsub.s32 0, %v5010
    %v5012 = vrot.slane %v4948, %v5011
    %v5013 = vlaneseq
    %v5014 = vshrl.u32 %v5013, 7
    %v5015 = vsub.s32 0, %v5014
    %v5016 = vrot.slane %v4950, %v5015
    %v5017 = vlaneseq
    %v5018 = vshrl.u32 %v5017, 7
    %v5019 = vsub.s32 0, %v5018
    %v5020 = vrot.slane %v4933, %v5019
    %v5021 = vlaneseq
    %v5022 = vshrl.u32 %v5021, 7
    %v5023 = vsub.s32 0, %v5022
    %v5024 = vrot.slane %v4947, %v5023
    %v5025 = vlaneseq
    %v5026 = vshrl.u32 %v5025, 7
    %v5027 = vsub.s32 0, %v5026
    %v5028 = vrot.slane %v4949, %v5027
    %v5029 = vlaneseq
    %v5030 = vshrl.u32 %v5029, 7
    %v5031 = vsub.s32 0, %v5030
    %v5032 = vrot.slane %v4951, %v5031
    %v5033 = vlaneseq
    %v5034 = vshrl.u32 %v5033, 7
    %v5035 = vsub.s32 0, %v5034
    %v5036 = vrot.slane %v4975, %v5035
    %v5037 = vlaneseq
    %v5038 = vshrl.u32 %v5037, 7
    %v5039 = vsub.s32 0, %v5038
    %v5040 = vrot.slane %v4989, %v5039
    %v5041 = vlaneseq
    %v5042 = vshrl.u32 %v5041, 7
    %v5043 = vsub.s32 0, %v5042
    %v5044 = vrot.slane %v4997, %v5043
    %v5045 = vlaneseq
    %v5046 = vshrl.u32 %v5045, 7
    %v5047 = vsub.s32 0, %v5046
    %v5048 = vrot.slane %v4999, %v5047
    %v5049 = vlaneseq
    %v5050 = vshrl.u32 %v5049, 7
    %v5051 = vsub.s32 0, %v5050
    %v5052 = vrot.slane %v4982, %v5051
    %v5053 = vlaneseq
    %v5054 = vshrl.u32 %v5053, 7
    %v5055 = vsub.s32 0, %v5054
    %v5056 = vrot.slane %v4996, %v5055
    %v5057 = vlaneseq
    %v5058 = vshrl.u32 %v5057, 7
    %v5059 = vsub.s32 0, %v5058
    %v5060 = vrot.slane %v4998, %v5059
    %v5061 = vlaneseq
    %v5062 = vshrl.u32 %v5061, 7
    %v5063 = vsub.s32 0, %v5062
    %v5064 = vrot.slane %v5000, %v5063
    %v5081 = vadd.f32 %v5004, %v4816
    %v5082 = vadd.f32 %v5004, %v4822
    %v5083 = vadd.f32 %v5008, %v4816
    %v5084 = vadd.f32 %v5008, %v4822
    %v5085 = vadd.f32 %v5012, %v4816
    %v5086 = vadd.f32 %v5012, %v4822
    %v5087 = vadd.f32 %v5016, %v4816
    %v5088 = vadd.f32 %v5016, %v4822
    %v5089 = vadd.f32 %v5020, %v4816
    %v5090 = vadd.f32 %v5020, %v4822
    %v5091 = vadd.f32 %v5024, %v4816
    %v5092 = vadd.f32 %v5024, %v4822
    %v5093 = vadd.f32 %v5028, %v4816
    %v5094 = vadd.f32 %v5028, %v4822
    %v5095 = vadd.f32 %v5032, %v4816
    %v5096 = vadd.f32 %v5032, %v4822
    %v5097 = vadd.f32 %v5036, %v4816
    %v5098 = vadd.f32 %v5036, %v4822
    %v5099 = vadd.f32 %v5040, %v4816
    %v5100 = vadd.f32 %v5040, %v4822
    %v5101 = vadd.f32 %v5044, %v4816
    %v5102 = vadd.f32 %v5044, %v4822
    %v5103 = vadd.f32 %v5048, %v4816
    %v5104 = vadd.f32 %v5048, %v4822
    %v5105 = vadd.f32 %v5052, %v4816
    %v5106 = vadd.f32 %v5052, %v4822
    %v5107 = vadd.f32 %v5056, %v4816
    %v5108 = vadd.f32 %v5056, %v4822
    %v5109 = vadd.f32 %v5060, %v4816
    %v5110 = vadd.f32 %v5060, %v4822
    %v5111 = vadd.f32 %v5064, %v4816
    %v5112 = vadd.f32 %v5064, %v4822
    %v5113 = vlaneseq
    %v5114 = vshrl.u32 %v5113, 7
    %v5115 = vsub.s32 1, %v5114
    %v5116 = vrot.slane %v4728, %v5115
    %v5117 = vmul.f32 %v530, %v5116
    %v5118 = vmul.f32 %v534, %v5116
    %v5119 = vmul.f32 %v541, %v5116
    %v5120 = vmul.f32 %v545, %v5116
    %v5121 = vmul.f32 %v552, %v5116
    %v5122 = vmul.f32 %v556, %v5116
    %v5123 = vmul.f32 %v563, %v5116
    %v5124 = vmul.f32 %v567, %v5116
    %v5125 = vmul.f32 %v574, %v5116
    %v5126 = vmul.f32 %v578, %v5116
    %v5127 = vmul.f32 %v585, %v5116
    %v5128 = vmul.f32 %v589, %v5116
    %v5129 = vmul.f32 %v596, %v5116
    %v5130 = vmul.f32 %v600, %v5116
    %v5131 = vmul.f32 %v607, %v5116
    %v5132 = vmul.f32 %v611, %v5116
    %v5133 = vmul.f32 %v618, %v5116
    %v5134 = vmul.f32 %v622, %v5116
    %v5135 = vmul.f32 %v629, %v5116
    %v5136 = vmul.f32 %v633, %v5116
    %v5137 = vmul.f32 %v640, %v5116
    %v5138 = vmul.f32 %v644, %v5116
    %v5139 = vmul.f32 %v651, %v5116
    %v5140 = vmul.f32 %v655, %v5116
    %v5141 = vmul.f32 %v662, %v5116
    %v5142 = vmul.f32 %v666, %v5116
    %v5143 = vmul.f32 %v673, %v5116
    %v5144 = vmul.f32 %v677, %v5116
    %v5145 = vmul.f32 %v684, %v5116
    %v5146 = vmul.f32 %v688, %v5116
    %v5147 = vmul.f32 %v695, %v5116
    %v5148 = vmul.f32 %v699, %v5116
    %v5149 = vadd.f32 %v5081, %v5117
    %v5150 = vadd.f32 %v5082, %v5118
    %v5151 = vadd.f32 %v5083, %v5119
    %v5152 = vadd.f32 %v5084, %v5120
    %v5153 = vadd.f32 %v5085, %v5121
    %v5154 = vadd.f32 %v5086, %v5122
    %v5155 = vadd.f32 %v5087, %v5123
    %v5156 = vadd.f32 %v5088, %v5124
    %v5157 = vadd.f32 %v5089, %v5125
    %v5158 = vadd.f32 %v5090, %v5126
    %v5159 = vadd.f32 %v5091, %v5127
    %v5160 = vadd.f32 %v5092, %v5128
    %v5161 = vadd.f32 %v5093, %v5129
    %v5162 = vadd.f32 %v5094, %v5130
    %v5163 = vadd.f32 %v5095, %v5131
    %v5164 = vadd.f32 %v5096, %v5132
    %v5165 = vadd.f32 %v5097, %v5133
    %v5166 = vadd.f32 %v5098, %v5134
    %v5167 = vadd.f32 %v5099, %v5135
    %v5168 = vadd.f32 %v5100, %v5136
    %v5169 = vadd.f32 %v5101, %v5137
    %v5170 = vadd.f32 %v5102, %v5138
    %v5171 = vadd.f32 %v5103, %v5139
    %v5172 = vadd.f32 %v5104, %v5140
    %v5173 = vadd.f32 %v5105, %v5141
    %v5174 = vadd.f32 %v5106, %v5142
    %v5175 = vadd.f32 %v5107, %v5143
    %v5176 = vadd.f32 %v5108, %v5144
    %v5177 = vadd.f32 %v5109, %v5145
    %v5178 = vadd.f32 %v5110, %v5146
    %v5179 = vadd.f32 %v5111, %v5147
    %v5180 = vadd.f32 %v5112, %v5148
    %v5181 = vlaneseq
    %v5182 = vshrl.u32 %v5181, 7
    %v5183 = vsub.s32 2, %v5182
    %v5184 = vrot.slane %v4728, %v5183
    %v5185 = vmul.f32 %v774, %v5184
    %v5186 = vmul.f32 %v778, %v5184
    %v5187 = vmul.f32 %v785, %v5184
    %v5188 = vmul.f32 %v789, %v5184
    %v5189 = vmul.f32 %v796, %v5184
    %v5190 = vmul.f32 %v800, %v5184
    %v5191 = vmul.f32 %v807, %v5184
    %v5192 = vmul.f32 %v811, %v5184
    %v5193 = vmul.f32 %v818, %v5184
    %v5194 = vmul.f32 %v822, %v5184
    %v5195 = vmul.f32 %v829, %v5184
    %v5196 = vmul.f32 %v833, %v5184
    %v5197 = vmul.f32 %v840, %v5184
    %v5198 = vmul.f32 %v844, %v5184
    %v5199 = vmul.f32 %v851, %v5184
    %v5200 = vmul.f32 %v855, %v5184
    %v5201 = vmul.f32 %v862, %v5184
    %v5202 = vmul.f32 %v866, %v5184
    %v5203 = vmul.f32 %v873, %v5184
    %v5204 = vmul.f32 %v877, %v5184
    %v5205 = vmul.f32 %v884, %v5184
    %v5206 = vmul.f32 %v888, %v5184
    %v5207 = vmul.f32 %v895, %v5184
    %v5208 = vmul.f32 %v899, %v5184
    %v5209 = vmul.f32 %v906, %v5184
    %v5210 = vmul.f32 %v910, %v5184
    %v5211 = vmul.f32 %v917, %v5184
    %v5212 = vmul.f32 %v921, %v5184
    %v5213 = vmul.f32 %v928, %v5184
    %v5214 = vmul.f32 %v932, %v5184
    %v5215 = vmul.f32 %v939, %v5184
    %v5216 = vmul.f32 %v943, %v5184
    %v5217 = vadd.f32 %v5149, %v5185
    %v5218 = vadd.f32 %v5150, %v5186
    %v5219 = vadd.f32 %v5151, %v5187
    %v5220 = vadd.f32 %v5152, %v5188
    %v5221 = vadd.f32 %v5153, %v5189
    %v5222 = vadd.f32 %v5154, %v5190
    %v5223 = vadd.f32 %v5155, %v5191
    %v5224 = vadd.f32 %v5156, %v5192
    %v5225 = vadd.f32 %v5157, %v5193
    %v5226 = vadd.f32 %v5158, %v5194
    %v5227 = vadd.f32 %v5159, %v5195
    %v5228 = vadd.f32 %v5160, %v5196
    %v5229 = vadd.f32 %v5161, %v5197
    %v5230 = vadd.f32 %v5162, %v5198
    %v5231 = vadd.f32 %v5163, %v5199
    %v5232 = vadd.f32 %v5164, %v5200
    %v5233 = vadd.f32 %v5165, %v5201
    %v5234 = vadd.f32 %v5166, %v5202
    %v5235 = vadd.f32 %v5167, %v5203
    %v5236 = vadd.f32 %v5168, %v5204
    %v5237 = vadd.f32 %v5169, %v5205
    %v5238 = vadd.f32 %v5170, %v5206
    %v5239 = vadd.f32 %v5171, %v5207
    %v5240 = vadd.f32 %v5172, %v5208
    %v5241 = vadd.f32 %v5173, %v5209
    %v5242 = vadd.f32 %v5174, %v5210
    %v5243 = vadd.f32 %v5175, %v5211
    %v5244 = vadd.f32 %v5176, %v5212
    %v5245 = vadd.f32 %v5177, %v5213
    %v5246 = vadd.f32 %v5178, %v5214
    %v5247 = vadd.f32 %v5179, %v5215
    %v5248 = vadd.f32 %v5180, %v5216
    %v5249 = vlaneseq
    %v5250 = vshrl.u32 %v5249, 7
    %v5251 = vsub.s32 3, %v5250
    %v5252 = vrot.slane %v4728, %v5251
    %v5253 = vmul.f32 %v1018, %v5252
    %v5254 = vmul.f32 %v1022, %v5252
    %v5255 = vmul.f32 %v1029, %v5252
    %v5256 = vmul.f32 %v1033, %v5252
    %v5257 = vmul.f32 %v1040, %v5252
    %v5258 = vmul.f32 %v1044, %v5252
    %v5259 = vmul.f32 %v1051, %v5252
    %v5260 = vmul.f32 %v1055, %v5252
    %v5261 = vmul.f32 %v1062, %v5252
    %v5262 = vmul.f32 %v1066, %v5252
    %v5263 = vmul.f32 %v1073, %v5252
    %v5264 = vmul.f32 %v1077, %v5252
    %v5265 = vmul.f32 %v1084, %v5252
    %v5266 = vmul.f32 %v1088, %v5252
    %v5267 = vmul.f32 %v1095, %v5252
    %v5268 = vmul.f32 %v1099, %v5252
    %v5269 = vmul.f32 %v1106, %v5252
    %v5270 = vmul.f32 %v1110, %v5252
    %v5271 = vmul.f32 %v1117, %v5252
    %v5272 = vmul.f32 %v1121, %v5252
    %v5273 = vmul.f32 %v1128, %v5252
    %v5274 = vmul.f32 %v1132, %v5252
    %v5275 = vmul.f32 %v1139, %v5252
    %v5276 = vmul.f32 %v1143, %v5252
    %v5277 = vmul.f32 %v1150, %v5252
    %v5278 = vmul.f32 %v1154, %v5252
    %v5279 = vmul.f32 %v1161, %v5252
    %v5280 = vmul.f32 %v1165, %v5252
    %v5281 = vmul.f32 %v1172, %v5252
    %v5282 = vmul.f32 %v1176, %v5252
    %v5283 = vmul.f32 %v1183, %v5252
    %v5284 = vmul.f32 %v1187, %v5252
    %v5285 = vadd.f32 %v5217, %v5253
    %v5286 = vadd.f32 %v5218, %v5254
    %v5287 = vadd.f32 %v5219, %v5255
    %v5288 = vadd.f32 %v5220, %v5256
    %v5289 = vadd.f32 %v5221, %v5257
    %v5290 = vadd.f32 %v5222, %v5258
    %v5291 = vadd.f32 %v5223, %v5259
    %v5292 = vadd.f32 %v5224, %v5260
    %v5293 = vadd.f32 %v5225, %v5261
    %v5294 = vadd.f32 %v5226, %v5262
    %v5295 = vadd.f32 %v5227, %v5263
    %v5296 = vadd.f32 %v5228, %v5264
    %v5297 = vadd.f32 %v5229, %v5265
    %v5298 = vadd.f32 %v5230, %v5266
    %v5299 = vadd.f32 %v5231, %v5267
    %v5300 = vadd.f32 %v5232, %v5268
    %v5301 = vadd.f32 %v5233, %v5269
    %v5302 = vadd.f32 %v5234, %v5270
    %v5303 = vadd.f32 %v5235, %v5271
    %v5304 = vadd.f32 %v5236, %v5272
    %v5305 = vadd.f32 %v5237, %v5273
    %v5306 = vadd.f32 %v5238, %v5274
    %v5307 = vadd.f32 %v5239, %v5275
    %v5308 = vadd.f32 %v5240, %v5276
    %v5309 = vadd.f32 %v5241, %v5277
    %v5310 = vadd.f32 %v5242, %v5278
    %v5311 = vadd.f32 %v5243, %v5279
    %v5312 = vadd.f32 %v5244, %v5280
    %v5313 = vadd.f32 %v5245, %v5281
    %v5314 = vadd.f32 %v5246, %v5282
    %v5315 = vadd.f32 %v5247, %v5283
    %v5316 = vadd.f32 %v5248, %v5284
    %vm5317 = vcmp.gt.f32.partialorder %v5285, 0.0
    %vm5318 = vcmp.gt.f32.partialorder %v5286, 0.0
    %vm5319 = vcmp.gt.f32.partialorder %v5287, 0.0
    %vm5320 = vcmp.gt.f32.partialorder %v5288, 0.0
    %vm5321 = vcmp.gt.f32.partialorder %v5289, 0.0
    %vm5322 = vcmp.gt.f32.partialorder %v5290, 0.0
    %vm5323 = vcmp.gt.f32.partialorder %v5291, 0.0
    %vm5324 = vcmp.gt.f32.partialorder %v5292, 0.0
    %vm5325 = vcmp.gt.f32.partialorder %v5293, 0.0
    %vm5326 = vcmp.gt.f32.partialorder %v5294, 0.0
    %vm5327 = vcmp.gt.f32.partialorder %v5295, 0.0
    %vm5328 = vcmp.gt.f32.partialorder %v5296, 0.0
    %vm5329 = vcmp.gt.f32.partialorder %v5297, 0.0
    %vm5330 = vcmp.gt.f32.partialorder %v5298, 0.0
    %vm5331 = vcmp.gt.f32.partialorder %v5299, 0.0
    %vm5332 = vcmp.gt.f32.partialorder %v5300, 0.0
    %vm5333 = vcmp.gt.f32.partialorder %v5301, 0.0
    %vm5334 = vcmp.gt.f32.partialorder %v5302, 0.0
    %vm5335 = vcmp.gt.f32.partialorder %v5303, 0.0
    %vm5336 = vcmp.gt.f32.partialorder %v5304, 0.0
    %vm5337 = vcmp.gt.f32.partialorder %v5305, 0.0
    %vm5338 = vcmp.gt.f32.partialorder %v5306, 0.0
    %vm5339 = vcmp.gt.f32.partialorder %v5307, 0.0
    %vm5340 = vcmp.gt.f32.partialorder %v5308, 0.0
    %vm5341 = vcmp.gt.f32.partialorder %v5309, 0.0
    %vm5342 = vcmp.gt.f32.partialorder %v5310, 0.0
    %vm5343 = vcmp.gt.f32.partialorder %v5311, 0.0
    %vm5344 = vcmp.gt.f32.partialorder %v5312, 0.0
    %vm5345 = vcmp.gt.f32.partialorder %v5313, 0.0
    %vm5346 = vcmp.gt.f32.partialorder %v5314, 0.0
    %vm5347 = vcmp.gt.f32.partialorder %v5315, 0.0
    %vm5348 = vcmp.gt.f32.partialorder %v5316, 0.0
    %v5349 = vmul.f32 %v5285, 0.2
    %v5350 = vmul.f32 %v5286, 0.2
    %v5351 = vmul.f32 %v5287, 0.2
    %v5352 = vmul.f32 %v5288, 0.2
    %v5353 = vmul.f32 %v5289, 0.2
    %v5354 = vmul.f32 %v5290, 0.2
    %v5355 = vmul.f32 %v5291, 0.2
    %v5356 = vmul.f32 %v5292, 0.2
    %v5357 = vmul.f32 %v5293, 0.2
    %v5358 = vmul.f32 %v5294, 0.2
    %v5359 = vmul.f32 %v5295, 0.2
    %v5360 = vmul.f32 %v5296, 0.2
    %v5361 = vmul.f32 %v5297, 0.2
    %v5362 = vmul.f32 %v5298, 0.2
    %v5363 = vmul.f32 %v5299, 0.2
    %v5364 = vmul.f32 %v5300, 0.2
    %v5365 = vmul.f32 %v5301, 0.2
    %v5366 = vmul.f32 %v5302, 0.2
    %v5367 = vmul.f32 %v5303, 0.2
    %v5368 = vmul.f32 %v5304, 0.2
    %v5369 = vmul.f32 %v5305, 0.2
    %v5370 = vmul.f32 %v5306, 0.2
    %v5371 = vmul.f32 %v5307, 0.2
    %v5372 = vmul.f32 %v5308, 0.2
    %v5373 = vmul.f32 %v5309, 0.2
    %v5374 = vmul.f32 %v5310, 0.2
    %v5375 = vmul.f32 %v5311, 0.2
    %v5376 = vmul.f32 %v5312, 0.2
    %v5377 = vmul.f32 %v5313, 0.2
    %v5378 = vmul.f32 %v5314, 0.2
    %v5379 = vmul.f32 %v5315, 0.2
    %v5380 = vmul.f32 %v5316, 0.2
    %v5381 = vsel %vm5317, %v5285, %v5349
    %v5382 = vsel %vm5318, %v5286, %v5350
    %v5383 = vsel %vm5319, %v5287, %v5351
    %v5384 = vsel %vm5320, %v5288, %v5352
    %v5385 = vsel %vm5321, %v5289, %v5353
    %v5386 = vsel %vm5322, %v5290, %v5354
    %v5387 = vsel %vm5323, %v5291, %v5355
    %v5388 = vsel %vm5324, %v5292, %v5356
    %v5389 = vsel %vm5325, %v5293, %v5357
    %v5390 = vsel %vm5326, %v5294, %v5358
    %v5391 = vsel %vm5327, %v5295, %v5359
    %v5392 = vsel %vm5328, %v5296, %v5360
    %v5393 = vsel %vm5329, %v5297, %v5361
    %v5394 = vsel %vm5330, %v5298, %v5362
    %v5395 = vsel %vm5331, %v5299, %v5363
    %v5396 = vsel %vm5332, %v5300, %v5364
    %v5397 = vsel %vm5333, %v5301, %v5365
    %v5398 = vsel %vm5334, %v5302, %v5366
    %v5399 = vsel %vm5335, %v5303, %v5367
    %v5400 = vsel %vm5336, %v5304, %v5368
    %v5401 = vsel %vm5337, %v5305, %v5369
    %v5402 = vsel %vm5338, %v5306, %v5370
    %v5403 = vsel %vm5339, %v5307, %v5371
    %v5404 = vsel %vm5340, %v5308, %v5372
    %v5405 = vsel %vm5341, %v5309, %v5373
    %v5406 = vsel %vm5342, %v5310, %v5374
    %v5407 = vsel %vm5343, %v5311, %v5375
    %v5408 = vsel %vm5344, %v5312, %v5376
    %v5409 = vsel %vm5345, %v5313, %v5377
    %v5410 = vsel %vm5346, %v5314, %v5378
    %v5411 = vsel %vm5347, %v5315, %v5379
    %v5412 = vsel %vm5348, %v5316, %v5380
    %v5413 = vlaneseq
    %v5414 = vshrl.u32 %v5413, 7
    %v5415 = vsub.s32 4, %v5414
    %v5416 = vrot.slane %v4728, %v5415
    %v5417 = vmul.f32 %v5381, %v5416
    %v5418 = vmul.f32 %v5382, %v5416
    %v5419 = vmul.f32 %v5383, %v5416
    %v5420 = vmul.f32 %v5384, %v5416
    %v5421 = vmul.f32 %v5385, %v5416
    %v5422 = vmul.f32 %v5386, %v5416
    %v5423 = vmul.f32 %v5387, %v5416
    %v5424 = vmul.f32 %v5388, %v5416
    %v5425 = vmul.f32 %v5389, %v5416
    %v5426 = vmul.f32 %v5390, %v5416
    %v5427 = vmul.f32 %v5391, %v5416
    %v5428 = vmul.f32 %v5392, %v5416
    %v5429 = vmul.f32 %v5393, %v5416
    %v5430 = vmul.f32 %v5394, %v5416
    %v5431 = vmul.f32 %v5395, %v5416
    %v5432 = vmul.f32 %v5396, %v5416
    %v5433 = vmul.f32 %v5397, %v5416
    %v5434 = vmul.f32 %v5398, %v5416
    %v5435 = vmul.f32 %v5399, %v5416
    %v5436 = vmul.f32 %v5400, %v5416
    %v5437 = vmul.f32 %v5401, %v5416
    %v5438 = vmul.f32 %v5402, %v5416
    %v5439 = vmul.f32 %v5403, %v5416
    %v5440 = vmul.f32 %v5404, %v5416
    %v5441 = vmul.f32 %v5405, %v5416
    %v5442 = vmul.f32 %v5406, %v5416
    %v5443 = vmul.f32 %v5407, %v5416
    %v5444 = vmul.f32 %v5408, %v5416
    %v5445 = vmul.f32 %v5409, %v5416
    %v5446 = vmul.f32 %v5410, %v5416
    %v5447 = vmul.f32 %v5411, %v5416
    %v5448 = vmul.f32 %v5412, %v5416
    %v5449 = vsel %vm1388, %v5417, 0.0
    %5450 = vadd.xlane.f32.xlu0 %v5449
    %v5451 = vpop.xlane.xlu0 %5450
    %v5452 = vsel %vm1388, %v5418, 0.0
    %5453 = vadd.xlane.f32.xlu0 %v5452
    %v5454 = vpop.xlane.xlu0 %5453
    %v5455 = vsel %vm1388, %v5419, 0.0
    %5456 = vadd.xlane.f32.xlu0 %v5455
    %v5457 = vpop.xlane.xlu0 %5456
    %v5458 = vsel %vm1388, %v5420, 0.0
    %5459 = vadd.xlane.f32.xlu0 %v5458
    %v5460 = vpop.xlane.xlu0 %5459
    %v5461 = vsel %vm1388, %v5421, 0.0
    %5462 = vadd.xlane.f32.xlu0 %v5461
    %v5463 = vpop.xlane.xlu0 %5462
    %v5464 = vsel %vm1388, %v5422, 0.0
    %5465 = vadd.xlane.f32.xlu0 %v5464
    %v5466 = vpop.xlane.xlu0 %5465
    %v5467 = vsel %vm1388, %v5423, 0.0
    %5468 = vadd.xlane.f32.xlu0 %v5467
    %v5469 = vpop.xlane.xlu0 %5468
    %v5470 = vsel %vm1388, %v5424, 0.0
    %5471 = vadd.xlane.f32.xlu0 %v5470
    %v5472 = vpop.xlane.xlu0 %5471
    %v5473 = vsel %vm1388, %v5425, 0.0
    %5474 = vadd.xlane.f32.xlu0 %v5473
    %v5475 = vpop.xlane.xlu0 %5474
    %v5476 = vsel %vm1388, %v5426, 0.0
    %5477 = vadd.xlane.f32.xlu0 %v5476
    %v5478 = vpop.xlane.xlu0 %5477
    %v5479 = vsel %vm1388, %v5427, 0.0
    %5480 = vadd.xlane.f32.xlu0 %v5479
    %v5481 = vpop.xlane.xlu0 %5480
    %v5482 = vsel %vm1388, %v5428, 0.0
    %5483 = vadd.xlane.f32.xlu0 %v5482
    %v5484 = vpop.xlane.xlu0 %5483
    %v5485 = vsel %vm1388, %v5429, 0.0
    %5486 = vadd.xlane.f32.xlu0 %v5485
    %v5487 = vpop.xlane.xlu0 %5486
    %v5488 = vsel %vm1388, %v5430, 0.0
    %5489 = vadd.xlane.f32.xlu0 %v5488
    %v5490 = vpop.xlane.xlu0 %5489
    %v5491 = vsel %vm1388, %v5431, 0.0
    %5492 = vadd.xlane.f32.xlu0 %v5491
    %v5493 = vpop.xlane.xlu0 %5492
    %v5494 = vsel %vm1388, %v5432, 0.0
    %5495 = vadd.xlane.f32.xlu0 %v5494
    %v5496 = vpop.xlane.xlu0 %5495
    %v5497 = vsel %vm1388, %v5433, 0.0
    %5498 = vadd.xlane.f32.xlu0 %v5497
    %v5499 = vpop.xlane.xlu0 %5498
    %v5500 = vsel %vm1388, %v5434, 0.0
    %5501 = vadd.xlane.f32.xlu0 %v5500
    %v5502 = vpop.xlane.xlu0 %5501
    %v5503 = vsel %vm1388, %v5435, 0.0
    %5504 = vadd.xlane.f32.xlu0 %v5503
    %v5505 = vpop.xlane.xlu0 %5504
    %v5506 = vsel %vm1388, %v5436, 0.0
    %5507 = vadd.xlane.f32.xlu0 %v5506
    %v5508 = vpop.xlane.xlu0 %5507
    %v5509 = vsel %vm1388, %v5437, 0.0
    %5510 = vadd.xlane.f32.xlu0 %v5509
    %v5511 = vpop.xlane.xlu0 %5510
    %v5512 = vsel %vm1388, %v5438, 0.0
    %5513 = vadd.xlane.f32.xlu0 %v5512
    %v5514 = vpop.xlane.xlu0 %5513
    %v5515 = vsel %vm1388, %v5439, 0.0
    %5516 = vadd.xlane.f32.xlu0 %v5515
    %v5517 = vpop.xlane.xlu0 %5516
    %v5518 = vsel %vm1388, %v5440, 0.0
    %5519 = vadd.xlane.f32.xlu0 %v5518
    %v5520 = vpop.xlane.xlu0 %5519
    %v5521 = vsel %vm1388, %v5441, 0.0
    %5522 = vadd.xlane.f32.xlu0 %v5521
    %v5523 = vpop.xlane.xlu0 %5522
    %v5524 = vsel %vm1388, %v5442, 0.0
    %5525 = vadd.xlane.f32.xlu0 %v5524
    %v5526 = vpop.xlane.xlu0 %5525
    %v5527 = vsel %vm1388, %v5443, 0.0
    %5528 = vadd.xlane.f32.xlu0 %v5527
    %v5529 = vpop.xlane.xlu0 %5528
    %v5530 = vsel %vm1388, %v5444, 0.0
    %5531 = vadd.xlane.f32.xlu0 %v5530
    %v5532 = vpop.xlane.xlu0 %5531
    %v5533 = vsel %vm1388, %v5445, 0.0
    %5534 = vadd.xlane.f32.xlu0 %v5533
    %v5535 = vpop.xlane.xlu0 %5534
    %v5536 = vsel %vm1388, %v5446, 0.0
    %5537 = vadd.xlane.f32.xlu0 %v5536
    %v5538 = vpop.xlane.xlu0 %5537
    %v5539 = vsel %vm1388, %v5447, 0.0
    %5540 = vadd.xlane.f32.xlu0 %v5539
    %v5541 = vpop.xlane.xlu0 %5540
    %v5542 = vsel %vm1388, %v5448, 0.0
    %5543 = vadd.xlane.f32.xlu0 %v5542
    %v5544 = vpop.xlane.xlu0 %5543
    %v5545 = vadd.f32 %v5451, %v1493
    %v5546 = vadd.f32 %v5454, %v1497
    %v5547 = vadd.f32 %v5457, %v1504
    %v5548 = vadd.f32 %v5460, %v1508
    %v5549 = vadd.f32 %v5463, %v1515
    %v5550 = vadd.f32 %v5466, %v1519
    %v5551 = vadd.f32 %v5469, %v1526
    %v5552 = vadd.f32 %v5472, %v1530
    %v5553 = vadd.f32 %v5475, %v1537
    %v5554 = vadd.f32 %v5478, %v1541
    %v5555 = vadd.f32 %v5481, %v1548
    %v5556 = vadd.f32 %v5484, %v1552
    %v5557 = vadd.f32 %v5487, %v1559
    %v5558 = vadd.f32 %v5490, %v1563
    %v5559 = vadd.f32 %v5493, %v1570
    %v5560 = vadd.f32 %v5496, %v1574
    %v5561 = vadd.f32 %v5499, %v1581
    %v5562 = vadd.f32 %v5502, %v1585
    %v5563 = vadd.f32 %v5505, %v1592
    %v5564 = vadd.f32 %v5508, %v1596
    %v5565 = vadd.f32 %v5511, %v1603
    %v5566 = vadd.f32 %v5514, %v1607
    %v5567 = vadd.f32 %v5517, %v1614
    %v5568 = vadd.f32 %v5520, %v1618
    %v5569 = vadd.f32 %v5523, %v1625
    %v5570 = vadd.f32 %v5526, %v1629
    %v5571 = vadd.f32 %v5529, %v1636
    %v5572 = vadd.f32 %v5532, %v1640
    %v5573 = vadd.f32 %v5535, %v1647
    %v5574 = vadd.f32 %v5538, %v1651
    %v5575 = vadd.f32 %v5541, %v1658
    %v5576 = vadd.f32 %v5544, %v1662
    %5609 = vset.pattern.permute.xlu0 0
    %5610 = vperm.xlu0 %5609, %v5545
    %v5611 = vpop.permute.xlu0 %5610
    %5612 = vset.pattern.permute.xlu0 0
    %5613 = vperm.xlu0 %5612, %v5546
    %v5614 = vpop.permute.xlu0 %5613
    %5615 = vset.pattern.permute.xlu0 0
    %5616 = vperm.xlu0 %5615, %v5547
    %v5617 = vpop.permute.xlu0 %5616
    %5618 = vset.pattern.permute.xlu0 0
    %5619 = vperm.xlu0 %5618, %v5548
    %v5620 = vpop.permute.xlu0 %5619
    %5621 = vset.pattern.permute.xlu0 0
    %5622 = vperm.xlu0 %5621, %v5549
    %v5623 = vpop.permute.xlu0 %5622
    %5624 = vset.pattern.permute.xlu0 0
    %5625 = vperm.xlu0 %5624, %v5550
    %v5626 = vpop.permute.xlu0 %5625
    %5627 = vset.pattern.permute.xlu0 0
    %5628 = vperm.xlu0 %5627, %v5551
    %v5629 = vpop.permute.xlu0 %5628
    %5630 = vset.pattern.permute.xlu0 0
    %5631 = vperm.xlu0 %5630, %v5552
    %v5632 = vpop.permute.xlu0 %5631
    %5633 = vset.pattern.permute.xlu0 0
    %5634 = vperm.xlu0 %5633, %v5553
    %v5635 = vpop.permute.xlu0 %5634
    %5636 = vset.pattern.permute.xlu0 0
    %5637 = vperm.xlu0 %5636, %v5554
    %v5638 = vpop.permute.xlu0 %5637
    %5639 = vset.pattern.permute.xlu0 0
    %5640 = vperm.xlu0 %5639, %v5555
    %v5641 = vpop.permute.xlu0 %5640
    %5642 = vset.pattern.permute.xlu0 0
    %5643 = vperm.xlu0 %5642, %v5556
    %v5644 = vpop.permute.xlu0 %5643
    %5645 = vset.pattern.permute.xlu0 0
    %5646 = vperm.xlu0 %5645, %v5557
    %v5647 = vpop.permute.xlu0 %5646
    %5648 = vset.pattern.permute.xlu0 0
    %5649 = vperm.xlu0 %5648, %v5558
    %v5650 = vpop.permute.xlu0 %5649
    %5651 = vset.pattern.permute.xlu0 0
    %5652 = vperm.xlu0 %5651, %v5559
    %v5653 = vpop.permute.xlu0 %5652
    %5654 = vset.pattern.permute.xlu0 0
    %5655 = vperm.xlu0 %5654, %v5560
    %v5656 = vpop.permute.xlu0 %5655
    %5657 = vset.pattern.permute.xlu0 0
    %5658 = vperm.xlu0 %5657, %v5561
    %v5659 = vpop.permute.xlu0 %5658
    %5660 = vset.pattern.permute.xlu0 0
    %5661 = vperm.xlu0 %5660, %v5562
    %v5662 = vpop.permute.xlu0 %5661
    %5663 = vset.pattern.permute.xlu0 0
    %5664 = vperm.xlu0 %5663, %v5563
    %v5665 = vpop.permute.xlu0 %5664
    %5666 = vset.pattern.permute.xlu0 0
    %5667 = vperm.xlu0 %5666, %v5564
    %v5668 = vpop.permute.xlu0 %5667
    %5669 = vset.pattern.permute.xlu0 0
    %5670 = vperm.xlu0 %5669, %v5565
    %v5671 = vpop.permute.xlu0 %5670
    %5672 = vset.pattern.permute.xlu0 0
    %5673 = vperm.xlu0 %5672, %v5566
    %v5674 = vpop.permute.xlu0 %5673
    %5675 = vset.pattern.permute.xlu0 0
    %5676 = vperm.xlu0 %5675, %v5567
    %v5677 = vpop.permute.xlu0 %5676
    %5678 = vset.pattern.permute.xlu0 0
    %5679 = vperm.xlu0 %5678, %v5568
    %v5680 = vpop.permute.xlu0 %5679
    %5681 = vset.pattern.permute.xlu0 0
    %5682 = vperm.xlu0 %5681, %v5569
    %v5683 = vpop.permute.xlu0 %5682
    %5684 = vset.pattern.permute.xlu0 0
    %5685 = vperm.xlu0 %5684, %v5570
    %v5686 = vpop.permute.xlu0 %5685
    %5687 = vset.pattern.permute.xlu0 0
    %5688 = vperm.xlu0 %5687, %v5571
    %v5689 = vpop.permute.xlu0 %5688
    %5690 = vset.pattern.permute.xlu0 0
    %5691 = vperm.xlu0 %5690, %v5572
    %v5692 = vpop.permute.xlu0 %5691
    %5693 = vset.pattern.permute.xlu0 0
    %5694 = vperm.xlu0 %5693, %v5573
    %v5695 = vpop.permute.xlu0 %5694
    %5696 = vset.pattern.permute.xlu0 0
    %5697 = vperm.xlu0 %5696, %v5574
    %v5698 = vpop.permute.xlu0 %5697
    %5699 = vset.pattern.permute.xlu0 0
    %5700 = vperm.xlu0 %5699, %v5575
    %v5701 = vpop.permute.xlu0 %5700
    %5702 = vset.pattern.permute.xlu0 0
    %5703 = vperm.xlu0 %5702, %v5576
    %v5704 = vpop.permute.xlu0 %5703
    %v5705 = vlaneseq
    %v5706 = vshrl.u32 %v5705, 7
    %v5707 = vsub.s32 %v1856, %v5706
    %v5708 = vrot.slane %v5611, %v5707
    %v5709 = vlaneseq
    %v5710 = vshrl.u32 %v5709, 7
    %v5711 = vsub.s32 %v1861, %v5710
    %v5712 = vrot.slane %v5614, %v5711
    %v5713 = vsel %vm1866, %v5712, %v5708
    %v5714 = vlaneseq
    %v5715 = vshrl.u32 %v5714, 7
    %v5716 = vsub.s32 %v1856, %v5715
    %v5717 = vrot.slane %v5617, %v5716
    %v5718 = vlaneseq
    %v5719 = vshrl.u32 %v5718, 7
    %v5720 = vsub.s32 %v1861, %v5719
    %v5721 = vrot.slane %v5620, %v5720
    %v5722 = vsel %vm1866, %v5721, %v5717
    %v5723 = vlaneseq
    %v5724 = vshrl.u32 %v5723, 7
    %v5725 = vsub.s32 %v1856, %v5724
    %v5726 = vrot.slane %v5623, %v5725
    %v5727 = vlaneseq
    %v5728 = vshrl.u32 %v5727, 7
    %v5729 = vsub.s32 %v1861, %v5728
    %v5730 = vrot.slane %v5626, %v5729
    %v5731 = vsel %vm1866, %v5730, %v5726
    %v5732 = vlaneseq
    %v5733 = vshrl.u32 %v5732, 7
    %v5734 = vsub.s32 %v1856, %v5733
    %v5735 = vrot.slane %v5629, %v5734
    %v5736 = vlaneseq
    %v5737 = vshrl.u32 %v5736, 7
    %v5738 = vsub.s32 %v1861, %v5737
    %v5739 = vrot.slane %v5632, %v5738
    %v5740 = vsel %vm1866, %v5739, %v5735
    %v5741 = vlaneseq
    %v5742 = vshrl.u32 %v5741, 7
    %v5743 = vsub.s32 %v1856, %v5742
    %v5744 = vrot.slane %v5635, %v5743
    %v5745 = vlaneseq
    %v5746 = vshrl.u32 %v5745, 7
    %v5747 = vsub.s32 %v1861, %v5746
    %v5748 = vrot.slane %v5638, %v5747
    %v5749 = vsel %vm1866, %v5748, %v5744
    %v5750 = vlaneseq
    %v5751 = vshrl.u32 %v5750, 7
    %v5752 = vsub.s32 %v1856, %v5751
    %v5753 = vrot.slane %v5641, %v5752
    %v5754 = vlaneseq
    %v5755 = vshrl.u32 %v5754, 7
    %v5756 = vsub.s32 %v1861, %v5755
    %v5757 = vrot.slane %v5644, %v5756
    %v5758 = vsel %vm1866, %v5757, %v5753
    %v5759 = vlaneseq
    %v5760 = vshrl.u32 %v5759, 7
    %v5761 = vsub.s32 %v1856, %v5760
    %v5762 = vrot.slane %v5647, %v5761
    %v5763 = vlaneseq
    %v5764 = vshrl.u32 %v5763, 7
    %v5765 = vsub.s32 %v1861, %v5764
    %v5766 = vrot.slane %v5650, %v5765
    %v5767 = vsel %vm1866, %v5766, %v5762
    %v5768 = vlaneseq
    %v5769 = vshrl.u32 %v5768, 7
    %v5770 = vsub.s32 %v1856, %v5769
    %v5771 = vrot.slane %v5653, %v5770
    %v5772 = vlaneseq
    %v5773 = vshrl.u32 %v5772, 7
    %v5774 = vsub.s32 %v1861, %v5773
    %v5775 = vrot.slane %v5656, %v5774
    %v5776 = vsel %vm1866, %v5775, %v5771
    %v5777 = vlaneseq
    %v5778 = vshrl.u32 %v5777, 7
    %v5779 = vsub.s32 %v1856, %v5778
    %v5780 = vrot.slane %v5659, %v5779
    %v5781 = vlaneseq
    %v5782 = vshrl.u32 %v5781, 7
    %v5783 = vsub.s32 %v1861, %v5782
    %v5784 = vrot.slane %v5662, %v5783
    %v5785 = vsel %vm1866, %v5784, %v5780
    %v5786 = vlaneseq
    %v5787 = vshrl.u32 %v5786, 7
    %v5788 = vsub.s32 %v1856, %v5787
    %v5789 = vrot.slane %v5665, %v5788
    %v5790 = vlaneseq
    %v5791 = vshrl.u32 %v5790, 7
    %v5792 = vsub.s32 %v1861, %v5791
    %v5793 = vrot.slane %v5668, %v5792
    %v5794 = vsel %vm1866, %v5793, %v5789
    %v5795 = vlaneseq
    %v5796 = vshrl.u32 %v5795, 7
    %v5797 = vsub.s32 %v1856, %v5796
    %v5798 = vrot.slane %v5671, %v5797
    %v5799 = vlaneseq
    %v5800 = vshrl.u32 %v5799, 7
    %v5801 = vsub.s32 %v1861, %v5800
    %v5802 = vrot.slane %v5674, %v5801
    %v5803 = vsel %vm1866, %v5802, %v5798
    %v5804 = vlaneseq
    %v5805 = vshrl.u32 %v5804, 7
    %v5806 = vsub.s32 %v1856, %v5805
    %v5807 = vrot.slane %v5677, %v5806
    %v5808 = vlaneseq
    %v5809 = vshrl.u32 %v5808, 7
    %v5810 = vsub.s32 %v1861, %v5809
    %v5811 = vrot.slane %v5680, %v5810
    %v5812 = vsel %vm1866, %v5811, %v5807
    %v5813 = vlaneseq
    %v5814 = vshrl.u32 %v5813, 7
    %v5815 = vsub.s32 %v1856, %v5814
    %v5816 = vrot.slane %v5683, %v5815
    %v5817 = vlaneseq
    %v5818 = vshrl.u32 %v5817, 7
    %v5819 = vsub.s32 %v1861, %v5818
    %v5820 = vrot.slane %v5686, %v5819
    %v5821 = vsel %vm1866, %v5820, %v5816
    %v5822 = vlaneseq
    %v5823 = vshrl.u32 %v5822, 7
    %v5824 = vsub.s32 %v1856, %v5823
    %v5825 = vrot.slane %v5689, %v5824
    %v5826 = vlaneseq
    %v5827 = vshrl.u32 %v5826, 7
    %v5828 = vsub.s32 %v1861, %v5827
    %v5829 = vrot.slane %v5692, %v5828
    %v5830 = vsel %vm1866, %v5829, %v5825
    %v5831 = vlaneseq
    %v5832 = vshrl.u32 %v5831, 7
    %v5833 = vsub.s32 %v1856, %v5832
    %v5834 = vrot.slane %v5695, %v5833
    %v5835 = vlaneseq
    %v5836 = vshrl.u32 %v5835, 7
    %v5837 = vsub.s32 %v1861, %v5836
    %v5838 = vrot.slane %v5698, %v5837
    %v5839 = vsel %vm1866, %v5838, %v5834
    %v5840 = vlaneseq
    %v5841 = vshrl.u32 %v5840, 7
    %v5842 = vsub.s32 %v1856, %v5841
    %v5843 = vrot.slane %v5701, %v5842
    %v5844 = vlaneseq
    %v5845 = vshrl.u32 %v5844, 7
    %v5846 = vsub.s32 %v1861, %v5845
    %v5847 = vrot.slane %v5704, %v5846
    %v5848 = vsel %vm1866, %v5847, %v5843
    %v5849 = vsel %vm2003, %v5722, %v5713
    %v5850 = vsel %vm2005, %v5731, %v5849
    %v5851 = vsel %vm2007, %v5740, %v5850
    %v5852 = vsel %vm2009, %v5749, %v5851
    %v5853 = vsel %vm2011, %v5758, %v5852
    %v5854 = vsel %vm2013, %v5767, %v5853
    %v5855 = vsel %vm2015, %v5776, %v5854
    %v5856 = vsel %vm2003, %v5794, %v5785
    %v5857 = vsel %vm2005, %v5803, %v5856
    %v5858 = vsel %vm2007, %v5812, %v5857
    %v5859 = vsel %vm2009, %v5821, %v5858
    %v5860 = vsel %vm2011, %v5830, %v5859
    %v5861 = vsel %vm2013, %v5839, %v5860
    %v5862 = vsel %vm2015, %v5848, %v5861
    %v5865 = vsel %vm153, %v5855, -inf
    %5866 = vmax.xlane.f32.xlu0 %v5865
    %v5867 = vpop.xlane.xlu0 %5866
    %v5868 = vsel %vm153, %v5862, -inf
    %5869 = vmax.xlane.f32.xlu0 %v5868
    %v5870 = vpop.xlane.xlu0 %5869
    %v5873 = vlaneseq
    %v5874 = vshrl.u32 %v5873, 7
    %v5875 = vsub.s32 0, %v5874
    %v5876 = vrot.slane %v5867, %v5875
    %v5877 = vlaneseq
    %v5878 = vshrl.u32 %v5877, 7
    %v5879 = vsub.s32 1, %v5878
    %v5880 = vrot.slane %v5867, %v5879
    %v5881 = vlaneseq
    %v5882 = vshrl.u32 %v5881, 7
    %v5883 = vsub.s32 2, %v5882
    %v5884 = vrot.slane %v5867, %v5883
    %v5885 = vlaneseq
    %v5886 = vshrl.u32 %v5885, 7
    %v5887 = vsub.s32 3, %v5886
    %v5888 = vrot.slane %v5867, %v5887
    %v5889 = vlaneseq
    %v5890 = vshrl.u32 %v5889, 7
    %v5891 = vsub.s32 4, %v5890
    %v5892 = vrot.slane %v5867, %v5891
    %v5893 = vlaneseq
    %v5894 = vshrl.u32 %v5893, 7
    %v5895 = vsub.s32 5, %v5894
    %v5896 = vrot.slane %v5867, %v5895
    %v5897 = vlaneseq
    %v5898 = vshrl.u32 %v5897, 7
    %v5899 = vsub.s32 6, %v5898
    %v5900 = vrot.slane %v5867, %v5899
    %v5901 = vlaneseq
    %v5902 = vshrl.u32 %v5901, 7
    %v5903 = vsub.s32 7, %v5902
    %v5904 = vrot.slane %v5867, %v5903
    %v5905 = vlaneseq
    %v5906 = vshrl.u32 %v5905, 7
    %v5907 = vsub.s32 0, %v5906
    %v5908 = vrot.slane %v5870, %v5907
    %v5909 = vlaneseq
    %v5910 = vshrl.u32 %v5909, 7
    %v5911 = vsub.s32 1, %v5910
    %v5912 = vrot.slane %v5870, %v5911
    %v5913 = vlaneseq
    %v5914 = vshrl.u32 %v5913, 7
    %v5915 = vsub.s32 2, %v5914
    %v5916 = vrot.slane %v5870, %v5915
    %v5917 = vlaneseq
    %v5918 = vshrl.u32 %v5917, 7
    %v5919 = vsub.s32 3, %v5918
    %v5920 = vrot.slane %v5870, %v5919
    %v5921 = vlaneseq
    %v5922 = vshrl.u32 %v5921, 7
    %v5923 = vsub.s32 4, %v5922
    %v5924 = vrot.slane %v5870, %v5923
    %v5925 = vlaneseq
    %v5926 = vshrl.u32 %v5925, 7
    %v5927 = vsub.s32 5, %v5926
    %v5928 = vrot.slane %v5870, %v5927
    %v5929 = vlaneseq
    %v5930 = vshrl.u32 %v5929, 7
    %v5931 = vsub.s32 6, %v5930
    %v5932 = vrot.slane %v5870, %v5931
    %v5933 = vlaneseq
    %v5934 = vshrl.u32 %v5933, 7
    %v5935 = vsub.s32 7, %v5934
    %v5936 = vrot.slane %v5870, %v5935
    %v5953 = vsub.f32 %v5545, %v5876
    %v5954 = vsub.f32 %v5546, %v5876
    %v5955 = vsub.f32 %v5547, %v5880
    %v5956 = vsub.f32 %v5548, %v5880
    %v5957 = vsub.f32 %v5549, %v5884
    %v5958 = vsub.f32 %v5550, %v5884
    %v5959 = vsub.f32 %v5551, %v5888
    %v5960 = vsub.f32 %v5552, %v5888
    %v5961 = vsub.f32 %v5553, %v5892
    %v5962 = vsub.f32 %v5554, %v5892
    %v5963 = vsub.f32 %v5555, %v5896
    %v5964 = vsub.f32 %v5556, %v5896
    %v5965 = vsub.f32 %v5557, %v5900
    %v5966 = vsub.f32 %v5558, %v5900
    %v5967 = vsub.f32 %v5559, %v5904
    %v5968 = vsub.f32 %v5560, %v5904
    %v5969 = vsub.f32 %v5561, %v5908
    %v5970 = vsub.f32 %v5562, %v5908
    %v5971 = vsub.f32 %v5563, %v5912
    %v5972 = vsub.f32 %v5564, %v5912
    %v5973 = vsub.f32 %v5565, %v5916
    %v5974 = vsub.f32 %v5566, %v5916
    %v5975 = vsub.f32 %v5567, %v5920
    %v5976 = vsub.f32 %v5568, %v5920
    %v5977 = vsub.f32 %v5569, %v5924
    %v5978 = vsub.f32 %v5570, %v5924
    %v5979 = vsub.f32 %v5571, %v5928
    %v5980 = vsub.f32 %v5572, %v5928
    %v5981 = vsub.f32 %v5573, %v5932
    %v5982 = vsub.f32 %v5574, %v5932
    %v5983 = vsub.f32 %v5575, %v5936
    %v5984 = vsub.f32 %v5576, %v5936
    %v5985 = vmul.f32 %v5953, 1.442695
    %v5986 = vpow.pop %v5985
    %v5987 = vmul.f32 %v5954, 1.442695
    %v5988 = vpow.pop %v5987
    %v5989 = vmul.f32 %v5955, 1.442695
    %v5990 = vpow.pop %v5989
    %v5991 = vmul.f32 %v5956, 1.442695
    %v5992 = vpow.pop %v5991
    %v5993 = vmul.f32 %v5957, 1.442695
    %v5994 = vpow.pop %v5993
    %v5995 = vmul.f32 %v5958, 1.442695
    %v5996 = vpow.pop %v5995
    %v5997 = vmul.f32 %v5959, 1.442695
    %v5998 = vpow.pop %v5997
    %v5999 = vmul.f32 %v5960, 1.442695
    %v6000 = vpow.pop %v5999
    %v6001 = vmul.f32 %v5961, 1.442695
    %v6002 = vpow.pop %v6001
    %v6003 = vmul.f32 %v5962, 1.442695
    %v6004 = vpow.pop %v6003
    %v6005 = vmul.f32 %v5963, 1.442695
    %v6006 = vpow.pop %v6005
    %v6007 = vmul.f32 %v5964, 1.442695
    %v6008 = vpow.pop %v6007
    %v6009 = vmul.f32 %v5965, 1.442695
    %v6010 = vpow.pop %v6009
    %v6011 = vmul.f32 %v5966, 1.442695
    %v6012 = vpow.pop %v6011
    %v6013 = vmul.f32 %v5967, 1.442695
    %v6014 = vpow.pop %v6013
    %v6015 = vmul.f32 %v5968, 1.442695
    %v6016 = vpow.pop %v6015
    %v6017 = vmul.f32 %v5969, 1.442695
    %v6018 = vpow.pop %v6017
    %v6019 = vmul.f32 %v5970, 1.442695
    %v6020 = vpow.pop %v6019
    %v6021 = vmul.f32 %v5971, 1.442695
    %v6022 = vpow.pop %v6021
    %v6023 = vmul.f32 %v5972, 1.442695
    %v6024 = vpow.pop %v6023
    %v6025 = vmul.f32 %v5973, 1.442695
    %v6026 = vpow.pop %v6025
    %v6027 = vmul.f32 %v5974, 1.442695
    %v6028 = vpow.pop %v6027
    %v6029 = vmul.f32 %v5975, 1.442695
    %v6030 = vpow.pop %v6029
    %v6031 = vmul.f32 %v5976, 1.442695
    %v6032 = vpow.pop %v6031
    %v6033 = vmul.f32 %v5977, 1.442695
    %v6034 = vpow.pop %v6033
    %v6035 = vmul.f32 %v5978, 1.442695
    %v6036 = vpow.pop %v6035
    %v6037 = vmul.f32 %v5979, 1.442695
    %v6038 = vpow.pop %v6037
    %v6039 = vmul.f32 %v5980, 1.442695
    %v6040 = vpow.pop %v6039
    %v6041 = vmul.f32 %v5981, 1.442695
    %v6042 = vpow.pop %v6041
    %v6043 = vmul.f32 %v5982, 1.442695
    %v6044 = vpow.pop %v6043
    %v6045 = vmul.f32 %v5983, 1.442695
    %v6046 = vpow.pop %v6045
    %v6047 = vmul.f32 %v5984, 1.442695
    %v6048 = vpow.pop %v6047
    %v6049 = vmul.f32 %v5986, %v2218
    %v6050 = vmul.f32 %v5988, %v2222
    %v6051 = vmul.f32 %v5990, %v2229
    %v6052 = vmul.f32 %v5992, %v2233
    %v6053 = vmul.f32 %v5994, %v2240
    %v6054 = vmul.f32 %v5996, %v2244
    %v6055 = vmul.f32 %v5998, %v2251
    %v6056 = vmul.f32 %v6000, %v2255
    %v6057 = vmul.f32 %v6002, %v2262
    %v6058 = vmul.f32 %v6004, %v2266
    %v6059 = vmul.f32 %v6006, %v2273
    %v6060 = vmul.f32 %v6008, %v2277
    %v6061 = vmul.f32 %v6010, %v2284
    %v6062 = vmul.f32 %v6012, %v2288
    %v6063 = vmul.f32 %v6014, %v2295
    %v6064 = vmul.f32 %v6016, %v2299
    %v6065 = vmul.f32 %v6018, %v2306
    %v6066 = vmul.f32 %v6020, %v2310
    %v6067 = vmul.f32 %v6022, %v2317
    %v6068 = vmul.f32 %v6024, %v2321
    %v6069 = vmul.f32 %v6026, %v2328
    %v6070 = vmul.f32 %v6028, %v2332
    %v6071 = vmul.f32 %v6030, %v2339
    %v6072 = vmul.f32 %v6032, %v2343
    %v6073 = vmul.f32 %v6034, %v2350
    %v6074 = vmul.f32 %v6036, %v2354
    %v6075 = vmul.f32 %v6038, %v2361
    %v6076 = vmul.f32 %v6040, %v2365
    %v6077 = vmul.f32 %v6042, %v2372
    %v6078 = vmul.f32 %v6044, %v2376
    %v6079 = vmul.f32 %v6046, %v2383
    %v6080 = vmul.f32 %v6048, %v2387
    %6113 = vset.pattern.permute.xlu0 0
    %6114 = vperm.xlu0 %6113, %v6049
    %v6115 = vpop.permute.xlu0 %6114
    %6116 = vset.pattern.permute.xlu0 0
    %6117 = vperm.xlu0 %6116, %v6050
    %v6118 = vpop.permute.xlu0 %6117
    %6119 = vset.pattern.permute.xlu0 0
    %6120 = vperm.xlu0 %6119, %v6051
    %v6121 = vpop.permute.xlu0 %6120
    %6122 = vset.pattern.permute.xlu0 0
    %6123 = vperm.xlu0 %6122, %v6052
    %v6124 = vpop.permute.xlu0 %6123
    %6125 = vset.pattern.permute.xlu0 0
    %6126 = vperm.xlu0 %6125, %v6053
    %v6127 = vpop.permute.xlu0 %6126
    %6128 = vset.pattern.permute.xlu0 0
    %6129 = vperm.xlu0 %6128, %v6054
    %v6130 = vpop.permute.xlu0 %6129
    %6131 = vset.pattern.permute.xlu0 0
    %6132 = vperm.xlu0 %6131, %v6055
    %v6133 = vpop.permute.xlu0 %6132
    %6134 = vset.pattern.permute.xlu0 0
    %6135 = vperm.xlu0 %6134, %v6056
    %v6136 = vpop.permute.xlu0 %6135
    %6137 = vset.pattern.permute.xlu0 0
    %6138 = vperm.xlu0 %6137, %v6057
    %v6139 = vpop.permute.xlu0 %6138
    %6140 = vset.pattern.permute.xlu0 0
    %6141 = vperm.xlu0 %6140, %v6058
    %v6142 = vpop.permute.xlu0 %6141
    %6143 = vset.pattern.permute.xlu0 0
    %6144 = vperm.xlu0 %6143, %v6059
    %v6145 = vpop.permute.xlu0 %6144
    %6146 = vset.pattern.permute.xlu0 0
    %6147 = vperm.xlu0 %6146, %v6060
    %v6148 = vpop.permute.xlu0 %6147
    %6149 = vset.pattern.permute.xlu0 0
    %6150 = vperm.xlu0 %6149, %v6061
    %v6151 = vpop.permute.xlu0 %6150
    %6152 = vset.pattern.permute.xlu0 0
    %6153 = vperm.xlu0 %6152, %v6062
    %v6154 = vpop.permute.xlu0 %6153
    %6155 = vset.pattern.permute.xlu0 0
    %6156 = vperm.xlu0 %6155, %v6063
    %v6157 = vpop.permute.xlu0 %6156
    %6158 = vset.pattern.permute.xlu0 0
    %6159 = vperm.xlu0 %6158, %v6064
    %v6160 = vpop.permute.xlu0 %6159
    %6161 = vset.pattern.permute.xlu0 0
    %6162 = vperm.xlu0 %6161, %v6065
    %v6163 = vpop.permute.xlu0 %6162
    %6164 = vset.pattern.permute.xlu0 0
    %6165 = vperm.xlu0 %6164, %v6066
    %v6166 = vpop.permute.xlu0 %6165
    %6167 = vset.pattern.permute.xlu0 0
    %6168 = vperm.xlu0 %6167, %v6067
    %v6169 = vpop.permute.xlu0 %6168
    %6170 = vset.pattern.permute.xlu0 0
    %6171 = vperm.xlu0 %6170, %v6068
    %v6172 = vpop.permute.xlu0 %6171
    %6173 = vset.pattern.permute.xlu0 0
    %6174 = vperm.xlu0 %6173, %v6069
    %v6175 = vpop.permute.xlu0 %6174
    %6176 = vset.pattern.permute.xlu0 0
    %6177 = vperm.xlu0 %6176, %v6070
    %v6178 = vpop.permute.xlu0 %6177
    %6179 = vset.pattern.permute.xlu0 0
    %6180 = vperm.xlu0 %6179, %v6071
    %v6181 = vpop.permute.xlu0 %6180
    %6182 = vset.pattern.permute.xlu0 0
    %6183 = vperm.xlu0 %6182, %v6072
    %v6184 = vpop.permute.xlu0 %6183
    %6185 = vset.pattern.permute.xlu0 0
    %6186 = vperm.xlu0 %6185, %v6073
    %v6187 = vpop.permute.xlu0 %6186
    %6188 = vset.pattern.permute.xlu0 0
    %6189 = vperm.xlu0 %6188, %v6074
    %v6190 = vpop.permute.xlu0 %6189
    %6191 = vset.pattern.permute.xlu0 0
    %6192 = vperm.xlu0 %6191, %v6075
    %v6193 = vpop.permute.xlu0 %6192
    %6194 = vset.pattern.permute.xlu0 0
    %6195 = vperm.xlu0 %6194, %v6076
    %v6196 = vpop.permute.xlu0 %6195
    %6197 = vset.pattern.permute.xlu0 0
    %6198 = vperm.xlu0 %6197, %v6077
    %v6199 = vpop.permute.xlu0 %6198
    %6200 = vset.pattern.permute.xlu0 0
    %6201 = vperm.xlu0 %6200, %v6078
    %v6202 = vpop.permute.xlu0 %6201
    %6203 = vset.pattern.permute.xlu0 0
    %6204 = vperm.xlu0 %6203, %v6079
    %v6205 = vpop.permute.xlu0 %6204
    %6206 = vset.pattern.permute.xlu0 0
    %6207 = vperm.xlu0 %6206, %v6080
    %v6208 = vpop.permute.xlu0 %6207
    %v6209 = vlaneseq
    %v6210 = vshrl.u32 %v6209, 7
    %v6211 = vsub.s32 %v1856, %v6210
    %v6212 = vrot.slane %v6115, %v6211
    %v6213 = vlaneseq
    %v6214 = vshrl.u32 %v6213, 7
    %v6215 = vsub.s32 %v1861, %v6214
    %v6216 = vrot.slane %v6118, %v6215
    %v6217 = vsel %vm1866, %v6216, %v6212
    %v6218 = vlaneseq
    %v6219 = vshrl.u32 %v6218, 7
    %v6220 = vsub.s32 %v1856, %v6219
    %v6221 = vrot.slane %v6121, %v6220
    %v6222 = vlaneseq
    %v6223 = vshrl.u32 %v6222, 7
    %v6224 = vsub.s32 %v1861, %v6223
    %v6225 = vrot.slane %v6124, %v6224
    %v6226 = vsel %vm1866, %v6225, %v6221
    %v6227 = vlaneseq
    %v6228 = vshrl.u32 %v6227, 7
    %v6229 = vsub.s32 %v1856, %v6228
    %v6230 = vrot.slane %v6127, %v6229
    %v6231 = vlaneseq
    %v6232 = vshrl.u32 %v6231, 7
    %v6233 = vsub.s32 %v1861, %v6232
    %v6234 = vrot.slane %v6130, %v6233
    %v6235 = vsel %vm1866, %v6234, %v6230
    %v6236 = vlaneseq
    %v6237 = vshrl.u32 %v6236, 7
    %v6238 = vsub.s32 %v1856, %v6237
    %v6239 = vrot.slane %v6133, %v6238
    %v6240 = vlaneseq
    %v6241 = vshrl.u32 %v6240, 7
    %v6242 = vsub.s32 %v1861, %v6241
    %v6243 = vrot.slane %v6136, %v6242
    %v6244 = vsel %vm1866, %v6243, %v6239
    %v6245 = vlaneseq
    %v6246 = vshrl.u32 %v6245, 7
    %v6247 = vsub.s32 %v1856, %v6246
    %v6248 = vrot.slane %v6139, %v6247
    %v6249 = vlaneseq
    %v6250 = vshrl.u32 %v6249, 7
    %v6251 = vsub.s32 %v1861, %v6250
    %v6252 = vrot.slane %v6142, %v6251
    %v6253 = vsel %vm1866, %v6252, %v6248
    %v6254 = vlaneseq
    %v6255 = vshrl.u32 %v6254, 7
    %v6256 = vsub.s32 %v1856, %v6255
    %v6257 = vrot.slane %v6145, %v6256
    %v6258 = vlaneseq
    %v6259 = vshrl.u32 %v6258, 7
    %v6260 = vsub.s32 %v1861, %v6259
    %v6261 = vrot.slane %v6148, %v6260
    %v6262 = vsel %vm1866, %v6261, %v6257
    %v6263 = vlaneseq
    %v6264 = vshrl.u32 %v6263, 7
    %v6265 = vsub.s32 %v1856, %v6264
    %v6266 = vrot.slane %v6151, %v6265
    %v6267 = vlaneseq
    %v6268 = vshrl.u32 %v6267, 7
    %v6269 = vsub.s32 %v1861, %v6268
    %v6270 = vrot.slane %v6154, %v6269
    %v6271 = vsel %vm1866, %v6270, %v6266
    %v6272 = vlaneseq
    %v6273 = vshrl.u32 %v6272, 7
    %v6274 = vsub.s32 %v1856, %v6273
    %v6275 = vrot.slane %v6157, %v6274
    %v6276 = vlaneseq
    %v6277 = vshrl.u32 %v6276, 7
    %v6278 = vsub.s32 %v1861, %v6277
    %v6279 = vrot.slane %v6160, %v6278
    %v6280 = vsel %vm1866, %v6279, %v6275
    %v6281 = vlaneseq
    %v6282 = vshrl.u32 %v6281, 7
    %v6283 = vsub.s32 %v1856, %v6282
    %v6284 = vrot.slane %v6163, %v6283
    %v6285 = vlaneseq
    %v6286 = vshrl.u32 %v6285, 7
    %v6287 = vsub.s32 %v1861, %v6286
    %v6288 = vrot.slane %v6166, %v6287
    %v6289 = vsel %vm1866, %v6288, %v6284
    %v6290 = vlaneseq
    %v6291 = vshrl.u32 %v6290, 7
    %v6292 = vsub.s32 %v1856, %v6291
    %v6293 = vrot.slane %v6169, %v6292
    %v6294 = vlaneseq
    %v6295 = vshrl.u32 %v6294, 7
    %v6296 = vsub.s32 %v1861, %v6295
    %v6297 = vrot.slane %v6172, %v6296
    %v6298 = vsel %vm1866, %v6297, %v6293
    %v6299 = vlaneseq
    %v6300 = vshrl.u32 %v6299, 7
    %v6301 = vsub.s32 %v1856, %v6300
    %v6302 = vrot.slane %v6175, %v6301
    %v6303 = vlaneseq
    %v6304 = vshrl.u32 %v6303, 7
    %v6305 = vsub.s32 %v1861, %v6304
    %v6306 = vrot.slane %v6178, %v6305
    %v6307 = vsel %vm1866, %v6306, %v6302
    %v6308 = vlaneseq
    %v6309 = vshrl.u32 %v6308, 7
    %v6310 = vsub.s32 %v1856, %v6309
    %v6311 = vrot.slane %v6181, %v6310
    %v6312 = vlaneseq
    %v6313 = vshrl.u32 %v6312, 7
    %v6314 = vsub.s32 %v1861, %v6313
    %v6315 = vrot.slane %v6184, %v6314
    %v6316 = vsel %vm1866, %v6315, %v6311
    %v6317 = vlaneseq
    %v6318 = vshrl.u32 %v6317, 7
    %v6319 = vsub.s32 %v1856, %v6318
    %v6320 = vrot.slane %v6187, %v6319
    %v6321 = vlaneseq
    %v6322 = vshrl.u32 %v6321, 7
    %v6323 = vsub.s32 %v1861, %v6322
    %v6324 = vrot.slane %v6190, %v6323
    %v6325 = vsel %vm1866, %v6324, %v6320
    %v6326 = vlaneseq
    %v6327 = vshrl.u32 %v6326, 7
    %v6328 = vsub.s32 %v1856, %v6327
    %v6329 = vrot.slane %v6193, %v6328
    %v6330 = vlaneseq
    %v6331 = vshrl.u32 %v6330, 7
    %v6332 = vsub.s32 %v1861, %v6331
    %v6333 = vrot.slane %v6196, %v6332
    %v6334 = vsel %vm1866, %v6333, %v6329
    %v6335 = vlaneseq
    %v6336 = vshrl.u32 %v6335, 7
    %v6337 = vsub.s32 %v1856, %v6336
    %v6338 = vrot.slane %v6199, %v6337
    %v6339 = vlaneseq
    %v6340 = vshrl.u32 %v6339, 7
    %v6341 = vsub.s32 %v1861, %v6340
    %v6342 = vrot.slane %v6202, %v6341
    %v6343 = vsel %vm1866, %v6342, %v6338
    %v6344 = vlaneseq
    %v6345 = vshrl.u32 %v6344, 7
    %v6346 = vsub.s32 %v1856, %v6345
    %v6347 = vrot.slane %v6205, %v6346
    %v6348 = vlaneseq
    %v6349 = vshrl.u32 %v6348, 7
    %v6350 = vsub.s32 %v1861, %v6349
    %v6351 = vrot.slane %v6208, %v6350
    %v6352 = vsel %vm1866, %v6351, %v6347
    %v6353 = vsel %vm2003, %v6226, %v6217
    %v6354 = vsel %vm2005, %v6235, %v6353
    %v6355 = vsel %vm2007, %v6244, %v6354
    %v6356 = vsel %vm2009, %v6253, %v6355
    %v6357 = vsel %vm2011, %v6262, %v6356
    %v6358 = vsel %vm2013, %v6271, %v6357
    %v6359 = vsel %vm2015, %v6280, %v6358
    %v6360 = vsel %vm2003, %v6298, %v6289
    %v6361 = vsel %vm2005, %v6307, %v6360
    %v6362 = vsel %vm2007, %v6316, %v6361
    %v6363 = vsel %vm2009, %v6325, %v6362
    %v6364 = vsel %vm2011, %v6334, %v6363
    %v6365 = vsel %vm2013, %v6343, %v6364
    %v6366 = vsel %vm2015, %v6352, %v6365
    %v6369 = vsel %vm153, %v6359, 0.0
    %6370 = vadd.xlane.f32.xlu0 %v6369
    %v6371 = vpop.xlane.xlu0 %6370
    %v6372 = vsel %vm153, %v6366, 0.0
    %6373 = vadd.xlane.f32.xlu0 %v6372
    %v6374 = vpop.xlane.xlu0 %6373
    %v6375 = vadd.f32 %v6371, 1e-16
    %v6376 = vadd.f32 %v6374, 1e-16
    %v6377 = vrcp.pop %v6375
    %v6378 = vrcp.pop %v6376
    %v6381 = vlaneseq
    %v6382 = vshrl.u32 %v6381, 7
    %v6383 = vsub.s32 0, %v6382
    %v6384 = vrot.slane %v6377, %v6383
    %v6385 = vlaneseq
    %v6386 = vshrl.u32 %v6385, 7
    %v6387 = vsub.s32 1, %v6386
    %v6388 = vrot.slane %v6377, %v6387
    %v6389 = vlaneseq
    %v6390 = vshrl.u32 %v6389, 7
    %v6391 = vsub.s32 2, %v6390
    %v6392 = vrot.slane %v6377, %v6391
    %v6393 = vlaneseq
    %v6394 = vshrl.u32 %v6393, 7
    %v6395 = vsub.s32 3, %v6394
    %v6396 = vrot.slane %v6377, %v6395
    %v6397 = vlaneseq
    %v6398 = vshrl.u32 %v6397, 7
    %v6399 = vsub.s32 4, %v6398
    %v6400 = vrot.slane %v6377, %v6399
    %v6401 = vlaneseq
    %v6402 = vshrl.u32 %v6401, 7
    %v6403 = vsub.s32 5, %v6402
    %v6404 = vrot.slane %v6377, %v6403
    %v6405 = vlaneseq
    %v6406 = vshrl.u32 %v6405, 7
    %v6407 = vsub.s32 6, %v6406
    %v6408 = vrot.slane %v6377, %v6407
    %v6409 = vlaneseq
    %v6410 = vshrl.u32 %v6409, 7
    %v6411 = vsub.s32 7, %v6410
    %v6412 = vrot.slane %v6377, %v6411
    %v6413 = vlaneseq
    %v6414 = vshrl.u32 %v6413, 7
    %v6415 = vsub.s32 0, %v6414
    %v6416 = vrot.slane %v6378, %v6415
    %v6417 = vlaneseq
    %v6418 = vshrl.u32 %v6417, 7
    %v6419 = vsub.s32 1, %v6418
    %v6420 = vrot.slane %v6378, %v6419
    %v6421 = vlaneseq
    %v6422 = vshrl.u32 %v6421, 7
    %v6423 = vsub.s32 2, %v6422
    %v6424 = vrot.slane %v6378, %v6423
    %v6425 = vlaneseq
    %v6426 = vshrl.u32 %v6425, 7
    %v6427 = vsub.s32 3, %v6426
    %v6428 = vrot.slane %v6378, %v6427
    %v6429 = vlaneseq
    %v6430 = vshrl.u32 %v6429, 7
    %v6431 = vsub.s32 4, %v6430
    %v6432 = vrot.slane %v6378, %v6431
    %v6433 = vlaneseq
    %v6434 = vshrl.u32 %v6433, 7
    %v6435 = vsub.s32 5, %v6434
    %v6436 = vrot.slane %v6378, %v6435
    %v6437 = vlaneseq
    %v6438 = vshrl.u32 %v6437, 7
    %v6439 = vsub.s32 6, %v6438
    %v6440 = vrot.slane %v6378, %v6439
    %v6441 = vlaneseq
    %v6442 = vshrl.u32 %v6441, 7
    %v6443 = vsub.s32 7, %v6442
    %v6444 = vrot.slane %v6378, %v6443
    %v6461 = vmul.f32 %v6049, %v6384
    %v6462 = vmul.f32 %v6050, %v6384
    %v6463 = vmul.f32 %v6051, %v6388
    %v6464 = vmul.f32 %v6052, %v6388
    %v6465 = vmul.f32 %v6053, %v6392
    %v6466 = vmul.f32 %v6054, %v6392
    %v6467 = vmul.f32 %v6055, %v6396
    %v6468 = vmul.f32 %v6056, %v6396
    %v6469 = vmul.f32 %v6057, %v6400
    %v6470 = vmul.f32 %v6058, %v6400
    %v6471 = vmul.f32 %v6059, %v6404
    %v6472 = vmul.f32 %v6060, %v6404
    %v6473 = vmul.f32 %v6061, %v6408
    %v6474 = vmul.f32 %v6062, %v6408
    %v6475 = vmul.f32 %v6063, %v6412
    %v6476 = vmul.f32 %v6064, %v6412
    %v6477 = vmul.f32 %v6065, %v6416
    %v6478 = vmul.f32 %v6066, %v6416
    %v6479 = vmul.f32 %v6067, %v6420
    %v6480 = vmul.f32 %v6068, %v6420
    %v6481 = vmul.f32 %v6069, %v6424
    %v6482 = vmul.f32 %v6070, %v6424
    %v6483 = vmul.f32 %v6071, %v6428
    %v6484 = vmul.f32 %v6072, %v6428
    %v6485 = vmul.f32 %v6073, %v6432
    %v6486 = vmul.f32 %v6074, %v6432
    %v6487 = vmul.f32 %v6075, %v6436
    %v6488 = vmul.f32 %v6076, %v6436
    %v6489 = vmul.f32 %v6077, %v6440
    %v6490 = vmul.f32 %v6078, %v6440
    %v6491 = vmul.f32 %v6079, %v6444
    %v6492 = vmul.f32 %v6080, %v6444
    %6525 = vrot.lane.b32.xlu0 %v5417, 96
    %v6526 = vpop.permute.xlu0 %6525
    %6527 = vrot.lane.b32.xlu0 %v5418, 96
    %v6528 = vpop.permute.xlu0 %6527
    %6529 = vrot.lane.b32.xlu0 %v5419, 96
    %v6530 = vpop.permute.xlu0 %6529
    %6531 = vrot.lane.b32.xlu0 %v5420, 96
    %v6532 = vpop.permute.xlu0 %6531
    %6533 = vrot.lane.b32.xlu0 %v5421, 96
    %v6534 = vpop.permute.xlu0 %6533
    %6535 = vrot.lane.b32.xlu0 %v5422, 96
    %v6536 = vpop.permute.xlu0 %6535
    %6537 = vrot.lane.b32.xlu0 %v5423, 96
    %v6538 = vpop.permute.xlu0 %6537
    %6539 = vrot.lane.b32.xlu0 %v5424, 96
    %v6540 = vpop.permute.xlu0 %6539
    %6541 = vrot.lane.b32.xlu0 %v5425, 96
    %v6542 = vpop.permute.xlu0 %6541
    %6543 = vrot.lane.b32.xlu0 %v5426, 96
    %v6544 = vpop.permute.xlu0 %6543
    %6545 = vrot.lane.b32.xlu0 %v5427, 96
    %v6546 = vpop.permute.xlu0 %6545
    %6547 = vrot.lane.b32.xlu0 %v5428, 96
    %v6548 = vpop.permute.xlu0 %6547
    %6549 = vrot.lane.b32.xlu0 %v5429, 96
    %v6550 = vpop.permute.xlu0 %6549
    %6551 = vrot.lane.b32.xlu0 %v5430, 96
    %v6552 = vpop.permute.xlu0 %6551
    %6553 = vrot.lane.b32.xlu0 %v5431, 96
    %v6554 = vpop.permute.xlu0 %6553
    %6555 = vrot.lane.b32.xlu0 %v5432, 96
    %v6556 = vpop.permute.xlu0 %6555
    %6557 = vrot.lane.b32.xlu0 %v5433, 96
    %v6558 = vpop.permute.xlu0 %6557
    %6559 = vrot.lane.b32.xlu0 %v5434, 96
    %v6560 = vpop.permute.xlu0 %6559
    %6561 = vrot.lane.b32.xlu0 %v5435, 96
    %v6562 = vpop.permute.xlu0 %6561
    %6563 = vrot.lane.b32.xlu0 %v5436, 96
    %v6564 = vpop.permute.xlu0 %6563
    %6565 = vrot.lane.b32.xlu0 %v5437, 96
    %v6566 = vpop.permute.xlu0 %6565
    %6567 = vrot.lane.b32.xlu0 %v5438, 96
    %v6568 = vpop.permute.xlu0 %6567
    %6569 = vrot.lane.b32.xlu0 %v5439, 96
    %v6570 = vpop.permute.xlu0 %6569
    %6571 = vrot.lane.b32.xlu0 %v5440, 96
    %v6572 = vpop.permute.xlu0 %6571
    %6573 = vrot.lane.b32.xlu0 %v5441, 96
    %v6574 = vpop.permute.xlu0 %6573
    %6575 = vrot.lane.b32.xlu0 %v5442, 96
    %v6576 = vpop.permute.xlu0 %6575
    %6577 = vrot.lane.b32.xlu0 %v5443, 96
    %v6578 = vpop.permute.xlu0 %6577
    %6579 = vrot.lane.b32.xlu0 %v5444, 96
    %v6580 = vpop.permute.xlu0 %6579
    %6581 = vrot.lane.b32.xlu0 %v5445, 96
    %v6582 = vpop.permute.xlu0 %6581
    %6583 = vrot.lane.b32.xlu0 %v5446, 96
    %v6584 = vpop.permute.xlu0 %6583
    %6585 = vrot.lane.b32.xlu0 %v5447, 96
    %v6586 = vpop.permute.xlu0 %6585
    %6587 = vrot.lane.b32.xlu0 %v5448, 96
    %v6588 = vpop.permute.xlu0 %6587
    %v6621 = vsel %vm1388, %v6526, 0.0
    %6622 = vadd.xlane.f32.xlu0 %v6621
    %v6623 = vpop.xlane.xlu0 %6622
    %v6624 = vsel %vm1388, %v6528, 0.0
    %6625 = vadd.xlane.f32.xlu0 %v6624
    %v6626 = vpop.xlane.xlu0 %6625
    %v6627 = vsel %vm1388, %v6530, 0.0
    %6628 = vadd.xlane.f32.xlu0 %v6627
    %v6629 = vpop.xlane.xlu0 %6628
    %v6630 = vsel %vm1388, %v6532, 0.0
    %6631 = vadd.xlane.f32.xlu0 %v6630
    %v6632 = vpop.xlane.xlu0 %6631
    %v6633 = vsel %vm1388, %v6534, 0.0
    %6634 = vadd.xlane.f32.xlu0 %v6633
    %v6635 = vpop.xlane.xlu0 %6634
    %v6636 = vsel %vm1388, %v6536, 0.0
    %6637 = vadd.xlane.f32.xlu0 %v6636
    %v6638 = vpop.xlane.xlu0 %6637
    %v6639 = vsel %vm1388, %v6538, 0.0
    %6640 = vadd.xlane.f32.xlu0 %v6639
    %v6641 = vpop.xlane.xlu0 %6640
    %v6642 = vsel %vm1388, %v6540, 0.0
    %6643 = vadd.xlane.f32.xlu0 %v6642
    %v6644 = vpop.xlane.xlu0 %6643
    %v6645 = vsel %vm1388, %v6542, 0.0
    %6646 = vadd.xlane.f32.xlu0 %v6645
    %v6647 = vpop.xlane.xlu0 %6646
    %v6648 = vsel %vm1388, %v6544, 0.0
    %6649 = vadd.xlane.f32.xlu0 %v6648
    %v6650 = vpop.xlane.xlu0 %6649
    %v6651 = vsel %vm1388, %v6546, 0.0
    %6652 = vadd.xlane.f32.xlu0 %v6651
    %v6653 = vpop.xlane.xlu0 %6652
    %v6654 = vsel %vm1388, %v6548, 0.0
    %6655 = vadd.xlane.f32.xlu0 %v6654
    %v6656 = vpop.xlane.xlu0 %6655
    %v6657 = vsel %vm1388, %v6550, 0.0
    %6658 = vadd.xlane.f32.xlu0 %v6657
    %v6659 = vpop.xlane.xlu0 %6658
    %v6660 = vsel %vm1388, %v6552, 0.0
    %6661 = vadd.xlane.f32.xlu0 %v6660
    %v6662 = vpop.xlane.xlu0 %6661
    %v6663 = vsel %vm1388, %v6554, 0.0
    %6664 = vadd.xlane.f32.xlu0 %v6663
    %v6665 = vpop.xlane.xlu0 %6664
    %v6666 = vsel %vm1388, %v6556, 0.0
    %6667 = vadd.xlane.f32.xlu0 %v6666
    %v6668 = vpop.xlane.xlu0 %6667
    %v6669 = vsel %vm1388, %v6558, 0.0
    %6670 = vadd.xlane.f32.xlu0 %v6669
    %v6671 = vpop.xlane.xlu0 %6670
    %v6672 = vsel %vm1388, %v6560, 0.0
    %6673 = vadd.xlane.f32.xlu0 %v6672
    %v6674 = vpop.xlane.xlu0 %6673
    %v6675 = vsel %vm1388, %v6562, 0.0
    %6676 = vadd.xlane.f32.xlu0 %v6675
    %v6677 = vpop.xlane.xlu0 %6676
    %v6678 = vsel %vm1388, %v6564, 0.0
    %6679 = vadd.xlane.f32.xlu0 %v6678
    %v6680 = vpop.xlane.xlu0 %6679
    %v6681 = vsel %vm1388, %v6566, 0.0
    %6682 = vadd.xlane.f32.xlu0 %v6681
    %v6683 = vpop.xlane.xlu0 %6682
    %v6684 = vsel %vm1388, %v6568, 0.0
    %6685 = vadd.xlane.f32.xlu0 %v6684
    %v6686 = vpop.xlane.xlu0 %6685
    %v6687 = vsel %vm1388, %v6570, 0.0
    %6688 = vadd.xlane.f32.xlu0 %v6687
    %v6689 = vpop.xlane.xlu0 %6688
    %v6690 = vsel %vm1388, %v6572, 0.0
    %6691 = vadd.xlane.f32.xlu0 %v6690
    %v6692 = vpop.xlane.xlu0 %6691
    %v6693 = vsel %vm1388, %v6574, 0.0
    %6694 = vadd.xlane.f32.xlu0 %v6693
    %v6695 = vpop.xlane.xlu0 %6694
    %v6696 = vsel %vm1388, %v6576, 0.0
    %6697 = vadd.xlane.f32.xlu0 %v6696
    %v6698 = vpop.xlane.xlu0 %6697
    %v6699 = vsel %vm1388, %v6578, 0.0
    %6700 = vadd.xlane.f32.xlu0 %v6699
    %v6701 = vpop.xlane.xlu0 %6700
    %v6702 = vsel %vm1388, %v6580, 0.0
    %6703 = vadd.xlane.f32.xlu0 %v6702
    %v6704 = vpop.xlane.xlu0 %6703
    %v6705 = vsel %vm1388, %v6582, 0.0
    %6706 = vadd.xlane.f32.xlu0 %v6705
    %v6707 = vpop.xlane.xlu0 %6706
    %v6708 = vsel %vm1388, %v6584, 0.0
    %6709 = vadd.xlane.f32.xlu0 %v6708
    %v6710 = vpop.xlane.xlu0 %6709
    %v6711 = vsel %vm1388, %v6586, 0.0
    %6712 = vadd.xlane.f32.xlu0 %v6711
    %v6713 = vpop.xlane.xlu0 %6712
    %v6714 = vsel %vm1388, %v6588, 0.0
    %6715 = vadd.xlane.f32.xlu0 %v6714
    %v6716 = vpop.xlane.xlu0 %6715
    %v6717 = vadd.f32 %v6623, %v1493
    %v6718 = vadd.f32 %v6626, %v1497
    %v6719 = vadd.f32 %v6629, %v1504
    %v6720 = vadd.f32 %v6632, %v1508
    %v6721 = vadd.f32 %v6635, %v1515
    %v6722 = vadd.f32 %v6638, %v1519
    %v6723 = vadd.f32 %v6641, %v1526
    %v6724 = vadd.f32 %v6644, %v1530
    %v6725 = vadd.f32 %v6647, %v1537
    %v6726 = vadd.f32 %v6650, %v1541
    %v6727 = vadd.f32 %v6653, %v1548
    %v6728 = vadd.f32 %v6656, %v1552
    %v6729 = vadd.f32 %v6659, %v1559
    %v6730 = vadd.f32 %v6662, %v1563
    %v6731 = vadd.f32 %v6665, %v1570
    %v6732 = vadd.f32 %v6668, %v1574
    %v6733 = vadd.f32 %v6671, %v1581
    %v6734 = vadd.f32 %v6674, %v1585
    %v6735 = vadd.f32 %v6677, %v1592
    %v6736 = vadd.f32 %v6680, %v1596
    %v6737 = vadd.f32 %v6683, %v1603
    %v6738 = vadd.f32 %v6686, %v1607
    %v6739 = vadd.f32 %v6689, %v1614
    %v6740 = vadd.f32 %v6692, %v1618
    %v6741 = vadd.f32 %v6695, %v1625
    %v6742 = vadd.f32 %v6698, %v1629
    %v6743 = vadd.f32 %v6701, %v1636
    %v6744 = vadd.f32 %v6704, %v1640
    %v6745 = vadd.f32 %v6707, %v1647
    %v6746 = vadd.f32 %v6710, %v1651
    %v6747 = vadd.f32 %v6713, %v1658
    %v6748 = vadd.f32 %v6716, %v1662
    %6781 = vset.pattern.permute.xlu0 0
    %6782 = vperm.xlu0 %6781, %v6717
    %v6783 = vpop.permute.xlu0 %6782
    %6784 = vset.pattern.permute.xlu0 0
    %6785 = vperm.xlu0 %6784, %v6718
    %v6786 = vpop.permute.xlu0 %6785
    %6787 = vset.pattern.permute.xlu0 0
    %6788 = vperm.xlu0 %6787, %v6719
    %v6789 = vpop.permute.xlu0 %6788
    %6790 = vset.pattern.permute.xlu0 0
    %6791 = vperm.xlu0 %6790, %v6720
    %v6792 = vpop.permute.xlu0 %6791
    %6793 = vset.pattern.permute.xlu0 0
    %6794 = vperm.xlu0 %6793, %v6721
    %v6795 = vpop.permute.xlu0 %6794
    %6796 = vset.pattern.permute.xlu0 0
    %6797 = vperm.xlu0 %6796, %v6722
    %v6798 = vpop.permute.xlu0 %6797
    %6799 = vset.pattern.permute.xlu0 0
    %6800 = vperm.xlu0 %6799, %v6723
    %v6801 = vpop.permute.xlu0 %6800
    %6802 = vset.pattern.permute.xlu0 0
    %6803 = vperm.xlu0 %6802, %v6724
    %v6804 = vpop.permute.xlu0 %6803
    %6805 = vset.pattern.permute.xlu0 0
    %6806 = vperm.xlu0 %6805, %v6725
    %v6807 = vpop.permute.xlu0 %6806
    %6808 = vset.pattern.permute.xlu0 0
    %6809 = vperm.xlu0 %6808, %v6726
    %v6810 = vpop.permute.xlu0 %6809
    %6811 = vset.pattern.permute.xlu0 0
    %6812 = vperm.xlu0 %6811, %v6727
    %v6813 = vpop.permute.xlu0 %6812
    %6814 = vset.pattern.permute.xlu0 0
    %6815 = vperm.xlu0 %6814, %v6728
    %v6816 = vpop.permute.xlu0 %6815
    %6817 = vset.pattern.permute.xlu0 0
    %6818 = vperm.xlu0 %6817, %v6729
    %v6819 = vpop.permute.xlu0 %6818
    %6820 = vset.pattern.permute.xlu0 0
    %6821 = vperm.xlu0 %6820, %v6730
    %v6822 = vpop.permute.xlu0 %6821
    %6823 = vset.pattern.permute.xlu0 0
    %6824 = vperm.xlu0 %6823, %v6731
    %v6825 = vpop.permute.xlu0 %6824
    %6826 = vset.pattern.permute.xlu0 0
    %6827 = vperm.xlu0 %6826, %v6732
    %v6828 = vpop.permute.xlu0 %6827
    %6829 = vset.pattern.permute.xlu0 0
    %6830 = vperm.xlu0 %6829, %v6733
    %v6831 = vpop.permute.xlu0 %6830
    %6832 = vset.pattern.permute.xlu0 0
    %6833 = vperm.xlu0 %6832, %v6734
    %v6834 = vpop.permute.xlu0 %6833
    %6835 = vset.pattern.permute.xlu0 0
    %6836 = vperm.xlu0 %6835, %v6735
    %v6837 = vpop.permute.xlu0 %6836
    %6838 = vset.pattern.permute.xlu0 0
    %6839 = vperm.xlu0 %6838, %v6736
    %v6840 = vpop.permute.xlu0 %6839
    %6841 = vset.pattern.permute.xlu0 0
    %6842 = vperm.xlu0 %6841, %v6737
    %v6843 = vpop.permute.xlu0 %6842
    %6844 = vset.pattern.permute.xlu0 0
    %6845 = vperm.xlu0 %6844, %v6738
    %v6846 = vpop.permute.xlu0 %6845
    %6847 = vset.pattern.permute.xlu0 0
    %6848 = vperm.xlu0 %6847, %v6739
    %v6849 = vpop.permute.xlu0 %6848
    %6850 = vset.pattern.permute.xlu0 0
    %6851 = vperm.xlu0 %6850, %v6740
    %v6852 = vpop.permute.xlu0 %6851
    %6853 = vset.pattern.permute.xlu0 0
    %6854 = vperm.xlu0 %6853, %v6741
    %v6855 = vpop.permute.xlu0 %6854
    %6856 = vset.pattern.permute.xlu0 0
    %6857 = vperm.xlu0 %6856, %v6742
    %v6858 = vpop.permute.xlu0 %6857
    %6859 = vset.pattern.permute.xlu0 0
    %6860 = vperm.xlu0 %6859, %v6743
    %v6861 = vpop.permute.xlu0 %6860
    %6862 = vset.pattern.permute.xlu0 0
    %6863 = vperm.xlu0 %6862, %v6744
    %v6864 = vpop.permute.xlu0 %6863
    %6865 = vset.pattern.permute.xlu0 0
    %6866 = vperm.xlu0 %6865, %v6745
    %v6867 = vpop.permute.xlu0 %6866
    %6868 = vset.pattern.permute.xlu0 0
    %6869 = vperm.xlu0 %6868, %v6746
    %v6870 = vpop.permute.xlu0 %6869
    %6871 = vset.pattern.permute.xlu0 0
    %6872 = vperm.xlu0 %6871, %v6747
    %v6873 = vpop.permute.xlu0 %6872
    %6874 = vset.pattern.permute.xlu0 0
    %6875 = vperm.xlu0 %6874, %v6748
    %v6876 = vpop.permute.xlu0 %6875
    %v6877 = vlaneseq
    %v6878 = vshrl.u32 %v6877, 7
    %v6879 = vsub.s32 %v1856, %v6878
    %v6880 = vrot.slane %v6783, %v6879
    %v6881 = vlaneseq
    %v6882 = vshrl.u32 %v6881, 7
    %v6883 = vsub.s32 %v1861, %v6882
    %v6884 = vrot.slane %v6786, %v6883
    %v6885 = vsel %vm1866, %v6884, %v6880
    %v6886 = vlaneseq
    %v6887 = vshrl.u32 %v6886, 7
    %v6888 = vsub.s32 %v1856, %v6887
    %v6889 = vrot.slane %v6789, %v6888
    %v6890 = vlaneseq
    %v6891 = vshrl.u32 %v6890, 7
    %v6892 = vsub.s32 %v1861, %v6891
    %v6893 = vrot.slane %v6792, %v6892
    %v6894 = vsel %vm1866, %v6893, %v6889
    %v6895 = vlaneseq
    %v6896 = vshrl.u32 %v6895, 7
    %v6897 = vsub.s32 %v1856, %v6896
    %v6898 = vrot.slane %v6795, %v6897
    %v6899 = vlaneseq
    %v6900 = vshrl.u32 %v6899, 7
    %v6901 = vsub.s32 %v1861, %v6900
    %v6902 = vrot.slane %v6798, %v6901
    %v6903 = vsel %vm1866, %v6902, %v6898
    %v6904 = vlaneseq
    %v6905 = vshrl.u32 %v6904, 7
    %v6906 = vsub.s32 %v1856, %v6905
    %v6907 = vrot.slane %v6801, %v6906
    %v6908 = vlaneseq
    %v6909 = vshrl.u32 %v6908, 7
    %v6910 = vsub.s32 %v1861, %v6909
    %v6911 = vrot.slane %v6804, %v6910
    %v6912 = vsel %vm1866, %v6911, %v6907
    %v6913 = vlaneseq
    %v6914 = vshrl.u32 %v6913, 7
    %v6915 = vsub.s32 %v1856, %v6914
    %v6916 = vrot.slane %v6807, %v6915
    %v6917 = vlaneseq
    %v6918 = vshrl.u32 %v6917, 7
    %v6919 = vsub.s32 %v1861, %v6918
    %v6920 = vrot.slane %v6810, %v6919
    %v6921 = vsel %vm1866, %v6920, %v6916
    %v6922 = vlaneseq
    %v6923 = vshrl.u32 %v6922, 7
    %v6924 = vsub.s32 %v1856, %v6923
    %v6925 = vrot.slane %v6813, %v6924
    %v6926 = vlaneseq
    %v6927 = vshrl.u32 %v6926, 7
    %v6928 = vsub.s32 %v1861, %v6927
    %v6929 = vrot.slane %v6816, %v6928
    %v6930 = vsel %vm1866, %v6929, %v6925
    %v6931 = vlaneseq
    %v6932 = vshrl.u32 %v6931, 7
    %v6933 = vsub.s32 %v1856, %v6932
    %v6934 = vrot.slane %v6819, %v6933
    %v6935 = vlaneseq
    %v6936 = vshrl.u32 %v6935, 7
    %v6937 = vsub.s32 %v1861, %v6936
    %v6938 = vrot.slane %v6822, %v6937
    %v6939 = vsel %vm1866, %v6938, %v6934
    %v6940 = vlaneseq
    %v6941 = vshrl.u32 %v6940, 7
    %v6942 = vsub.s32 %v1856, %v6941
    %v6943 = vrot.slane %v6825, %v6942
    %v6944 = vlaneseq
    %v6945 = vshrl.u32 %v6944, 7
    %v6946 = vsub.s32 %v1861, %v6945
    %v6947 = vrot.slane %v6828, %v6946
    %v6948 = vsel %vm1866, %v6947, %v6943
    %v6949 = vlaneseq
    %v6950 = vshrl.u32 %v6949, 7
    %v6951 = vsub.s32 %v1856, %v6950
    %v6952 = vrot.slane %v6831, %v6951
    %v6953 = vlaneseq
    %v6954 = vshrl.u32 %v6953, 7
    %v6955 = vsub.s32 %v1861, %v6954
    %v6956 = vrot.slane %v6834, %v6955
    %v6957 = vsel %vm1866, %v6956, %v6952
    %v6958 = vlaneseq
    %v6959 = vshrl.u32 %v6958, 7
    %v6960 = vsub.s32 %v1856, %v6959
    %v6961 = vrot.slane %v6837, %v6960
    %v6962 = vlaneseq
    %v6963 = vshrl.u32 %v6962, 7
    %v6964 = vsub.s32 %v1861, %v6963
    %v6965 = vrot.slane %v6840, %v6964
    %v6966 = vsel %vm1866, %v6965, %v6961
    %v6967 = vlaneseq
    %v6968 = vshrl.u32 %v6967, 7
    %v6969 = vsub.s32 %v1856, %v6968
    %v6970 = vrot.slane %v6843, %v6969
    %v6971 = vlaneseq
    %v6972 = vshrl.u32 %v6971, 7
    %v6973 = vsub.s32 %v1861, %v6972
    %v6974 = vrot.slane %v6846, %v6973
    %v6975 = vsel %vm1866, %v6974, %v6970
    %v6976 = vlaneseq
    %v6977 = vshrl.u32 %v6976, 7
    %v6978 = vsub.s32 %v1856, %v6977
    %v6979 = vrot.slane %v6849, %v6978
    %v6980 = vlaneseq
    %v6981 = vshrl.u32 %v6980, 7
    %v6982 = vsub.s32 %v1861, %v6981
    %v6983 = vrot.slane %v6852, %v6982
    %v6984 = vsel %vm1866, %v6983, %v6979
    %v6985 = vlaneseq
    %v6986 = vshrl.u32 %v6985, 7
    %v6987 = vsub.s32 %v1856, %v6986
    %v6988 = vrot.slane %v6855, %v6987
    %v6989 = vlaneseq
    %v6990 = vshrl.u32 %v6989, 7
    %v6991 = vsub.s32 %v1861, %v6990
    %v6992 = vrot.slane %v6858, %v6991
    %v6993 = vsel %vm1866, %v6992, %v6988
    %v6994 = vlaneseq
    %v6995 = vshrl.u32 %v6994, 7
    %v6996 = vsub.s32 %v1856, %v6995
    %v6997 = vrot.slane %v6861, %v6996
    %v6998 = vlaneseq
    %v6999 = vshrl.u32 %v6998, 7
    %v7000 = vsub.s32 %v1861, %v6999
    %v7001 = vrot.slane %v6864, %v7000
    %v7002 = vsel %vm1866, %v7001, %v6997
    %v7003 = vlaneseq
    %v7004 = vshrl.u32 %v7003, 7
    %v7005 = vsub.s32 %v1856, %v7004
    %v7006 = vrot.slane %v6867, %v7005
    %v7007 = vlaneseq
    %v7008 = vshrl.u32 %v7007, 7
    %v7009 = vsub.s32 %v1861, %v7008
    %v7010 = vrot.slane %v6870, %v7009
    %v7011 = vsel %vm1866, %v7010, %v7006
    %v7012 = vlaneseq
    %v7013 = vshrl.u32 %v7012, 7
    %v7014 = vsub.s32 %v1856, %v7013
    %v7015 = vrot.slane %v6873, %v7014
    %v7016 = vlaneseq
    %v7017 = vshrl.u32 %v7016, 7
    %v7018 = vsub.s32 %v1861, %v7017
    %v7019 = vrot.slane %v6876, %v7018
    %v7020 = vsel %vm1866, %v7019, %v7015
    %v7021 = vsel %vm2003, %v6894, %v6885
    %v7022 = vsel %vm2005, %v6903, %v7021
    %v7023 = vsel %vm2007, %v6912, %v7022
    %v7024 = vsel %vm2009, %v6921, %v7023
    %v7025 = vsel %vm2011, %v6930, %v7024
    %v7026 = vsel %vm2013, %v6939, %v7025
    %v7027 = vsel %vm2015, %v6948, %v7026
    %v7028 = vsel %vm2003, %v6966, %v6957
    %v7029 = vsel %vm2005, %v6975, %v7028
    %v7030 = vsel %vm2007, %v6984, %v7029
    %v7031 = vsel %vm2009, %v6993, %v7030
    %v7032 = vsel %vm2011, %v7002, %v7031
    %v7033 = vsel %vm2013, %v7011, %v7032
    %v7034 = vsel %vm2015, %v7020, %v7033
    %v7037 = vsel %vm153, %v7027, -inf
    %7038 = vmax.xlane.f32.xlu0 %v7037
    %v7039 = vpop.xlane.xlu0 %7038
    %v7040 = vsel %vm153, %v7034, -inf
    %7041 = vmax.xlane.f32.xlu0 %v7040
    %v7042 = vpop.xlane.xlu0 %7041
    %v7045 = vlaneseq
    %v7046 = vshrl.u32 %v7045, 7
    %v7047 = vsub.s32 0, %v7046
    %v7048 = vrot.slane %v7039, %v7047
    %v7049 = vlaneseq
    %v7050 = vshrl.u32 %v7049, 7
    %v7051 = vsub.s32 1, %v7050
    %v7052 = vrot.slane %v7039, %v7051
    %v7053 = vlaneseq
    %v7054 = vshrl.u32 %v7053, 7
    %v7055 = vsub.s32 2, %v7054
    %v7056 = vrot.slane %v7039, %v7055
    %v7057 = vlaneseq
    %v7058 = vshrl.u32 %v7057, 7
    %v7059 = vsub.s32 3, %v7058
    %v7060 = vrot.slane %v7039, %v7059
    %v7061 = vlaneseq
    %v7062 = vshrl.u32 %v7061, 7
    %v7063 = vsub.s32 4, %v7062
    %v7064 = vrot.slane %v7039, %v7063
    %v7065 = vlaneseq
    %v7066 = vshrl.u32 %v7065, 7
    %v7067 = vsub.s32 5, %v7066
    %v7068 = vrot.slane %v7039, %v7067
    %v7069 = vlaneseq
    %v7070 = vshrl.u32 %v7069, 7
    %v7071 = vsub.s32 6, %v7070
    %v7072 = vrot.slane %v7039, %v7071
    %v7073 = vlaneseq
    %v7074 = vshrl.u32 %v7073, 7
    %v7075 = vsub.s32 7, %v7074
    %v7076 = vrot.slane %v7039, %v7075
    %v7077 = vlaneseq
    %v7078 = vshrl.u32 %v7077, 7
    %v7079 = vsub.s32 0, %v7078
    %v7080 = vrot.slane %v7042, %v7079
    %v7081 = vlaneseq
    %v7082 = vshrl.u32 %v7081, 7
    %v7083 = vsub.s32 1, %v7082
    %v7084 = vrot.slane %v7042, %v7083
    %v7085 = vlaneseq
    %v7086 = vshrl.u32 %v7085, 7
    %v7087 = vsub.s32 2, %v7086
    %v7088 = vrot.slane %v7042, %v7087
    %v7089 = vlaneseq
    %v7090 = vshrl.u32 %v7089, 7
    %v7091 = vsub.s32 3, %v7090
    %v7092 = vrot.slane %v7042, %v7091
    %v7093 = vlaneseq
    %v7094 = vshrl.u32 %v7093, 7
    %v7095 = vsub.s32 4, %v7094
    %v7096 = vrot.slane %v7042, %v7095
    %v7097 = vlaneseq
    %v7098 = vshrl.u32 %v7097, 7
    %v7099 = vsub.s32 5, %v7098
    %v7100 = vrot.slane %v7042, %v7099
    %v7101 = vlaneseq
    %v7102 = vshrl.u32 %v7101, 7
    %v7103 = vsub.s32 6, %v7102
    %v7104 = vrot.slane %v7042, %v7103
    %v7105 = vlaneseq
    %v7106 = vshrl.u32 %v7105, 7
    %v7107 = vsub.s32 7, %v7106
    %v7108 = vrot.slane %v7042, %v7107
    %v7125 = vsub.f32 %v6717, %v7048
    %v7126 = vsub.f32 %v6718, %v7048
    %v7127 = vsub.f32 %v6719, %v7052
    %v7128 = vsub.f32 %v6720, %v7052
    %v7129 = vsub.f32 %v6721, %v7056
    %v7130 = vsub.f32 %v6722, %v7056
    %v7131 = vsub.f32 %v6723, %v7060
    %v7132 = vsub.f32 %v6724, %v7060
    %v7133 = vsub.f32 %v6725, %v7064
    %v7134 = vsub.f32 %v6726, %v7064
    %v7135 = vsub.f32 %v6727, %v7068
    %v7136 = vsub.f32 %v6728, %v7068
    %v7137 = vsub.f32 %v6729, %v7072
    %v7138 = vsub.f32 %v6730, %v7072
    %v7139 = vsub.f32 %v6731, %v7076
    %v7140 = vsub.f32 %v6732, %v7076
    %v7141 = vsub.f32 %v6733, %v7080
    %v7142 = vsub.f32 %v6734, %v7080
    %v7143 = vsub.f32 %v6735, %v7084
    %v7144 = vsub.f32 %v6736, %v7084
    %v7145 = vsub.f32 %v6737, %v7088
    %v7146 = vsub.f32 %v6738, %v7088
    %v7147 = vsub.f32 %v6739, %v7092
    %v7148 = vsub.f32 %v6740, %v7092
    %v7149 = vsub.f32 %v6741, %v7096
    %v7150 = vsub.f32 %v6742, %v7096
    %v7151 = vsub.f32 %v6743, %v7100
    %v7152 = vsub.f32 %v6744, %v7100
    %v7153 = vsub.f32 %v6745, %v7104
    %v7154 = vsub.f32 %v6746, %v7104
    %v7155 = vsub.f32 %v6747, %v7108
    %v7156 = vsub.f32 %v6748, %v7108
    %v7157 = vmul.f32 %v7125, 1.442695
    %v7158 = vpow.pop %v7157
    %v7159 = vmul.f32 %v7126, 1.442695
    %v7160 = vpow.pop %v7159
    %v7161 = vmul.f32 %v7127, 1.442695
    %v7162 = vpow.pop %v7161
    %v7163 = vmul.f32 %v7128, 1.442695
    %v7164 = vpow.pop %v7163
    %v7165 = vmul.f32 %v7129, 1.442695
    %v7166 = vpow.pop %v7165
    %v7167 = vmul.f32 %v7130, 1.442695
    %v7168 = vpow.pop %v7167
    %v7169 = vmul.f32 %v7131, 1.442695
    %v7170 = vpow.pop %v7169
    %v7171 = vmul.f32 %v7132, 1.442695
    %v7172 = vpow.pop %v7171
    %v7173 = vmul.f32 %v7133, 1.442695
    %v7174 = vpow.pop %v7173
    %v7175 = vmul.f32 %v7134, 1.442695
    %v7176 = vpow.pop %v7175
    %v7177 = vmul.f32 %v7135, 1.442695
    %v7178 = vpow.pop %v7177
    %v7179 = vmul.f32 %v7136, 1.442695
    %v7180 = vpow.pop %v7179
    %v7181 = vmul.f32 %v7137, 1.442695
    %v7182 = vpow.pop %v7181
    %v7183 = vmul.f32 %v7138, 1.442695
    %v7184 = vpow.pop %v7183
    %v7185 = vmul.f32 %v7139, 1.442695
    %v7186 = vpow.pop %v7185
    %v7187 = vmul.f32 %v7140, 1.442695
    %v7188 = vpow.pop %v7187
    %v7189 = vmul.f32 %v7141, 1.442695
    %v7190 = vpow.pop %v7189
    %v7191 = vmul.f32 %v7142, 1.442695
    %v7192 = vpow.pop %v7191
    %v7193 = vmul.f32 %v7143, 1.442695
    %v7194 = vpow.pop %v7193
    %v7195 = vmul.f32 %v7144, 1.442695
    %v7196 = vpow.pop %v7195
    %v7197 = vmul.f32 %v7145, 1.442695
    %v7198 = vpow.pop %v7197
    %v7199 = vmul.f32 %v7146, 1.442695
    %v7200 = vpow.pop %v7199
    %v7201 = vmul.f32 %v7147, 1.442695
    %v7202 = vpow.pop %v7201
    %v7203 = vmul.f32 %v7148, 1.442695
    %v7204 = vpow.pop %v7203
    %v7205 = vmul.f32 %v7149, 1.442695
    %v7206 = vpow.pop %v7205
    %v7207 = vmul.f32 %v7150, 1.442695
    %v7208 = vpow.pop %v7207
    %v7209 = vmul.f32 %v7151, 1.442695
    %v7210 = vpow.pop %v7209
    %v7211 = vmul.f32 %v7152, 1.442695
    %v7212 = vpow.pop %v7211
    %v7213 = vmul.f32 %v7153, 1.442695
    %v7214 = vpow.pop %v7213
    %v7215 = vmul.f32 %v7154, 1.442695
    %v7216 = vpow.pop %v7215
    %v7217 = vmul.f32 %v7155, 1.442695
    %v7218 = vpow.pop %v7217
    %v7219 = vmul.f32 %v7156, 1.442695
    %v7220 = vpow.pop %v7219
    %v7221 = vmul.f32 %v7158, %v2218
    %v7222 = vmul.f32 %v7160, %v2222
    %v7223 = vmul.f32 %v7162, %v2229
    %v7224 = vmul.f32 %v7164, %v2233
    %v7225 = vmul.f32 %v7166, %v2240
    %v7226 = vmul.f32 %v7168, %v2244
    %v7227 = vmul.f32 %v7170, %v2251
    %v7228 = vmul.f32 %v7172, %v2255
    %v7229 = vmul.f32 %v7174, %v2262
    %v7230 = vmul.f32 %v7176, %v2266
    %v7231 = vmul.f32 %v7178, %v2273
    %v7232 = vmul.f32 %v7180, %v2277
    %v7233 = vmul.f32 %v7182, %v2284
    %v7234 = vmul.f32 %v7184, %v2288
    %v7235 = vmul.f32 %v7186, %v2295
    %v7236 = vmul.f32 %v7188, %v2299
    %v7237 = vmul.f32 %v7190, %v2306
    %v7238 = vmul.f32 %v7192, %v2310
    %v7239 = vmul.f32 %v7194, %v2317
    %v7240 = vmul.f32 %v7196, %v2321
    %v7241 = vmul.f32 %v7198, %v2328
    %v7242 = vmul.f32 %v7200, %v2332
    %v7243 = vmul.f32 %v7202, %v2339
    %v7244 = vmul.f32 %v7204, %v2343
    %v7245 = vmul.f32 %v7206, %v2350
    %v7246 = vmul.f32 %v7208, %v2354
    %v7247 = vmul.f32 %v7210, %v2361
    %v7248 = vmul.f32 %v7212, %v2365
    %v7249 = vmul.f32 %v7214, %v2372
    %v7250 = vmul.f32 %v7216, %v2376
    %v7251 = vmul.f32 %v7218, %v2383
    %v7252 = vmul.f32 %v7220, %v2387
    %7285 = vset.pattern.permute.xlu0 0
    %7286 = vperm.xlu0 %7285, %v7221
    %v7287 = vpop.permute.xlu0 %7286
    %7288 = vset.pattern.permute.xlu0 0
    %7289 = vperm.xlu0 %7288, %v7222
    %v7290 = vpop.permute.xlu0 %7289
    %7291 = vset.pattern.permute.xlu0 0
    %7292 = vperm.xlu0 %7291, %v7223
    %v7293 = vpop.permute.xlu0 %7292
    %7294 = vset.pattern.permute.xlu0 0
    %7295 = vperm.xlu0 %7294, %v7224
    %v7296 = vpop.permute.xlu0 %7295
    %7297 = vset.pattern.permute.xlu0 0
    %7298 = vperm.xlu0 %7297, %v7225
    %v7299 = vpop.permute.xlu0 %7298
    %7300 = vset.pattern.permute.xlu0 0
    %7301 = vperm.xlu0 %7300, %v7226
    %v7302 = vpop.permute.xlu0 %7301
    %7303 = vset.pattern.permute.xlu0 0
    %7304 = vperm.xlu0 %7303, %v7227
    %v7305 = vpop.permute.xlu0 %7304
    %7306 = vset.pattern.permute.xlu0 0
    %7307 = vperm.xlu0 %7306, %v7228
    %v7308 = vpop.permute.xlu0 %7307
    %7309 = vset.pattern.permute.xlu0 0
    %7310 = vperm.xlu0 %7309, %v7229
    %v7311 = vpop.permute.xlu0 %7310
    %7312 = vset.pattern.permute.xlu0 0
    %7313 = vperm.xlu0 %7312, %v7230
    %v7314 = vpop.permute.xlu0 %7313
    %7315 = vset.pattern.permute.xlu0 0
    %7316 = vperm.xlu0 %7315, %v7231
    %v7317 = vpop.permute.xlu0 %7316
    %7318 = vset.pattern.permute.xlu0 0
    %7319 = vperm.xlu0 %7318, %v7232
    %v7320 = vpop.permute.xlu0 %7319
    %7321 = vset.pattern.permute.xlu0 0
    %7322 = vperm.xlu0 %7321, %v7233
    %v7323 = vpop.permute.xlu0 %7322
    %7324 = vset.pattern.permute.xlu0 0
    %7325 = vperm.xlu0 %7324, %v7234
    %v7326 = vpop.permute.xlu0 %7325
    %7327 = vset.pattern.permute.xlu0 0
    %7328 = vperm.xlu0 %7327, %v7235
    %v7329 = vpop.permute.xlu0 %7328
    %7330 = vset.pattern.permute.xlu0 0
    %7331 = vperm.xlu0 %7330, %v7236
    %v7332 = vpop.permute.xlu0 %7331
    %7333 = vset.pattern.permute.xlu0 0
    %7334 = vperm.xlu0 %7333, %v7237
    %v7335 = vpop.permute.xlu0 %7334
    %7336 = vset.pattern.permute.xlu0 0
    %7337 = vperm.xlu0 %7336, %v7238
    %v7338 = vpop.permute.xlu0 %7337
    %7339 = vset.pattern.permute.xlu0 0
    %7340 = vperm.xlu0 %7339, %v7239
    %v7341 = vpop.permute.xlu0 %7340
    %7342 = vset.pattern.permute.xlu0 0
    %7343 = vperm.xlu0 %7342, %v7240
    %v7344 = vpop.permute.xlu0 %7343
    %7345 = vset.pattern.permute.xlu0 0
    %7346 = vperm.xlu0 %7345, %v7241
    %v7347 = vpop.permute.xlu0 %7346
    %7348 = vset.pattern.permute.xlu0 0
    %7349 = vperm.xlu0 %7348, %v7242
    %v7350 = vpop.permute.xlu0 %7349
    %7351 = vset.pattern.permute.xlu0 0
    %7352 = vperm.xlu0 %7351, %v7243
    %v7353 = vpop.permute.xlu0 %7352
    %7354 = vset.pattern.permute.xlu0 0
    %7355 = vperm.xlu0 %7354, %v7244
    %v7356 = vpop.permute.xlu0 %7355
    %7357 = vset.pattern.permute.xlu0 0
    %7358 = vperm.xlu0 %7357, %v7245
    %v7359 = vpop.permute.xlu0 %7358
    %7360 = vset.pattern.permute.xlu0 0
    %7361 = vperm.xlu0 %7360, %v7246
    %v7362 = vpop.permute.xlu0 %7361
    %7363 = vset.pattern.permute.xlu0 0
    %7364 = vperm.xlu0 %7363, %v7247
    %v7365 = vpop.permute.xlu0 %7364
    %7366 = vset.pattern.permute.xlu0 0
    %7367 = vperm.xlu0 %7366, %v7248
    %v7368 = vpop.permute.xlu0 %7367
    %7369 = vset.pattern.permute.xlu0 0
    %7370 = vperm.xlu0 %7369, %v7249
    %v7371 = vpop.permute.xlu0 %7370
    %7372 = vset.pattern.permute.xlu0 0
    %7373 = vperm.xlu0 %7372, %v7250
    %v7374 = vpop.permute.xlu0 %7373
    %7375 = vset.pattern.permute.xlu0 0
    %7376 = vperm.xlu0 %7375, %v7251
    %v7377 = vpop.permute.xlu0 %7376
    %7378 = vset.pattern.permute.xlu0 0
    %7379 = vperm.xlu0 %7378, %v7252
    %v7380 = vpop.permute.xlu0 %7379
    %v7381 = vlaneseq
    %v7382 = vshrl.u32 %v7381, 7
    %v7383 = vsub.s32 %v1856, %v7382
    %v7384 = vrot.slane %v7287, %v7383
    %v7385 = vlaneseq
    %v7386 = vshrl.u32 %v7385, 7
    %v7387 = vsub.s32 %v1861, %v7386
    %v7388 = vrot.slane %v7290, %v7387
    %v7389 = vsel %vm1866, %v7388, %v7384
    %v7390 = vlaneseq
    %v7391 = vshrl.u32 %v7390, 7
    %v7392 = vsub.s32 %v1856, %v7391
    %v7393 = vrot.slane %v7293, %v7392
    %v7394 = vlaneseq
    %v7395 = vshrl.u32 %v7394, 7
    %v7396 = vsub.s32 %v1861, %v7395
    %v7397 = vrot.slane %v7296, %v7396
    %v7398 = vsel %vm1866, %v7397, %v7393
    %v7399 = vlaneseq
    %v7400 = vshrl.u32 %v7399, 7
    %v7401 = vsub.s32 %v1856, %v7400
    %v7402 = vrot.slane %v7299, %v7401
    %v7403 = vlaneseq
    %v7404 = vshrl.u32 %v7403, 7
    %v7405 = vsub.s32 %v1861, %v7404
    %v7406 = vrot.slane %v7302, %v7405
    %v7407 = vsel %vm1866, %v7406, %v7402
    %v7408 = vlaneseq
    %v7409 = vshrl.u32 %v7408, 7
    %v7410 = vsub.s32 %v1856, %v7409
    %v7411 = vrot.slane %v7305, %v7410
    %v7412 = vlaneseq
    %v7413 = vshrl.u32 %v7412, 7
    %v7414 = vsub.s32 %v1861, %v7413
    %v7415 = vrot.slane %v7308, %v7414
    %v7416 = vsel %vm1866, %v7415, %v7411
    %v7417 = vlaneseq
    %v7418 = vshrl.u32 %v7417, 7
    %v7419 = vsub.s32 %v1856, %v7418
    %v7420 = vrot.slane %v7311, %v7419
    %v7421 = vlaneseq
    %v7422 = vshrl.u32 %v7421, 7
    %v7423 = vsub.s32 %v1861, %v7422
    %v7424 = vrot.slane %v7314, %v7423
    %v7425 = vsel %vm1866, %v7424, %v7420
    %v7426 = vlaneseq
    %v7427 = vshrl.u32 %v7426, 7
    %v7428 = vsub.s32 %v1856, %v7427
    %v7429 = vrot.slane %v7317, %v7428
    %v7430 = vlaneseq
    %v7431 = vshrl.u32 %v7430, 7
    %v7432 = vsub.s32 %v1861, %v7431
    %v7433 = vrot.slane %v7320, %v7432
    %v7434 = vsel %vm1866, %v7433, %v7429
    %v7435 = vlaneseq
    %v7436 = vshrl.u32 %v7435, 7
    %v7437 = vsub.s32 %v1856, %v7436
    %v7438 = vrot.slane %v7323, %v7437
    %v7439 = vlaneseq
    %v7440 = vshrl.u32 %v7439, 7
    %v7441 = vsub.s32 %v1861, %v7440
    %v7442 = vrot.slane %v7326, %v7441
    %v7443 = vsel %vm1866, %v7442, %v7438
    %v7444 = vlaneseq
    %v7445 = vshrl.u32 %v7444, 7
    %v7446 = vsub.s32 %v1856, %v7445
    %v7447 = vrot.slane %v7329, %v7446
    %v7448 = vlaneseq
    %v7449 = vshrl.u32 %v7448, 7
    %v7450 = vsub.s32 %v1861, %v7449
    %v7451 = vrot.slane %v7332, %v7450
    %v7452 = vsel %vm1866, %v7451, %v7447
    %v7453 = vlaneseq
    %v7454 = vshrl.u32 %v7453, 7
    %v7455 = vsub.s32 %v1856, %v7454
    %v7456 = vrot.slane %v7335, %v7455
    %v7457 = vlaneseq
    %v7458 = vshrl.u32 %v7457, 7
    %v7459 = vsub.s32 %v1861, %v7458
    %v7460 = vrot.slane %v7338, %v7459
    %v7461 = vsel %vm1866, %v7460, %v7456
    %v7462 = vlaneseq
    %v7463 = vshrl.u32 %v7462, 7
    %v7464 = vsub.s32 %v1856, %v7463
    %v7465 = vrot.slane %v7341, %v7464
    %v7466 = vlaneseq
    %v7467 = vshrl.u32 %v7466, 7
    %v7468 = vsub.s32 %v1861, %v7467
    %v7469 = vrot.slane %v7344, %v7468
    %v7470 = vsel %vm1866, %v7469, %v7465
    %v7471 = vlaneseq
    %v7472 = vshrl.u32 %v7471, 7
    %v7473 = vsub.s32 %v1856, %v7472
    %v7474 = vrot.slane %v7347, %v7473
    %v7475 = vlaneseq
    %v7476 = vshrl.u32 %v7475, 7
    %v7477 = vsub.s32 %v1861, %v7476
    %v7478 = vrot.slane %v7350, %v7477
    %v7479 = vsel %vm1866, %v7478, %v7474
    %v7480 = vlaneseq
    %v7481 = vshrl.u32 %v7480, 7
    %v7482 = vsub.s32 %v1856, %v7481
    %v7483 = vrot.slane %v7353, %v7482
    %v7484 = vlaneseq
    %v7485 = vshrl.u32 %v7484, 7
    %v7486 = vsub.s32 %v1861, %v7485
    %v7487 = vrot.slane %v7356, %v7486
    %v7488 = vsel %vm1866, %v7487, %v7483
    %v7489 = vlaneseq
    %v7490 = vshrl.u32 %v7489, 7
    %v7491 = vsub.s32 %v1856, %v7490
    %v7492 = vrot.slane %v7359, %v7491
    %v7493 = vlaneseq
    %v7494 = vshrl.u32 %v7493, 7
    %v7495 = vsub.s32 %v1861, %v7494
    %v7496 = vrot.slane %v7362, %v7495
    %v7497 = vsel %vm1866, %v7496, %v7492
    %v7498 = vlaneseq
    %v7499 = vshrl.u32 %v7498, 7
    %v7500 = vsub.s32 %v1856, %v7499
    %v7501 = vrot.slane %v7365, %v7500
    %v7502 = vlaneseq
    %v7503 = vshrl.u32 %v7502, 7
    %v7504 = vsub.s32 %v1861, %v7503
    %v7505 = vrot.slane %v7368, %v7504
    %v7506 = vsel %vm1866, %v7505, %v7501
    %v7507 = vlaneseq
    %v7508 = vshrl.u32 %v7507, 7
    %v7509 = vsub.s32 %v1856, %v7508
    %v7510 = vrot.slane %v7371, %v7509
    %v7511 = vlaneseq
    %v7512 = vshrl.u32 %v7511, 7
    %v7513 = vsub.s32 %v1861, %v7512
    %v7514 = vrot.slane %v7374, %v7513
    %v7515 = vsel %vm1866, %v7514, %v7510
    %v7516 = vlaneseq
    %v7517 = vshrl.u32 %v7516, 7
    %v7518 = vsub.s32 %v1856, %v7517
    %v7519 = vrot.slane %v7377, %v7518
    %v7520 = vlaneseq
    %v7521 = vshrl.u32 %v7520, 7
    %v7522 = vsub.s32 %v1861, %v7521
    %v7523 = vrot.slane %v7380, %v7522
    %v7524 = vsel %vm1866, %v7523, %v7519
    %v7525 = vsel %vm2003, %v7398, %v7389
    %v7526 = vsel %vm2005, %v7407, %v7525
    %v7527 = vsel %vm2007, %v7416, %v7526
    %v7528 = vsel %vm2009, %v7425, %v7527
    %v7529 = vsel %vm2011, %v7434, %v7528
    %v7530 = vsel %vm2013, %v7443, %v7529
    %v7531 = vsel %vm2015, %v7452, %v7530
    %v7532 = vsel %vm2003, %v7470, %v7461
    %v7533 = vsel %vm2005, %v7479, %v7532
    %v7534 = vsel %vm2007, %v7488, %v7533
    %v7535 = vsel %vm2009, %v7497, %v7534
    %v7536 = vsel %vm2011, %v7506, %v7535
    %v7537 = vsel %vm2013, %v7515, %v7536
    %v7538 = vsel %vm2015, %v7524, %v7537
    %v7541 = vsel %vm153, %v7531, 0.0
    %7542 = vadd.xlane.f32.xlu0 %v7541
    %v7543 = vpop.xlane.xlu0 %7542
    %v7544 = vsel %vm153, %v7538, 0.0
    %7545 = vadd.xlane.f32.xlu0 %v7544
    %v7546 = vpop.xlane.xlu0 %7545
    %v7547 = vadd.f32 %v7543, 1e-16
    %v7548 = vadd.f32 %v7546, 1e-16
    %v7549 = vrcp.pop %v7547
    %v7550 = vrcp.pop %v7548
    %v7553 = vlaneseq
    %v7554 = vshrl.u32 %v7553, 7
    %v7555 = vsub.s32 0, %v7554
    %v7556 = vrot.slane %v7549, %v7555
    %v7557 = vlaneseq
    %v7558 = vshrl.u32 %v7557, 7
    %v7559 = vsub.s32 1, %v7558
    %v7560 = vrot.slane %v7549, %v7559
    %v7561 = vlaneseq
    %v7562 = vshrl.u32 %v7561, 7
    %v7563 = vsub.s32 2, %v7562
    %v7564 = vrot.slane %v7549, %v7563
    %v7565 = vlaneseq
    %v7566 = vshrl.u32 %v7565, 7
    %v7567 = vsub.s32 3, %v7566
    %v7568 = vrot.slane %v7549, %v7567
    %v7569 = vlaneseq
    %v7570 = vshrl.u32 %v7569, 7
    %v7571 = vsub.s32 4, %v7570
    %v7572 = vrot.slane %v7549, %v7571
    %v7573 = vlaneseq
    %v7574 = vshrl.u32 %v7573, 7
    %v7575 = vsub.s32 5, %v7574
    %v7576 = vrot.slane %v7549, %v7575
    %v7577 = vlaneseq
    %v7578 = vshrl.u32 %v7577, 7
    %v7579 = vsub.s32 6, %v7578
    %v7580 = vrot.slane %v7549, %v7579
    %v7581 = vlaneseq
    %v7582 = vshrl.u32 %v7581, 7
    %v7583 = vsub.s32 7, %v7582
    %v7584 = vrot.slane %v7549, %v7583
    %v7585 = vlaneseq
    %v7586 = vshrl.u32 %v7585, 7
    %v7587 = vsub.s32 0, %v7586
    %v7588 = vrot.slane %v7550, %v7587
    %v7589 = vlaneseq
    %v7590 = vshrl.u32 %v7589, 7
    %v7591 = vsub.s32 1, %v7590
    %v7592 = vrot.slane %v7550, %v7591
    %v7593 = vlaneseq
    %v7594 = vshrl.u32 %v7593, 7
    %v7595 = vsub.s32 2, %v7594
    %v7596 = vrot.slane %v7550, %v7595
    %v7597 = vlaneseq
    %v7598 = vshrl.u32 %v7597, 7
    %v7599 = vsub.s32 3, %v7598
    %v7600 = vrot.slane %v7550, %v7599
    %v7601 = vlaneseq
    %v7602 = vshrl.u32 %v7601, 7
    %v7603 = vsub.s32 4, %v7602
    %v7604 = vrot.slane %v7550, %v7603
    %v7605 = vlaneseq
    %v7606 = vshrl.u32 %v7605, 7
    %v7607 = vsub.s32 5, %v7606
    %v7608 = vrot.slane %v7550, %v7607
    %v7609 = vlaneseq
    %v7610 = vshrl.u32 %v7609, 7
    %v7611 = vsub.s32 6, %v7610
    %v7612 = vrot.slane %v7550, %v7611
    %v7613 = vlaneseq
    %v7614 = vshrl.u32 %v7613, 7
    %v7615 = vsub.s32 7, %v7614
    %v7616 = vrot.slane %v7550, %v7615
    %v7633 = vmul.f32 %v7221, %v7556
    %v7634 = vmul.f32 %v7222, %v7556
    %v7635 = vmul.f32 %v7223, %v7560
    %v7636 = vmul.f32 %v7224, %v7560
    %v7637 = vmul.f32 %v7225, %v7564
    %v7638 = vmul.f32 %v7226, %v7564
    %v7639 = vmul.f32 %v7227, %v7568
    %v7640 = vmul.f32 %v7228, %v7568
    %v7641 = vmul.f32 %v7229, %v7572
    %v7642 = vmul.f32 %v7230, %v7572
    %v7643 = vmul.f32 %v7231, %v7576
    %v7644 = vmul.f32 %v7232, %v7576
    %v7645 = vmul.f32 %v7233, %v7580
    %v7646 = vmul.f32 %v7234, %v7580
    %v7647 = vmul.f32 %v7235, %v7584
    %v7648 = vmul.f32 %v7236, %v7584
    %v7649 = vmul.f32 %v7237, %v7588
    %v7650 = vmul.f32 %v7238, %v7588
    %v7651 = vmul.f32 %v7239, %v7592
    %v7652 = vmul.f32 %v7240, %v7592
    %v7653 = vmul.f32 %v7241, %v7596
    %v7654 = vmul.f32 %v7242, %v7596
    %v7655 = vmul.f32 %v7243, %v7600
    %v7656 = vmul.f32 %v7244, %v7600
    %v7657 = vmul.f32 %v7245, %v7604
    %v7658 = vmul.f32 %v7246, %v7604
    %v7659 = vmul.f32 %v7247, %v7608
    %v7660 = vmul.f32 %v7248, %v7608
    %v7661 = vmul.f32 %v7249, %v7612
    %v7662 = vmul.f32 %v7250, %v7612
    %v7663 = vmul.f32 %v7251, %v7616
    %v7664 = vmul.f32 %v7252, %v7616
    %7697 = vset.pattern.permute.xlu0 0
    %7698 = vperm.xlu0 %7697, %v6461
    %v7699 = vpop.permute.xlu0 %7698
    %7700 = vset.pattern.permute.xlu0 0
    %7701 = vperm.xlu0 %7700, %v6462
    %v7702 = vpop.permute.xlu0 %7701
    %7703 = vset.pattern.permute.xlu0 0
    %7704 = vperm.xlu0 %7703, %v6463
    %v7705 = vpop.permute.xlu0 %7704
    %7706 = vset.pattern.permute.xlu0 0
    %7707 = vperm.xlu0 %7706, %v6464
    %v7708 = vpop.permute.xlu0 %7707
    %7709 = vset.pattern.permute.xlu0 0
    %7710 = vperm.xlu0 %7709, %v6465
    %v7711 = vpop.permute.xlu0 %7710
    %7712 = vset.pattern.permute.xlu0 0
    %7713 = vperm.xlu0 %7712, %v6466
    %v7714 = vpop.permute.xlu0 %7713
    %7715 = vset.pattern.permute.xlu0 0
    %7716 = vperm.xlu0 %7715, %v6467
    %v7717 = vpop.permute.xlu0 %7716
    %7718 = vset.pattern.permute.xlu0 0
    %7719 = vperm.xlu0 %7718, %v6468
    %v7720 = vpop.permute.xlu0 %7719
    %7721 = vset.pattern.permute.xlu0 0
    %7722 = vperm.xlu0 %7721, %v6469
    %v7723 = vpop.permute.xlu0 %7722
    %7724 = vset.pattern.permute.xlu0 0
    %7725 = vperm.xlu0 %7724, %v6470
    %v7726 = vpop.permute.xlu0 %7725
    %7727 = vset.pattern.permute.xlu0 0
    %7728 = vperm.xlu0 %7727, %v6471
    %v7729 = vpop.permute.xlu0 %7728
    %7730 = vset.pattern.permute.xlu0 0
    %7731 = vperm.xlu0 %7730, %v6472
    %v7732 = vpop.permute.xlu0 %7731
    %7733 = vset.pattern.permute.xlu0 0
    %7734 = vperm.xlu0 %7733, %v6473
    %v7735 = vpop.permute.xlu0 %7734
    %7736 = vset.pattern.permute.xlu0 0
    %7737 = vperm.xlu0 %7736, %v6474
    %v7738 = vpop.permute.xlu0 %7737
    %7739 = vset.pattern.permute.xlu0 0
    %7740 = vperm.xlu0 %7739, %v6475
    %v7741 = vpop.permute.xlu0 %7740
    %7742 = vset.pattern.permute.xlu0 0
    %7743 = vperm.xlu0 %7742, %v6476
    %v7744 = vpop.permute.xlu0 %7743
    %7745 = vset.pattern.permute.xlu0 0
    %7746 = vperm.xlu0 %7745, %v6477
    %v7747 = vpop.permute.xlu0 %7746
    %7748 = vset.pattern.permute.xlu0 0
    %7749 = vperm.xlu0 %7748, %v6478
    %v7750 = vpop.permute.xlu0 %7749
    %7751 = vset.pattern.permute.xlu0 0
    %7752 = vperm.xlu0 %7751, %v6479
    %v7753 = vpop.permute.xlu0 %7752
    %7754 = vset.pattern.permute.xlu0 0
    %7755 = vperm.xlu0 %7754, %v6480
    %v7756 = vpop.permute.xlu0 %7755
    %7757 = vset.pattern.permute.xlu0 0
    %7758 = vperm.xlu0 %7757, %v6481
    %v7759 = vpop.permute.xlu0 %7758
    %7760 = vset.pattern.permute.xlu0 0
    %7761 = vperm.xlu0 %7760, %v6482
    %v7762 = vpop.permute.xlu0 %7761
    %7763 = vset.pattern.permute.xlu0 0
    %7764 = vperm.xlu0 %7763, %v6483
    %v7765 = vpop.permute.xlu0 %7764
    %7766 = vset.pattern.permute.xlu0 0
    %7767 = vperm.xlu0 %7766, %v6484
    %v7768 = vpop.permute.xlu0 %7767
    %7769 = vset.pattern.permute.xlu0 0
    %7770 = vperm.xlu0 %7769, %v6485
    %v7771 = vpop.permute.xlu0 %7770
    %7772 = vset.pattern.permute.xlu0 0
    %7773 = vperm.xlu0 %7772, %v6486
    %v7774 = vpop.permute.xlu0 %7773
    %7775 = vset.pattern.permute.xlu0 0
    %7776 = vperm.xlu0 %7775, %v6487
    %v7777 = vpop.permute.xlu0 %7776
    %7778 = vset.pattern.permute.xlu0 0
    %7779 = vperm.xlu0 %7778, %v6488
    %v7780 = vpop.permute.xlu0 %7779
    %7781 = vset.pattern.permute.xlu0 0
    %7782 = vperm.xlu0 %7781, %v6489
    %v7783 = vpop.permute.xlu0 %7782
    %7784 = vset.pattern.permute.xlu0 0
    %7785 = vperm.xlu0 %7784, %v6490
    %v7786 = vpop.permute.xlu0 %7785
    %7787 = vset.pattern.permute.xlu0 0
    %7788 = vperm.xlu0 %7787, %v6491
    %v7789 = vpop.permute.xlu0 %7788
    %7790 = vset.pattern.permute.xlu0 0
    %7791 = vperm.xlu0 %7790, %v6492
    %v7792 = vpop.permute.xlu0 %7791
    %v7793 = vlaneseq
    %v7794 = vshrl.u32 %v7793, 7
    %v7795 = vsub.s32 %v1856, %v7794
    %v7796 = vrot.slane %v7699, %v7795
    %v7797 = vlaneseq
    %v7798 = vshrl.u32 %v7797, 7
    %v7799 = vsub.s32 %v1861, %v7798
    %v7800 = vrot.slane %v7702, %v7799
    %v7801 = vsel %vm1866, %v7800, %v7796
    %v7802 = vlaneseq
    %v7803 = vshrl.u32 %v7802, 7
    %v7804 = vsub.s32 %v1856, %v7803
    %v7805 = vrot.slane %v7705, %v7804
    %v7806 = vlaneseq
    %v7807 = vshrl.u32 %v7806, 7
    %v7808 = vsub.s32 %v1861, %v7807
    %v7809 = vrot.slane %v7708, %v7808
    %v7810 = vsel %vm1866, %v7809, %v7805
    %v7811 = vlaneseq
    %v7812 = vshrl.u32 %v7811, 7
    %v7813 = vsub.s32 %v1856, %v7812
    %v7814 = vrot.slane %v7711, %v7813
    %v7815 = vlaneseq
    %v7816 = vshrl.u32 %v7815, 7
    %v7817 = vsub.s32 %v1861, %v7816
    %v7818 = vrot.slane %v7714, %v7817
    %v7819 = vsel %vm1866, %v7818, %v7814
    %v7820 = vlaneseq
    %v7821 = vshrl.u32 %v7820, 7
    %v7822 = vsub.s32 %v1856, %v7821
    %v7823 = vrot.slane %v7717, %v7822
    %v7824 = vlaneseq
    %v7825 = vshrl.u32 %v7824, 7
    %v7826 = vsub.s32 %v1861, %v7825
    %v7827 = vrot.slane %v7720, %v7826
    %v7828 = vsel %vm1866, %v7827, %v7823
    %v7829 = vlaneseq
    %v7830 = vshrl.u32 %v7829, 7
    %v7831 = vsub.s32 %v1856, %v7830
    %v7832 = vrot.slane %v7723, %v7831
    %v7833 = vlaneseq
    %v7834 = vshrl.u32 %v7833, 7
    %v7835 = vsub.s32 %v1861, %v7834
    %v7836 = vrot.slane %v7726, %v7835
    %v7837 = vsel %vm1866, %v7836, %v7832
    %v7838 = vlaneseq
    %v7839 = vshrl.u32 %v7838, 7
    %v7840 = vsub.s32 %v1856, %v7839
    %v7841 = vrot.slane %v7729, %v7840
    %v7842 = vlaneseq
    %v7843 = vshrl.u32 %v7842, 7
    %v7844 = vsub.s32 %v1861, %v7843
    %v7845 = vrot.slane %v7732, %v7844
    %v7846 = vsel %vm1866, %v7845, %v7841
    %v7847 = vlaneseq
    %v7848 = vshrl.u32 %v7847, 7
    %v7849 = vsub.s32 %v1856, %v7848
    %v7850 = vrot.slane %v7735, %v7849
    %v7851 = vlaneseq
    %v7852 = vshrl.u32 %v7851, 7
    %v7853 = vsub.s32 %v1861, %v7852
    %v7854 = vrot.slane %v7738, %v7853
    %v7855 = vsel %vm1866, %v7854, %v7850
    %v7856 = vlaneseq
    %v7857 = vshrl.u32 %v7856, 7
    %v7858 = vsub.s32 %v1856, %v7857
    %v7859 = vrot.slane %v7741, %v7858
    %v7860 = vlaneseq
    %v7861 = vshrl.u32 %v7860, 7
    %v7862 = vsub.s32 %v1861, %v7861
    %v7863 = vrot.slane %v7744, %v7862
    %v7864 = vsel %vm1866, %v7863, %v7859
    %v7865 = vlaneseq
    %v7866 = vshrl.u32 %v7865, 7
    %v7867 = vsub.s32 %v1856, %v7866
    %v7868 = vrot.slane %v7747, %v7867
    %v7869 = vlaneseq
    %v7870 = vshrl.u32 %v7869, 7
    %v7871 = vsub.s32 %v1861, %v7870
    %v7872 = vrot.slane %v7750, %v7871
    %v7873 = vsel %vm1866, %v7872, %v7868
    %v7874 = vlaneseq
    %v7875 = vshrl.u32 %v7874, 7
    %v7876 = vsub.s32 %v1856, %v7875
    %v7877 = vrot.slane %v7753, %v7876
    %v7878 = vlaneseq
    %v7879 = vshrl.u32 %v7878, 7
    %v7880 = vsub.s32 %v1861, %v7879
    %v7881 = vrot.slane %v7756, %v7880
    %v7882 = vsel %vm1866, %v7881, %v7877
    %v7883 = vlaneseq
    %v7884 = vshrl.u32 %v7883, 7
    %v7885 = vsub.s32 %v1856, %v7884
    %v7886 = vrot.slane %v7759, %v7885
    %v7887 = vlaneseq
    %v7888 = vshrl.u32 %v7887, 7
    %v7889 = vsub.s32 %v1861, %v7888
    %v7890 = vrot.slane %v7762, %v7889
    %v7891 = vsel %vm1866, %v7890, %v7886
    %v7892 = vlaneseq
    %v7893 = vshrl.u32 %v7892, 7
    %v7894 = vsub.s32 %v1856, %v7893
    %v7895 = vrot.slane %v7765, %v7894
    %v7896 = vlaneseq
    %v7897 = vshrl.u32 %v7896, 7
    %v7898 = vsub.s32 %v1861, %v7897
    %v7899 = vrot.slane %v7768, %v7898
    %v7900 = vsel %vm1866, %v7899, %v7895
    %v7901 = vlaneseq
    %v7902 = vshrl.u32 %v7901, 7
    %v7903 = vsub.s32 %v1856, %v7902
    %v7904 = vrot.slane %v7771, %v7903
    %v7905 = vlaneseq
    %v7906 = vshrl.u32 %v7905, 7
    %v7907 = vsub.s32 %v1861, %v7906
    %v7908 = vrot.slane %v7774, %v7907
    %v7909 = vsel %vm1866, %v7908, %v7904
    %v7910 = vlaneseq
    %v7911 = vshrl.u32 %v7910, 7
    %v7912 = vsub.s32 %v1856, %v7911
    %v7913 = vrot.slane %v7777, %v7912
    %v7914 = vlaneseq
    %v7915 = vshrl.u32 %v7914, 7
    %v7916 = vsub.s32 %v1861, %v7915
    %v7917 = vrot.slane %v7780, %v7916
    %v7918 = vsel %vm1866, %v7917, %v7913
    %v7919 = vlaneseq
    %v7920 = vshrl.u32 %v7919, 7
    %v7921 = vsub.s32 %v1856, %v7920
    %v7922 = vrot.slane %v7783, %v7921
    %v7923 = vlaneseq
    %v7924 = vshrl.u32 %v7923, 7
    %v7925 = vsub.s32 %v1861, %v7924
    %v7926 = vrot.slane %v7786, %v7925
    %v7927 = vsel %vm1866, %v7926, %v7922
    %v7928 = vlaneseq
    %v7929 = vshrl.u32 %v7928, 7
    %v7930 = vsub.s32 %v1856, %v7929
    %v7931 = vrot.slane %v7789, %v7930
    %v7932 = vlaneseq
    %v7933 = vshrl.u32 %v7932, 7
    %v7934 = vsub.s32 %v1861, %v7933
    %v7935 = vrot.slane %v7792, %v7934
    %v7936 = vsel %vm1866, %v7935, %v7931
    %v7937 = vsel %vm2003, %v7810, %v7801
    %v7938 = vsel %vm2005, %v7819, %v7937
    %v7939 = vsel %vm2007, %v7828, %v7938
    %v7940 = vsel %vm2009, %v7837, %v7939
    %v7941 = vsel %vm2011, %v7846, %v7940
    %v7942 = vsel %vm2013, %v7855, %v7941
    %v7943 = vsel %vm2015, %v7864, %v7942
    %v7944 = vsel %vm2003, %v7882, %v7873
    %v7945 = vsel %vm2005, %v7891, %v7944
    %v7946 = vsel %vm2007, %v7900, %v7945
    %v7947 = vsel %vm2009, %v7909, %v7946
    %v7948 = vsel %vm2011, %v7918, %v7947
    %v7949 = vsel %vm2013, %v7927, %v7948
    %v7950 = vsel %vm2015, %v7936, %v7949
    %7985 = vset.pattern.permute.xlu0 0
    %7986 = vperm.xlu0 %7985, %v7633
    %v7987 = vpop.permute.xlu0 %7986
    %7988 = vset.pattern.permute.xlu0 0
    %7989 = vperm.xlu0 %7988, %v7634
    %v7990 = vpop.permute.xlu0 %7989
    %7991 = vset.pattern.permute.xlu0 0
    %7992 = vperm.xlu0 %7991, %v7635
    %v7993 = vpop.permute.xlu0 %7992
    %7994 = vset.pattern.permute.xlu0 0
    %7995 = vperm.xlu0 %7994, %v7636
    %v7996 = vpop.permute.xlu0 %7995
    %7997 = vset.pattern.permute.xlu0 0
    %7998 = vperm.xlu0 %7997, %v7637
    %v7999 = vpop.permute.xlu0 %7998
    %8000 = vset.pattern.permute.xlu0 0
    %8001 = vperm.xlu0 %8000, %v7638
    %v8002 = vpop.permute.xlu0 %8001
    %8003 = vset.pattern.permute.xlu0 0
    %8004 = vperm.xlu0 %8003, %v7639
    %v8005 = vpop.permute.xlu0 %8004
    %8006 = vset.pattern.permute.xlu0 0
    %8007 = vperm.xlu0 %8006, %v7640
    %v8008 = vpop.permute.xlu0 %8007
    %8009 = vset.pattern.permute.xlu0 0
    %8010 = vperm.xlu0 %8009, %v7641
    %v8011 = vpop.permute.xlu0 %8010
    %8012 = vset.pattern.permute.xlu0 0
    %8013 = vperm.xlu0 %8012, %v7642
    %v8014 = vpop.permute.xlu0 %8013
    %8015 = vset.pattern.permute.xlu0 0
    %8016 = vperm.xlu0 %8015, %v7643
    %v8017 = vpop.permute.xlu0 %8016
    %8018 = vset.pattern.permute.xlu0 0
    %8019 = vperm.xlu0 %8018, %v7644
    %v8020 = vpop.permute.xlu0 %8019
    %8021 = vset.pattern.permute.xlu0 0
    %8022 = vperm.xlu0 %8021, %v7645
    %v8023 = vpop.permute.xlu0 %8022
    %8024 = vset.pattern.permute.xlu0 0
    %8025 = vperm.xlu0 %8024, %v7646
    %v8026 = vpop.permute.xlu0 %8025
    %8027 = vset.pattern.permute.xlu0 0
    %8028 = vperm.xlu0 %8027, %v7647
    %v8029 = vpop.permute.xlu0 %8028
    %8030 = vset.pattern.permute.xlu0 0
    %8031 = vperm.xlu0 %8030, %v7648
    %v8032 = vpop.permute.xlu0 %8031
    %8033 = vset.pattern.permute.xlu0 0
    %8034 = vperm.xlu0 %8033, %v7649
    %v8035 = vpop.permute.xlu0 %8034
    %8036 = vset.pattern.permute.xlu0 0
    %8037 = vperm.xlu0 %8036, %v7650
    %v8038 = vpop.permute.xlu0 %8037
    %8039 = vset.pattern.permute.xlu0 0
    %8040 = vperm.xlu0 %8039, %v7651
    %v8041 = vpop.permute.xlu0 %8040
    %8042 = vset.pattern.permute.xlu0 0
    %8043 = vperm.xlu0 %8042, %v7652
    %v8044 = vpop.permute.xlu0 %8043
    %8045 = vset.pattern.permute.xlu0 0
    %8046 = vperm.xlu0 %8045, %v7653
    %v8047 = vpop.permute.xlu0 %8046
    %8048 = vset.pattern.permute.xlu0 0
    %8049 = vperm.xlu0 %8048, %v7654
    %v8050 = vpop.permute.xlu0 %8049
    %8051 = vset.pattern.permute.xlu0 0
    %8052 = vperm.xlu0 %8051, %v7655
    %v8053 = vpop.permute.xlu0 %8052
    %8054 = vset.pattern.permute.xlu0 0
    %8055 = vperm.xlu0 %8054, %v7656
    %v8056 = vpop.permute.xlu0 %8055
    %8057 = vset.pattern.permute.xlu0 0
    %8058 = vperm.xlu0 %8057, %v7657
    %v8059 = vpop.permute.xlu0 %8058
    %8060 = vset.pattern.permute.xlu0 0
    %8061 = vperm.xlu0 %8060, %v7658
    %v8062 = vpop.permute.xlu0 %8061
    %8063 = vset.pattern.permute.xlu0 0
    %8064 = vperm.xlu0 %8063, %v7659
    %v8065 = vpop.permute.xlu0 %8064
    %8066 = vset.pattern.permute.xlu0 0
    %8067 = vperm.xlu0 %8066, %v7660
    %v8068 = vpop.permute.xlu0 %8067
    %8069 = vset.pattern.permute.xlu0 0
    %8070 = vperm.xlu0 %8069, %v7661
    %v8071 = vpop.permute.xlu0 %8070
    %8072 = vset.pattern.permute.xlu0 0
    %8073 = vperm.xlu0 %8072, %v7662
    %v8074 = vpop.permute.xlu0 %8073
    %8075 = vset.pattern.permute.xlu0 0
    %8076 = vperm.xlu0 %8075, %v7663
    %v8077 = vpop.permute.xlu0 %8076
    %8078 = vset.pattern.permute.xlu0 0
    %8079 = vperm.xlu0 %8078, %v7664
    %v8080 = vpop.permute.xlu0 %8079
    %v8081 = vlaneseq
    %v8082 = vshrl.u32 %v8081, 7
    %v8083 = vsub.s32 %v4452, %v8082
    %v8084 = vrot.slane %v7987, %v8083
    %v8085 = vlaneseq
    %v8086 = vshrl.u32 %v8085, 7
    %v8087 = vsub.s32 %v4457, %v8086
    %v8088 = vrot.slane %v7990, %v8087
    %v8089 = vsel %vm4462, %v8088, %v8084
    %v8090 = vlaneseq
    %v8091 = vshrl.u32 %v8090, 7
    %v8092 = vsub.s32 %v4452, %v8091
    %v8093 = vrot.slane %v7993, %v8092
    %v8094 = vlaneseq
    %v8095 = vshrl.u32 %v8094, 7
    %v8096 = vsub.s32 %v4457, %v8095
    %v8097 = vrot.slane %v7996, %v8096
    %v8098 = vsel %vm4462, %v8097, %v8093
    %v8099 = vlaneseq
    %v8100 = vshrl.u32 %v8099, 7
    %v8101 = vsub.s32 %v4452, %v8100
    %v8102 = vrot.slane %v7999, %v8101
    %v8103 = vlaneseq
    %v8104 = vshrl.u32 %v8103, 7
    %v8105 = vsub.s32 %v4457, %v8104
    %v8106 = vrot.slane %v8002, %v8105
    %v8107 = vsel %vm4462, %v8106, %v8102
    %v8108 = vlaneseq
    %v8109 = vshrl.u32 %v8108, 7
    %v8110 = vsub.s32 %v4452, %v8109
    %v8111 = vrot.slane %v8005, %v8110
    %v8112 = vlaneseq
    %v8113 = vshrl.u32 %v8112, 7
    %v8114 = vsub.s32 %v4457, %v8113
    %v8115 = vrot.slane %v8008, %v8114
    %v8116 = vsel %vm4462, %v8115, %v8111
    %v8117 = vlaneseq
    %v8118 = vshrl.u32 %v8117, 7
    %v8119 = vsub.s32 %v4452, %v8118
    %v8120 = vrot.slane %v8011, %v8119
    %v8121 = vlaneseq
    %v8122 = vshrl.u32 %v8121, 7
    %v8123 = vsub.s32 %v4457, %v8122
    %v8124 = vrot.slane %v8014, %v8123
    %v8125 = vsel %vm4462, %v8124, %v8120
    %v8126 = vlaneseq
    %v8127 = vshrl.u32 %v8126, 7
    %v8128 = vsub.s32 %v4452, %v8127
    %v8129 = vrot.slane %v8017, %v8128
    %v8130 = vlaneseq
    %v8131 = vshrl.u32 %v8130, 7
    %v8132 = vsub.s32 %v4457, %v8131
    %v8133 = vrot.slane %v8020, %v8132
    %v8134 = vsel %vm4462, %v8133, %v8129
    %v8135 = vlaneseq
    %v8136 = vshrl.u32 %v8135, 7
    %v8137 = vsub.s32 %v4452, %v8136
    %v8138 = vrot.slane %v8023, %v8137
    %v8139 = vlaneseq
    %v8140 = vshrl.u32 %v8139, 7
    %v8141 = vsub.s32 %v4457, %v8140
    %v8142 = vrot.slane %v8026, %v8141
    %v8143 = vsel %vm4462, %v8142, %v8138
    %v8144 = vlaneseq
    %v8145 = vshrl.u32 %v8144, 7
    %v8146 = vsub.s32 %v4452, %v8145
    %v8147 = vrot.slane %v8029, %v8146
    %v8148 = vlaneseq
    %v8149 = vshrl.u32 %v8148, 7
    %v8150 = vsub.s32 %v4457, %v8149
    %v8151 = vrot.slane %v8032, %v8150
    %v8152 = vsel %vm4462, %v8151, %v8147
    %v8153 = vlaneseq
    %v8154 = vshrl.u32 %v8153, 7
    %v8155 = vsub.s32 %v4452, %v8154
    %v8156 = vrot.slane %v8035, %v8155
    %v8157 = vlaneseq
    %v8158 = vshrl.u32 %v8157, 7
    %v8159 = vsub.s32 %v4457, %v8158
    %v8160 = vrot.slane %v8038, %v8159
    %v8161 = vsel %vm4462, %v8160, %v8156
    %v8162 = vlaneseq
    %v8163 = vshrl.u32 %v8162, 7
    %v8164 = vsub.s32 %v4452, %v8163
    %v8165 = vrot.slane %v8041, %v8164
    %v8166 = vlaneseq
    %v8167 = vshrl.u32 %v8166, 7
    %v8168 = vsub.s32 %v4457, %v8167
    %v8169 = vrot.slane %v8044, %v8168
    %v8170 = vsel %vm4462, %v8169, %v8165
    %v8171 = vlaneseq
    %v8172 = vshrl.u32 %v8171, 7
    %v8173 = vsub.s32 %v4452, %v8172
    %v8174 = vrot.slane %v8047, %v8173
    %v8175 = vlaneseq
    %v8176 = vshrl.u32 %v8175, 7
    %v8177 = vsub.s32 %v4457, %v8176
    %v8178 = vrot.slane %v8050, %v8177
    %v8179 = vsel %vm4462, %v8178, %v8174
    %v8180 = vlaneseq
    %v8181 = vshrl.u32 %v8180, 7
    %v8182 = vsub.s32 %v4452, %v8181
    %v8183 = vrot.slane %v8053, %v8182
    %v8184 = vlaneseq
    %v8185 = vshrl.u32 %v8184, 7
    %v8186 = vsub.s32 %v4457, %v8185
    %v8187 = vrot.slane %v8056, %v8186
    %v8188 = vsel %vm4462, %v8187, %v8183
    %v8189 = vlaneseq
    %v8190 = vshrl.u32 %v8189, 7
    %v8191 = vsub.s32 %v4452, %v8190
    %v8192 = vrot.slane %v8059, %v8191
    %v8193 = vlaneseq
    %v8194 = vshrl.u32 %v8193, 7
    %v8195 = vsub.s32 %v4457, %v8194
    %v8196 = vrot.slane %v8062, %v8195
    %v8197 = vsel %vm4462, %v8196, %v8192
    %v8198 = vlaneseq
    %v8199 = vshrl.u32 %v8198, 7
    %v8200 = vsub.s32 %v4452, %v8199
    %v8201 = vrot.slane %v8065, %v8200
    %v8202 = vlaneseq
    %v8203 = vshrl.u32 %v8202, 7
    %v8204 = vsub.s32 %v4457, %v8203
    %v8205 = vrot.slane %v8068, %v8204
    %v8206 = vsel %vm4462, %v8205, %v8201
    %v8207 = vlaneseq
    %v8208 = vshrl.u32 %v8207, 7
    %v8209 = vsub.s32 %v4452, %v8208
    %v8210 = vrot.slane %v8071, %v8209
    %v8211 = vlaneseq
    %v8212 = vshrl.u32 %v8211, 7
    %v8213 = vsub.s32 %v4457, %v8212
    %v8214 = vrot.slane %v8074, %v8213
    %v8215 = vsel %vm4462, %v8214, %v8210
    %v8216 = vlaneseq
    %v8217 = vshrl.u32 %v8216, 7
    %v8218 = vsub.s32 %v4452, %v8217
    %v8219 = vrot.slane %v8077, %v8218
    %v8220 = vlaneseq
    %v8221 = vshrl.u32 %v8220, 7
    %v8222 = vsub.s32 %v4457, %v8221
    %v8223 = vrot.slane %v8080, %v8222
    %v8224 = vsel %vm4462, %v8223, %v8219
    %v8225 = vsel %vm2003, %v8098, %v8089
    %v8226 = vsel %vm2005, %v8107, %v8225
    %v8227 = vsel %vm2007, %v8116, %v8226
    %v8228 = vsel %vm2009, %v8125, %v8227
    %v8229 = vsel %vm2011, %v8134, %v8228
    %v8230 = vsel %vm2013, %v8143, %v8229
    %v8231 = vsel %vm2015, %v8152, %v8230
    %v8232 = vsel %vm2003, %v8170, %v8161
    %v8233 = vsel %vm2005, %v8179, %v8232
    %v8234 = vsel %vm2007, %v8188, %v8233
    %v8235 = vsel %vm2009, %v8197, %v8234
    %v8236 = vsel %vm2011, %v8206, %v8235
    %v8237 = vsel %vm2013, %v8215, %v8236
    %v8238 = vsel %vm2015, %v8224, %v8237
    %v8241 = vsel %vm153, %v7943, %v8231
    %v8242 = vsel %vm153, %v7950, %v8238
    %8245 = vrot.lane.b32.xlu0 %v4816, 96
    %v8246 = vpop.permute.xlu0 %8245
    %8247 = vrot.lane.b32.xlu0 %v4822, 96
    %v8248 = vpop.permute.xlu0 %8247
    %v8252 = vsel %vm1388, %v8241, 0
    %v8255 = vsel %vm1388, %v8242, 0
    %8257 = vmatprep.subr.mxu0 0.0
    %8258 = vmatpush1.msra.mxu0 %v4816
    %8259 = vmatprep.subr.mxu0 0.0
    %8260 = vmatpush1.msra.mxu0 %v4822
    %8261 = vmatprep.subr.mxu0 0.0
    %8262 = vmatpush1.msra.mxu0 %v8246
    %8263 = vmatprep.subr.mxu0 0.0
    %8264 = vmatpush1.msra.mxu0 %v8248
    %8265 = vmatprep.subr.mxu0 0.0
    %8266 = vmatpush1.msra.mxu0 0.0
    %8267 = vmatprep.subr.mxu0 0.0
    %8268 = vmatpush1.msra.mxu0 0.0
    %8269 = vmatprep.subr.mxu0 0.0
    %8270 = vmatpush1.msra.mxu0 0.0
    %8271 = vmatprep.subr.mxu0 0.0
    %8272 = vmatpush1.msra.mxu0 0.0
    %8273 = vmatprep.subr.mxu0 0.0
    %8274 = vmatpush1.msra.mxu0 0.0
    %8275 = vmatprep.subr.mxu0 0.0
    %8276 = vmatpush1.msra.mxu0 0.0
    %8277 = vmatprep.subr.mxu0 0.0
    %8278 = vmatpush1.msra.mxu0 0.0
    %8279 = vmatprep.subr.mxu0 0.0
    %8280 = vmatpush1.msra.mxu0 0.0
    %8281 = vmatprep.subr.mxu0 0.0
    %8282 = vmatpush1.msra.mxu0 0.0
    %8283 = vmatprep.subr.mxu0 0.0
    %8284 = vmatpush1.msra.mxu0 0.0
    %8285 = vmatprep.subr.mxu0 0.0
    %8286 = vmatpush1.msra.mxu0 0.0
    %8287 = vmatprep.subr.mxu0 0.0
    %8288 = vmatpush1.msra.mxu0 0.0
    %8289 = vmatprep.subr.mxu0 0.0
    %8290 = vmatpush1.msra.mxu0 0.0
    %8291 = vmatprep.subr.mxu0 0.0
    %8292 = vmatpush1.msra.mxu0 0.0
    %8293 = vmatprep.subr.mxu0 0.0
    %8294 = vmatpush1.msra.mxu0 0.0
    %8295 = vmatprep.subr.mxu0 0.0
    %8296 = vmatpush1.msra.mxu0 0.0
    %8297 = vmatprep.subr.mxu0 0.0
    %8298 = vmatpush1.msra.mxu0 0.0
    %8299 = vmatprep.subr.mxu0 0.0
    %8300 = vmatpush1.msra.mxu0 0.0
    %8301 = vmatprep.subr.mxu0 0.0
    %8302 = vmatpush1.msra.mxu0 0.0
    %8303 = vmatprep.subr.mxu0 0.0
    %8304 = vmatpush1.msra.mxu0 0.0
    %8305 = vmatprep.subr.mxu0 0.0
    %8306 = vmatpush1.msra.mxu0 0.0
    %8307 = vmatprep.subr.mxu0 0.0
    %8308 = vmatpush1.msra.mxu0 0.0
    %8309 = vmatprep.subr.mxu0 0.0
    %8310 = vmatpush1.msra.mxu0 0.0
    %8311 = vmatprep.subr.mxu0 0.0
    %8312 = vmatpush1.msra.mxu0 0.0
    %8313 = vmatprep.subr.mxu0 0.0
    %8314 = vmatpush1.msra.mxu0 0.0
    %8315 = vmatprep.subr.mxu0 0.0
    %8316 = vmatpush1.msra.mxu0 0.0
    %8317 = vmatprep.subr.mxu0 0.0
    %8318 = vmatpush1.msra.mxu0 0.0
    %8319 = vmatprep.subr.mxu0 0.0
    %8320 = vmatpush1.msra.mxu0 0.0
    %8321 = vmatprep.mubr.f32.mxu0 0.0
    %8322 = vmatmul.mubr.f32.gmra.mrb[0].mxu0 %v8252
    %v8323 = vpop.f32.mrb[0].mxu0
    %v8324 = vadd.f32 0.0, %v8323
    %v8325 = vpop.f32.mrb[0].mxu0
    %8326 = vmatprep.mubr.f32.mxu0 0.0
    %8327 = vmatmul.mubr.f32.gmra.mrb[0].mxu0 %v8255
    %v8328 = vpop.f32.mrb[0].mxu0
    %v8329 = vadd.f32 0.0, %v8328
    %v8330 = vpop.f32.mrb[0].mxu0
    %8331 = vdwg.mxu0
    %v8332 = vmul.f32 %v8324, 0.5
    %v8333 = vmul.f32 %v8329, 0.5
    %v8334 = vlaneseq
    %v8335 = vshrl.u32 %v8334, 7
    %v8336 = vsub.s32 5, %v8335
    %v8337 = vrot.slane %v4728, %v8336
    %v8338 = vadd.f32 %v8332, %v8337
    %v8339 = vadd.f32 %v8333, %v8337
    %v8340 = vadd.f32 %v8338, %v4893
    %v8341 = vadd.f32 %v8339, %v4898
    %vm8342 = vcmp.gt.f32.partialorder %v8340, 0.0
    %vm8343 = vcmp.gt.f32.partialorder %v8341, 0.0
    %v8344 = vlaneseq
    %v8345 = vshrl.u32 %v8344, 7
    %v8346 = vsub.s32 6, %v8345
    %v8347 = vrot.slane %v4728, %v8346
    %v8348 = vmul.f32 %v8347, %v8340
    %v8349 = vmul.f32 %v8347, %v8341
    %v8350 = vsel %vm8342, %v8340, %v8348
    %v8351 = vsel %vm8343, %v8341, %v8349
    %8352 = vst.msk [vmem:[#allocation14] sm:$0xff] %vm1388, %v8350
    %8353 = vst.msk [vmem:[#allocation14 + $0x8] sm:$0xff] %vm1388, %v8351
    // Predicated region
    $region58: #{_lambda_.1} parent=1 // pred_check
      _
    $region59: #{_lambda_.1} parent=1 // pred_check_branch
      %8355 = sbr.rel (0) target = $region61
    $region60: #{_lambda_.1} parent=1 // pred_region
      %s8357 = ssub.s32 256, 256
      %8358 = vsyncadd [#allocation4], %s8357
      %s8359 = sshll.u32 [#allocation14], 4
      %s8360 = int_to_ptr.vmem [resolvable:$true] %s8359
      %8365 = dma.vmem_to_hbm [thread:$0]  %s8360, 256, %s7, [#allocation4], 128, 128, 8
    $region61: #{_lambda_.1} parent=1 // pred_fallthru
      _
    // Predicated region
    $region62: #{_lambda_.1} parent=1 // pred_check
      _
    $region63: #{_lambda_.1} parent=1 // pred_check_branch
      %8367 = sbr.rel (0) target = $region65
    $region64: #{_lambda_.1} parent=1 // pred_region
      %8368 = dma.done [#allocation4], 256
    $region65: #{_lambda_.1} parent=1 // pred_fallthru
      _
    %8369 = vsyncpa [#allocation3], 1
    %8370 = vsyncpa [#allocation6], 1
    %8371 = vsyncpa [#allocation9], 1
    %8372 = vsyncpa [#allocation12], 1
    %8373 = vsyncpa [#allocation4], 1

</llo_original>
